<compile_context>
chip_gen: v5e
topology: v5e:2x2
jax: 0.10.0
libtpu: 0.0.40
codegen_flags: <defaults>
</compile_context>

<pallas_src>
import jax
import jax.numpy as jnp
from jax.experimental import pallas as pl
from jax.experimental.pallas import tpu as pltpu

BN_EPS = 1e-5
LEAKY_SLOPE = 0.01


def _lrelu(x):
    return jnp.where(x >= 0.0, x, LEAKY_SLOPE * x)


# --------------------------------------------------------------------------
# Fused kernel (one batch element per grid step):
#   conv1+BN+act -> conv2+BN+act -> conv3(+bias)
# --------------------------------------------------------------------------
def _fused_encoder_kernel(p1_ref, m_ref, w1_ref, s1_ref, b1_ref,
                          w2_ref, s2_ref, b2_ref,
                          w3_ref, b3_ref,
                          o_ref,
                          y1_ref, lhs2_ref, y2_ref, lhs3_ref):
    # ---- Layer 1: 16x16x64 -> 8x8x128 (3x3, s=2, p=1) + BN + LeakyReLU ------
    # p1 rows are already in the padded phase-split layout used by layer 2:
    #   row = c*48 + ipad*8 + jpad, chunk c = 2*by + bx holds layer-1 outputs
    #   (oy, ox) = (2*ipad - by, 2*jpad - bx); out-of-range / pad rows are zero
    #   in the patches and forced to exactly zero by the 0/1 row mask m_ref
    #   (this IS the zero padding of conv 2).
    y1 = jnp.dot(p1_ref[...], w1_ref[...].astype(jnp.float32),
                 preferred_element_type=jnp.float32)
    y1_ref[...] = m_ref[...] * _lrelu(y1 * s1_ref[...] + b1_ref[...])

    # ---- Layer 2: 8x8x128 -> 4x4x256 (3x3, s=2, p=1) + BN + LeakyReLU -------
    # Build the full im2col LHS (32 rows x 9*128) with ONE contiguous 32-row
    # slab copy per tap, then a single K=1152 matmul (MXU-side accumulation).
    # Valid output rows are qy*8 + qx (qy,qx in 0..3); the rest is harmless
    # padding that never reaches the result.
    for t in range(9):
        ky, kx = t // 3, t % 3
        c = 2 * (1 - ky % 2) + (1 - kx % 2)
        src = c * 48 + (ky // 2) * 8 + (kx // 2)
        lhs2_ref[:, t * 128:(t + 1) * 128] = y1_ref[src:src + 32, :]
    y2 = jnp.dot(lhs2_ref[...], w2_ref[...].astype(jnp.float32),
                 preferred_element_type=jnp.float32)
    y2_ref[...] = _lrelu(y2 * s2_ref[...] + b2_ref[...])

    # ---- Layer 3: 4x4x256 -> 2x2x512 (3x3, s=1, p=0), conv bias only --------
    # Full im2col LHS (16 rows x 9*256) with ONE contiguous 10-row slab copy
    # per tap; single K=2304 matmul.  Valid output rows: ry*8 + rx (ry,rx<2).
    lhs3_ref[8:16, :] = jnp.zeros((8, 9 * 256), jnp.float32)   # keep rows 10..15 defined
    for t in range(9):
        ky, kx = t // 3, t % 3
        src = ky * 8 + kx
        lhs3_ref[0:10, t * 256:(t + 1) * 256] = y2_ref[src:src + 10, :]
    y3 = jnp.dot(lhs3_ref[...], w3_ref[...].astype(jnp.float32),
                 preferred_element_type=jnp.float32)
    o_ref[...] = y3 + b3_ref[...]


# --------------------------------------------------------------------------
# Host-side glue: padded phase-split im2col for layer 1, BN folding, weights
# --------------------------------------------------------------------------
def fold_bn(conv_bias, gamma, beta, mean, var):
    # eval-mode BatchNorm folded into a per-channel affine applied post-matmul
    # TODO(synk): training-mode BN (batch statistics) not reproduced; eval-mode running stats used.
    scale = gamma / jnp.sqrt(var + BN_EPS)
    bias_eff = (conv_bias - mean) * scale + beta
    return scale, bias_eff


def _build_padded_phase_patches(x_nchw):
    """Layer-1 im2col (3x3, s=2, p=1), rows in padded phase-split layout.

    Row layout (per batch element): row = c*48 + ipad*8 + jpad with
    c = 2*by + bx; cell (ipad, jpad) of chunk (by, bx) corresponds to layer-1
    output (oy, ox) = (2*ipad - by, 2*jpad - bx); out-of-range cells are zero
    rows (mask = 0) and double as conv-2 zero padding.
    """
    N, C, H, W = x_nchw.shape
    Ho = H // 2                                                    # 8
    x = jnp.transpose(x_nchw, (0, 2, 3, 1)).astype(jnp.float32)    # NHWC
    xp = jnp.pad(x, ((0, 0), (1, 1), (1, 1), (0, 0)))              # (N,18,18,C)
    taps = [xp[:, ky:ky + 2 * Ho:2, kx:kx + 2 * Ho:2, :]
            for ky in range(3) for kx in range(3)]
    p = jnp.concatenate(taps, axis=-1)                             # (N,8,8,9C)
    K = 9 * C
    Kp = ((K + 127) // 128) * 128                                  # 640 (lane-dense MXU feed)

    gs, ms = [], []
    for by in range(2):
        for bx in range(2):
            g = jnp.zeros((N, 6, 8, K), jnp.float32)
            g = g.at[:, by:by + 4, bx:bx + 4, :].set(p[:, by::2, bx::2, :])
            m = jnp.zeros((6, 8), jnp.float32)
            m = m.at[by:by + 4, bx:bx + 4].set(1.0)
            gs.append(g)
            ms.append(m)
    patches = jnp.stack(gs, axis=1).reshape(N * 4 * 48, K)         # rows (n, c, ipad, jpad)
    patches = jnp.pad(patches, ((0, 0), (0, Kp - K)))
    mask = jnp.stack(ms, axis=0).reshape(4 * 48, 1)                # batch-invariant
    return patches, mask, Kp


def global_encoder(x_nchw, p):
    N, Cin, H, W = x_nchw.shape
    assert (Cin, H, W) == (64, 16, 16)

    patches, mask, Kp = _build_padded_phase_patches(x_nchw)        # (N*192, 640), (192, 1)

    # Weights packed (tap-major, cin) x cout and cast to bf16 (halves the
    # dominant weight DMA); per-channel BN affine stays f32.
    w1m = jnp.transpose(p["w1"], (2, 3, 1, 0)).reshape(9 * 64, 128)
    w1m = jnp.pad(w1m, ((0, Kp - 9 * 64), (0, 0))).astype(jnp.bfloat16)
    s1, be1 = fold_bn(p["b1"], *p["bn1"])
    w2m = jnp.transpose(p["w2"], (2, 3, 1, 0)).reshape(9 * 128, 256).astype(jnp.bfloat16)
    s2, be2 = fold_bn(p["b2"], *p["bn2"])
    w3m = jnp.transpose(p["w3"], (2, 3, 1, 0)).reshape(9 * 256, 512).astype(jnp.bfloat16)

    out = pl.pallas_call(
        _fused_encoder_kernel,
        out_shape=jax.ShapeDtypeStruct((N * 16, 512), jnp.float32),
        grid=(N,),
        in_specs=[
            pl.BlockSpec((192, Kp), lambda n: (n, 0)),       # per-batch patches
            pl.BlockSpec((192, 1), lambda n: (0, 0)),        # halo row mask (grid-invariant)
            pl.BlockSpec((Kp, 128), lambda n: (0, 0)),       # w1 (bf16)
            pl.BlockSpec((1, 128), lambda n: (0, 0)),        # bn1 scale
            pl.BlockSpec((1, 128), lambda n: (0, 0)),        # bn1 bias
            pl.BlockSpec((9 * 128, 256), lambda n: (0, 0)),  # w2 (bf16)
            pl.BlockSpec((1, 256), lambda n: (0, 0)),        # bn2 scale
            pl.BlockSpec((1, 256), lambda n: (0, 0)),        # bn2 bias
            pl.BlockSpec((9 * 256, 512), lambda n: (0, 0)),  # w3 (bf16)
            pl.BlockSpec((1, 512), lambda n: (0, 0)),        # conv3 bias
        ],
        out_specs=pl.BlockSpec((16, 512), lambda n: (n, 0)),
        scratch_shapes=[
            pltpu.VMEM((192, 128), jnp.float32),       # y1: padded phase-split layer-1 output
            pltpu.VMEM((32, 9 * 128), jnp.float32),    # layer-2 im2col LHS
            pltpu.VMEM((32, 256), jnp.float32),        # y2 (padded layout)
            pltpu.VMEM((16, 9 * 256), jnp.float32),    # layer-3 im2col LHS
        ],
        compiler_params=pltpu.CompilerParams(
            dimension_semantics=("parallel",),
            vmem_limit_bytes=32 * 1024 * 1024),
    )(patches, mask, w1m,
      s1.reshape(1, 128).astype(jnp.float32), be1.reshape(1, 128).astype(jnp.float32),
      w2m,
      s2.reshape(1, 256).astype(jnp.float32), be2.reshape(1, 256).astype(jnp.float32),
      w3m, p["b3"].reshape(1, 512).astype(jnp.float32))

    # Valid output rows per batch element: ry*8 + rx (ry, rx in {0,1}).
    out = out.reshape(N, 2, 8, 512)[:, :, :2, :]                   # (N, 2, 2, 512) NHWC
    return jnp.transpose(out, (0, 3, 1, 2))                        # NCHW


# --------------------------------------------------------------------------
# Parameters (deterministic, synthetic)
# --------------------------------------------------------------------------
def init_params(key):
    ks = jax.random.split(key, 16)

    def conv(kw_, kb_, cout, cin):
        w = 0.05 * jax.random.normal(kw_, (cout, cin, 3, 3), jnp.float32)
        b = 0.05 * jax.random.normal(kb_, (cout,), jnp.float32)
        return w, b

    def bn(k0, k1, k2, k3, c):
        gamma = 1.0 + 0.1 * jax.random.normal(k0, (c,), jnp.float32)
        beta = 0.1 * jax.random.normal(k1, (c,), jnp.float32)
        mean = 0.1 * jax.random.normal(k2, (c,), jnp.float32)
        var = 1.0 + 0.1 * jnp.abs(jax.random.normal(k3, (c,), jnp.float32))
        return gamma, beta, mean, var

    w1, b1 = conv(ks[0], ks[1], 128, 64)
    bn1 = bn(ks[2], ks[3], ks[4], ks[5], 128)
    w2, b2 = conv(ks[6], ks[7], 256, 128)
    bn2 = bn(ks[8], ks[9], ks[10], ks[11], 256)
    w3, b3 = conv(ks[12], ks[13], 512, 256)
    return dict(w1=w1, b1=b1, bn1=bn1, w2=w2, b2=b2, bn2=bn2, w3=w3, b3=b3)


def _bf16_roundtrip_weights(p):
    q = dict(p)
    for k in ("w1", "w2", "w3"):
        q[k] = p[k].astype(jnp.bfloat16).astype(jnp.float32)
    return q


# --------------------------------------------------------------------------
# Pure-JAX reference (for correctness check)
# --------------------------------------------------------------------------
def reference(x_nchw, p):
    dn = ("NCHW", "OIHW", "NCHW")

    def conv(x, w, b, stride, pad):
        y = jax.lax.conv_general_dilated(
            x, w, (stride, stride), [(pad, pad), (pad, pad)],
            dimension_numbers=dn)
        return y + b[None, :, None, None]

    def bn(x, gamma, beta, mean, var):
        inv = gamma / jnp.sqrt(var + BN_EPS)
        return (x - mean[None, :, None, None]) * inv[None, :, None, None] \
            + beta[None, :, None, None]

    def lrelu(x):
        return jnp.where(x >= 0, x, LEAKY_SLOPE * x)

    x = x_nchw.astype(jnp.float32)
    x = lrelu(bn(conv(x, p["w1"], p["b1"], 2, 1), *p["bn1"]))
    x = lrelu(bn(conv(x, p["w2"], p["b2"], 2, 1), *p["bn2"]))
    x = conv(x, p["w3"], p["b3"], 1, 0)
    return x


if __name__ == "__main__":
    key = jax.random.PRNGKey(0)
    kx, kp = jax.random.split(key)
    # Input consistent with Conv2d(64, ...) at small spatial size.
    x = jax.random.normal(kx, (2, 64, 16, 16), jnp.float32)
    params = init_params(kp)

    out = jax.block_until_ready(jax.jit(global_encoder)(x, params))
    assert out.shape == (2, 512, 2, 2), out.shape

    # (1) Tight check of the kernel's math (layout, phase indexing, BN fold)
    #     against a reference using the SAME bf16-rounded weights.
    ref_q = jax.block_until_ready(
        jax.jit(reference)(x, _bf16_roundtrip_weights(params)))
    assert jnp.allclose(out, ref_q, atol=2e-3, rtol=2e-3), \
        float(jnp.max(jnp.abs(out - ref_q)))

    # (2) Fidelity vs the full-f32 module; extra slack covers the bf16 weight
    #     cast adopted per the performance review (activations remain f32).
    ref_f32 = jax.block_until_ready(jax.jit(reference)(x, params))
    assert jnp.allclose(out, ref_f32, atol=1e-1, rtol=1e-1), \
        float(jnp.max(jnp.abs(out - ref_f32)))

    print("KERNEL_OK")
</pallas_src>

<mosaic_0001>
module attributes {stable_mosaic.version = 11 : i64} {
  func.func @_fused_encoder_kernel(%arg0: i32, %arg1: memref<192x640xf32, #tpu.memory_space<vmem>>, %arg2: memref<192x1xf32, #tpu.memory_space<vmem>>, %arg3: memref<640x128xbf16, #tpu.memory_space<vmem>>, %arg4: memref<1x128xf32, #tpu.memory_space<vmem>>, %arg5: memref<1x128xf32, #tpu.memory_space<vmem>>, %arg6: memref<1152x256xbf16, #tpu.memory_space<vmem>>, %arg7: memref<1x256xf32, #tpu.memory_space<vmem>>, %arg8: memref<1x256xf32, #tpu.memory_space<vmem>>, %arg9: memref<2304x512xbf16, #tpu.memory_space<vmem>>, %arg10: memref<1x512xf32, #tpu.memory_space<vmem>>, %arg11: memref<16x512xf32, #tpu.memory_space<vmem>>, %arg12: memref<192x128xf32, #tpu.memory_space<vmem>>, %arg13: memref<32x1152xf32, #tpu.memory_space<vmem>>, %arg14: memref<32x256xf32, #tpu.memory_space<vmem>>, %arg15: memref<16x2304xf32, #tpu.memory_space<vmem>>) attributes {dimension_semantics = [#tpu.dimension_semantics<parallel>], iteration_bounds = array<i64: 2>, scalar_prefetch = 0 : i64, scratch_operands = 4 : i64, tpu.core_type = #tpu.core_type<tc>, window_params = [{transform_indices = @transform_0, window_bounds = array<i64: 192, 640>}, {pipeline_mode = #tpu.pipeline_mode<synchronous>, transform_indices = @transform_1, window_bounds = array<i64: 192, 1>}, {pipeline_mode = #tpu.pipeline_mode<synchronous>, transform_indices = @transform_2, window_bounds = array<i64: 640, 128>}, {pipeline_mode = #tpu.pipeline_mode<synchronous>, transform_indices = @transform_3, window_bounds = array<i64: 1, 128>}, {pipeline_mode = #tpu.pipeline_mode<synchronous>, transform_indices = @transform_4, window_bounds = array<i64: 1, 128>}, {pipeline_mode = #tpu.pipeline_mode<synchronous>, transform_indices = @transform_5, window_bounds = array<i64: 1152, 256>}, {pipeline_mode = #tpu.pipeline_mode<synchronous>, transform_indices = @transform_6, window_bounds = array<i64: 1, 256>}, {pipeline_mode = #tpu.pipeline_mode<synchronous>, transform_indices = @transform_7, window_bounds = array<i64: 1, 256>}, {pipeline_mode = #tpu.pipeline_mode<synchronous>, transform_indices = @transform_8, window_bounds = array<i64: 2304, 512>}, {pipeline_mode = #tpu.pipeline_mode<synchronous>, transform_indices = @transform_9, window_bounds = array<i64: 1, 512>}, {transform_indices = @transform_10, window_bounds = array<i64: 16, 512>}]} {
    %c0 = arith.constant 0 : index
    %c0_0 = arith.constant 0 : index
    %0 = vector.load %arg1[%c0, %c0_0] : memref<192x640xf32, #tpu.memory_space<vmem>>, vector<192x640xf32>
    %c0_1 = arith.constant 0 : index
    %c0_2 = arith.constant 0 : index
    %1 = vector.load %arg3[%c0_1, %c0_2] : memref<640x128xbf16, #tpu.memory_space<vmem>>, vector<640x128xbf16>
    %2 = arith.extf %1 : vector<640x128xbf16> to vector<640x128xf32>
    %cst = arith.constant dense<0.000000e+00> : vector<192x128xf32>
    %3 = tpu.matmul %0, %2, %cst {dimension_numbers = #tpu.dot_dimension_numbers<[1], [0], [0], [1], [0, 0, 1, 1], [], []>} : vector<192x640xf32>, vector<640x128xf32>, vector<192x128xf32> -> vector<192x128xf32>
    %c0_3 = arith.constant 0 : index
    %c0_4 = arith.constant 0 : index
    %4 = vector.load %arg2[%c0_3, %c0_4] : memref<192x1xf32, #tpu.memory_space<vmem>>, vector<192x1xf32>
    %c0_5 = arith.constant 0 : index
    %c0_6 = arith.constant 0 : index
    %5 = vector.load %arg4[%c0_5, %c0_6] : memref<1x128xf32, #tpu.memory_space<vmem>>, vector<1x128xf32>
    %6 = vector.broadcast %5 : vector<1x128xf32> to vector<192x128xf32>
    %7 = arith.mulf %3, %6 : vector<192x128xf32>
    %c0_7 = arith.constant 0 : index
    %c0_8 = arith.constant 0 : index
    %8 = vector.load %arg5[%c0_7, %c0_8] : memref<1x128xf32, #tpu.memory_space<vmem>>, vector<1x128xf32>
    %9 = vector.broadcast %8 : vector<1x128xf32> to vector<192x128xf32>
    %10 = arith.addf %7, %9 : vector<192x128xf32>
    %cst_9 = arith.constant 0.000000e+00 : f32
    %11 = vector.broadcast %cst_9 : f32 to vector<192x128xf32>
    %12 = arith.cmpf oge, %10, %11 : vector<192x128xf32>
    %cst_10 = arith.constant 0.00999999977 : f32
    %13 = vector.broadcast %cst_10 : f32 to vector<192x128xf32>
    %14 = arith.mulf %13, %10 : vector<192x128xf32>
    %15 = arith.select %12, %10, %14 : vector<192x128xi1>, vector<192x128xf32>
    %16 = vector.broadcast %4 : vector<192x1xf32> to vector<192x128xf32>
    %17 = arith.mulf %16, %15 : vector<192x128xf32>
    %c0_11 = arith.constant 0 : index
    %c0_12 = arith.constant 0 : index
    %18 = vector.load %arg12[%c0_11, %c0_12] : memref<192x128xf32, #tpu.memory_space<vmem>>, vector<192x128xf32>
    tpu.vector_store %arg12[%c0_11, %c0_12], %17 {strides = array<i32>} : memref<192x128xf32, #tpu.memory_space<vmem>>, vector<192x128xf32>,
    %c144 = arith.constant 144 : index
    %c0_13 = arith.constant 0 : index
    %19 = vector.load %arg12[%c144, %c0_13] : memref<192x128xf32, #tpu.memory_space<vmem>>, vector<32x128xf32>
    %c0_14 = arith.constant 0 : index
    %c0_15 = arith.constant 0 : index
    %20 = vector.load %arg13[%c0_14, %c0_15] : memref<32x1152xf32, #tpu.memory_space<vmem>>, vector<32x128xf32>
    tpu.vector_store %arg13[%c0_14, %c0_15], %19 {strides = array<i32>} : memref<32x1152xf32, #tpu.memory_space<vmem>>, vector<32x128xf32>,
    %c96 = arith.constant 96 : index
    %c0_16 = arith.constant 0 : index
    %21 = vector.load %arg12[%c96, %c0_16] : memref<192x128xf32, #tpu.memory_space<vmem>>, vector<32x128xf32>
    %c0_17 = arith.constant 0 : index
    %c128 = arith.constant 128 : index
    %22 = vector.load %arg13[%c0_17, %c128] : memref<32x1152xf32, #tpu.memory_space<vmem>>, vector<32x128xf32>
    tpu.vector_store %arg13[%c0_17, %c128], %21 {strides = array<i32>} : memref<32x1152xf32, #tpu.memory_space<vmem>>, vector<32x128xf32>,
    %c145 = arith.constant 145 : index
    %c0_18 = arith.constant 0 : index
    %23 = vector.load %arg12[%c145, %c0_18] : memref<192x128xf32, #tpu.memory_space<vmem>>, vector<32x128xf32>
    %c0_19 = arith.constant 0 : index
    %c256 = arith.constant 256 : index
    %24 = vector.load %arg13[%c0_19, %c256] : memref<32x1152xf32, #tpu.memory_space<vmem>>, vector<32x128xf32>
    tpu.vector_store %arg13[%c0_19, %c256], %23 {strides = array<i32>} : memref<32x1152xf32, #tpu.memory_space<vmem>>, vector<32x128xf32>,
    %c48 = arith.constant 48 : index
    %c0_20 = arith.constant 0 : index
    %25 = vector.load %arg12[%c48, %c0_20] : memref<192x128xf32, #tpu.memory_space<vmem>>, vector<32x128xf32>
    %c0_21 = arith.constant 0 : index
    %c384 = arith.constant 384 : index
    %26 = vector.load %arg13[%c0_21, %c384] : memref<32x1152xf32, #tpu.memory_space<vmem>>, vector<32x128xf32>
    tpu.vector_store %arg13[%c0_21, %c384], %25 {strides = array<i32>} : memref<32x1152xf32, #tpu.memory_space<vmem>>, vector<32x128xf32>,
    %c0_22 = arith.constant 0 : index
    %c0_23 = arith.constant 0 : index
    %27 = vector.load %arg12[%c0_22, %c0_23] : memref<192x128xf32, #tpu.memory_space<vmem>>, vector<32x128xf32>
    %c0_24 = arith.constant 0 : index
    %c512 = arith.constant 512 : index
    %28 = vector.load %arg13[%c0_24, %c512] : memref<32x1152xf32, #tpu.memory_space<vmem>>, vector<32x128xf32>
    tpu.vector_store %arg13[%c0_24, %c512], %27 {strides = array<i32>} : memref<32x1152xf32, #tpu.memory_space<vmem>>, vector<32x128xf32>,
    %c49 = arith.constant 49 : index
    %c0_25 = arith.constant 0 : index
    %29 = vector.load %arg12[%c49, %c0_25] : memref<192x128xf32, #tpu.memory_space<vmem>>, vector<32x128xf32>
    %c0_26 = arith.constant 0 : index
    %c640 = arith.constant 640 : index
    %30 = vector.load %arg13[%c0_26, %c640] : memref<32x1152xf32, #tpu.memory_space<vmem>>, vector<32x128xf32>
    tpu.vector_store %arg13[%c0_26, %c640], %29 {strides = array<i32>} : memref<32x1152xf32, #tpu.memory_space<vmem>>, vector<32x128xf32>,
    %c152 = arith.constant 152 : index
    %c0_27 = arith.constant 0 : index
    %31 = vector.load %arg12[%c152, %c0_27] : memref<192x128xf32, #tpu.memory_space<vmem>>, vector<32x128xf32>
    %c0_28 = arith.constant 0 : index
    %c768 = arith.constant 768 : index
    %32 = vector.load %arg13[%c0_28, %c768] : memref<32x1152xf32, #tpu.memory_space<vmem>>, vector<32x128xf32>
    tpu.vector_store %arg13[%c0_28, %c768], %31 {strides = array<i32>} : memref<32x1152xf32, #tpu.memory_space<vmem>>, vector<32x128xf32>,
    %c104 = arith.constant 104 : index
    %c0_29 = arith.constant 0 : index
    %33 = vector.load %arg12[%c104, %c0_29] : memref<192x128xf32, #tpu.memory_space<vmem>>, vector<32x128xf32>
    %c0_30 = arith.constant 0 : index
    %c896 = arith.constant 896 : index
    %34 = vector.load %arg13[%c0_30, %c896] : memref<32x1152xf32, #tpu.memory_space<vmem>>, vector<32x128xf32>
    tpu.vector_store %arg13[%c0_30, %c896], %33 {strides = array<i32>} : memref<32x1152xf32, #tpu.memory_space<vmem>>, vector<32x128xf32>,
    %c153 = arith.constant 153 : index
    %c0_31 = arith.constant 0 : index
    %35 = vector.load %arg12[%c153, %c0_31] : memref<192x128xf32, #tpu.memory_space<vmem>>, vector<32x128xf32>
    %c0_32 = arith.constant 0 : index
    %c1024 = arith.constant 1024 : index
    %36 = vector.load %arg13[%c0_32, %c1024] : memref<32x1152xf32, #tpu.memory_space<vmem>>, vector<32x128xf32>
    tpu.vector_store %arg13[%c0_32, %c1024], %35 {strides = array<i32>} : memref<32x1152xf32, #tpu.memory_space<vmem>>, vector<32x128xf32>,
    %c0_33 = arith.constant 0 : index
    %c0_34 = arith.constant 0 : index
    %37 = vector.load %arg13[%c0_33, %c0_34] : memref<32x1152xf32, #tpu.memory_space<vmem>>, vector<32x1152xf32>
    %c0_35 = arith.constant 0 : index
    %c0_36 = arith.constant 0 : index
    %38 = vector.load %arg6[%c0_35, %c0_36] : memref<1152x256xbf16, #tpu.memory_space<vmem>>, vector<1152x256xbf16>
    %39 = arith.extf %38 : vector<1152x256xbf16> to vector<1152x256xf32>
    %cst_37 = arith.constant dense<0.000000e+00> : vector<32x256xf32>
    %40 = tpu.matmul %37, %39, %cst_37 {dimension_numbers = #tpu.dot_dimension_numbers<[1], [0], [0], [1], [0, 0, 1, 1], [], []>} : vector<32x1152xf32>, vector<1152x256xf32>, vector<32x256xf32> -> vector<32x256xf32>
    %c0_38 = arith.constant 0 : index
    %c0_39 = arith.constant 0 : index
    %41 = vector.load %arg7[%c0_38, %c0_39] : memref<1x256xf32, #tpu.memory_space<vmem>>, vector<1x256xf32>
    %42 = vector.broadcast %41 : vector<1x256xf32> to vector<32x256xf32>
    %43 = arith.mulf %40, %42 : vector<32x256xf32>
    %c0_40 = arith.constant 0 : index
    %c0_41 = arith.constant 0 : index
    %44 = vector.load %arg8[%c0_40, %c0_41] : memref<1x256xf32, #tpu.memory_space<vmem>>, vector<1x256xf32>
    %45 = vector.broadcast %44 : vector<1x256xf32> to vector<32x256xf32>
    %46 = arith.addf %43, %45 : vector<32x256xf32>
    %cst_42 = arith.constant 0.000000e+00 : f32
    %47 = vector.broadcast %cst_42 : f32 to vector<32x256xf32>
    %48 = arith.cmpf oge, %46, %47 : vector<32x256xf32>
    %cst_43 = arith.constant 0.00999999977 : f32
    %49 = vector.broadcast %cst_43 : f32 to vector<32x256xf32>
    %50 = arith.mulf %49, %46 : vector<32x256xf32>
    %51 = arith.select %48, %46, %50 : vector<32x256xi1>, vector<32x256xf32>
    %c0_44 = arith.constant 0 : index
    %c0_45 = arith.constant 0 : index
    %52 = vector.load %arg14[%c0_44, %c0_45] : memref<32x256xf32, #tpu.memory_space<vmem>>, vector<32x256xf32>
    tpu.vector_store %arg14[%c0_44, %c0_45], %51 {strides = array<i32>} : memref<32x256xf32, #tpu.memory_space<vmem>>, vector<32x256xf32>,
    %cst_46 = arith.constant 0.000000e+00 : f32
    %53 = vector.broadcast %cst_46 : f32 to vector<8x2304xf32>
    %c8 = arith.constant 8 : index
    %c0_47 = arith.constant 0 : index
    %54 = vector.load %arg15[%c8, %c0_47] : memref<16x2304xf32, #tpu.memory_space<vmem>>, vector<8x2304xf32>
    tpu.vector_store %arg15[%c8, %c0_47], %53 {strides = array<i32>} : memref<16x2304xf32, #tpu.memory_space<vmem>>, vector<8x2304xf32>,
    %c0_48 = arith.constant 0 : index
    %c0_49 = arith.constant 0 : index
    %55 = vector.load %arg14[%c0_48, %c0_49] : memref<32x256xf32, #tpu.memory_space<vmem>>, vector<10x256xf32>
    %c0_50 = arith.constant 0 : index
    %c0_51 = arith.constant 0 : index
    %56 = vector.load %arg15[%c0_50, %c0_51] : memref<16x2304xf32, #tpu.memory_space<vmem>>, vector<10x256xf32>
    tpu.vector_store %arg15[%c0_50, %c0_51], %55 {strides = array<i32>} : memref<16x2304xf32, #tpu.memory_space<vmem>>, vector<10x256xf32>,
    %c1 = arith.constant 1 : index
    %c0_52 = arith.constant 0 : index
    %57 = vector.load %arg14[%c1, %c0_52] : memref<32x256xf32, #tpu.memory_space<vmem>>, vector<10x256xf32>
    %c0_53 = arith.constant 0 : index
    %c256_54 = arith.constant 256 : index
    %58 = vector.load %arg15[%c0_53, %c256_54] : memref<16x2304xf32, #tpu.memory_space<vmem>>, vector<10x256xf32>
    tpu.vector_store %arg15[%c0_53, %c256_54], %57 {strides = array<i32>} : memref<16x2304xf32, #tpu.memory_space<vmem>>, vector<10x256xf32>,
    %c2 = arith.constant 2 : index
    %c0_55 = arith.constant 0 : index
    %59 = vector.load %arg14[%c2, %c0_55] : memref<32x256xf32, #tpu.memory_space<vmem>>, vector<10x256xf32>
    %c0_56 = arith.constant 0 : index
    %c512_57 = arith.constant 512 : index
    %60 = vector.load %arg15[%c0_56, %c512_57] : memref<16x2304xf32, #tpu.memory_space<vmem>>, vector<10x256xf32>
    tpu.vector_store %arg15[%c0_56, %c512_57], %59 {strides = array<i32>} : memref<16x2304xf32, #tpu.memory_space<vmem>>, vector<10x256xf32>,
    %c8_58 = arith.constant 8 : index
    %c0_59 = arith.constant 0 : index
    %61 = vector.load %arg14[%c8_58, %c0_59] : memref<32x256xf32, #tpu.memory_space<vmem>>, vector<10x256xf32>
    %c0_60 = arith.constant 0 : index
    %c768_61 = arith.constant 768 : index
    %62 = vector.load %arg15[%c0_60, %c768_61] : memref<16x2304xf32, #tpu.memory_space<vmem>>, vector<10x256xf32>
    tpu.vector_store %arg15[%c0_60, %c768_61], %61 {strides = array<i32>} : memref<16x2304xf32, #tpu.memory_space<vmem>>, vector<10x256xf32>,
    %c9 = arith.constant 9 : index
    %c0_62 = arith.constant 0 : index
    %63 = vector.load %arg14[%c9, %c0_62] : memref<32x256xf32, #tpu.memory_space<vmem>>, vector<10x256xf32>
    %c0_63 = arith.constant 0 : index
    %c1024_64 = arith.constant 1024 : index
    %64 = vector.load %arg15[%c0_63, %c1024_64] : memref<16x2304xf32, #tpu.memory_space<vmem>>, vector<10x256xf32>
    tpu.vector_store %arg15[%c0_63, %c1024_64], %63 {strides = array<i32>} : memref<16x2304xf32, #tpu.memory_space<vmem>>, vector<10x256xf32>,
    %c10 = arith.constant 10 : index
    %c0_65 = arith.constant 0 : index
    %65 = vector.load %arg14[%c10, %c0_65] : memref<32x256xf32, #tpu.memory_space<vmem>>, vector<10x256xf32>
    %c0_66 = arith.constant 0 : index
    %c1280 = arith.constant 1280 : index
    %66 = vector.load %arg15[%c0_66, %c1280] : memref<16x2304xf32, #tpu.memory_space<vmem>>, vector<10x256xf32>
    tpu.vector_store %arg15[%c0_66, %c1280], %65 {strides = array<i32>} : memref<16x2304xf32, #tpu.memory_space<vmem>>, vector<10x256xf32>,
    %c16 = arith.constant 16 : index
    %c0_67 = arith.constant 0 : index
    %67 = vector.load %arg14[%c16, %c0_67] : memref<32x256xf32, #tpu.memory_space<vmem>>, vector<10x256xf32>
    %c0_68 = arith.constant 0 : index
    %c1536 = arith.constant 1536 : index
    %68 = vector.load %arg15[%c0_68, %c1536] : memref<16x2304xf32, #tpu.memory_space<vmem>>, vector<10x256xf32>
    tpu.vector_store %arg15[%c0_68, %c1536], %67 {strides = array<i32>} : memref<16x2304xf32, #tpu.memory_space<vmem>>, vector<10x256xf32>,
    %c17 = arith.constant 17 : index
    %c0_69 = arith.constant 0 : index
    %69 = vector.load %arg14[%c17, %c0_69] : memref<32x256xf32, #tpu.memory_space<vmem>>, vector<10x256xf32>
    %c0_70 = arith.constant 0 : index
    %c1792 = arith.constant 1792 : index
    %70 = vector.load %arg15[%c0_70, %c1792] : memref<16x2304xf32, #tpu.memory_space<vmem>>, vector<10x256xf32>
    tpu.vector_store %arg15[%c0_70, %c1792], %69 {strides = array<i32>} : memref<16x2304xf32, #tpu.memory_space<vmem>>, vector<10x256xf32>,
    %c18 = arith.constant 18 : index
    %c0_71 = arith.constant 0 : index
    %71 = vector.load %arg14[%c18, %c0_71] : memref<32x256xf32, #tpu.memory_space<vmem>>, vector<10x256xf32>
    %c0_72 = arith.constant 0 : index
    %c2048 = arith.constant 2048 : index
    %72 = vector.load %arg15[%c0_72, %c2048] : memref<16x2304xf32, #tpu.memory_space<vmem>>, vector<10x256xf32>
    tpu.vector_store %arg15[%c0_72, %c2048], %71 {strides = array<i32>} : memref<16x2304xf32, #tpu.memory_space<vmem>>, vector<10x256xf32>,
    %c0_73 = arith.constant 0 : index
    %c0_74 = arith.constant 0 : index
    %73 = vector.load %arg15[%c0_73, %c0_74] : memref<16x2304xf32, #tpu.memory_space<vmem>>, vector<16x2304xf32>
    %c0_75 = arith.constant 0 : index
    %c0_76 = arith.constant 0 : index
    %74 = vector.load %arg9[%c0_75, %c0_76] : memref<2304x512xbf16, #tpu.memory_space<vmem>>, vector<2304x512xbf16>
    %75 = arith.extf %74 : vector<2304x512xbf16> to vector<2304x512xf32>
    %cst_77 = arith.constant dense<0.000000e+00> : vector<16x512xf32>
    %76 = tpu.matmul %73, %75, %cst_77 {dimension_numbers = #tpu.dot_dimension_numbers<[1], [0], [0], [1], [0, 0, 1, 1], [], []>} : vector<16x2304xf32>, vector<2304x512xf32>, vector<16x512xf32> -> vector<16x512xf32>
    %c0_78 = arith.constant 0 : index
    %c0_79 = arith.constant 0 : index
    %77 = vector.load %arg10[%c0_78, %c0_79] : memref<1x512xf32, #tpu.memory_space<vmem>>, vector<1x512xf32>
    %78 = vector.broadcast %77 : vector<1x512xf32> to vector<16x512xf32>
    %79 = arith.addf %76, %78 : vector<16x512xf32>
    %c0_80 = arith.constant 0 : index
    %c0_81 = arith.constant 0 : index
    %80 = vector.load %arg11[%c0_80, %c0_81] : memref<16x512xf32, #tpu.memory_space<vmem>>, vector<16x512xf32>
    tpu.vector_store %arg11[%c0_80, %c0_81], %79 {strides = array<i32>} : memref<16x512xf32, #tpu.memory_space<vmem>>, vector<16x512xf32>,
    return
  }
  func.func @transform_0(%arg0: i32) -> (i32, i32) {
    %c0_i32 = arith.constant 0 : i32
    %c0_i32_0 = arith.constant 0 : i32
    return %arg0, %c0_i32 : i32, i32
  }
  func.func @transform_1(%arg0: i32) -> (i32, i32) {
    %c0_i32 = arith.constant 0 : i32
    %c0_i32_0 = arith.constant 0 : i32
    %c0_i32_1 = arith.constant 0 : i32
    return %c0_i32, %c0_i32_0 : i32, i32
  }
  func.func @transform_2(%arg0: i32) -> (i32, i32) {
    %c0_i32 = arith.constant 0 : i32
    %c0_i32_0 = arith.constant 0 : i32
    %c0_i32_1 = arith.constant 0 : i32
    return %c0_i32, %c0_i32_0 : i32, i32
  }
  func.func @transform_3(%arg0: i32) -> (i32, i32) {
    %c0_i32 = arith.constant 0 : i32
    %c0_i32_0 = arith.constant 0 : i32
    %c0_i32_1 = arith.constant 0 : i32
    return %c0_i32, %c0_i32_0 : i32, i32
  }
  func.func @transform_4(%arg0: i32) -> (i32, i32) {
    %c0_i32 = arith.constant 0 : i32
    %c0_i32_0 = arith.constant 0 : i32
    %c0_i32_1 = arith.constant 0 : i32
    return %c0_i32, %c0_i32_0 : i32, i32
  }
  func.func @transform_5(%arg0: i32) -> (i32, i32) {
    %c0_i32 = arith.constant 0 : i32
    %c0_i32_0 = arith.constant 0 : i32
    %c0_i32_1 = arith.constant 0 : i32
    return %c0_i32, %c0_i32_0 : i32, i32
  }
  func.func @transform_6(%arg0: i32) -> (i32, i32) {
    %c0_i32 = arith.constant 0 : i32
    %c0_i32_0 = arith.constant 0 : i32
    %c0_i32_1 = arith.constant 0 : i32
    return %c0_i32, %c0_i32_0 : i32, i32
  }
  func.func @transform_7(%arg0: i32) -> (i32, i32) {
    %c0_i32 = arith.constant 0 : i32
    %c0_i32_0 = arith.constant 0 : i32
    %c0_i32_1 = arith.constant 0 : i32
    return %c0_i32, %c0_i32_0 : i32, i32
  }
  func.func @transform_8(%arg0: i32) -> (i32, i32) {
    %c0_i32 = arith.constant 0 : i32
    %c0_i32_0 = arith.constant 0 : i32
    %c0_i32_1 = arith.constant 0 : i32
    return %c0_i32, %c0_i32_0 : i32, i32
  }
  func.func @transform_9(%arg0: i32) -> (i32, i32) {
    %c0_i32 = arith.constant 0 : i32
    %c0_i32_0 = arith.constant 0 : i32
    %c0_i32_1 = arith.constant 0 : i32
    return %c0_i32, %c0_i32_0 : i32, i32
  }
  func.func @transform_10(%arg0: i32) -> (i32, i32) {
    %c0_i32 = arith.constant 0 : i32
    %c0_i32_0 = arith.constant 0 : i32
    return %arg0, %c0_i32 : i32, i32
  }
}

</mosaic_0001>

<llo_original>
// kernel: global_encoder.1
$region0: #{global_encoder.1}
  #allocation0 [shape = 'u32[]', space=smem, size = 0x4, offset = 0x4, fixed_abs, tag = 'smem constant byte address 0x4 - core index']
  #allocation1 [shape = 'u32[72,128]{1,0:T(1,128)}', space=vmem, size = 0x9000, scoped, tag = 'internal scratch']
  #allocation2 [shape = 'f32[192,128]{1,0:T(8,128)}', space=vmem, size = 0x18000, scoped, tag = 'scratch operand']
  #allocation3 [shape = 'f32[32,1152]{1,0:T(8,128)}', space=vmem, size = 0x24000, scoped, tag = 'scratch operand']
  #allocation4 [shape = 'f32[32,256]{1,0:T(8,128)}', space=vmem, size = 0x8000, scoped, tag = 'scratch operand']
  #allocation5 [shape = 'f32[16,2304]{1,0:T(8,128)}', space=vmem, size = 0x24000, scoped, tag = 'scratch operand']
  %s0 = inlined_call_operand.vmem [shape: f32[384,640], index: 0, kind: input, shape index: {}]
  %s1 = inlined_call_operand.vmem [shape: f32[192,1], index: 1, kind: input, shape index: {}]
  %s2 = inlined_call_operand.vmem [shape: bf16[640,128], index: 2, kind: input, shape index: {}]
  %s3 = inlined_call_operand.vmem [shape: f32[1,128], index: 3, kind: input, shape index: {}]
  %s4 = inlined_call_operand.vmem [shape: f32[1,128], index: 4, kind: input, shape index: {}]
  %s5 = inlined_call_operand.vmem [shape: bf16[1152,256], index: 5, kind: input, shape index: {}]
  %s6 = inlined_call_operand.vmem [shape: f32[1,256], index: 6, kind: input, shape index: {}]
  %s7 = inlined_call_operand.vmem [shape: f32[1,256], index: 7, kind: input, shape index: {}]
  %s8 = inlined_call_operand.vmem [shape: bf16[2304,512], index: 8, kind: input, shape index: {}]
  %s9 = inlined_call_operand.vmem [shape: f32[1,512], index: 9, kind: input, shape index: {}]
  %s10 = inlined_call_operand.vmem [shape: f32[32,512], index: 10, kind: output, shape index: {}]
  %s11 = sld [smem:[#allocation0]]
  $region73: #{global_encoder.1} parent=0
    _
  %s13 = ssub.s32 1, %s11
  %s14 = scalar_select 0, %s13, %s11
  loop: start=0, step=1, limit=4
  $region2: #{global_encoder.1} parent=0 // loop_pre_header
    _
  $region3: #{global_encoder.1} parent=0 // loop_header
    %s16 = sphi 0, %s20
    %p17 = scmp.ge.s32.totalorder %s16, 4
    %s26 = sphi 0, %s28
    %s29 = sphi 0, %s26
    %s30 = sphi 0, %s29
    %s46 = sphi 0, %s30
    %s50 = sphi 0, %s50
    %s52 = sphi 0, %s50
    %s53 = sphi 0, %s52
    %s67 = sphi 0, %s53
    %s71 = sphi 0, %s71
    %s73 = sphi 0, %s71
    %s74 = sphi 0, %s73
    %s88 = sphi 0, %s74
    %s92 = sphi 0, %s92
    %s94 = sphi 0, %s92
    %s95 = sphi 0, %s94
    %s109 = sphi 0, %s95
    %s113 = sphi 0, %s113
    %s115 = sphi 0, %s113
    %s116 = sphi 0, %s115
    %s130 = sphi 0, %s116
    %s134 = sphi 0, %s134
    %s136 = sphi 0, %s134
    %s137 = sphi 0, %s136
    %s151 = sphi 0, %s137
    %s155 = sphi 0, %s155
    %s157 = sphi 0, %s155
    %s158 = sphi 0, %s157
    %s172 = sphi 0, %s158
    %s176 = sphi 0, %s176
    %s178 = sphi 0, %s176
    %s179 = sphi 0, %s178
    %s193 = sphi 0, %s179
    %s197 = sphi 0, %s197
    %s199 = sphi 0, %s197
    %s200 = sphi 0, %s199
    %s214 = sphi 0, %s200
    %s218 = sphi 0, %s218
    %s220 = sphi 0, %s218
    %s221 = sphi 0, %s220
    %s235 = sphi 0, %s221
    %s241 = sphi 0, %s243
    %s244 = sphi 0, %s241
    %s245 = sphi 0, %s244
    %s261 = sphi 0, %s245
  $region4: #{global_encoder.1} parent=0 // loop_header_branch
    %19 = sbr.rel (%p17) target = $region8
  $region5: #{global_encoder.1} parent=0 // loop_body
    %s21 = ssub.s32 %s16, 1
    %s22 = ssub.s32 %s16, 2
    %s23 = sadd.s32 %s16, 1
    %s24 = ssub.s32 %s16, %s23
    %p25 = scmp.eq.s32.totalorder %s24, 0
    %s27 = sadd.s32 %s26, 1
    %s28 = scalar_select %p25, %s26, %s27
    %p31 = pneg %p25
    %p32 = scmp.eq.s32.totalorder %s16, 1
    %p33 = por %p31, %p32
    %p34 = scmp.ne.s32.totalorder %s26, %s29
    %p35 = scmp.eq.s32.totalorder %s16, 0
    %p36 = por %p34, %p35
    %p37 = scmp.ne.s32.totalorder %s26, %s29
    %p38 = scmp.eq.s32.totalorder %s21, 1
    %p39 = por %p37, %p38
    %p40 = scmp.ne.s32.totalorder %s29, %s30
    %p41 = scmp.eq.s32.totalorder %s21, 0
    %p42 = por %p40, %p41
    %p43 = scmp.ne.s32.totalorder %s29, %s30
    %p44 = scmp.eq.s32.totalorder %s22, 1
    %p45 = por %p43, %p44
    %p47 = scmp.ne.s32.totalorder %s30, %s46
    %p48 = scmp.eq.s32.totalorder %s22, 0
    %p49 = por %p47, %p48
    %s51 = sadd.s32 %s50, 1
    %p54 = scmp.eq.s32.totalorder %s16, 1
    %p55 = scmp.ne.s32.totalorder %s50, %s52
    %p56 = scmp.eq.s32.totalorder %s16, 0
    %p57 = por %p55, %p56
    %p58 = scmp.ne.s32.totalorder %s50, %s52
    %p59 = scmp.eq.s32.totalorder %s21, 1
    %p60 = por %p58, %p59
    %p61 = scmp.ne.s32.totalorder %s52, %s53
    %p62 = scmp.eq.s32.totalorder %s21, 0
    %p63 = por %p61, %p62
    %p64 = scmp.ne.s32.totalorder %s52, %s53
    %p65 = scmp.eq.s32.totalorder %s22, 1
    %p66 = por %p64, %p65
    %p68 = scmp.ne.s32.totalorder %s53, %s67
    %p69 = scmp.eq.s32.totalorder %s22, 0
    %p70 = por %p68, %p69
    %s72 = sadd.s32 %s71, 1
    %p75 = scmp.eq.s32.totalorder %s16, 1
    %p76 = scmp.ne.s32.totalorder %s71, %s73
    %p77 = scmp.eq.s32.totalorder %s16, 0
    %p78 = por %p76, %p77
    %p79 = scmp.ne.s32.totalorder %s71, %s73
    %p80 = scmp.eq.s32.totalorder %s21, 1
    %p81 = por %p79, %p80
    %p82 = scmp.ne.s32.totalorder %s73, %s74
    %p83 = scmp.eq.s32.totalorder %s21, 0
    %p84 = por %p82, %p83
    %p85 = scmp.ne.s32.totalorder %s73, %s74
    %p86 = scmp.eq.s32.totalorder %s22, 1
    %p87 = por %p85, %p86
    %p89 = scmp.ne.s32.totalorder %s74, %s88
    %p90 = scmp.eq.s32.totalorder %s22, 0
    %p91 = por %p89, %p90
    %s93 = sadd.s32 %s92, 1
    %p96 = scmp.eq.s32.totalorder %s16, 1
    %p97 = scmp.ne.s32.totalorder %s92, %s94
    %p98 = scmp.eq.s32.totalorder %s16, 0
    %p99 = por %p97, %p98
    %p100 = scmp.ne.s32.totalorder %s92, %s94
    %p101 = scmp.eq.s32.totalorder %s21, 1
    %p102 = por %p100, %p101
    %p103 = scmp.ne.s32.totalorder %s94, %s95
    %p104 = scmp.eq.s32.totalorder %s21, 0
    %p105 = por %p103, %p104
    %p106 = scmp.ne.s32.totalorder %s94, %s95
    %p107 = scmp.eq.s32.totalorder %s22, 1
    %p108 = por %p106, %p107
    %p110 = scmp.ne.s32.totalorder %s95, %s109
    %p111 = scmp.eq.s32.totalorder %s22, 0
    %p112 = por %p110, %p111
    %s114 = sadd.s32 %s113, 1
    %p117 = scmp.eq.s32.totalorder %s16, 1
    %p118 = scmp.ne.s32.totalorder %s113, %s115
    %p119 = scmp.eq.s32.totalorder %s16, 0
    %p120 = por %p118, %p119
    %p121 = scmp.ne.s32.totalorder %s113, %s115
    %p122 = scmp.eq.s32.totalorder %s21, 1
    %p123 = por %p121, %p122
    %p124 = scmp.ne.s32.totalorder %s115, %s116
    %p125 = scmp.eq.s32.totalorder %s21, 0
    %p126 = por %p124, %p125
    %p127 = scmp.ne.s32.totalorder %s115, %s116
    %p128 = scmp.eq.s32.totalorder %s22, 1
    %p129 = por %p127, %p128
    %p131 = scmp.ne.s32.totalorder %s116, %s130
    %p132 = scmp.eq.s32.totalorder %s22, 0
    %p133 = por %p131, %p132
    %s135 = sadd.s32 %s134, 1
    %p138 = scmp.eq.s32.totalorder %s16, 1
    %p139 = scmp.ne.s32.totalorder %s134, %s136
    %p140 = scmp.eq.s32.totalorder %s16, 0
    %p141 = por %p139, %p140
    %p142 = scmp.ne.s32.totalorder %s134, %s136
    %p143 = scmp.eq.s32.totalorder %s21, 1
    %p144 = por %p142, %p143
    %p145 = scmp.ne.s32.totalorder %s136, %s137
    %p146 = scmp.eq.s32.totalorder %s21, 0
    %p147 = por %p145, %p146
    %p148 = scmp.ne.s32.totalorder %s136, %s137
    %p149 = scmp.eq.s32.totalorder %s22, 1
    %p150 = por %p148, %p149
    %p152 = scmp.ne.s32.totalorder %s137, %s151
    %p153 = scmp.eq.s32.totalorder %s22, 0
    %p154 = por %p152, %p153
    %s156 = sadd.s32 %s155, 1
    %p159 = scmp.eq.s32.totalorder %s16, 1
    %p160 = scmp.ne.s32.totalorder %s155, %s157
    %p161 = scmp.eq.s32.totalorder %s16, 0
    %p162 = por %p160, %p161
    %p163 = scmp.ne.s32.totalorder %s155, %s157
    %p164 = scmp.eq.s32.totalorder %s21, 1
    %p165 = por %p163, %p164
    %p166 = scmp.ne.s32.totalorder %s157, %s158
    %p167 = scmp.eq.s32.totalorder %s21, 0
    %p168 = por %p166, %p167
    %p169 = scmp.ne.s32.totalorder %s157, %s158
    %p170 = scmp.eq.s32.totalorder %s22, 1
    %p171 = por %p169, %p170
    %p173 = scmp.ne.s32.totalorder %s158, %s172
    %p174 = scmp.eq.s32.totalorder %s22, 0
    %p175 = por %p173, %p174
    %s177 = sadd.s32 %s176, 1
    %p180 = scmp.eq.s32.totalorder %s16, 1
    %p181 = scmp.ne.s32.totalorder %s176, %s178
    %p182 = scmp.eq.s32.totalorder %s16, 0
    %p183 = por %p181, %p182
    %p184 = scmp.ne.s32.totalorder %s176, %s178
    %p185 = scmp.eq.s32.totalorder %s21, 1
    %p186 = por %p184, %p185
    %p187 = scmp.ne.s32.totalorder %s178, %s179
    %p188 = scmp.eq.s32.totalorder %s21, 0
    %p189 = por %p187, %p188
    %p190 = scmp.ne.s32.totalorder %s178, %s179
    %p191 = scmp.eq.s32.totalorder %s22, 1
    %p192 = por %p190, %p191
    %p194 = scmp.ne.s32.totalorder %s179, %s193
    %p195 = scmp.eq.s32.totalorder %s22, 0
    %p196 = por %p194, %p195
    %s198 = sadd.s32 %s197, 1
    %p201 = scmp.eq.s32.totalorder %s16, 1
    %p202 = scmp.ne.s32.totalorder %s197, %s199
    %p203 = scmp.eq.s32.totalorder %s16, 0
    %p204 = por %p202, %p203
    %p205 = scmp.ne.s32.totalorder %s197, %s199
    %p206 = scmp.eq.s32.totalorder %s21, 1
    %p207 = por %p205, %p206
    %p208 = scmp.ne.s32.totalorder %s199, %s200
    %p209 = scmp.eq.s32.totalorder %s21, 0
    %p210 = por %p208, %p209
    %p211 = scmp.ne.s32.totalorder %s199, %s200
    %p212 = scmp.eq.s32.totalorder %s22, 1
    %p213 = por %p211, %p212
    %p215 = scmp.ne.s32.totalorder %s200, %s214
    %p216 = scmp.eq.s32.totalorder %s22, 0
    %p217 = por %p215, %p216
    %s219 = sadd.s32 %s218, 1
    %p222 = scmp.eq.s32.totalorder %s16, 1
    %p223 = scmp.ne.s32.totalorder %s218, %s220
    %p224 = scmp.eq.s32.totalorder %s16, 0
    %p225 = por %p223, %p224
    %p226 = scmp.ne.s32.totalorder %s218, %s220
    %p227 = scmp.eq.s32.totalorder %s21, 1
    %p228 = por %p226, %p227
    %p229 = scmp.ne.s32.totalorder %s220, %s221
    %p230 = scmp.eq.s32.totalorder %s21, 0
    %p231 = por %p229, %p230
    %p232 = scmp.ne.s32.totalorder %s220, %s221
    %p233 = scmp.eq.s32.totalorder %s22, 1
    %p234 = por %p232, %p233
    %p236 = scmp.ne.s32.totalorder %s221, %s235
    %p237 = scmp.eq.s32.totalorder %s22, 0
    %p238 = por %p236, %p237
    %s239 = ssub.s32 %s16, %s23
    %p240 = scmp.eq.s32.totalorder %s239, 0
    %s242 = sadd.s32 %s241, 1
    %s243 = scalar_select %p240, %s241, %s242
    %p246 = pneg %p240
    %p247 = scmp.eq.s32.totalorder %s16, 1
    %p248 = por %p246, %p247
    %p249 = scmp.ne.s32.totalorder %s241, %s244
    %p250 = scmp.eq.s32.totalorder %s16, 0
    %p251 = por %p249, %p250
    %p252 = scmp.ne.s32.totalorder %s241, %s244
    %p253 = scmp.eq.s32.totalorder %s21, 1
    %p254 = por %p252, %p253
    %p255 = scmp.ne.s32.totalorder %s244, %s245
    %p256 = scmp.eq.s32.totalorder %s21, 0
    %p257 = por %p255, %p256
    %p258 = scmp.ne.s32.totalorder %s244, %s245
    %p259 = scmp.eq.s32.totalorder %s22, 1
    %p260 = por %p258, %p259
    %p262 = scmp.ne.s32.totalorder %s245, %s261
    %p263 = scmp.eq.s32.totalorder %s22, 0
    %p264 = por %p262, %p263
    %p265 = scmp.le.s32.totalorder 1, %s16
    %p266 = scmp.lt.s32.totalorder %s16, 3
    %p267 = pnand %p265, %p266
    %p268 = pneg %p267
    // Predicated region
    $region9: #{global_encoder.1} parent=5 // pred_check
      _
    $region10: #{global_encoder.1} parent=5 // pred_check_branch
      %270 = sbr.rel (%p267) target = $region12
    $region11: #{global_encoder.1} parent=5 // pred_region
      %s271 = ssub.s32 %s16, 1
      // Predicated region
      $region13: #{global_encoder.1} parent=11 // pred_check
        %p272 = pneg %p63
      $region14: #{global_encoder.1} parent=11 // pred_check_branch
        %274 = sbr.rel (%p272) target = $region16
      $region15: #{global_encoder.1} parent=11 // pred_region
        _
      $region16: #{global_encoder.1} parent=11 // pred_fallthru
        _
      // Predicated region
      $region17: #{global_encoder.1} parent=11 // pred_check
        %p275 = pneg %p84
      $region18: #{global_encoder.1} parent=11 // pred_check_branch
        %277 = sbr.rel (%p275) target = $region20
      $region19: #{global_encoder.1} parent=11 // pred_region
        _
      $region20: #{global_encoder.1} parent=11 // pred_fallthru
        _
      // Predicated region
      $region21: #{global_encoder.1} parent=11 // pred_check
        %p278 = pneg %p105
      $region22: #{global_encoder.1} parent=11 // pred_check_branch
        %280 = sbr.rel (%p278) target = $region24
      $region23: #{global_encoder.1} parent=11 // pred_region
        _
      $region24: #{global_encoder.1} parent=11 // pred_fallthru
        _
      // Predicated region
      $region25: #{global_encoder.1} parent=11 // pred_check
        %p281 = pneg %p126
      $region26: #{global_encoder.1} parent=11 // pred_check_branch
        %283 = sbr.rel (%p281) target = $region28
      $region27: #{global_encoder.1} parent=11 // pred_region
        _
      $region28: #{global_encoder.1} parent=11 // pred_fallthru
        _
      // Predicated region
      $region29: #{global_encoder.1} parent=11 // pred_check
        %p284 = pneg %p147
      $region30: #{global_encoder.1} parent=11 // pred_check_branch
        %286 = sbr.rel (%p284) target = $region32
      $region31: #{global_encoder.1} parent=11 // pred_region
        _
      $region32: #{global_encoder.1} parent=11 // pred_fallthru
        _
      // Predicated region
      $region33: #{global_encoder.1} parent=11 // pred_check
        %p287 = pneg %p168
      $region34: #{global_encoder.1} parent=11 // pred_check_branch
        %289 = sbr.rel (%p287) target = $region36
      $region35: #{global_encoder.1} parent=11 // pred_region
        _
      $region36: #{global_encoder.1} parent=11 // pred_fallthru
        _
      // Predicated region
      $region37: #{global_encoder.1} parent=11 // pred_check
        %p290 = pneg %p189
      $region38: #{global_encoder.1} parent=11 // pred_check_branch
        %292 = sbr.rel (%p290) target = $region40
      $region39: #{global_encoder.1} parent=11 // pred_region
        _
      $region40: #{global_encoder.1} parent=11 // pred_fallthru
        _
      // Predicated region
      $region41: #{global_encoder.1} parent=11 // pred_check
        %p293 = pneg %p210
      $region42: #{global_encoder.1} parent=11 // pred_check_branch
        %295 = sbr.rel (%p293) target = $region44
      $region43: #{global_encoder.1} parent=11 // pred_region
        _
      $region44: #{global_encoder.1} parent=11 // pred_fallthru
        _
      // Predicated region
      $region45: #{global_encoder.1} parent=11 // pred_check
        %p296 = pneg %p231
      $region46: #{global_encoder.1} parent=11 // pred_check_branch
        %298 = sbr.rel (%p296) target = $region48
      $region47: #{global_encoder.1} parent=11 // pred_region
        _
      $region48: #{global_encoder.1} parent=11 // pred_fallthru
        _
    $region12: #{global_encoder.1} parent=5 // pred_fallthru
      _
    %p299 = scmp.lt.s32.totalorder %s16, 2
    // Predicated region
    $region49: #{global_encoder.1} parent=5 // pred_check
      %p300 = pneg %p299
    $region50: #{global_encoder.1} parent=5 // pred_check_branch
      %302 = sbr.rel (%p300) target = $region52
    $region51: #{global_encoder.1} parent=5 // pred_region
      // Predicated region
      $region53: #{global_encoder.1} parent=51 // pred_check
        %p303 = pneg %p36
      $region54: #{global_encoder.1} parent=51 // pred_check_branch
        %305 = sbr.rel (%p303) target = $region56
      $region55: #{global_encoder.1} parent=51 // pred_region
        %s306 = smul.u32 24, %s16
        %p307 = scmp.lt.s32.totalorder %s306, 47
        %s308 = scalar_select %p307, %s306, 47
        %s309 = smul.addr %s308, 5
        %s310 = smul.addr %s309, 8
        %s311 = scalar_lea.vmem %s0, %s310
        %s312 = smul.u32 24, %s16
      $region56: #{global_encoder.1} parent=51 // pred_fallthru
        _
    $region52: #{global_encoder.1} parent=5 // pred_fallthru
      _
    %p313 = scmp.le.s32.totalorder 1, %s16
    %p314 = scmp.lt.s32.totalorder %s16, 3
    %p315 = pnand %p313, %p314
    %p316 = pneg %p315
    // Predicated region
    $region57: #{global_encoder.1} parent=5 // pred_check
      _
    $region58: #{global_encoder.1} parent=5 // pred_check_branch
      %318 = sbr.rel (%p315) target = $region60
    $region59: #{global_encoder.1} parent=5 // pred_region
      %s319 = ssub.s32 %s16, 1
      %s320 = smul.u32 24, %s21
      %p321 = scmp.lt.s32.totalorder %s320, 47
      %s322 = scalar_select %p321, %s320, 47
      %s323 = smul.addr %s322, 5
      %s324 = smul.addr %s323, 8
      %s325 = scalar_lea.vmem %s0, %s324
      %p326 = pneg %p42
      %p327 = pneg %p39
      %p328 = pneg %p63
      %p329 = pneg %p60
      %p330 = pneg %p84
      %p331 = pneg %p81
      %p332 = pneg %p105
      %p333 = pneg %p102
      %p334 = pneg %p126
      %p335 = pneg %p123
      %p336 = pneg %p147
      %p337 = pneg %p144
      %p338 = pneg %p168
      %p339 = pneg %p165
      %p340 = pneg %p189
      %p341 = pneg %p186
      %p342 = pneg %p210
      %p343 = pneg %p207
      %p344 = pneg %p231
      %p345 = pneg %p228
      %p346 = pneg %p257
      %p347 = pneg %p254
      %s348 = smul.u32 2, %s21
      %p349 = scmp.lt.s32.totalorder %s348, 3
      %s350 = scalar_select %p349, %s348, 3
      %s351 = smul.addr %s350, 4
      %s352 = smul.addr %s351, 8
      %s353 = scalar_lea.vmem %s10, %s352
      %s354 = smul.u32 24, %s21
      %p355 = scmp.lt.s32.totalorder %s354, 47
      %s356 = scalar_select %p355, %s354, 47
      %s357 = smul.addr %s356, 5
      %s358 = smul.addr %s357, 8
      %s359 = scalar_lea.vmem %s0, %s358
      %s360 = smul.u32 24, %s21
      %s361 = smul.u32 2, %s21
      %p362 = scmp.lt.s32.totalorder %s361, 3
      %s363 = scalar_select %p362, %s361, 3
      %s364 = smul.addr %s363, 4
      %s365 = smul.addr %s364, 8
      %s366 = scalar_lea.vmem %s10, %s365
      %s367 = smul.u32 2, %s21
      %v368 = vld [vmem:[%s359] sm:$0xff]
      %v369 = vld [vmem:[%s359 + $0x8] sm:$0xff]
      %v370 = vld [vmem:[%s359 + $0x10] sm:$0xff]
      %v371 = vld [vmem:[%s359 + $0x18] sm:$0xff]
      %v372 = vld [vmem:[%s359 + $0x20] sm:$0xff]
      %v373 = vld [vmem:[%s359 + $0x28] sm:$0xff]
      %v374 = vld [vmem:[%s359 + $0x30] sm:$0xff]
      %v375 = vld [vmem:[%s359 + $0x38] sm:$0xff]
      %v376 = vld [vmem:[%s359 + $0x40] sm:$0xff]
      %v377 = vld [vmem:[%s359 + $0x48] sm:$0xff]
      %v378 = vld [vmem:[%s359 + $0x50] sm:$0xff]
      %v379 = vld [vmem:[%s359 + $0x58] sm:$0xff]
      %v380 = vld [vmem:[%s359 + $0x60] sm:$0xff]
      %v381 = vld [vmem:[%s359 + $0x68] sm:$0xff]
      %v382 = vld [vmem:[%s359 + $0x70] sm:$0xff]
      %v383 = vld [vmem:[%s359 + $0x78] sm:$0xff]
      %v384 = vld [vmem:[%s359 + $0x80] sm:$0xff]
      %v385 = vld [vmem:[%s359 + $0x88] sm:$0xff]
      %v386 = vld [vmem:[%s359 + $0x90] sm:$0xff]
      %v387 = vld [vmem:[%s359 + $0x98] sm:$0xff]
      %v388 = vld [vmem:[%s359 + $0xa0] sm:$0xff]
      %v389 = vld [vmem:[%s359 + $0xa8] sm:$0xff]
      %v390 = vld [vmem:[%s359 + $0xb0] sm:$0xff]
      %v391 = vld [vmem:[%s359 + $0xb8] sm:$0xff]
      %v392 = vld [vmem:[%s359 + $0xc0] sm:$0xff]
      %v393 = vld [vmem:[%s359 + $0xc8] sm:$0xff]
      %v394 = vld [vmem:[%s359 + $0xd0] sm:$0xff]
      %v395 = vld [vmem:[%s359 + $0xd8] sm:$0xff]
      %v396 = vld [vmem:[%s359 + $0xe0] sm:$0xff]
      %v397 = vld [vmem:[%s359 + $0xe8] sm:$0xff]
      %v398 = vld [vmem:[%s359 + $0xf0] sm:$0xff]
      %v399 = vld [vmem:[%s359 + $0xf8] sm:$0xff]
      %v400 = vld [vmem:[%s359 + $0x100] sm:$0xff]
      %v401 = vld [vmem:[%s359 + $0x108] sm:$0xff]
      %v402 = vld [vmem:[%s359 + $0x110] sm:$0xff]
      %v403 = vld [vmem:[%s359 + $0x118] sm:$0xff]
      %v404 = vld [vmem:[%s359 + $0x120] sm:$0xff]
      %v405 = vld [vmem:[%s359 + $0x128] sm:$0xff]
      %v406 = vld [vmem:[%s359 + $0x130] sm:$0xff]
      %v407 = vld [vmem:[%s359 + $0x138] sm:$0xff]
      %v408 = vld [vmem:[%s359 + $0x140] sm:$0xff]
      %v409 = vld [vmem:[%s359 + $0x148] sm:$0xff]
      %v410 = vld [vmem:[%s359 + $0x150] sm:$0xff]
      %v411 = vld [vmem:[%s359 + $0x158] sm:$0xff]
      %v412 = vld [vmem:[%s359 + $0x160] sm:$0xff]
      %v413 = vld [vmem:[%s359 + $0x168] sm:$0xff]
      %v414 = vld [vmem:[%s359 + $0x170] sm:$0xff]
      %v415 = vld [vmem:[%s359 + $0x178] sm:$0xff]
      %v416 = vld [vmem:[%s359 + $0x180] sm:$0xff]
      %v417 = vld [vmem:[%s359 + $0x188] sm:$0xff]
      %v418 = vld [vmem:[%s359 + $0x190] sm:$0xff]
      %v419 = vld [vmem:[%s359 + $0x198] sm:$0xff]
      %v420 = vld [vmem:[%s359 + $0x1a0] sm:$0xff]
      %v421 = vld [vmem:[%s359 + $0x1a8] sm:$0xff]
      %v422 = vld [vmem:[%s359 + $0x1b0] sm:$0xff]
      %v423 = vld [vmem:[%s359 + $0x1b8] sm:$0xff]
      %v424 = vld [vmem:[%s359 + $0x1c0] sm:$0xff]
      %v425 = vld [vmem:[%s359 + $0x1c8] sm:$0xff]
      %v426 = vld [vmem:[%s359 + $0x1d0] sm:$0xff]
      %v427 = vld [vmem:[%s359 + $0x1d8] sm:$0xff]
      %v428 = vld [vmem:[%s359 + $0x1e0] sm:$0xff]
      %v429 = vld [vmem:[%s359 + $0x1e8] sm:$0xff]
      %v430 = vld [vmem:[%s359 + $0x1f0] sm:$0xff]
      %v431 = vld [vmem:[%s359 + $0x1f8] sm:$0xff]
      %v432 = vld [vmem:[%s359 + $0x200] sm:$0xff]
      %v433 = vld [vmem:[%s359 + $0x208] sm:$0xff]
      %v434 = vld [vmem:[%s359 + $0x210] sm:$0xff]
      %v435 = vld [vmem:[%s359 + $0x218] sm:$0xff]
      %v436 = vld [vmem:[%s359 + $0x220] sm:$0xff]
      %v437 = vld [vmem:[%s359 + $0x228] sm:$0xff]
      %v438 = vld [vmem:[%s359 + $0x230] sm:$0xff]
      %v439 = vld [vmem:[%s359 + $0x238] sm:$0xff]
      %v440 = vld [vmem:[%s359 + $0x240] sm:$0xff]
      %v441 = vld [vmem:[%s359 + $0x248] sm:$0xff]
      %v442 = vld [vmem:[%s359 + $0x250] sm:$0xff]
      %v443 = vld [vmem:[%s359 + $0x258] sm:$0xff]
      %v444 = vld [vmem:[%s359 + $0x260] sm:$0xff]
      %v445 = vld [vmem:[%s359 + $0x268] sm:$0xff]
      %v446 = vld [vmem:[%s359 + $0x270] sm:$0xff]
      %v447 = vld [vmem:[%s359 + $0x278] sm:$0xff]
      %v448 = vld [vmem:[%s359 + $0x280] sm:$0xff]
      %v449 = vld [vmem:[%s359 + $0x288] sm:$0xff]
      %v450 = vld [vmem:[%s359 + $0x290] sm:$0xff]
      %v451 = vld [vmem:[%s359 + $0x298] sm:$0xff]
      %v452 = vld [vmem:[%s359 + $0x2a0] sm:$0xff]
      %v453 = vld [vmem:[%s359 + $0x2a8] sm:$0xff]
      %v454 = vld [vmem:[%s359 + $0x2b0] sm:$0xff]
      %v455 = vld [vmem:[%s359 + $0x2b8] sm:$0xff]
      %v456 = vld [vmem:[%s359 + $0x2c0] sm:$0xff]
      %v457 = vld [vmem:[%s359 + $0x2c8] sm:$0xff]
      %v458 = vld [vmem:[%s359 + $0x2d0] sm:$0xff]
      %v459 = vld [vmem:[%s359 + $0x2d8] sm:$0xff]
      %v460 = vld [vmem:[%s359 + $0x2e0] sm:$0xff]
      %v461 = vld [vmem:[%s359 + $0x2e8] sm:$0xff]
      %v462 = vld [vmem:[%s359 + $0x2f0] sm:$0xff]
      %v463 = vld [vmem:[%s359 + $0x2f8] sm:$0xff]
      %v464 = vld [vmem:[%s359 + $0x300] sm:$0xff]
      %v465 = vld [vmem:[%s359 + $0x308] sm:$0xff]
      %v466 = vld [vmem:[%s359 + $0x310] sm:$0xff]
      %v467 = vld [vmem:[%s359 + $0x318] sm:$0xff]
      %v468 = vld [vmem:[%s359 + $0x320] sm:$0xff]
      %v469 = vld [vmem:[%s359 + $0x328] sm:$0xff]
      %v470 = vld [vmem:[%s359 + $0x330] sm:$0xff]
      %v471 = vld [vmem:[%s359 + $0x338] sm:$0xff]
      %v472 = vld [vmem:[%s359 + $0x340] sm:$0xff]
      %v473 = vld [vmem:[%s359 + $0x348] sm:$0xff]
      %v474 = vld [vmem:[%s359 + $0x350] sm:$0xff]
      %v475 = vld [vmem:[%s359 + $0x358] sm:$0xff]
      %v476 = vld [vmem:[%s359 + $0x360] sm:$0xff]
      %v477 = vld [vmem:[%s359 + $0x368] sm:$0xff]
      %v478 = vld [vmem:[%s359 + $0x370] sm:$0xff]
      %v479 = vld [vmem:[%s359 + $0x378] sm:$0xff]
      %v480 = vld [vmem:[%s359 + $0x380] sm:$0xff]
      %v481 = vld [vmem:[%s359 + $0x388] sm:$0xff]
      %v482 = vld [vmem:[%s359 + $0x390] sm:$0xff]
      %v483 = vld [vmem:[%s359 + $0x398] sm:$0xff]
      %v484 = vld [vmem:[%s359 + $0x3a0] sm:$0xff]
      %v485 = vld [vmem:[%s359 + $0x3a8] sm:$0xff]
      %v486 = vld [vmem:[%s359 + $0x3b0] sm:$0xff]
      %v487 = vld [vmem:[%s359 + $0x3b8] sm:$0xff]
      %v488 = vld [vmem:[%s2] sm:$0xf]
      %v489 = vld [vmem:[%s2 + $0x4] sm:$0xf]
      %v490 = vld [vmem:[%s2 + $0x8] sm:$0xf]
      %v491 = vld [vmem:[%s2 + $0xc] sm:$0xf]
      %v492 = vld [vmem:[%s2 + $0x10] sm:$0xf]
      %v493 = vld [vmem:[%s2 + $0x14] sm:$0xf]
      %v494 = vld [vmem:[%s2 + $0x18] sm:$0xf]
      %v495 = vld [vmem:[%s2 + $0x1c] sm:$0xf]
      %v496 = vld [vmem:[%s2 + $0x20] sm:$0xf]
      %v497 = vld [vmem:[%s2 + $0x24] sm:$0xf]
      %v498 = vld [vmem:[%s2 + $0x28] sm:$0xf]
      %v499 = vld [vmem:[%s2 + $0x2c] sm:$0xf]
      %v500 = vld [vmem:[%s2 + $0x30] sm:$0xf]
      %v501 = vld [vmem:[%s2 + $0x34] sm:$0xf]
      %v502 = vld [vmem:[%s2 + $0x38] sm:$0xf]
      %v503 = vld [vmem:[%s2 + $0x3c] sm:$0xf]
      %v504 = vld [vmem:[%s2 + $0x40] sm:$0xf]
      %v505 = vld [vmem:[%s2 + $0x44] sm:$0xf]
      %v506 = vld [vmem:[%s2 + $0x48] sm:$0xf]
      %v507 = vld [vmem:[%s2 + $0x4c] sm:$0xf]
      %v508 = vld [vmem:[%s2 + $0x50] sm:$0xf]
      %v509 = vld [vmem:[%s2 + $0x54] sm:$0xf]
      %v510 = vld [vmem:[%s2 + $0x58] sm:$0xf]
      %v511 = vld [vmem:[%s2 + $0x5c] sm:$0xf]
      %v512 = vld [vmem:[%s2 + $0x60] sm:$0xf]
      %v513 = vld [vmem:[%s2 + $0x64] sm:$0xf]
      %v514 = vld [vmem:[%s2 + $0x68] sm:$0xf]
      %v515 = vld [vmem:[%s2 + $0x6c] sm:$0xf]
      %v516 = vld [vmem:[%s2 + $0x70] sm:$0xf]
      %v517 = vld [vmem:[%s2 + $0x74] sm:$0xf]
      %v518 = vld [vmem:[%s2 + $0x78] sm:$0xf]
      %v519 = vld [vmem:[%s2 + $0x7c] sm:$0xf]
      %v520 = vld [vmem:[%s2 + $0x80] sm:$0xf]
      %v521 = vld [vmem:[%s2 + $0x84] sm:$0xf]
      %v522 = vld [vmem:[%s2 + $0x88] sm:$0xf]
      %v523 = vld [vmem:[%s2 + $0x8c] sm:$0xf]
      %v524 = vld [vmem:[%s2 + $0x90] sm:$0xf]
      %v525 = vld [vmem:[%s2 + $0x94] sm:$0xf]
      %v526 = vld [vmem:[%s2 + $0x98] sm:$0xf]
      %v527 = vld [vmem:[%s2 + $0x9c] sm:$0xf]
      %v528 = vld [vmem:[%s2 + $0xa0] sm:$0xf]
      %v529 = vld [vmem:[%s2 + $0xa4] sm:$0xf]
      %v530 = vld [vmem:[%s2 + $0xa8] sm:$0xf]
      %v531 = vld [vmem:[%s2 + $0xac] sm:$0xf]
      %v532 = vld [vmem:[%s2 + $0xb0] sm:$0xf]
      %v533 = vld [vmem:[%s2 + $0xb4] sm:$0xf]
      %v534 = vld [vmem:[%s2 + $0xb8] sm:$0xf]
      %v535 = vld [vmem:[%s2 + $0xbc] sm:$0xf]
      %v536 = vld [vmem:[%s2 + $0xc0] sm:$0xf]
      %v537 = vld [vmem:[%s2 + $0xc4] sm:$0xf]
      %v538 = vld [vmem:[%s2 + $0xc8] sm:$0xf]
      %v539 = vld [vmem:[%s2 + $0xcc] sm:$0xf]
      %v540 = vld [vmem:[%s2 + $0xd0] sm:$0xf]
      %v541 = vld [vmem:[%s2 + $0xd4] sm:$0xf]
      %v542 = vld [vmem:[%s2 + $0xd8] sm:$0xf]
      %v543 = vld [vmem:[%s2 + $0xdc] sm:$0xf]
      %v544 = vld [vmem:[%s2 + $0xe0] sm:$0xf]
      %v545 = vld [vmem:[%s2 + $0xe4] sm:$0xf]
      %v546 = vld [vmem:[%s2 + $0xe8] sm:$0xf]
      %v547 = vld [vmem:[%s2 + $0xec] sm:$0xf]
      %v548 = vld [vmem:[%s2 + $0xf0] sm:$0xf]
      %v549 = vld [vmem:[%s2 + $0xf4] sm:$0xf]
      %v550 = vld [vmem:[%s2 + $0xf8] sm:$0xf]
      %v551 = vld [vmem:[%s2 + $0xfc] sm:$0xf]
      %v552 = vld [vmem:[%s2 + $0x100] sm:$0xf]
      %v553 = vld [vmem:[%s2 + $0x104] sm:$0xf]
      %v554 = vld [vmem:[%s2 + $0x108] sm:$0xf]
      %v555 = vld [vmem:[%s2 + $0x10c] sm:$0xf]
      %v556 = vld [vmem:[%s2 + $0x110] sm:$0xf]
      %v557 = vld [vmem:[%s2 + $0x114] sm:$0xf]
      %v558 = vld [vmem:[%s2 + $0x118] sm:$0xf]
      %v559 = vld [vmem:[%s2 + $0x11c] sm:$0xf]
      %v560 = vld [vmem:[%s2 + $0x120] sm:$0xf]
      %v561 = vld [vmem:[%s2 + $0x124] sm:$0xf]
      %v562 = vld [vmem:[%s2 + $0x128] sm:$0xf]
      %v563 = vld [vmem:[%s2 + $0x12c] sm:$0xf]
      %v564 = vld [vmem:[%s2 + $0x130] sm:$0xf]
      %v565 = vld [vmem:[%s2 + $0x134] sm:$0xf]
      %v566 = vld [vmem:[%s2 + $0x138] sm:$0xf]
      %v567 = vld [vmem:[%s2 + $0x13c] sm:$0xf]
      %v568 = vunpack.c.l.bf16 %v488
      %v569 = vunpack.c.l.bf16 %v489
      %v570 = vunpack.c.l.bf16 %v490
      %v571 = vunpack.c.l.bf16 %v491
      %v572 = vunpack.c.l.bf16 %v492
      %v573 = vunpack.c.l.bf16 %v493
      %v574 = vunpack.c.l.bf16 %v494
      %v575 = vunpack.c.l.bf16 %v495
      %v576 = vunpack.c.l.bf16 %v496
      %v577 = vunpack.c.l.bf16 %v497
      %v578 = vunpack.c.l.bf16 %v498
      %v579 = vunpack.c.l.bf16 %v499
      %v580 = vunpack.c.l.bf16 %v500
      %v581 = vunpack.c.l.bf16 %v501
      %v582 = vunpack.c.l.bf16 %v502
      %v583 = vunpack.c.l.bf16 %v503
      %v584 = vunpack.c.l.bf16 %v504
      %v585 = vunpack.c.l.bf16 %v505
      %v586 = vunpack.c.l.bf16 %v506
      %v587 = vunpack.c.l.bf16 %v507
      %v588 = vunpack.c.l.bf16 %v508
      %v589 = vunpack.c.l.bf16 %v509
      %v590 = vunpack.c.l.bf16 %v510
      %v591 = vunpack.c.l.bf16 %v511
      %v592 = vunpack.c.l.bf16 %v512
      %v593 = vunpack.c.l.bf16 %v513
      %v594 = vunpack.c.l.bf16 %v514
      %v595 = vunpack.c.l.bf16 %v515
      %v596 = vunpack.c.l.bf16 %v516
      %v597 = vunpack.c.l.bf16 %v517
      %v598 = vunpack.c.l.bf16 %v518
      %v599 = vunpack.c.l.bf16 %v519
      %v600 = vunpack.c.l.bf16 %v520
      %v601 = vunpack.c.l.bf16 %v521
      %v602 = vunpack.c.l.bf16 %v522
      %v603 = vunpack.c.l.bf16 %v523
      %v604 = vunpack.c.l.bf16 %v524
      %v605 = vunpack.c.l.bf16 %v525
      %v606 = vunpack.c.l.bf16 %v526
      %v607 = vunpack.c.l.bf16 %v527
      %v608 = vunpack.c.l.bf16 %v528
      %v609 = vunpack.c.l.bf16 %v529
      %v610 = vunpack.c.l.bf16 %v530
      %v611 = vunpack.c.l.bf16 %v531
      %v612 = vunpack.c.l.bf16 %v532
      %v613 = vunpack.c.l.bf16 %v533
      %v614 = vunpack.c.l.bf16 %v534
      %v615 = vunpack.c.l.bf16 %v535
      %v616 = vunpack.c.l.bf16 %v536
      %v617 = vunpack.c.l.bf16 %v537
      %v618 = vunpack.c.l.bf16 %v538
      %v619 = vunpack.c.l.bf16 %v539
      %v620 = vunpack.c.l.bf16 %v540
      %v621 = vunpack.c.l.bf16 %v541
      %v622 = vunpack.c.l.bf16 %v542
      %v623 = vunpack.c.l.bf16 %v543
      %v624 = vunpack.c.l.bf16 %v544
      %v625 = vunpack.c.l.bf16 %v545
      %v626 = vunpack.c.l.bf16 %v546
      %v627 = vunpack.c.l.bf16 %v547
      %v628 = vunpack.c.l.bf16 %v548
      %v629 = vunpack.c.l.bf16 %v549
      %v630 = vunpack.c.l.bf16 %v550
      %v631 = vunpack.c.l.bf16 %v551
      %v632 = vunpack.c.l.bf16 %v552
      %v633 = vunpack.c.l.bf16 %v553
      %v634 = vunpack.c.l.bf16 %v554
      %v635 = vunpack.c.l.bf16 %v555
      %v636 = vunpack.c.l.bf16 %v556
      %v637 = vunpack.c.l.bf16 %v557
      %v638 = vunpack.c.l.bf16 %v558
      %v639 = vunpack.c.l.bf16 %v559
      %v640 = vunpack.c.l.bf16 %v560
      %v641 = vunpack.c.l.bf16 %v561
      %v642 = vunpack.c.l.bf16 %v562
      %v643 = vunpack.c.l.bf16 %v563
      %v644 = vunpack.c.l.bf16 %v564
      %v645 = vunpack.c.l.bf16 %v565
      %v646 = vunpack.c.l.bf16 %v566
      %v647 = vunpack.c.l.bf16 %v567
      %648 = vmatpush.msra.mxu0 %v583
      %649 = vmatpush.msra.mxu0 %v582
      %650 = vmatpush.msra.mxu0 %v581
      %651 = vmatpush.msra.mxu0 %v580
      %652 = vmatpush.msra.mxu0 %v579
      %653 = vmatpush.msra.mxu0 %v578
      %654 = vmatpush.msra.mxu0 %v577
      %655 = vmatpush.msra.mxu0 %v576
      %656 = vmatpush.msra.mxu0 %v575
      %657 = vmatpush.msra.mxu0 %v574
      %658 = vmatpush.msra.mxu0 %v573
      %659 = vmatpush.msra.mxu0 %v572
      %660 = vmatpush.msra.mxu0 %v571
      %661 = vmatpush.msra.mxu0 %v570
      %662 = vmatpush.msra.mxu0 %v569
      %663 = vmatpush.msra.mxu0 %v568
      %664 = vmatmul.f32.gmra.mxu0 %v368
      %v665 = vpop.f32.mrf.mxu0
      %v666 = vadd.f32 0.0, %v665
      %667 = vmatmul.f32.gmra.mxu0 %v373
      %v668 = vpop.f32.mrf.mxu0
      %v669 = vadd.f32 0.0, %v668
      %670 = vmatmul.f32.gmra.mxu0 %v378
      %v671 = vpop.f32.mrf.mxu0
      %v672 = vadd.f32 0.0, %v671
      %673 = vmatmul.f32.gmra.mxu0 %v383
      %v674 = vpop.f32.mrf.mxu0
      %v675 = vadd.f32 0.0, %v674
      %676 = vmatmul.f32.gmra.mxu0 %v388
      %v677 = vpop.f32.mrf.mxu0
      %v678 = vadd.f32 0.0, %v677
      %679 = vmatmul.f32.gmra.mxu0 %v393
      %v680 = vpop.f32.mrf.mxu0
      %v681 = vadd.f32 0.0, %v680
      %682 = vmatmul.f32.gmra.mxu0 %v398
      %v683 = vpop.f32.mrf.mxu0
      %v684 = vadd.f32 0.0, %v683
      %685 = vmatmul.f32.gmra.mxu0 %v403
      %v686 = vpop.f32.mrf.mxu0
      %v687 = vadd.f32 0.0, %v686
      %688 = vmatmul.f32.gmra.mxu0 %v408
      %v689 = vpop.f32.mrf.mxu0
      %v690 = vadd.f32 0.0, %v689
      %691 = vmatmul.f32.gmra.mxu0 %v413
      %v692 = vpop.f32.mrf.mxu0
      %v693 = vadd.f32 0.0, %v692
      %694 = vmatmul.f32.gmra.mxu0 %v418
      %v695 = vpop.f32.mrf.mxu0
      %v696 = vadd.f32 0.0, %v695
      %697 = vmatmul.f32.gmra.mxu0 %v423
      %v698 = vpop.f32.mrf.mxu0
      %v699 = vadd.f32 0.0, %v698
      %700 = vmatmul.f32.gmra.mxu0 %v428
      %v701 = vpop.f32.mrf.mxu0
      %v702 = vadd.f32 0.0, %v701
      %703 = vmatmul.f32.gmra.mxu0 %v433
      %v704 = vpop.f32.mrf.mxu0
      %v705 = vadd.f32 0.0, %v704
      %706 = vmatmul.f32.gmra.mxu0 %v438
      %v707 = vpop.f32.mrf.mxu0
      %v708 = vadd.f32 0.0, %v707
      %709 = vmatmul.f32.gmra.mxu0 %v443
      %v710 = vpop.f32.mrf.mxu0
      %v711 = vadd.f32 0.0, %v710
      %712 = vmatmul.f32.gmra.mxu0 %v448
      %v713 = vpop.f32.mrf.mxu0
      %v714 = vadd.f32 0.0, %v713
      %715 = vmatmul.f32.gmra.mxu0 %v453
      %v716 = vpop.f32.mrf.mxu0
      %v717 = vadd.f32 0.0, %v716
      %718 = vmatmul.f32.gmra.mxu0 %v458
      %v719 = vpop.f32.mrf.mxu0
      %v720 = vadd.f32 0.0, %v719
      %721 = vmatmul.f32.gmra.mxu0 %v463
      %v722 = vpop.f32.mrf.mxu0
      %v723 = vadd.f32 0.0, %v722
      %724 = vmatmul.f32.gmra.mxu0 %v468
      %v725 = vpop.f32.mrf.mxu0
      %v726 = vadd.f32 0.0, %v725
      %727 = vmatmul.f32.gmra.mxu0 %v473
      %v728 = vpop.f32.mrf.mxu0
      %v729 = vadd.f32 0.0, %v728
      %730 = vmatmul.f32.gmra.mxu0 %v478
      %v731 = vpop.f32.mrf.mxu0
      %v732 = vadd.f32 0.0, %v731
      %733 = vmatmul.f32.gmra.mxu0 %v483
      %v734 = vpop.f32.mrf.mxu0
      %v735 = vadd.f32 0.0, %v734
      %736 = vdwg.mxu0
      %737 = vmatpush.msra.mxu0 %v599
      %738 = vmatpush.msra.mxu0 %v598
      %739 = vmatpush.msra.mxu0 %v597
      %740 = vmatpush.msra.mxu0 %v596
      %741 = vmatpush.msra.mxu0 %v595
      %742 = vmatpush.msra.mxu0 %v594
      %743 = vmatpush.msra.mxu0 %v593
      %744 = vmatpush.msra.mxu0 %v592
      %745 = vmatpush.msra.mxu0 %v591
      %746 = vmatpush.msra.mxu0 %v590
      %747 = vmatpush.msra.mxu0 %v589
      %748 = vmatpush.msra.mxu0 %v588
      %749 = vmatpush.msra.mxu0 %v587
      %750 = vmatpush.msra.mxu0 %v586
      %751 = vmatpush.msra.mxu0 %v585
      %752 = vmatpush.msra.mxu0 %v584
      %753 = vmatmul.f32.gmra.mxu0 %v369
      %v754 = vpop.f32.mrf.mxu0
      %v755 = vadd.f32 %v666, %v754
      %756 = vmatmul.f32.gmra.mxu0 %v374
      %v757 = vpop.f32.mrf.mxu0
      %v758 = vadd.f32 %v669, %v757
      %759 = vmatmul.f32.gmra.mxu0 %v379
      %v760 = vpop.f32.mrf.mxu0
      %v761 = vadd.f32 %v672, %v760
      %762 = vmatmul.f32.gmra.mxu0 %v384
      %v763 = vpop.f32.mrf.mxu0
      %v764 = vadd.f32 %v675, %v763
      %765 = vmatmul.f32.gmra.mxu0 %v389
      %v766 = vpop.f32.mrf.mxu0
      %v767 = vadd.f32 %v678, %v766
      %768 = vmatmul.f32.gmra.mxu0 %v394
      %v769 = vpop.f32.mrf.mxu0
      %v770 = vadd.f32 %v681, %v769
      %771 = vmatmul.f32.gmra.mxu0 %v399
      %v772 = vpop.f32.mrf.mxu0
      %v773 = vadd.f32 %v684, %v772
      %774 = vmatmul.f32.gmra.mxu0 %v404
      %v775 = vpop.f32.mrf.mxu0
      %v776 = vadd.f32 %v687, %v775
      %777 = vmatmul.f32.gmra.mxu0 %v409
      %v778 = vpop.f32.mrf.mxu0
      %v779 = vadd.f32 %v690, %v778
      %780 = vmatmul.f32.gmra.mxu0 %v414
      %v781 = vpop.f32.mrf.mxu0
      %v782 = vadd.f32 %v693, %v781
      %783 = vmatmul.f32.gmra.mxu0 %v419
      %v784 = vpop.f32.mrf.mxu0
      %v785 = vadd.f32 %v696, %v784
      %786 = vmatmul.f32.gmra.mxu0 %v424
      %v787 = vpop.f32.mrf.mxu0
      %v788 = vadd.f32 %v699, %v787
      %789 = vmatmul.f32.gmra.mxu0 %v429
      %v790 = vpop.f32.mrf.mxu0
      %v791 = vadd.f32 %v702, %v790
      %792 = vmatmul.f32.gmra.mxu0 %v434
      %v793 = vpop.f32.mrf.mxu0
      %v794 = vadd.f32 %v705, %v793
      %795 = vmatmul.f32.gmra.mxu0 %v439
      %v796 = vpop.f32.mrf.mxu0
      %v797 = vadd.f32 %v708, %v796
      %798 = vmatmul.f32.gmra.mxu0 %v444
      %v799 = vpop.f32.mrf.mxu0
      %v800 = vadd.f32 %v711, %v799
      %801 = vmatmul.f32.gmra.mxu0 %v449
      %v802 = vpop.f32.mrf.mxu0
      %v803 = vadd.f32 %v714, %v802
      %804 = vmatmul.f32.gmra.mxu0 %v454
      %v805 = vpop.f32.mrf.mxu0
      %v806 = vadd.f32 %v717, %v805
      %807 = vmatmul.f32.gmra.mxu0 %v459
      %v808 = vpop.f32.mrf.mxu0
      %v809 = vadd.f32 %v720, %v808
      %810 = vmatmul.f32.gmra.mxu0 %v464
      %v811 = vpop.f32.mrf.mxu0
      %v812 = vadd.f32 %v723, %v811
      %813 = vmatmul.f32.gmra.mxu0 %v469
      %v814 = vpop.f32.mrf.mxu0
      %v815 = vadd.f32 %v726, %v814
      %816 = vmatmul.f32.gmra.mxu0 %v474
      %v817 = vpop.f32.mrf.mxu0
      %v818 = vadd.f32 %v729, %v817
      %819 = vmatmul.f32.gmra.mxu0 %v479
      %v820 = vpop.f32.mrf.mxu0
      %v821 = vadd.f32 %v732, %v820
      %822 = vmatmul.f32.gmra.mxu0 %v484
      %v823 = vpop.f32.mrf.mxu0
      %v824 = vadd.f32 %v735, %v823
      %825 = vdwg.mxu0
      %826 = vmatpush.msra.mxu0 %v615
      %827 = vmatpush.msra.mxu0 %v614
      %828 = vmatpush.msra.mxu0 %v613
      %829 = vmatpush.msra.mxu0 %v612
      %830 = vmatpush.msra.mxu0 %v611
      %831 = vmatpush.msra.mxu0 %v610
      %832 = vmatpush.msra.mxu0 %v609
      %833 = vmatpush.msra.mxu0 %v608
      %834 = vmatpush.msra.mxu0 %v607
      %835 = vmatpush.msra.mxu0 %v606
      %836 = vmatpush.msra.mxu0 %v605
      %837 = vmatpush.msra.mxu0 %v604
      %838 = vmatpush.msra.mxu0 %v603
      %839 = vmatpush.msra.mxu0 %v602
      %840 = vmatpush.msra.mxu0 %v601
      %841 = vmatpush.msra.mxu0 %v600
      %842 = vmatmul.f32.gmra.mxu0 %v370
      %v843 = vpop.f32.mrf.mxu0
      %v844 = vadd.f32 %v755, %v843
      %845 = vmatmul.f32.gmra.mxu0 %v375
      %v846 = vpop.f32.mrf.mxu0
      %v847 = vadd.f32 %v758, %v846
      %848 = vmatmul.f32.gmra.mxu0 %v380
      %v849 = vpop.f32.mrf.mxu0
      %v850 = vadd.f32 %v761, %v849
      %851 = vmatmul.f32.gmra.mxu0 %v385
      %v852 = vpop.f32.mrf.mxu0
      %v853 = vadd.f32 %v764, %v852
      %854 = vmatmul.f32.gmra.mxu0 %v390
      %v855 = vpop.f32.mrf.mxu0
      %v856 = vadd.f32 %v767, %v855
      %857 = vmatmul.f32.gmra.mxu0 %v395
      %v858 = vpop.f32.mrf.mxu0
      %v859 = vadd.f32 %v770, %v858
      %860 = vmatmul.f32.gmra.mxu0 %v400
      %v861 = vpop.f32.mrf.mxu0
      %v862 = vadd.f32 %v773, %v861
      %863 = vmatmul.f32.gmra.mxu0 %v405
      %v864 = vpop.f32.mrf.mxu0
      %v865 = vadd.f32 %v776, %v864
      %866 = vmatmul.f32.gmra.mxu0 %v410
      %v867 = vpop.f32.mrf.mxu0
      %v868 = vadd.f32 %v779, %v867
      %869 = vmatmul.f32.gmra.mxu0 %v415
      %v870 = vpop.f32.mrf.mxu0
      %v871 = vadd.f32 %v782, %v870
      %872 = vmatmul.f32.gmra.mxu0 %v420
      %v873 = vpop.f32.mrf.mxu0
      %v874 = vadd.f32 %v785, %v873
      %875 = vmatmul.f32.gmra.mxu0 %v425
      %v876 = vpop.f32.mrf.mxu0
      %v877 = vadd.f32 %v788, %v876
      %878 = vmatmul.f32.gmra.mxu0 %v430
      %v879 = vpop.f32.mrf.mxu0
      %v880 = vadd.f32 %v791, %v879
      %881 = vmatmul.f32.gmra.mxu0 %v435
      %v882 = vpop.f32.mrf.mxu0
      %v883 = vadd.f32 %v794, %v882
      %884 = vmatmul.f32.gmra.mxu0 %v440
      %v885 = vpop.f32.mrf.mxu0
      %v886 = vadd.f32 %v797, %v885
      %887 = vmatmul.f32.gmra.mxu0 %v445
      %v888 = vpop.f32.mrf.mxu0
      %v889 = vadd.f32 %v800, %v888
      %890 = vmatmul.f32.gmra.mxu0 %v450
      %v891 = vpop.f32.mrf.mxu0
      %v892 = vadd.f32 %v803, %v891
      %893 = vmatmul.f32.gmra.mxu0 %v455
      %v894 = vpop.f32.mrf.mxu0
      %v895 = vadd.f32 %v806, %v894
      %896 = vmatmul.f32.gmra.mxu0 %v460
      %v897 = vpop.f32.mrf.mxu0
      %v898 = vadd.f32 %v809, %v897
      %899 = vmatmul.f32.gmra.mxu0 %v465
      %v900 = vpop.f32.mrf.mxu0
      %v901 = vadd.f32 %v812, %v900
      %902 = vmatmul.f32.gmra.mxu0 %v470
      %v903 = vpop.f32.mrf.mxu0
      %v904 = vadd.f32 %v815, %v903
      %905 = vmatmul.f32.gmra.mxu0 %v475
      %v906 = vpop.f32.mrf.mxu0
      %v907 = vadd.f32 %v818, %v906
      %908 = vmatmul.f32.gmra.mxu0 %v480
      %v909 = vpop.f32.mrf.mxu0
      %v910 = vadd.f32 %v821, %v909
      %911 = vmatmul.f32.gmra.mxu0 %v485
      %v912 = vpop.f32.mrf.mxu0
      %v913 = vadd.f32 %v824, %v912
      %914 = vdwg.mxu0
      %915 = vmatpush.msra.mxu0 %v631
      %916 = vmatpush.msra.mxu0 %v630
      %917 = vmatpush.msra.mxu0 %v629
      %918 = vmatpush.msra.mxu0 %v628
      %919 = vmatpush.msra.mxu0 %v627
      %920 = vmatpush.msra.mxu0 %v626
      %921 = vmatpush.msra.mxu0 %v625
      %922 = vmatpush.msra.mxu0 %v624
      %923 = vmatpush.msra.mxu0 %v623
      %924 = vmatpush.msra.mxu0 %v622
      %925 = vmatpush.msra.mxu0 %v621
      %926 = vmatpush.msra.mxu0 %v620
      %927 = vmatpush.msra.mxu0 %v619
      %928 = vmatpush.msra.mxu0 %v618
      %929 = vmatpush.msra.mxu0 %v617
      %930 = vmatpush.msra.mxu0 %v616
      %931 = vmatmul.f32.gmra.mxu0 %v371
      %v932 = vpop.f32.mrf.mxu0
      %v933 = vadd.f32 %v844, %v932
      %934 = vmatmul.f32.gmra.mxu0 %v376
      %v935 = vpop.f32.mrf.mxu0
      %v936 = vadd.f32 %v847, %v935
      %937 = vmatmul.f32.gmra.mxu0 %v381
      %v938 = vpop.f32.mrf.mxu0
      %v939 = vadd.f32 %v850, %v938
      %940 = vmatmul.f32.gmra.mxu0 %v386
      %v941 = vpop.f32.mrf.mxu0
      %v942 = vadd.f32 %v853, %v941
      %943 = vmatmul.f32.gmra.mxu0 %v391
      %v944 = vpop.f32.mrf.mxu0
      %v945 = vadd.f32 %v856, %v944
      %946 = vmatmul.f32.gmra.mxu0 %v396
      %v947 = vpop.f32.mrf.mxu0
      %v948 = vadd.f32 %v859, %v947
      %949 = vmatmul.f32.gmra.mxu0 %v401
      %v950 = vpop.f32.mrf.mxu0
      %v951 = vadd.f32 %v862, %v950
      %952 = vmatmul.f32.gmra.mxu0 %v406
      %v953 = vpop.f32.mrf.mxu0
      %v954 = vadd.f32 %v865, %v953
      %955 = vmatmul.f32.gmra.mxu0 %v411
      %v956 = vpop.f32.mrf.mxu0
      %v957 = vadd.f32 %v868, %v956
      %958 = vmatmul.f32.gmra.mxu0 %v416
      %v959 = vpop.f32.mrf.mxu0
      %v960 = vadd.f32 %v871, %v959
      %961 = vmatmul.f32.gmra.mxu0 %v421
      %v962 = vpop.f32.mrf.mxu0
      %v963 = vadd.f32 %v874, %v962
      %964 = vmatmul.f32.gmra.mxu0 %v426
      %v965 = vpop.f32.mrf.mxu0
      %v966 = vadd.f32 %v877, %v965
      %967 = vmatmul.f32.gmra.mxu0 %v431
      %v968 = vpop.f32.mrf.mxu0
      %v969 = vadd.f32 %v880, %v968
      %970 = vmatmul.f32.gmra.mxu0 %v436
      %v971 = vpop.f32.mrf.mxu0
      %v972 = vadd.f32 %v883, %v971
      %973 = vmatmul.f32.gmra.mxu0 %v441
      %v974 = vpop.f32.mrf.mxu0
      %v975 = vadd.f32 %v886, %v974
      %976 = vmatmul.f32.gmra.mxu0 %v446
      %v977 = vpop.f32.mrf.mxu0
      %v978 = vadd.f32 %v889, %v977
      %979 = vmatmul.f32.gmra.mxu0 %v451
      %v980 = vpop.f32.mrf.mxu0
      %v981 = vadd.f32 %v892, %v980
      %982 = vmatmul.f32.gmra.mxu0 %v456
      %v983 = vpop.f32.mrf.mxu0
      %v984 = vadd.f32 %v895, %v983
      %985 = vmatmul.f32.gmra.mxu0 %v461
      %v986 = vpop.f32.mrf.mxu0
      %v987 = vadd.f32 %v898, %v986
      %988 = vmatmul.f32.gmra.mxu0 %v466
      %v989 = vpop.f32.mrf.mxu0
      %v990 = vadd.f32 %v901, %v989
      %991 = vmatmul.f32.gmra.mxu0 %v471
      %v992 = vpop.f32.mrf.mxu0
      %v993 = vadd.f32 %v904, %v992
      %994 = vmatmul.f32.gmra.mxu0 %v476
      %v995 = vpop.f32.mrf.mxu0
      %v996 = vadd.f32 %v907, %v995
      %997 = vmatmul.f32.gmra.mxu0 %v481
      %v998 = vpop.f32.mrf.mxu0
      %v999 = vadd.f32 %v910, %v998
      %1000 = vmatmul.f32.gmra.mxu0 %v486
      %v1001 = vpop.f32.mrf.mxu0
      %v1002 = vadd.f32 %v913, %v1001
      %1003 = vdwg.mxu0
      %1004 = vmatpush.msra.mxu0 %v647
      %1005 = vmatpush.msra.mxu0 %v646
      %1006 = vmatpush.msra.mxu0 %v645
      %1007 = vmatpush.msra.mxu0 %v644
      %1008 = vmatpush.msra.mxu0 %v643
      %1009 = vmatpush.msra.mxu0 %v642
      %1010 = vmatpush.msra.mxu0 %v641
      %1011 = vmatpush.msra.mxu0 %v640
      %1012 = vmatpush.msra.mxu0 %v639
      %1013 = vmatpush.msra.mxu0 %v638
      %1014 = vmatpush.msra.mxu0 %v637
      %1015 = vmatpush.msra.mxu0 %v636
      %1016 = vmatpush.msra.mxu0 %v635
      %1017 = vmatpush.msra.mxu0 %v634
      %1018 = vmatpush.msra.mxu0 %v633
      %1019 = vmatpush.msra.mxu0 %v632
      %1020 = vmatmul.f32.gmra.mxu0 %v372
      %v1021 = vpop.f32.mrf.mxu0
      %v1022 = vadd.f32 %v933, %v1021
      %1023 = vmatmul.f32.gmra.mxu0 %v377
      %v1024 = vpop.f32.mrf.mxu0
      %v1025 = vadd.f32 %v936, %v1024
      %1026 = vmatmul.f32.gmra.mxu0 %v382
      %v1027 = vpop.f32.mrf.mxu0
      %v1028 = vadd.f32 %v939, %v1027
      %1029 = vmatmul.f32.gmra.mxu0 %v387
      %v1030 = vpop.f32.mrf.mxu0
      %v1031 = vadd.f32 %v942, %v1030
      %1032 = vmatmul.f32.gmra.mxu0 %v392
      %v1033 = vpop.f32.mrf.mxu0
      %v1034 = vadd.f32 %v945, %v1033
      %1035 = vmatmul.f32.gmra.mxu0 %v397
      %v1036 = vpop.f32.mrf.mxu0
      %v1037 = vadd.f32 %v948, %v1036
      %1038 = vmatmul.f32.gmra.mxu0 %v402
      %v1039 = vpop.f32.mrf.mxu0
      %v1040 = vadd.f32 %v951, %v1039
      %1041 = vmatmul.f32.gmra.mxu0 %v407
      %v1042 = vpop.f32.mrf.mxu0
      %v1043 = vadd.f32 %v954, %v1042
      %1044 = vmatmul.f32.gmra.mxu0 %v412
      %v1045 = vpop.f32.mrf.mxu0
      %v1046 = vadd.f32 %v957, %v1045
      %1047 = vmatmul.f32.gmra.mxu0 %v417
      %v1048 = vpop.f32.mrf.mxu0
      %v1049 = vadd.f32 %v960, %v1048
      %1050 = vmatmul.f32.gmra.mxu0 %v422
      %v1051 = vpop.f32.mrf.mxu0
      %v1052 = vadd.f32 %v963, %v1051
      %1053 = vmatmul.f32.gmra.mxu0 %v427
      %v1054 = vpop.f32.mrf.mxu0
      %v1055 = vadd.f32 %v966, %v1054
      %1056 = vmatmul.f32.gmra.mxu0 %v432
      %v1057 = vpop.f32.mrf.mxu0
      %v1058 = vadd.f32 %v969, %v1057
      %1059 = vmatmul.f32.gmra.mxu0 %v437
      %v1060 = vpop.f32.mrf.mxu0
      %v1061 = vadd.f32 %v972, %v1060
      %1062 = vmatmul.f32.gmra.mxu0 %v442
      %v1063 = vpop.f32.mrf.mxu0
      %v1064 = vadd.f32 %v975, %v1063
      %1065 = vmatmul.f32.gmra.mxu0 %v447
      %v1066 = vpop.f32.mrf.mxu0
      %v1067 = vadd.f32 %v978, %v1066
      %1068 = vmatmul.f32.gmra.mxu0 %v452
      %v1069 = vpop.f32.mrf.mxu0
      %v1070 = vadd.f32 %v981, %v1069
      %1071 = vmatmul.f32.gmra.mxu0 %v457
      %v1072 = vpop.f32.mrf.mxu0
      %v1073 = vadd.f32 %v984, %v1072
      %1074 = vmatmul.f32.gmra.mxu0 %v462
      %v1075 = vpop.f32.mrf.mxu0
      %v1076 = vadd.f32 %v987, %v1075
      %1077 = vmatmul.f32.gmra.mxu0 %v467
      %v1078 = vpop.f32.mrf.mxu0
      %v1079 = vadd.f32 %v990, %v1078
      %1080 = vmatmul.f32.gmra.mxu0 %v472
      %v1081 = vpop.f32.mrf.mxu0
      %v1082 = vadd.f32 %v993, %v1081
      %1083 = vmatmul.f32.gmra.mxu0 %v477
      %v1084 = vpop.f32.mrf.mxu0
      %v1085 = vadd.f32 %v996, %v1084
      %1086 = vmatmul.f32.gmra.mxu0 %v482
      %v1087 = vpop.f32.mrf.mxu0
      %v1088 = vadd.f32 %v999, %v1087
      %1089 = vmatmul.f32.gmra.mxu0 %v487
      %v1090 = vpop.f32.mrf.mxu0
      %v1091 = vadd.f32 %v1002, %v1090
      %1092 = vdwg.mxu0
      %v1093 = vld [vmem:[%s1] sm:$0xff]
      %v1094 = vld [vmem:[%s1 + $0x8] sm:$0xff]
      %v1095 = vld [vmem:[%s1 + $0x10] sm:$0xff]
      %v1096 = vld [vmem:[%s1 + $0x18] sm:$0xff]
      %v1097 = vld [vmem:[%s1 + $0x20] sm:$0xff]
      %v1098 = vld [vmem:[%s1 + $0x28] sm:$0xff]
      %v1099 = vld [vmem:[%s1 + $0x30] sm:$0xff]
      %v1100 = vld [vmem:[%s1 + $0x38] sm:$0xff]
      %v1101 = vld [vmem:[%s1 + $0x40] sm:$0xff]
      %v1102 = vld [vmem:[%s1 + $0x48] sm:$0xff]
      %v1103 = vld [vmem:[%s1 + $0x50] sm:$0xff]
      %v1104 = vld [vmem:[%s1 + $0x58] sm:$0xff]
      %v1105 = vld [vmem:[%s1 + $0x60] sm:$0xff]
      %v1106 = vld [vmem:[%s1 + $0x68] sm:$0xff]
      %v1107 = vld [vmem:[%s1 + $0x70] sm:$0xff]
      %v1108 = vld [vmem:[%s1 + $0x78] sm:$0xff]
      %v1109 = vld [vmem:[%s1 + $0x80] sm:$0xff]
      %v1110 = vld [vmem:[%s1 + $0x88] sm:$0xff]
      %v1111 = vld [vmem:[%s1 + $0x90] sm:$0xff]
      %v1112 = vld [vmem:[%s1 + $0x98] sm:$0xff]
      %v1113 = vld [vmem:[%s1 + $0xa0] sm:$0xff]
      %v1114 = vld [vmem:[%s1 + $0xa8] sm:$0xff]
      %v1115 = vld [vmem:[%s1 + $0xb0] sm:$0xff]
      %v1116 = vld [vmem:[%s1 + $0xb8] sm:$0xff]
      %v1117 = vld [vmem:[%s3] sm:$0x1]
      %v1119 = vperm.slane %v1117, 0
      %v1121 = vmul.f32 %v1022, %v1119
      %v1122 = vmul.f32 %v1025, %v1119
      %v1123 = vmul.f32 %v1028, %v1119
      %v1124 = vmul.f32 %v1031, %v1119
      %v1125 = vmul.f32 %v1034, %v1119
      %v1126 = vmul.f32 %v1037, %v1119
      %v1127 = vmul.f32 %v1040, %v1119
      %v1128 = vmul.f32 %v1043, %v1119
      %v1129 = vmul.f32 %v1046, %v1119
      %v1130 = vmul.f32 %v1049, %v1119
      %v1131 = vmul.f32 %v1052, %v1119
      %v1132 = vmul.f32 %v1055, %v1119
      %v1133 = vmul.f32 %v1058, %v1119
      %v1134 = vmul.f32 %v1061, %v1119
      %v1135 = vmul.f32 %v1064, %v1119
      %v1136 = vmul.f32 %v1067, %v1119
      %v1137 = vmul.f32 %v1070, %v1119
      %v1138 = vmul.f32 %v1073, %v1119
      %v1139 = vmul.f32 %v1076, %v1119
      %v1140 = vmul.f32 %v1079, %v1119
      %v1141 = vmul.f32 %v1082, %v1119
      %v1142 = vmul.f32 %v1085, %v1119
      %v1143 = vmul.f32 %v1088, %v1119
      %v1144 = vmul.f32 %v1091, %v1119
      %v1145 = vld [vmem:[%s4] sm:$0x1]
      %v1147 = vperm.slane %v1145, 0
      %v1149 = vadd.f32 %v1121, %v1147
      %v1150 = vadd.f32 %v1122, %v1147
      %v1151 = vadd.f32 %v1123, %v1147
      %v1152 = vadd.f32 %v1124, %v1147
      %v1153 = vadd.f32 %v1125, %v1147
      %v1154 = vadd.f32 %v1126, %v1147
      %v1155 = vadd.f32 %v1127, %v1147
      %v1156 = vadd.f32 %v1128, %v1147
      %v1157 = vadd.f32 %v1129, %v1147
      %v1158 = vadd.f32 %v1130, %v1147
      %v1159 = vadd.f32 %v1131, %v1147
      %v1160 = vadd.f32 %v1132, %v1147
      %v1161 = vadd.f32 %v1133, %v1147
      %v1162 = vadd.f32 %v1134, %v1147
      %v1163 = vadd.f32 %v1135, %v1147
      %v1164 = vadd.f32 %v1136, %v1147
      %v1165 = vadd.f32 %v1137, %v1147
      %v1166 = vadd.f32 %v1138, %v1147
      %v1167 = vadd.f32 %v1139, %v1147
      %v1168 = vadd.f32 %v1140, %v1147
      %v1169 = vadd.f32 %v1141, %v1147
      %v1170 = vadd.f32 %v1142, %v1147
      %v1171 = vadd.f32 %v1143, %v1147
      %v1172 = vadd.f32 %v1144, %v1147
      %vm1173 = vcmp.ge.f32.partialorder %v1149, 0.0
      %vm1174 = vcmp.ge.f32.partialorder %v1150, 0.0
      %vm1175 = vcmp.ge.f32.partialorder %v1151, 0.0
      %vm1176 = vcmp.ge.f32.partialorder %v1152, 0.0
      %vm1177 = vcmp.ge.f32.partialorder %v1153, 0.0
      %vm1178 = vcmp.ge.f32.partialorder %v1154, 0.0
      %vm1179 = vcmp.ge.f32.partialorder %v1155, 0.0
      %vm1180 = vcmp.ge.f32.partialorder %v1156, 0.0
      %vm1181 = vcmp.ge.f32.partialorder %v1157, 0.0
      %vm1182 = vcmp.ge.f32.partialorder %v1158, 0.0
      %vm1183 = vcmp.ge.f32.partialorder %v1159, 0.0
      %vm1184 = vcmp.ge.f32.partialorder %v1160, 0.0
      %vm1185 = vcmp.ge.f32.partialorder %v1161, 0.0
      %vm1186 = vcmp.ge.f32.partialorder %v1162, 0.0
      %vm1187 = vcmp.ge.f32.partialorder %v1163, 0.0
      %vm1188 = vcmp.ge.f32.partialorder %v1164, 0.0
      %vm1189 = vcmp.ge.f32.partialorder %v1165, 0.0
      %vm1190 = vcmp.ge.f32.partialorder %v1166, 0.0
      %vm1191 = vcmp.ge.f32.partialorder %v1167, 0.0
      %vm1192 = vcmp.ge.f32.partialorder %v1168, 0.0
      %vm1193 = vcmp.ge.f32.partialorder %v1169, 0.0
      %vm1194 = vcmp.ge.f32.partialorder %v1170, 0.0
      %vm1195 = vcmp.ge.f32.partialorder %v1171, 0.0
      %vm1196 = vcmp.ge.f32.partialorder %v1172, 0.0
      %v1197 = vmul.f32 %v1149, 0.01
      %v1198 = vmul.f32 %v1150, 0.01
      %v1199 = vmul.f32 %v1151, 0.01
      %v1200 = vmul.f32 %v1152, 0.01
      %v1201 = vmul.f32 %v1153, 0.01
      %v1202 = vmul.f32 %v1154, 0.01
      %v1203 = vmul.f32 %v1155, 0.01
      %v1204 = vmul.f32 %v1156, 0.01
      %v1205 = vmul.f32 %v1157, 0.01
      %v1206 = vmul.f32 %v1158, 0.01
      %v1207 = vmul.f32 %v1159, 0.01
      %v1208 = vmul.f32 %v1160, 0.01
      %v1209 = vmul.f32 %v1161, 0.01
      %v1210 = vmul.f32 %v1162, 0.01
      %v1211 = vmul.f32 %v1163, 0.01
      %v1212 = vmul.f32 %v1164, 0.01
      %v1213 = vmul.f32 %v1165, 0.01
      %v1214 = vmul.f32 %v1166, 0.01
      %v1215 = vmul.f32 %v1167, 0.01
      %v1216 = vmul.f32 %v1168, 0.01
      %v1217 = vmul.f32 %v1169, 0.01
      %v1218 = vmul.f32 %v1170, 0.01
      %v1219 = vmul.f32 %v1171, 0.01
      %v1220 = vmul.f32 %v1172, 0.01
      %v1221 = vsel %vm1173, %v1149, %v1197
      %v1222 = vsel %vm1174, %v1150, %v1198
      %v1223 = vsel %vm1175, %v1151, %v1199
      %v1224 = vsel %vm1176, %v1152, %v1200
      %v1225 = vsel %vm1177, %v1153, %v1201
      %v1226 = vsel %vm1178, %v1154, %v1202
      %v1227 = vsel %vm1179, %v1155, %v1203
      %v1228 = vsel %vm1180, %v1156, %v1204
      %v1229 = vsel %vm1181, %v1157, %v1205
      %v1230 = vsel %vm1182, %v1158, %v1206
      %v1231 = vsel %vm1183, %v1159, %v1207
      %v1232 = vsel %vm1184, %v1160, %v1208
      %v1233 = vsel %vm1185, %v1161, %v1209
      %v1234 = vsel %vm1186, %v1162, %v1210
      %v1235 = vsel %vm1187, %v1163, %v1211
      %v1236 = vsel %vm1188, %v1164, %v1212
      %v1237 = vsel %vm1189, %v1165, %v1213
      %v1238 = vsel %vm1190, %v1166, %v1214
      %v1239 = vsel %vm1191, %v1167, %v1215
      %v1240 = vsel %vm1192, %v1168, %v1216
      %v1241 = vsel %vm1193, %v1169, %v1217
      %v1242 = vsel %vm1194, %v1170, %v1218
      %v1243 = vsel %vm1195, %v1171, %v1219
      %v1244 = vsel %vm1196, %v1172, %v1220
      %1246 = vset.pattern.permute.xlu0 0
      %1247 = vperm.xlu0 %1246, %v1093
      %v1248 = vpop.permute.xlu0 %1247
      %1251 = vset.pattern.permute.xlu0 0
      %1252 = vperm.xlu0 %1251, %v1094
      %v1253 = vpop.permute.xlu0 %1252
      %1256 = vset.pattern.permute.xlu0 0
      %1257 = vperm.xlu0 %1256, %v1095
      %v1258 = vpop.permute.xlu0 %1257
      %1261 = vset.pattern.permute.xlu0 0
      %1262 = vperm.xlu0 %1261, %v1096
      %v1263 = vpop.permute.xlu0 %1262
      %1266 = vset.pattern.permute.xlu0 0
      %1267 = vperm.xlu0 %1266, %v1097
      %v1268 = vpop.permute.xlu0 %1267
      %1271 = vset.pattern.permute.xlu0 0
      %1272 = vperm.xlu0 %1271, %v1098
      %v1273 = vpop.permute.xlu0 %1272
      %1276 = vset.pattern.permute.xlu0 0
      %1277 = vperm.xlu0 %1276, %v1099
      %v1278 = vpop.permute.xlu0 %1277
      %1281 = vset.pattern.permute.xlu0 0
      %1282 = vperm.xlu0 %1281, %v1100
      %v1283 = vpop.permute.xlu0 %1282
      %1286 = vset.pattern.permute.xlu0 0
      %1287 = vperm.xlu0 %1286, %v1101
      %v1288 = vpop.permute.xlu0 %1287
      %1291 = vset.pattern.permute.xlu0 0
      %1292 = vperm.xlu0 %1291, %v1102
      %v1293 = vpop.permute.xlu0 %1292
      %1296 = vset.pattern.permute.xlu0 0
      %1297 = vperm.xlu0 %1296, %v1103
      %v1298 = vpop.permute.xlu0 %1297
      %1301 = vset.pattern.permute.xlu0 0
      %1302 = vperm.xlu0 %1301, %v1104
      %v1303 = vpop.permute.xlu0 %1302
      %1306 = vset.pattern.permute.xlu0 0
      %1307 = vperm.xlu0 %1306, %v1105
      %v1308 = vpop.permute.xlu0 %1307
      %1311 = vset.pattern.permute.xlu0 0
      %1312 = vperm.xlu0 %1311, %v1106
      %v1313 = vpop.permute.xlu0 %1312
      %1316 = vset.pattern.permute.xlu0 0
      %1317 = vperm.xlu0 %1316, %v1107
      %v1318 = vpop.permute.xlu0 %1317
      %1321 = vset.pattern.permute.xlu0 0
      %1322 = vperm.xlu0 %1321, %v1108
      %v1323 = vpop.permute.xlu0 %1322
      %1326 = vset.pattern.permute.xlu0 0
      %1327 = vperm.xlu0 %1326, %v1109
      %v1328 = vpop.permute.xlu0 %1327
      %1331 = vset.pattern.permute.xlu0 0
      %1332 = vperm.xlu0 %1331, %v1110
      %v1333 = vpop.permute.xlu0 %1332
      %1336 = vset.pattern.permute.xlu0 0
      %1337 = vperm.xlu0 %1336, %v1111
      %v1338 = vpop.permute.xlu0 %1337
      %1341 = vset.pattern.permute.xlu0 0
      %1342 = vperm.xlu0 %1341, %v1112
      %v1343 = vpop.permute.xlu0 %1342
      %1346 = vset.pattern.permute.xlu0 0
      %1347 = vperm.xlu0 %1346, %v1113
      %v1348 = vpop.permute.xlu0 %1347
      %1351 = vset.pattern.permute.xlu0 0
      %1352 = vperm.xlu0 %1351, %v1114
      %v1353 = vpop.permute.xlu0 %1352
      %1356 = vset.pattern.permute.xlu0 0
      %1357 = vperm.xlu0 %1356, %v1115
      %v1358 = vpop.permute.xlu0 %1357
      %1361 = vset.pattern.permute.xlu0 0
      %1362 = vperm.xlu0 %1361, %v1116
      %v1363 = vpop.permute.xlu0 %1362
      %v1365 = vmul.f32 %v1248, %v1221
      %v1366 = vmul.f32 %v1253, %v1222
      %v1367 = vmul.f32 %v1258, %v1223
      %v1368 = vmul.f32 %v1263, %v1224
      %v1369 = vmul.f32 %v1268, %v1225
      %v1370 = vmul.f32 %v1273, %v1226
      %v1371 = vmul.f32 %v1278, %v1227
      %v1372 = vmul.f32 %v1283, %v1228
      %v1373 = vmul.f32 %v1288, %v1229
      %v1374 = vmul.f32 %v1293, %v1230
      %v1375 = vmul.f32 %v1298, %v1231
      %v1376 = vmul.f32 %v1303, %v1232
      %v1377 = vmul.f32 %v1308, %v1233
      %v1378 = vmul.f32 %v1313, %v1234
      %v1379 = vmul.f32 %v1318, %v1235
      %v1380 = vmul.f32 %v1323, %v1236
      %v1381 = vmul.f32 %v1328, %v1237
      %v1382 = vmul.f32 %v1333, %v1238
      %v1383 = vmul.f32 %v1338, %v1239
      %v1384 = vmul.f32 %v1343, %v1240
      %v1385 = vmul.f32 %v1348, %v1241
      %v1386 = vmul.f32 %v1353, %v1242
      %v1387 = vmul.f32 %v1358, %v1243
      %v1388 = vmul.f32 %v1363, %v1244
      %1389 = vst [vmem:[#allocation2] sm:$0xff] %v1365
      %1390 = vst [vmem:[#allocation2 + $0x8] sm:$0xff] %v1366
      %1391 = vst [vmem:[#allocation2 + $0x10] sm:$0xff] %v1367
      %1392 = vst [vmem:[#allocation2 + $0x18] sm:$0xff] %v1368
      %1393 = vst [vmem:[#allocation2 + $0x20] sm:$0xff] %v1369
      %1394 = vst [vmem:[#allocation2 + $0x28] sm:$0xff] %v1370
      %1395 = vst [vmem:[#allocation2 + $0x30] sm:$0xff] %v1371
      %1396 = vst [vmem:[#allocation2 + $0x38] sm:$0xff] %v1372
      %1397 = vst [vmem:[#allocation2 + $0x40] sm:$0xff] %v1373
      %1398 = vst [vmem:[#allocation2 + $0x48] sm:$0xff] %v1374
      %1399 = vst [vmem:[#allocation2 + $0x50] sm:$0xff] %v1375
      %1400 = vst [vmem:[#allocation2 + $0x58] sm:$0xff] %v1376
      %1401 = vst [vmem:[#allocation2 + $0x60] sm:$0xff] %v1377
      %1402 = vst [vmem:[#allocation2 + $0x68] sm:$0xff] %v1378
      %1403 = vst [vmem:[#allocation2 + $0x70] sm:$0xff] %v1379
      %1404 = vst [vmem:[#allocation2 + $0x78] sm:$0xff] %v1380
      %1405 = vst [vmem:[#allocation2 + $0x80] sm:$0xff] %v1381
      %1406 = vst [vmem:[#allocation2 + $0x88] sm:$0xff] %v1382
      %1407 = vst [vmem:[#allocation2 + $0x90] sm:$0xff] %v1383
      %1408 = vst [vmem:[#allocation2 + $0x98] sm:$0xff] %v1384
      %1409 = vst [vmem:[#allocation2 + $0xa0] sm:$0xff] %v1385
      %1410 = vst [vmem:[#allocation2 + $0xa8] sm:$0xff] %v1386
      %1411 = vst [vmem:[#allocation2 + $0xb0] sm:$0xff] %v1387
      %1412 = vst [vmem:[#allocation2 + $0xb8] sm:$0xff] %v1388
      %v1413 = vld [vmem:[#allocation2 + $0x90] sm:$0xff]
      %v1414 = vld [vmem:[#allocation2 + $0x98] sm:$0xff]
      %v1415 = vld [vmem:[#allocation2 + $0xa0] sm:$0xff]
      %v1416 = vld [vmem:[#allocation2 + $0xa8] sm:$0xff]
      %1417 = vst [vmem:[#allocation3] sm:$0xff] %v1413
      %1418 = vst [vmem:[#allocation3 + $0x48] sm:$0xff] %v1414
      %1419 = vst [vmem:[#allocation3 + $0x90] sm:$0xff] %v1415
      %1420 = vst [vmem:[#allocation3 + $0xd8] sm:$0xff] %v1416
      %v1421 = vld [vmem:[#allocation2 + $0x60] sm:$0xff]
      %v1422 = vld [vmem:[#allocation2 + $0x68] sm:$0xff]
      %v1423 = vld [vmem:[#allocation2 + $0x70] sm:$0xff]
      %v1424 = vld [vmem:[#allocation2 + $0x78] sm:$0xff]
      %1425 = vst [vmem:[#allocation3 + $0x8] sm:$0xff] %v1421
      %1426 = vst [vmem:[#allocation3 + $0x50] sm:$0xff] %v1422
      %1427 = vst [vmem:[#allocation3 + $0x98] sm:$0xff] %v1423
      %1428 = vst [vmem:[#allocation3 + $0xe0] sm:$0xff] %v1424
      %v1429 = vld [vmem:[#allocation2 + $0x91] sm:$0xff]
      %v1430 = vld [vmem:[#allocation2 + $0x99] sm:$0xff]
      %v1431 = vld [vmem:[#allocation2 + $0xa1] sm:$0xff]
      %v1432 = vld [vmem:[#allocation2 + $0xa9] sm:$0xff]
      %1433 = vst [vmem:[#allocation3 + $0x10] sm:$0xff] %v1429
      %1434 = vst [vmem:[#allocation3 + $0x58] sm:$0xff] %v1430
      %1435 = vst [vmem:[#allocation3 + $0xa0] sm:$0xff] %v1431
      %1436 = vst [vmem:[#allocation3 + $0xe8] sm:$0xff] %v1432
      %v1437 = vld [vmem:[#allocation2 + $0x30] sm:$0xff]
      %v1438 = vld [vmem:[#allocation2 + $0x38] sm:$0xff]
      %v1439 = vld [vmem:[#allocation2 + $0x40] sm:$0xff]
      %v1440 = vld [vmem:[#allocation2 + $0x48] sm:$0xff]
      %1441 = vst [vmem:[#allocation3 + $0x18] sm:$0xff] %v1437
      %1442 = vst [vmem:[#allocation3 + $0x60] sm:$0xff] %v1438
      %1443 = vst [vmem:[#allocation3 + $0xa8] sm:$0xff] %v1439
      %1444 = vst [vmem:[#allocation3 + $0xf0] sm:$0xff] %v1440
      %v1445 = vld [vmem:[#allocation2] sm:$0xff]
      %v1446 = vld [vmem:[#allocation2 + $0x8] sm:$0xff]
      %v1447 = vld [vmem:[#allocation2 + $0x10] sm:$0xff]
      %v1448 = vld [vmem:[#allocation2 + $0x18] sm:$0xff]
      %1449 = vst [vmem:[#allocation3 + $0x20] sm:$0xff] %v1445
      %1450 = vst [vmem:[#allocation3 + $0x68] sm:$0xff] %v1446
      %1451 = vst [vmem:[#allocation3 + $0xb0] sm:$0xff] %v1447
      %1452 = vst [vmem:[#allocation3 + $0xf8] sm:$0xff] %v1448
      %v1453 = vld [vmem:[#allocation2 + $0x31] sm:$0xff]
      %v1454 = vld [vmem:[#allocation2 + $0x39] sm:$0xff]
      %v1455 = vld [vmem:[#allocation2 + $0x41] sm:$0xff]
      %v1456 = vld [vmem:[#allocation2 + $0x49] sm:$0xff]
      %1457 = vst [vmem:[#allocation3 + $0x28] sm:$0xff] %v1453
      %1458 = vst [vmem:[#allocation3 + $0x70] sm:$0xff] %v1454
      %1459 = vst [vmem:[#allocation3 + $0xb8] sm:$0xff] %v1455
      %1460 = vst [vmem:[#allocation3 + $0x100] sm:$0xff] %v1456
      %v1461 = vld [vmem:[#allocation2 + $0x98] sm:$0xff]
      %v1462 = vld [vmem:[#allocation2 + $0xa0] sm:$0xff]
      %v1463 = vld [vmem:[#allocation2 + $0xa8] sm:$0xff]
      %v1464 = vld [vmem:[#allocation2 + $0xb0] sm:$0xff]
      %1465 = vst [vmem:[#allocation3 + $0x30] sm:$0xff] %v1461
      %1466 = vst [vmem:[#allocation3 + $0x78] sm:$0xff] %v1462
      %1467 = vst [vmem:[#allocation3 + $0xc0] sm:$0xff] %v1463
      %1468 = vst [vmem:[#allocation3 + $0x108] sm:$0xff] %v1464
      %v1469 = vld [vmem:[#allocation2 + $0x68] sm:$0xff]
      %v1470 = vld [vmem:[#allocation2 + $0x70] sm:$0xff]
      %v1471 = vld [vmem:[#allocation2 + $0x78] sm:$0xff]
      %v1472 = vld [vmem:[#allocation2 + $0x80] sm:$0xff]
      %1473 = vst [vmem:[#allocation3 + $0x38] sm:$0xff] %v1469
      %1474 = vst [vmem:[#allocation3 + $0x80] sm:$0xff] %v1470
      %1475 = vst [vmem:[#allocation3 + $0xc8] sm:$0xff] %v1471
      %1476 = vst [vmem:[#allocation3 + $0x110] sm:$0xff] %v1472
      %v1477 = vld [vmem:[#allocation2 + $0x99] sm:$0xff]
      %v1478 = vld [vmem:[#allocation2 + $0xa1] sm:$0xff]
      %v1479 = vld [vmem:[#allocation2 + $0xa9] sm:$0xff]
      %v1480 = vld [vmem:[#allocation2 + $0xb1] sm:$0xff]
      %1481 = vst [vmem:[#allocation3 + $0x40] sm:$0xff] %v1477
      %1482 = vst [vmem:[#allocation3 + $0x88] sm:$0xff] %v1478
      %1483 = vst [vmem:[#allocation3 + $0xd0] sm:$0xff] %v1479
      %1484 = vst [vmem:[#allocation3 + $0x118] sm:$0xff] %v1480
      %v1485 = vld [vmem:[#allocation3] sm:$0xff]
      %v1486 = vld [vmem:[#allocation3 + $0x8] sm:$0xff]
      %v1487 = vld [vmem:[#allocation3 + $0x10] sm:$0xff]
      %v1488 = vld [vmem:[#allocation3 + $0x18] sm:$0xff]
      %v1489 = vld [vmem:[#allocation3 + $0x20] sm:$0xff]
      %v1490 = vld [vmem:[#allocation3 + $0x28] sm:$0xff]
      %v1491 = vld [vmem:[#allocation3 + $0x30] sm:$0xff]
      %v1492 = vld [vmem:[#allocation3 + $0x38] sm:$0xff]
      %v1493 = vld [vmem:[#allocation3 + $0x40] sm:$0xff]
      %v1494 = vld [vmem:[#allocation3 + $0x48] sm:$0xff]
      %v1495 = vld [vmem:[#allocation3 + $0x50] sm:$0xff]
      %v1496 = vld [vmem:[#allocation3 + $0x58] sm:$0xff]
      %v1497 = vld [vmem:[#allocation3 + $0x60] sm:$0xff]
      %v1498 = vld [vmem:[#allocation3 + $0x68] sm:$0xff]
      %v1499 = vld [vmem:[#allocation3 + $0x70] sm:$0xff]
      %v1500 = vld [vmem:[#allocation3 + $0x78] sm:$0xff]
      %v1501 = vld [vmem:[#allocation3 + $0x80] sm:$0xff]
      %v1502 = vld [vmem:[#allocation3 + $0x88] sm:$0xff]
      %v1503 = vld [vmem:[#allocation3 + $0x90] sm:$0xff]
      %v1504 = vld [vmem:[#allocation3 + $0x98] sm:$0xff]
      %v1505 = vld [vmem:[#allocation3 + $0xa0] sm:$0xff]
      %v1506 = vld [vmem:[#allocation3 + $0xa8] sm:$0xff]
      %v1507 = vld [vmem:[#allocation3 + $0xb0] sm:$0xff]
      %v1508 = vld [vmem:[#allocation3 + $0xb8] sm:$0xff]
      %v1509 = vld [vmem:[#allocation3 + $0xc0] sm:$0xff]
      %v1510 = vld [vmem:[#allocation3 + $0xc8] sm:$0xff]
      %v1511 = vld [vmem:[#allocation3 + $0xd0] sm:$0xff]
      %v1512 = vld [vmem:[#allocation3 + $0xd8] sm:$0xff]
      %v1513 = vld [vmem:[#allocation3 + $0xe0] sm:$0xff]
      %v1514 = vld [vmem:[#allocation3 + $0xe8] sm:$0xff]
      %v1515 = vld [vmem:[#allocation3 + $0xf0] sm:$0xff]
      %v1516 = vld [vmem:[#allocation3 + $0xf8] sm:$0xff]
      %v1517 = vld [vmem:[#allocation3 + $0x100] sm:$0xff]
      %v1518 = vld [vmem:[#allocation3 + $0x108] sm:$0xff]
      %v1519 = vld [vmem:[#allocation3 + $0x110] sm:$0xff]
      %v1520 = vld [vmem:[#allocation3 + $0x118] sm:$0xff]
      %v1521 = vld [vmem:[%s5] sm:$0xff]
      %v1522 = vld [vmem:[%s5 + $0x8] sm:$0xff]
      %v1523 = vld [vmem:[%s5 + $0x10] sm:$0xff]
      %v1524 = vld [vmem:[%s5 + $0x18] sm:$0xff]
      %v1525 = vld [vmem:[%s5 + $0x20] sm:$0xff]
      %v1526 = vld [vmem:[%s5 + $0x28] sm:$0xff]
      %v1527 = vld [vmem:[%s5 + $0x30] sm:$0xff]
      %v1528 = vld [vmem:[%s5 + $0x38] sm:$0xff]
      %v1529 = vld [vmem:[%s5 + $0x40] sm:$0xff]
      %v1530 = vld [vmem:[%s5 + $0x48] sm:$0xff]
      %v1531 = vld [vmem:[%s5 + $0x50] sm:$0xff]
      %v1532 = vld [vmem:[%s5 + $0x58] sm:$0xff]
      %v1533 = vld [vmem:[%s5 + $0x60] sm:$0xff]
      %v1534 = vld [vmem:[%s5 + $0x68] sm:$0xff]
      %v1535 = vld [vmem:[%s5 + $0x70] sm:$0xff]
      %v1536 = vld [vmem:[%s5 + $0x78] sm:$0xff]
      %v1537 = vld [vmem:[%s5 + $0x80] sm:$0xff]
      %v1538 = vld [vmem:[%s5 + $0x88] sm:$0xff]
      %v1539 = vld [vmem:[%s5 + $0x90] sm:$0xff]
      %v1540 = vld [vmem:[%s5 + $0x98] sm:$0xff]
      %v1541 = vld [vmem:[%s5 + $0xa0] sm:$0xff]
      %v1542 = vld [vmem:[%s5 + $0xa8] sm:$0xff]
      %v1543 = vld [vmem:[%s5 + $0xb0] sm:$0xff]
      %v1544 = vld [vmem:[%s5 + $0xb8] sm:$0xff]
      %v1545 = vld [vmem:[%s5 + $0xc0] sm:$0xff]
      %v1546 = vld [vmem:[%s5 + $0xc8] sm:$0xff]
      %v1547 = vld [vmem:[%s5 + $0xd0] sm:$0xff]
      %v1548 = vld [vmem:[%s5 + $0xd8] sm:$0xff]
      %v1549 = vld [vmem:[%s5 + $0xe0] sm:$0xff]
      %v1550 = vld [vmem:[%s5 + $0xe8] sm:$0xff]
      %v1551 = vld [vmem:[%s5 + $0xf0] sm:$0xff]
      %v1552 = vld [vmem:[%s5 + $0xf8] sm:$0xff]
      %v1553 = vld [vmem:[%s5 + $0x100] sm:$0xff]
      %v1554 = vld [vmem:[%s5 + $0x108] sm:$0xff]
      %v1555 = vld [vmem:[%s5 + $0x110] sm:$0xff]
      %v1556 = vld [vmem:[%s5 + $0x118] sm:$0xff]
      %v1557 = vld [vmem:[%s5 + $0x120] sm:$0xff]
      %v1558 = vld [vmem:[%s5 + $0x128] sm:$0xff]
      %v1559 = vld [vmem:[%s5 + $0x130] sm:$0xff]
      %v1560 = vld [vmem:[%s5 + $0x138] sm:$0xff]
      %v1561 = vld [vmem:[%s5 + $0x140] sm:$0xff]
      %v1562 = vld [vmem:[%s5 + $0x148] sm:$0xff]
      %v1563 = vld [vmem:[%s5 + $0x150] sm:$0xff]
      %v1564 = vld [vmem:[%s5 + $0x158] sm:$0xff]
      %v1565 = vld [vmem:[%s5 + $0x160] sm:$0xff]
      %v1566 = vld [vmem:[%s5 + $0x168] sm:$0xff]
      %v1567 = vld [vmem:[%s5 + $0x170] sm:$0xff]
      %v1568 = vld [vmem:[%s5 + $0x178] sm:$0xff]
      %v1569 = vld [vmem:[%s5 + $0x180] sm:$0xff]
      %v1570 = vld [vmem:[%s5 + $0x188] sm:$0xff]
      %v1571 = vld [vmem:[%s5 + $0x190] sm:$0xff]
      %v1572 = vld [vmem:[%s5 + $0x198] sm:$0xff]
      %v1573 = vld [vmem:[%s5 + $0x1a0] sm:$0xff]
      %v1574 = vld [vmem:[%s5 + $0x1a8] sm:$0xff]
      %v1575 = vld [vmem:[%s5 + $0x1b0] sm:$0xff]
      %v1576 = vld [vmem:[%s5 + $0x1b8] sm:$0xff]
      %v1577 = vld [vmem:[%s5 + $0x1c0] sm:$0xff]
      %v1578 = vld [vmem:[%s5 + $0x1c8] sm:$0xff]
      %v1579 = vld [vmem:[%s5 + $0x1d0] sm:$0xff]
      %v1580 = vld [vmem:[%s5 + $0x1d8] sm:$0xff]
      %v1581 = vld [vmem:[%s5 + $0x1e0] sm:$0xff]
      %v1582 = vld [vmem:[%s5 + $0x1e8] sm:$0xff]
      %v1583 = vld [vmem:[%s5 + $0x1f0] sm:$0xff]
      %v1584 = vld [vmem:[%s5 + $0x1f8] sm:$0xff]
      %v1585 = vld [vmem:[%s5 + $0x200] sm:$0xff]
      %v1586 = vld [vmem:[%s5 + $0x208] sm:$0xff]
      %v1587 = vld [vmem:[%s5 + $0x210] sm:$0xff]
      %v1588 = vld [vmem:[%s5 + $0x218] sm:$0xff]
      %v1589 = vld [vmem:[%s5 + $0x220] sm:$0xff]
      %v1590 = vld [vmem:[%s5 + $0x228] sm:$0xff]
      %v1591 = vld [vmem:[%s5 + $0x230] sm:$0xff]
      %v1592 = vld [vmem:[%s5 + $0x238] sm:$0xff]
      %v1593 = vld [vmem:[%s5 + $0x240] sm:$0xff]
      %v1594 = vld [vmem:[%s5 + $0x248] sm:$0xff]
      %v1595 = vld [vmem:[%s5 + $0x250] sm:$0xff]
      %v1596 = vld [vmem:[%s5 + $0x258] sm:$0xff]
      %v1597 = vld [vmem:[%s5 + $0x260] sm:$0xff]
      %v1598 = vld [vmem:[%s5 + $0x268] sm:$0xff]
      %v1599 = vld [vmem:[%s5 + $0x270] sm:$0xff]
      %v1600 = vld [vmem:[%s5 + $0x278] sm:$0xff]
      %v1601 = vld [vmem:[%s5 + $0x280] sm:$0xff]
      %v1602 = vld [vmem:[%s5 + $0x288] sm:$0xff]
      %v1603 = vld [vmem:[%s5 + $0x290] sm:$0xff]
      %v1604 = vld [vmem:[%s5 + $0x298] sm:$0xff]
      %v1605 = vld [vmem:[%s5 + $0x2a0] sm:$0xff]
      %v1606 = vld [vmem:[%s5 + $0x2a8] sm:$0xff]
      %v1607 = vld [vmem:[%s5 + $0x2b0] sm:$0xff]
      %v1608 = vld [vmem:[%s5 + $0x2b8] sm:$0xff]
      %v1609 = vld [vmem:[%s5 + $0x2c0] sm:$0xff]
      %v1610 = vld [vmem:[%s5 + $0x2c8] sm:$0xff]
      %v1611 = vld [vmem:[%s5 + $0x2d0] sm:$0xff]
      %v1612 = vld [vmem:[%s5 + $0x2d8] sm:$0xff]
      %v1613 = vld [vmem:[%s5 + $0x2e0] sm:$0xff]
      %v1614 = vld [vmem:[%s5 + $0x2e8] sm:$0xff]
      %v1615 = vld [vmem:[%s5 + $0x2f0] sm:$0xff]
      %v1616 = vld [vmem:[%s5 + $0x2f8] sm:$0xff]
      %v1617 = vld [vmem:[%s5 + $0x300] sm:$0xff]
      %v1618 = vld [vmem:[%s5 + $0x308] sm:$0xff]
      %v1619 = vld [vmem:[%s5 + $0x310] sm:$0xff]
      %v1620 = vld [vmem:[%s5 + $0x318] sm:$0xff]
      %v1621 = vld [vmem:[%s5 + $0x320] sm:$0xff]
      %v1622 = vld [vmem:[%s5 + $0x328] sm:$0xff]
      %v1623 = vld [vmem:[%s5 + $0x330] sm:$0xff]
      %v1624 = vld [vmem:[%s5 + $0x338] sm:$0xff]
      %v1625 = vld [vmem:[%s5 + $0x340] sm:$0xff]
      %v1626 = vld [vmem:[%s5 + $0x348] sm:$0xff]
      %v1627 = vld [vmem:[%s5 + $0x350] sm:$0xff]
      %v1628 = vld [vmem:[%s5 + $0x358] sm:$0xff]
      %v1629 = vld [vmem:[%s5 + $0x360] sm:$0xff]
      %v1630 = vld [vmem:[%s5 + $0x368] sm:$0xff]
      %v1631 = vld [vmem:[%s5 + $0x370] sm:$0xff]
      %v1632 = vld [vmem:[%s5 + $0x378] sm:$0xff]
      %v1633 = vld [vmem:[%s5 + $0x380] sm:$0xff]
      %v1634 = vld [vmem:[%s5 + $0x388] sm:$0xff]
      %v1635 = vld [vmem:[%s5 + $0x390] sm:$0xff]
      %v1636 = vld [vmem:[%s5 + $0x398] sm:$0xff]
      %v1637 = vld [vmem:[%s5 + $0x3a0] sm:$0xff]
      %v1638 = vld [vmem:[%s5 + $0x3a8] sm:$0xff]
      %v1639 = vld [vmem:[%s5 + $0x3b0] sm:$0xff]
      %v1640 = vld [vmem:[%s5 + $0x3b8] sm:$0xff]
      %v1641 = vld [vmem:[%s5 + $0x3c0] sm:$0xff]
      %v1642 = vld [vmem:[%s5 + $0x3c8] sm:$0xff]
      %v1643 = vld [vmem:[%s5 + $0x3d0] sm:$0xff]
      %v1644 = vld [vmem:[%s5 + $0x3d8] sm:$0xff]
      %v1645 = vld [vmem:[%s5 + $0x3e0] sm:$0xff]
      %v1646 = vld [vmem:[%s5 + $0x3e8] sm:$0xff]
      %v1647 = vld [vmem:[%s5 + $0x3f0] sm:$0xff]
      %v1648 = vld [vmem:[%s5 + $0x3f8] sm:$0xff]
      %v1649 = vld [vmem:[%s5 + $0x400] sm:$0xff]
      %v1650 = vld [vmem:[%s5 + $0x408] sm:$0xff]
      %v1651 = vld [vmem:[%s5 + $0x410] sm:$0xff]
      %v1652 = vld [vmem:[%s5 + $0x418] sm:$0xff]
      %v1653 = vld [vmem:[%s5 + $0x420] sm:$0xff]
      %v1654 = vld [vmem:[%s5 + $0x428] sm:$0xff]
      %v1655 = vld [vmem:[%s5 + $0x430] sm:$0xff]
      %v1656 = vld [vmem:[%s5 + $0x438] sm:$0xff]
      %v1657 = vld [vmem:[%s5 + $0x440] sm:$0xff]
      %v1658 = vld [vmem:[%s5 + $0x448] sm:$0xff]
      %v1659 = vld [vmem:[%s5 + $0x450] sm:$0xff]
      %v1660 = vld [vmem:[%s5 + $0x458] sm:$0xff]
      %v1661 = vld [vmem:[%s5 + $0x460] sm:$0xff]
      %v1662 = vld [vmem:[%s5 + $0x468] sm:$0xff]
      %v1663 = vld [vmem:[%s5 + $0x470] sm:$0xff]
      %v1664 = vld [vmem:[%s5 + $0x478] sm:$0xff]
      %v1665 = vunpack.c.l.bf16 %v1521
      %v1666 = vunpack.c.h.bf16 %v1521
      %v1667 = vunpack.c.l.bf16 %v1522
      %v1668 = vunpack.c.h.bf16 %v1522
      %v1669 = vunpack.c.l.bf16 %v1523
      %v1670 = vunpack.c.h.bf16 %v1523
      %v1671 = vunpack.c.l.bf16 %v1524
      %v1672 = vunpack.c.h.bf16 %v1524
      %v1673 = vunpack.c.l.bf16 %v1525
      %v1674 = vunpack.c.h.bf16 %v1525
      %v1675 = vunpack.c.l.bf16 %v1526
      %v1676 = vunpack.c.h.bf16 %v1526
      %v1677 = vunpack.c.l.bf16 %v1527
      %v1678 = vunpack.c.h.bf16 %v1527
      %v1679 = vunpack.c.l.bf16 %v1528
      %v1680 = vunpack.c.h.bf16 %v1528
      %v1681 = vunpack.c.l.bf16 %v1529
      %v1682 = vunpack.c.h.bf16 %v1529
      %v1683 = vunpack.c.l.bf16 %v1530
      %v1684 = vunpack.c.h.bf16 %v1530
      %v1685 = vunpack.c.l.bf16 %v1531
      %v1686 = vunpack.c.h.bf16 %v1531
      %v1687 = vunpack.c.l.bf16 %v1532
      %v1688 = vunpack.c.h.bf16 %v1532
      %v1689 = vunpack.c.l.bf16 %v1533
      %v1690 = vunpack.c.h.bf16 %v1533
      %v1691 = vunpack.c.l.bf16 %v1534
      %v1692 = vunpack.c.h.bf16 %v1534
      %v1693 = vunpack.c.l.bf16 %v1535
      %v1694 = vunpack.c.h.bf16 %v1535
      %v1695 = vunpack.c.l.bf16 %v1536
      %v1696 = vunpack.c.h.bf16 %v1536
      %v1697 = vunpack.c.l.bf16 %v1537
      %v1698 = vunpack.c.h.bf16 %v1537
      %v1699 = vunpack.c.l.bf16 %v1538
      %v1700 = vunpack.c.h.bf16 %v1538
      %v1701 = vunpack.c.l.bf16 %v1539
      %v1702 = vunpack.c.h.bf16 %v1539
      %v1703 = vunpack.c.l.bf16 %v1540
      %v1704 = vunpack.c.h.bf16 %v1540
      %v1705 = vunpack.c.l.bf16 %v1541
      %v1706 = vunpack.c.h.bf16 %v1541
      %v1707 = vunpack.c.l.bf16 %v1542
      %v1708 = vunpack.c.h.bf16 %v1542
      %v1709 = vunpack.c.l.bf16 %v1543
      %v1710 = vunpack.c.h.bf16 %v1543
      %v1711 = vunpack.c.l.bf16 %v1544
      %v1712 = vunpack.c.h.bf16 %v1544
      %v1713 = vunpack.c.l.bf16 %v1545
      %v1714 = vunpack.c.h.bf16 %v1545
      %v1715 = vunpack.c.l.bf16 %v1546
      %v1716 = vunpack.c.h.bf16 %v1546
      %v1717 = vunpack.c.l.bf16 %v1547
      %v1718 = vunpack.c.h.bf16 %v1547
      %v1719 = vunpack.c.l.bf16 %v1548
      %v1720 = vunpack.c.h.bf16 %v1548
      %v1721 = vunpack.c.l.bf16 %v1549
      %v1722 = vunpack.c.h.bf16 %v1549
      %v1723 = vunpack.c.l.bf16 %v1550
      %v1724 = vunpack.c.h.bf16 %v1550
      %v1725 = vunpack.c.l.bf16 %v1551
      %v1726 = vunpack.c.h.bf16 %v1551
      %v1727 = vunpack.c.l.bf16 %v1552
      %v1728 = vunpack.c.h.bf16 %v1552
      %v1729 = vunpack.c.l.bf16 %v1553
      %v1730 = vunpack.c.h.bf16 %v1553
      %v1731 = vunpack.c.l.bf16 %v1554
      %v1732 = vunpack.c.h.bf16 %v1554
      %v1733 = vunpack.c.l.bf16 %v1555
      %v1734 = vunpack.c.h.bf16 %v1555
      %v1735 = vunpack.c.l.bf16 %v1556
      %v1736 = vunpack.c.h.bf16 %v1556
      %v1737 = vunpack.c.l.bf16 %v1557
      %v1738 = vunpack.c.h.bf16 %v1557
      %v1739 = vunpack.c.l.bf16 %v1558
      %v1740 = vunpack.c.h.bf16 %v1558
      %v1741 = vunpack.c.l.bf16 %v1559
      %v1742 = vunpack.c.h.bf16 %v1559
      %v1743 = vunpack.c.l.bf16 %v1560
      %v1744 = vunpack.c.h.bf16 %v1560
      %v1745 = vunpack.c.l.bf16 %v1561
      %v1746 = vunpack.c.h.bf16 %v1561
      %v1747 = vunpack.c.l.bf16 %v1562
      %v1748 = vunpack.c.h.bf16 %v1562
      %v1749 = vunpack.c.l.bf16 %v1563
      %v1750 = vunpack.c.h.bf16 %v1563
      %v1751 = vunpack.c.l.bf16 %v1564
      %v1752 = vunpack.c.h.bf16 %v1564
      %v1753 = vunpack.c.l.bf16 %v1565
      %v1754 = vunpack.c.h.bf16 %v1565
      %v1755 = vunpack.c.l.bf16 %v1566
      %v1756 = vunpack.c.h.bf16 %v1566
      %v1757 = vunpack.c.l.bf16 %v1567
      %v1758 = vunpack.c.h.bf16 %v1567
      %v1759 = vunpack.c.l.bf16 %v1568
      %v1760 = vunpack.c.h.bf16 %v1568
      %v1761 = vunpack.c.l.bf16 %v1569
      %v1762 = vunpack.c.h.bf16 %v1569
      %v1763 = vunpack.c.l.bf16 %v1570
      %v1764 = vunpack.c.h.bf16 %v1570
      %v1765 = vunpack.c.l.bf16 %v1571
      %v1766 = vunpack.c.h.bf16 %v1571
      %v1767 = vunpack.c.l.bf16 %v1572
      %v1768 = vunpack.c.h.bf16 %v1572
      %v1769 = vunpack.c.l.bf16 %v1573
      %v1770 = vunpack.c.h.bf16 %v1573
      %v1771 = vunpack.c.l.bf16 %v1574
      %v1772 = vunpack.c.h.bf16 %v1574
      %v1773 = vunpack.c.l.bf16 %v1575
      %v1774 = vunpack.c.h.bf16 %v1575
      %v1775 = vunpack.c.l.bf16 %v1576
      %v1776 = vunpack.c.h.bf16 %v1576
      %v1777 = vunpack.c.l.bf16 %v1577
      %v1778 = vunpack.c.h.bf16 %v1577
      %v1779 = vunpack.c.l.bf16 %v1578
      %v1780 = vunpack.c.h.bf16 %v1578
      %v1781 = vunpack.c.l.bf16 %v1579
      %v1782 = vunpack.c.h.bf16 %v1579
      %v1783 = vunpack.c.l.bf16 %v1580
      %v1784 = vunpack.c.h.bf16 %v1580
      %v1785 = vunpack.c.l.bf16 %v1581
      %v1786 = vunpack.c.h.bf16 %v1581
      %v1787 = vunpack.c.l.bf16 %v1582
      %v1788 = vunpack.c.h.bf16 %v1582
      %v1789 = vunpack.c.l.bf16 %v1583
      %v1790 = vunpack.c.h.bf16 %v1583
      %v1791 = vunpack.c.l.bf16 %v1584
      %v1792 = vunpack.c.h.bf16 %v1584
      %v1793 = vunpack.c.l.bf16 %v1585
      %v1794 = vunpack.c.h.bf16 %v1585
      %v1795 = vunpack.c.l.bf16 %v1586
      %v1796 = vunpack.c.h.bf16 %v1586
      %v1797 = vunpack.c.l.bf16 %v1587
      %v1798 = vunpack.c.h.bf16 %v1587
      %v1799 = vunpack.c.l.bf16 %v1588
      %v1800 = vunpack.c.h.bf16 %v1588
      %v1801 = vunpack.c.l.bf16 %v1589
      %v1802 = vunpack.c.h.bf16 %v1589
      %v1803 = vunpack.c.l.bf16 %v1590
      %v1804 = vunpack.c.h.bf16 %v1590
      %v1805 = vunpack.c.l.bf16 %v1591
      %v1806 = vunpack.c.h.bf16 %v1591
      %v1807 = vunpack.c.l.bf16 %v1592
      %v1808 = vunpack.c.h.bf16 %v1592
      %v1809 = vunpack.c.l.bf16 %v1593
      %v1810 = vunpack.c.h.bf16 %v1593
      %v1811 = vunpack.c.l.bf16 %v1594
      %v1812 = vunpack.c.h.bf16 %v1594
      %v1813 = vunpack.c.l.bf16 %v1595
      %v1814 = vunpack.c.h.bf16 %v1595
      %v1815 = vunpack.c.l.bf16 %v1596
      %v1816 = vunpack.c.h.bf16 %v1596
      %v1817 = vunpack.c.l.bf16 %v1597
      %v1818 = vunpack.c.h.bf16 %v1597
      %v1819 = vunpack.c.l.bf16 %v1598
      %v1820 = vunpack.c.h.bf16 %v1598
      %v1821 = vunpack.c.l.bf16 %v1599
      %v1822 = vunpack.c.h.bf16 %v1599
      %v1823 = vunpack.c.l.bf16 %v1600
      %v1824 = vunpack.c.h.bf16 %v1600
      %v1825 = vunpack.c.l.bf16 %v1601
      %v1826 = vunpack.c.h.bf16 %v1601
      %v1827 = vunpack.c.l.bf16 %v1602
      %v1828 = vunpack.c.h.bf16 %v1602
      %v1829 = vunpack.c.l.bf16 %v1603
      %v1830 = vunpack.c.h.bf16 %v1603
      %v1831 = vunpack.c.l.bf16 %v1604
      %v1832 = vunpack.c.h.bf16 %v1604
      %v1833 = vunpack.c.l.bf16 %v1605
      %v1834 = vunpack.c.h.bf16 %v1605
      %v1835 = vunpack.c.l.bf16 %v1606
      %v1836 = vunpack.c.h.bf16 %v1606
      %v1837 = vunpack.c.l.bf16 %v1607
      %v1838 = vunpack.c.h.bf16 %v1607
      %v1839 = vunpack.c.l.bf16 %v1608
      %v1840 = vunpack.c.h.bf16 %v1608
      %v1841 = vunpack.c.l.bf16 %v1609
      %v1842 = vunpack.c.h.bf16 %v1609
      %v1843 = vunpack.c.l.bf16 %v1610
      %v1844 = vunpack.c.h.bf16 %v1610
      %v1845 = vunpack.c.l.bf16 %v1611
      %v1846 = vunpack.c.h.bf16 %v1611
      %v1847 = vunpack.c.l.bf16 %v1612
      %v1848 = vunpack.c.h.bf16 %v1612
      %v1849 = vunpack.c.l.bf16 %v1613
      %v1850 = vunpack.c.h.bf16 %v1613
      %v1851 = vunpack.c.l.bf16 %v1614
      %v1852 = vunpack.c.h.bf16 %v1614
      %v1853 = vunpack.c.l.bf16 %v1615
      %v1854 = vunpack.c.h.bf16 %v1615
      %v1855 = vunpack.c.l.bf16 %v1616
      %v1856 = vunpack.c.h.bf16 %v1616
      %v1857 = vunpack.c.l.bf16 %v1617
      %v1858 = vunpack.c.h.bf16 %v1617
      %v1859 = vunpack.c.l.bf16 %v1618
      %v1860 = vunpack.c.h.bf16 %v1618
      %v1861 = vunpack.c.l.bf16 %v1619
      %v1862 = vunpack.c.h.bf16 %v1619
      %v1863 = vunpack.c.l.bf16 %v1620
      %v1864 = vunpack.c.h.bf16 %v1620
      %v1865 = vunpack.c.l.bf16 %v1621
      %v1866 = vunpack.c.h.bf16 %v1621
      %v1867 = vunpack.c.l.bf16 %v1622
      %v1868 = vunpack.c.h.bf16 %v1622
      %v1869 = vunpack.c.l.bf16 %v1623
      %v1870 = vunpack.c.h.bf16 %v1623
      %v1871 = vunpack.c.l.bf16 %v1624
      %v1872 = vunpack.c.h.bf16 %v1624
      %v1873 = vunpack.c.l.bf16 %v1625
      %v1874 = vunpack.c.h.bf16 %v1625
      %v1875 = vunpack.c.l.bf16 %v1626
      %v1876 = vunpack.c.h.bf16 %v1626
      %v1877 = vunpack.c.l.bf16 %v1627
      %v1878 = vunpack.c.h.bf16 %v1627
      %v1879 = vunpack.c.l.bf16 %v1628
      %v1880 = vunpack.c.h.bf16 %v1628
      %v1881 = vunpack.c.l.bf16 %v1629
      %v1882 = vunpack.c.h.bf16 %v1629
      %v1883 = vunpack.c.l.bf16 %v1630
      %v1884 = vunpack.c.h.bf16 %v1630
      %v1885 = vunpack.c.l.bf16 %v1631
      %v1886 = vunpack.c.h.bf16 %v1631
      %v1887 = vunpack.c.l.bf16 %v1632
      %v1888 = vunpack.c.h.bf16 %v1632
      %v1889 = vunpack.c.l.bf16 %v1633
      %v1890 = vunpack.c.h.bf16 %v1633
      %v1891 = vunpack.c.l.bf16 %v1634
      %v1892 = vunpack.c.h.bf16 %v1634
      %v1893 = vunpack.c.l.bf16 %v1635
      %v1894 = vunpack.c.h.bf16 %v1635
      %v1895 = vunpack.c.l.bf16 %v1636
      %v1896 = vunpack.c.h.bf16 %v1636
      %v1897 = vunpack.c.l.bf16 %v1637
      %v1898 = vunpack.c.h.bf16 %v1637
      %v1899 = vunpack.c.l.bf16 %v1638
      %v1900 = vunpack.c.h.bf16 %v1638
      %v1901 = vunpack.c.l.bf16 %v1639
      %v1902 = vunpack.c.h.bf16 %v1639
      %v1903 = vunpack.c.l.bf16 %v1640
      %v1904 = vunpack.c.h.bf16 %v1640
      %v1905 = vunpack.c.l.bf16 %v1641
      %v1906 = vunpack.c.h.bf16 %v1641
      %v1907 = vunpack.c.l.bf16 %v1642
      %v1908 = vunpack.c.h.bf16 %v1642
      %v1909 = vunpack.c.l.bf16 %v1643
      %v1910 = vunpack.c.h.bf16 %v1643
      %v1911 = vunpack.c.l.bf16 %v1644
      %v1912 = vunpack.c.h.bf16 %v1644
      %v1913 = vunpack.c.l.bf16 %v1645
      %v1914 = vunpack.c.h.bf16 %v1645
      %v1915 = vunpack.c.l.bf16 %v1646
      %v1916 = vunpack.c.h.bf16 %v1646
      %v1917 = vunpack.c.l.bf16 %v1647
      %v1918 = vunpack.c.h.bf16 %v1647
      %v1919 = vunpack.c.l.bf16 %v1648
      %v1920 = vunpack.c.h.bf16 %v1648
      %v1921 = vunpack.c.l.bf16 %v1649
      %v1922 = vunpack.c.h.bf16 %v1649
      %v1923 = vunpack.c.l.bf16 %v1650
      %v1924 = vunpack.c.h.bf16 %v1650
      %v1925 = vunpack.c.l.bf16 %v1651
      %v1926 = vunpack.c.h.bf16 %v1651
      %v1927 = vunpack.c.l.bf16 %v1652
      %v1928 = vunpack.c.h.bf16 %v1652
      %v1929 = vunpack.c.l.bf16 %v1653
      %v1930 = vunpack.c.h.bf16 %v1653
      %v1931 = vunpack.c.l.bf16 %v1654
      %v1932 = vunpack.c.h.bf16 %v1654
      %v1933 = vunpack.c.l.bf16 %v1655
      %v1934 = vunpack.c.h.bf16 %v1655
      %v1935 = vunpack.c.l.bf16 %v1656
      %v1936 = vunpack.c.h.bf16 %v1656
      %v1937 = vunpack.c.l.bf16 %v1657
      %v1938 = vunpack.c.h.bf16 %v1657
      %v1939 = vunpack.c.l.bf16 %v1658
      %v1940 = vunpack.c.h.bf16 %v1658
      %v1941 = vunpack.c.l.bf16 %v1659
      %v1942 = vunpack.c.h.bf16 %v1659
      %v1943 = vunpack.c.l.bf16 %v1660
      %v1944 = vunpack.c.h.bf16 %v1660
      %v1945 = vunpack.c.l.bf16 %v1661
      %v1946 = vunpack.c.h.bf16 %v1661
      %v1947 = vunpack.c.l.bf16 %v1662
      %v1948 = vunpack.c.h.bf16 %v1662
      %v1949 = vunpack.c.l.bf16 %v1663
      %v1950 = vunpack.c.h.bf16 %v1663
      %v1951 = vunpack.c.l.bf16 %v1664
      %v1952 = vunpack.c.h.bf16 %v1664
      %1953 = vmatpush.msra.mxu0 %v1695
      %1954 = vmatpush.msra.mxu0 %v1693
      %1955 = vmatpush.msra.mxu0 %v1691
      %1956 = vmatpush.msra.mxu0 %v1689
      %1957 = vmatpush.msra.mxu0 %v1687
      %1958 = vmatpush.msra.mxu0 %v1685
      %1959 = vmatpush.msra.mxu0 %v1683
      %1960 = vmatpush.msra.mxu0 %v1681
      %1961 = vmatpush.msra.mxu0 %v1679
      %1962 = vmatpush.msra.mxu0 %v1677
      %1963 = vmatpush.msra.mxu0 %v1675
      %1964 = vmatpush.msra.mxu0 %v1673
      %1965 = vmatpush.msra.mxu0 %v1671
      %1966 = vmatpush.msra.mxu0 %v1669
      %1967 = vmatpush.msra.mxu0 %v1667
      %1968 = vmatpush.msra.mxu0 %v1665
      %1969 = vmatmul.f32.gmra.mxu0 %v1485
      %v1970 = vpop.f32.mrf.mxu0
      %v1971 = vadd.f32 0.0, %v1970
      %1972 = vmatmul.f32.gmra.mxu0 %v1494
      %v1973 = vpop.f32.mrf.mxu0
      %v1974 = vadd.f32 0.0, %v1973
      %1975 = vmatmul.f32.gmra.mxu0 %v1503
      %v1976 = vpop.f32.mrf.mxu0
      %v1977 = vadd.f32 0.0, %v1976
      %1978 = vmatmul.f32.gmra.mxu0 %v1512
      %v1979 = vpop.f32.mrf.mxu0
      %v1980 = vadd.f32 0.0, %v1979
      %1981 = vdwg.mxu0
      %1982 = vmatpush.msra.mxu0 %v1727
      %1983 = vmatpush.msra.mxu0 %v1725
      %1984 = vmatpush.msra.mxu0 %v1723
      %1985 = vmatpush.msra.mxu0 %v1721
      %1986 = vmatpush.msra.mxu0 %v1719
      %1987 = vmatpush.msra.mxu0 %v1717
      %1988 = vmatpush.msra.mxu0 %v1715
      %1989 = vmatpush.msra.mxu0 %v1713
      %1990 = vmatpush.msra.mxu0 %v1711
      %1991 = vmatpush.msra.mxu0 %v1709
      %1992 = vmatpush.msra.mxu0 %v1707
      %1993 = vmatpush.msra.mxu0 %v1705
      %1994 = vmatpush.msra.mxu0 %v1703
      %1995 = vmatpush.msra.mxu0 %v1701
      %1996 = vmatpush.msra.mxu0 %v1699
      %1997 = vmatpush.msra.mxu0 %v1697
      %1998 = vmatmul.f32.gmra.mxu0 %v1486
      %v1999 = vpop.f32.mrf.mxu0
      %v2000 = vadd.f32 %v1971, %v1999
      %2001 = vmatmul.f32.gmra.mxu0 %v1495
      %v2002 = vpop.f32.mrf.mxu0
      %v2003 = vadd.f32 %v1974, %v2002
      %2004 = vmatmul.f32.gmra.mxu0 %v1504
      %v2005 = vpop.f32.mrf.mxu0
      %v2006 = vadd.f32 %v1977, %v2005
      %2007 = vmatmul.f32.gmra.mxu0 %v1513
      %v2008 = vpop.f32.mrf.mxu0
      %v2009 = vadd.f32 %v1980, %v2008
      %2010 = vdwg.mxu0
      %2011 = vmatpush.msra.mxu0 %v1759
      %2012 = vmatpush.msra.mxu0 %v1757
      %2013 = vmatpush.msra.mxu0 %v1755
      %2014 = vmatpush.msra.mxu0 %v1753
      %2015 = vmatpush.msra.mxu0 %v1751
      %2016 = vmatpush.msra.mxu0 %v1749
      %2017 = vmatpush.msra.mxu0 %v1747
      %2018 = vmatpush.msra.mxu0 %v1745
      %2019 = vmatpush.msra.mxu0 %v1743
      %2020 = vmatpush.msra.mxu0 %v1741
      %2021 = vmatpush.msra.mxu0 %v1739
      %2022 = vmatpush.msra.mxu0 %v1737
      %2023 = vmatpush.msra.mxu0 %v1735
      %2024 = vmatpush.msra.mxu0 %v1733
      %2025 = vmatpush.msra.mxu0 %v1731
      %2026 = vmatpush.msra.mxu0 %v1729
      %2027 = vmatmul.f32.gmra.mxu0 %v1487
      %v2028 = vpop.f32.mrf.mxu0
      %v2029 = vadd.f32 %v2000, %v2028
      %2030 = vmatmul.f32.gmra.mxu0 %v1496
      %v2031 = vpop.f32.mrf.mxu0
      %v2032 = vadd.f32 %v2003, %v2031
      %2033 = vmatmul.f32.gmra.mxu0 %v1505
      %v2034 = vpop.f32.mrf.mxu0
      %v2035 = vadd.f32 %v2006, %v2034
      %2036 = vmatmul.f32.gmra.mxu0 %v1514
      %v2037 = vpop.f32.mrf.mxu0
      %v2038 = vadd.f32 %v2009, %v2037
      %2039 = vdwg.mxu0
      %2040 = vmatpush.msra.mxu0 %v1791
      %2041 = vmatpush.msra.mxu0 %v1789
      %2042 = vmatpush.msra.mxu0 %v1787
      %2043 = vmatpush.msra.mxu0 %v1785
      %2044 = vmatpush.msra.mxu0 %v1783
      %2045 = vmatpush.msra.mxu0 %v1781
      %2046 = vmatpush.msra.mxu0 %v1779
      %2047 = vmatpush.msra.mxu0 %v1777
      %2048 = vmatpush.msra.mxu0 %v1775
      %2049 = vmatpush.msra.mxu0 %v1773
      %2050 = vmatpush.msra.mxu0 %v1771
      %2051 = vmatpush.msra.mxu0 %v1769
      %2052 = vmatpush.msra.mxu0 %v1767
      %2053 = vmatpush.msra.mxu0 %v1765
      %2054 = vmatpush.msra.mxu0 %v1763
      %2055 = vmatpush.msra.mxu0 %v1761
      %2056 = vmatmul.f32.gmra.mxu0 %v1488
      %v2057 = vpop.f32.mrf.mxu0
      %v2058 = vadd.f32 %v2029, %v2057
      %2059 = vmatmul.f32.gmra.mxu0 %v1497
      %v2060 = vpop.f32.mrf.mxu0
      %v2061 = vadd.f32 %v2032, %v2060
      %2062 = vmatmul.f32.gmra.mxu0 %v1506
      %v2063 = vpop.f32.mrf.mxu0
      %v2064 = vadd.f32 %v2035, %v2063
      %2065 = vmatmul.f32.gmra.mxu0 %v1515
      %v2066 = vpop.f32.mrf.mxu0
      %v2067 = vadd.f32 %v2038, %v2066
      %2068 = vdwg.mxu0
      %2069 = vmatpush.msra.mxu0 %v1823
      %2070 = vmatpush.msra.mxu0 %v1821
      %2071 = vmatpush.msra.mxu0 %v1819
      %2072 = vmatpush.msra.mxu0 %v1817
      %2073 = vmatpush.msra.mxu0 %v1815
      %2074 = vmatpush.msra.mxu0 %v1813
      %2075 = vmatpush.msra.mxu0 %v1811
      %2076 = vmatpush.msra.mxu0 %v1809
      %2077 = vmatpush.msra.mxu0 %v1807
      %2078 = vmatpush.msra.mxu0 %v1805
      %2079 = vmatpush.msra.mxu0 %v1803
      %2080 = vmatpush.msra.mxu0 %v1801
      %2081 = vmatpush.msra.mxu0 %v1799
      %2082 = vmatpush.msra.mxu0 %v1797
      %2083 = vmatpush.msra.mxu0 %v1795
      %2084 = vmatpush.msra.mxu0 %v1793
      %2085 = vmatmul.f32.gmra.mxu0 %v1489
      %v2086 = vpop.f32.mrf.mxu0
      %v2087 = vadd.f32 %v2058, %v2086
      %2088 = vmatmul.f32.gmra.mxu0 %v1498
      %v2089 = vpop.f32.mrf.mxu0
      %v2090 = vadd.f32 %v2061, %v2089
      %2091 = vmatmul.f32.gmra.mxu0 %v1507
      %v2092 = vpop.f32.mrf.mxu0
      %v2093 = vadd.f32 %v2064, %v2092
      %2094 = vmatmul.f32.gmra.mxu0 %v1516
      %v2095 = vpop.f32.mrf.mxu0
      %v2096 = vadd.f32 %v2067, %v2095
      %2097 = vdwg.mxu0
      %2098 = vmatpush.msra.mxu0 %v1855
      %2099 = vmatpush.msra.mxu0 %v1853
      %2100 = vmatpush.msra.mxu0 %v1851
      %2101 = vmatpush.msra.mxu0 %v1849
      %2102 = vmatpush.msra.mxu0 %v1847
      %2103 = vmatpush.msra.mxu0 %v1845
      %2104 = vmatpush.msra.mxu0 %v1843
      %2105 = vmatpush.msra.mxu0 %v1841
      %2106 = vmatpush.msra.mxu0 %v1839
      %2107 = vmatpush.msra.mxu0 %v1837
      %2108 = vmatpush.msra.mxu0 %v1835
      %2109 = vmatpush.msra.mxu0 %v1833
      %2110 = vmatpush.msra.mxu0 %v1831
      %2111 = vmatpush.msra.mxu0 %v1829
      %2112 = vmatpush.msra.mxu0 %v1827
      %2113 = vmatpush.msra.mxu0 %v1825
      %2114 = vmatmul.f32.gmra.mxu0 %v1490
      %v2115 = vpop.f32.mrf.mxu0
      %v2116 = vadd.f32 %v2087, %v2115
      %2117 = vmatmul.f32.gmra.mxu0 %v1499
      %v2118 = vpop.f32.mrf.mxu0
      %v2119 = vadd.f32 %v2090, %v2118
      %2120 = vmatmul.f32.gmra.mxu0 %v1508
      %v2121 = vpop.f32.mrf.mxu0
      %v2122 = vadd.f32 %v2093, %v2121
      %2123 = vmatmul.f32.gmra.mxu0 %v1517
      %v2124 = vpop.f32.mrf.mxu0
      %v2125 = vadd.f32 %v2096, %v2124
      %2126 = vdwg.mxu0
      %2127 = vmatpush.msra.mxu0 %v1887
      %2128 = vmatpush.msra.mxu0 %v1885
      %2129 = vmatpush.msra.mxu0 %v1883
      %2130 = vmatpush.msra.mxu0 %v1881
      %2131 = vmatpush.msra.mxu0 %v1879
      %2132 = vmatpush.msra.mxu0 %v1877
      %2133 = vmatpush.msra.mxu0 %v1875
      %2134 = vmatpush.msra.mxu0 %v1873
      %2135 = vmatpush.msra.mxu0 %v1871
      %2136 = vmatpush.msra.mxu0 %v1869
      %2137 = vmatpush.msra.mxu0 %v1867
      %2138 = vmatpush.msra.mxu0 %v1865
      %2139 = vmatpush.msra.mxu0 %v1863
      %2140 = vmatpush.msra.mxu0 %v1861
      %2141 = vmatpush.msra.mxu0 %v1859
      %2142 = vmatpush.msra.mxu0 %v1857
      %2143 = vmatmul.f32.gmra.mxu0 %v1491
      %v2144 = vpop.f32.mrf.mxu0
      %v2145 = vadd.f32 %v2116, %v2144
      %2146 = vmatmul.f32.gmra.mxu0 %v1500
      %v2147 = vpop.f32.mrf.mxu0
      %v2148 = vadd.f32 %v2119, %v2147
      %2149 = vmatmul.f32.gmra.mxu0 %v1509
      %v2150 = vpop.f32.mrf.mxu0
      %v2151 = vadd.f32 %v2122, %v2150
      %2152 = vmatmul.f32.gmra.mxu0 %v1518
      %v2153 = vpop.f32.mrf.mxu0
      %v2154 = vadd.f32 %v2125, %v2153
      %2155 = vdwg.mxu0
      %2156 = vmatpush.msra.mxu0 %v1919
      %2157 = vmatpush.msra.mxu0 %v1917
      %2158 = vmatpush.msra.mxu0 %v1915
      %2159 = vmatpush.msra.mxu0 %v1913
      %2160 = vmatpush.msra.mxu0 %v1911
      %2161 = vmatpush.msra.mxu0 %v1909
      %2162 = vmatpush.msra.mxu0 %v1907
      %2163 = vmatpush.msra.mxu0 %v1905
      %2164 = vmatpush.msra.mxu0 %v1903
      %2165 = vmatpush.msra.mxu0 %v1901
      %2166 = vmatpush.msra.mxu0 %v1899
      %2167 = vmatpush.msra.mxu0 %v1897
      %2168 = vmatpush.msra.mxu0 %v1895
      %2169 = vmatpush.msra.mxu0 %v1893
      %2170 = vmatpush.msra.mxu0 %v1891
      %2171 = vmatpush.msra.mxu0 %v1889
      %2172 = vmatmul.f32.gmra.mxu0 %v1492
      %v2173 = vpop.f32.mrf.mxu0
      %v2174 = vadd.f32 %v2145, %v2173
      %2175 = vmatmul.f32.gmra.mxu0 %v1501
      %v2176 = vpop.f32.mrf.mxu0
      %v2177 = vadd.f32 %v2148, %v2176
      %2178 = vmatmul.f32.gmra.mxu0 %v1510
      %v2179 = vpop.f32.mrf.mxu0
      %v2180 = vadd.f32 %v2151, %v2179
      %2181 = vmatmul.f32.gmra.mxu0 %v1519
      %v2182 = vpop.f32.mrf.mxu0
      %v2183 = vadd.f32 %v2154, %v2182
      %2184 = vdwg.mxu0
      %2185 = vmatpush.msra.mxu0 %v1951
      %2186 = vmatpush.msra.mxu0 %v1949
      %2187 = vmatpush.msra.mxu0 %v1947
      %2188 = vmatpush.msra.mxu0 %v1945
      %2189 = vmatpush.msra.mxu0 %v1943
      %2190 = vmatpush.msra.mxu0 %v1941
      %2191 = vmatpush.msra.mxu0 %v1939
      %2192 = vmatpush.msra.mxu0 %v1937
      %2193 = vmatpush.msra.mxu0 %v1935
      %2194 = vmatpush.msra.mxu0 %v1933
      %2195 = vmatpush.msra.mxu0 %v1931
      %2196 = vmatpush.msra.mxu0 %v1929
      %2197 = vmatpush.msra.mxu0 %v1927
      %2198 = vmatpush.msra.mxu0 %v1925
      %2199 = vmatpush.msra.mxu0 %v1923
      %2200 = vmatpush.msra.mxu0 %v1921
      %2201 = vmatmul.f32.gmra.mxu0 %v1493
      %v2202 = vpop.f32.mrf.mxu0
      %v2203 = vadd.f32 %v2174, %v2202
      %2204 = vmatmul.f32.gmra.mxu0 %v1502
      %v2205 = vpop.f32.mrf.mxu0
      %v2206 = vadd.f32 %v2177, %v2205
      %2207 = vmatmul.f32.gmra.mxu0 %v1511
      %v2208 = vpop.f32.mrf.mxu0
      %v2209 = vadd.f32 %v2180, %v2208
      %2210 = vmatmul.f32.gmra.mxu0 %v1520
      %v2211 = vpop.f32.mrf.mxu0
      %v2212 = vadd.f32 %v2183, %v2211
      %2213 = vdwg.mxu0
      %2214 = vmatpush.msra.mxu0 %v1696
      %2215 = vmatpush.msra.mxu0 %v1694
      %2216 = vmatpush.msra.mxu0 %v1692
      %2217 = vmatpush.msra.mxu0 %v1690
      %2218 = vmatpush.msra.mxu0 %v1688
      %2219 = vmatpush.msra.mxu0 %v1686
      %2220 = vmatpush.msra.mxu0 %v1684
      %2221 = vmatpush.msra.mxu0 %v1682
      %2222 = vmatpush.msra.mxu0 %v1680
      %2223 = vmatpush.msra.mxu0 %v1678
      %2224 = vmatpush.msra.mxu0 %v1676
      %2225 = vmatpush.msra.mxu0 %v1674
      %2226 = vmatpush.msra.mxu0 %v1672
      %2227 = vmatpush.msra.mxu0 %v1670
      %2228 = vmatpush.msra.mxu0 %v1668
      %2229 = vmatpush.msra.mxu0 %v1666
      %2230 = vmatmul.f32.gmra.mxu0 %v1485
      %v2231 = vpop.f32.mrf.mxu0
      %v2232 = vadd.f32 0.0, %v2231
      %2233 = vmatmul.f32.gmra.mxu0 %v1494
      %v2234 = vpop.f32.mrf.mxu0
      %v2235 = vadd.f32 0.0, %v2234
      %2236 = vmatmul.f32.gmra.mxu0 %v1503
      %v2237 = vpop.f32.mrf.mxu0
      %v2238 = vadd.f32 0.0, %v2237
      %2239 = vmatmul.f32.gmra.mxu0 %v1512
      %v2240 = vpop.f32.mrf.mxu0
      %v2241 = vadd.f32 0.0, %v2240
      %2242 = vdwg.mxu0
      %2243 = vmatpush.msra.mxu0 %v1728
      %2244 = vmatpush.msra.mxu0 %v1726
      %2245 = vmatpush.msra.mxu0 %v1724
      %2246 = vmatpush.msra.mxu0 %v1722
      %2247 = vmatpush.msra.mxu0 %v1720
      %2248 = vmatpush.msra.mxu0 %v1718
      %2249 = vmatpush.msra.mxu0 %v1716
      %2250 = vmatpush.msra.mxu0 %v1714
      %2251 = vmatpush.msra.mxu0 %v1712
      %2252 = vmatpush.msra.mxu0 %v1710
      %2253 = vmatpush.msra.mxu0 %v1708
      %2254 = vmatpush.msra.mxu0 %v1706
      %2255 = vmatpush.msra.mxu0 %v1704
      %2256 = vmatpush.msra.mxu0 %v1702
      %2257 = vmatpush.msra.mxu0 %v1700
      %2258 = vmatpush.msra.mxu0 %v1698
      %2259 = vmatmul.f32.gmra.mxu0 %v1486
      %v2260 = vpop.f32.mrf.mxu0
      %v2261 = vadd.f32 %v2232, %v2260
      %2262 = vmatmul.f32.gmra.mxu0 %v1495
      %v2263 = vpop.f32.mrf.mxu0
      %v2264 = vadd.f32 %v2235, %v2263
      %2265 = vmatmul.f32.gmra.mxu0 %v1504
      %v2266 = vpop.f32.mrf.mxu0
      %v2267 = vadd.f32 %v2238, %v2266
      %2268 = vmatmul.f32.gmra.mxu0 %v1513
      %v2269 = vpop.f32.mrf.mxu0
      %v2270 = vadd.f32 %v2241, %v2269
      %2271 = vdwg.mxu0
      %2272 = vmatpush.msra.mxu0 %v1760
      %2273 = vmatpush.msra.mxu0 %v1758
      %2274 = vmatpush.msra.mxu0 %v1756
      %2275 = vmatpush.msra.mxu0 %v1754
      %2276 = vmatpush.msra.mxu0 %v1752
      %2277 = vmatpush.msra.mxu0 %v1750
      %2278 = vmatpush.msra.mxu0 %v1748
      %2279 = vmatpush.msra.mxu0 %v1746
      %2280 = vmatpush.msra.mxu0 %v1744
      %2281 = vmatpush.msra.mxu0 %v1742
      %2282 = vmatpush.msra.mxu0 %v1740
      %2283 = vmatpush.msra.mxu0 %v1738
      %2284 = vmatpush.msra.mxu0 %v1736
      %2285 = vmatpush.msra.mxu0 %v1734
      %2286 = vmatpush.msra.mxu0 %v1732
      %2287 = vmatpush.msra.mxu0 %v1730
      %2288 = vmatmul.f32.gmra.mxu0 %v1487
      %v2289 = vpop.f32.mrf.mxu0
      %v2290 = vadd.f32 %v2261, %v2289
      %2291 = vmatmul.f32.gmra.mxu0 %v1496
      %v2292 = vpop.f32.mrf.mxu0
      %v2293 = vadd.f32 %v2264, %v2292
      %2294 = vmatmul.f32.gmra.mxu0 %v1505
      %v2295 = vpop.f32.mrf.mxu0
      %v2296 = vadd.f32 %v2267, %v2295
      %2297 = vmatmul.f32.gmra.mxu0 %v1514
      %v2298 = vpop.f32.mrf.mxu0
      %v2299 = vadd.f32 %v2270, %v2298
      %2300 = vdwg.mxu0
      %2301 = vmatpush.msra.mxu0 %v1792
      %2302 = vmatpush.msra.mxu0 %v1790
      %2303 = vmatpush.msra.mxu0 %v1788
      %2304 = vmatpush.msra.mxu0 %v1786
      %2305 = vmatpush.msra.mxu0 %v1784
      %2306 = vmatpush.msra.mxu0 %v1782
      %2307 = vmatpush.msra.mxu0 %v1780
      %2308 = vmatpush.msra.mxu0 %v1778
      %2309 = vmatpush.msra.mxu0 %v1776
      %2310 = vmatpush.msra.mxu0 %v1774
      %2311 = vmatpush.msra.mxu0 %v1772
      %2312 = vmatpush.msra.mxu0 %v1770
      %2313 = vmatpush.msra.mxu0 %v1768
      %2314 = vmatpush.msra.mxu0 %v1766
      %2315 = vmatpush.msra.mxu0 %v1764
      %2316 = vmatpush.msra.mxu0 %v1762
      %2317 = vmatmul.f32.gmra.mxu0 %v1488
      %v2318 = vpop.f32.mrf.mxu0
      %v2319 = vadd.f32 %v2290, %v2318
      %2320 = vmatmul.f32.gmra.mxu0 %v1497
      %v2321 = vpop.f32.mrf.mxu0
      %v2322 = vadd.f32 %v2293, %v2321
      %2323 = vmatmul.f32.gmra.mxu0 %v1506
      %v2324 = vpop.f32.mrf.mxu0
      %v2325 = vadd.f32 %v2296, %v2324
      %2326 = vmatmul.f32.gmra.mxu0 %v1515
      %v2327 = vpop.f32.mrf.mxu0
      %v2328 = vadd.f32 %v2299, %v2327
      %2329 = vdwg.mxu0
      %2330 = vmatpush.msra.mxu0 %v1824
      %2331 = vmatpush.msra.mxu0 %v1822
      %2332 = vmatpush.msra.mxu0 %v1820
      %2333 = vmatpush.msra.mxu0 %v1818
      %2334 = vmatpush.msra.mxu0 %v1816
      %2335 = vmatpush.msra.mxu0 %v1814
      %2336 = vmatpush.msra.mxu0 %v1812
      %2337 = vmatpush.msra.mxu0 %v1810
      %2338 = vmatpush.msra.mxu0 %v1808
      %2339 = vmatpush.msra.mxu0 %v1806
      %2340 = vmatpush.msra.mxu0 %v1804
      %2341 = vmatpush.msra.mxu0 %v1802
      %2342 = vmatpush.msra.mxu0 %v1800
      %2343 = vmatpush.msra.mxu0 %v1798
      %2344 = vmatpush.msra.mxu0 %v1796
      %2345 = vmatpush.msra.mxu0 %v1794
      %2346 = vmatmul.f32.gmra.mxu0 %v1489
      %v2347 = vpop.f32.mrf.mxu0
      %v2348 = vadd.f32 %v2319, %v2347
      %2349 = vmatmul.f32.gmra.mxu0 %v1498
      %v2350 = vpop.f32.mrf.mxu0
      %v2351 = vadd.f32 %v2322, %v2350
      %2352 = vmatmul.f32.gmra.mxu0 %v1507
      %v2353 = vpop.f32.mrf.mxu0
      %v2354 = vadd.f32 %v2325, %v2353
      %2355 = vmatmul.f32.gmra.mxu0 %v1516
      %v2356 = vpop.f32.mrf.mxu0
      %v2357 = vadd.f32 %v2328, %v2356
      %2358 = vdwg.mxu0
      %2359 = vmatpush.msra.mxu0 %v1856
      %2360 = vmatpush.msra.mxu0 %v1854
      %2361 = vmatpush.msra.mxu0 %v1852
      %2362 = vmatpush.msra.mxu0 %v1850
      %2363 = vmatpush.msra.mxu0 %v1848
      %2364 = vmatpush.msra.mxu0 %v1846
      %2365 = vmatpush.msra.mxu0 %v1844
      %2366 = vmatpush.msra.mxu0 %v1842
      %2367 = vmatpush.msra.mxu0 %v1840
      %2368 = vmatpush.msra.mxu0 %v1838
      %2369 = vmatpush.msra.mxu0 %v1836
      %2370 = vmatpush.msra.mxu0 %v1834
      %2371 = vmatpush.msra.mxu0 %v1832
      %2372 = vmatpush.msra.mxu0 %v1830
      %2373 = vmatpush.msra.mxu0 %v1828
      %2374 = vmatpush.msra.mxu0 %v1826
      %2375 = vmatmul.f32.gmra.mxu0 %v1490
      %v2376 = vpop.f32.mrf.mxu0
      %v2377 = vadd.f32 %v2348, %v2376
      %2378 = vmatmul.f32.gmra.mxu0 %v1499
      %v2379 = vpop.f32.mrf.mxu0
      %v2380 = vadd.f32 %v2351, %v2379
      %2381 = vmatmul.f32.gmra.mxu0 %v1508
      %v2382 = vpop.f32.mrf.mxu0
      %v2383 = vadd.f32 %v2354, %v2382
      %2384 = vmatmul.f32.gmra.mxu0 %v1517
      %v2385 = vpop.f32.mrf.mxu0
      %v2386 = vadd.f32 %v2357, %v2385
      %2387 = vdwg.mxu0
      %2388 = vmatpush.msra.mxu0 %v1888
      %2389 = vmatpush.msra.mxu0 %v1886
      %2390 = vmatpush.msra.mxu0 %v1884
      %2391 = vmatpush.msra.mxu0 %v1882
      %2392 = vmatpush.msra.mxu0 %v1880
      %2393 = vmatpush.msra.mxu0 %v1878
      %2394 = vmatpush.msra.mxu0 %v1876
      %2395 = vmatpush.msra.mxu0 %v1874
      %2396 = vmatpush.msra.mxu0 %v1872
      %2397 = vmatpush.msra.mxu0 %v1870
      %2398 = vmatpush.msra.mxu0 %v1868
      %2399 = vmatpush.msra.mxu0 %v1866
      %2400 = vmatpush.msra.mxu0 %v1864
      %2401 = vmatpush.msra.mxu0 %v1862
      %2402 = vmatpush.msra.mxu0 %v1860
      %2403 = vmatpush.msra.mxu0 %v1858
      %2404 = vmatmul.f32.gmra.mxu0 %v1491
      %v2405 = vpop.f32.mrf.mxu0
      %v2406 = vadd.f32 %v2377, %v2405
      %2407 = vmatmul.f32.gmra.mxu0 %v1500
      %v2408 = vpop.f32.mrf.mxu0
      %v2409 = vadd.f32 %v2380, %v2408
      %2410 = vmatmul.f32.gmra.mxu0 %v1509
      %v2411 = vpop.f32.mrf.mxu0
      %v2412 = vadd.f32 %v2383, %v2411
      %2413 = vmatmul.f32.gmra.mxu0 %v1518
      %v2414 = vpop.f32.mrf.mxu0
      %v2415 = vadd.f32 %v2386, %v2414
      %2416 = vdwg.mxu0
      %2417 = vmatpush.msra.mxu0 %v1920
      %2418 = vmatpush.msra.mxu0 %v1918
      %2419 = vmatpush.msra.mxu0 %v1916
      %2420 = vmatpush.msra.mxu0 %v1914
      %2421 = vmatpush.msra.mxu0 %v1912
      %2422 = vmatpush.msra.mxu0 %v1910
      %2423 = vmatpush.msra.mxu0 %v1908
      %2424 = vmatpush.msra.mxu0 %v1906
      %2425 = vmatpush.msra.mxu0 %v1904
      %2426 = vmatpush.msra.mxu0 %v1902
      %2427 = vmatpush.msra.mxu0 %v1900
      %2428 = vmatpush.msra.mxu0 %v1898
      %2429 = vmatpush.msra.mxu0 %v1896
      %2430 = vmatpush.msra.mxu0 %v1894
      %2431 = vmatpush.msra.mxu0 %v1892
      %2432 = vmatpush.msra.mxu0 %v1890
      %2433 = vmatmul.f32.gmra.mxu0 %v1492
      %v2434 = vpop.f32.mrf.mxu0
      %v2435 = vadd.f32 %v2406, %v2434
      %2436 = vmatmul.f32.gmra.mxu0 %v1501
      %v2437 = vpop.f32.mrf.mxu0
      %v2438 = vadd.f32 %v2409, %v2437
      %2439 = vmatmul.f32.gmra.mxu0 %v1510
      %v2440 = vpop.f32.mrf.mxu0
      %v2441 = vadd.f32 %v2412, %v2440
      %2442 = vmatmul.f32.gmra.mxu0 %v1519
      %v2443 = vpop.f32.mrf.mxu0
      %v2444 = vadd.f32 %v2415, %v2443
      %2445 = vdwg.mxu0
      %2446 = vmatpush.msra.mxu0 %v1952
      %2447 = vmatpush.msra.mxu0 %v1950
      %2448 = vmatpush.msra.mxu0 %v1948
      %2449 = vmatpush.msra.mxu0 %v1946
      %2450 = vmatpush.msra.mxu0 %v1944
      %2451 = vmatpush.msra.mxu0 %v1942
      %2452 = vmatpush.msra.mxu0 %v1940
      %2453 = vmatpush.msra.mxu0 %v1938
      %2454 = vmatpush.msra.mxu0 %v1936
      %2455 = vmatpush.msra.mxu0 %v1934
      %2456 = vmatpush.msra.mxu0 %v1932
      %2457 = vmatpush.msra.mxu0 %v1930
      %2458 = vmatpush.msra.mxu0 %v1928
      %2459 = vmatpush.msra.mxu0 %v1926
      %2460 = vmatpush.msra.mxu0 %v1924
      %2461 = vmatpush.msra.mxu0 %v1922
      %2462 = vmatmul.f32.gmra.mxu0 %v1493
      %v2463 = vpop.f32.mrf.mxu0
      %v2464 = vadd.f32 %v2435, %v2463
      %2465 = vmatmul.f32.gmra.mxu0 %v1502
      %v2466 = vpop.f32.mrf.mxu0
      %v2467 = vadd.f32 %v2438, %v2466
      %2468 = vmatmul.f32.gmra.mxu0 %v1511
      %v2469 = vpop.f32.mrf.mxu0
      %v2470 = vadd.f32 %v2441, %v2469
      %2471 = vmatmul.f32.gmra.mxu0 %v1520
      %v2472 = vpop.f32.mrf.mxu0
      %v2473 = vadd.f32 %v2444, %v2472
      %2474 = vdwg.mxu0
      %v2475 = vld [vmem:[%s6] sm:$0x3]
      %v2477 = vperm.slane %v2475, 0
      %v2478 = vperm.slane %v2475, 1
      %v2481 = vmul.f32 %v2203, %v2477
      %v2482 = vmul.f32 %v2464, %v2478
      %v2483 = vmul.f32 %v2206, %v2477
      %v2484 = vmul.f32 %v2467, %v2478
      %v2485 = vmul.f32 %v2209, %v2477
      %v2486 = vmul.f32 %v2470, %v2478
      %v2487 = vmul.f32 %v2212, %v2477
      %v2488 = vmul.f32 %v2473, %v2478
      %v2489 = vld [vmem:[%s7] sm:$0x3]
      %v2491 = vperm.slane %v2489, 0
      %v2492 = vperm.slane %v2489, 1
      %v2495 = vadd.f32 %v2481, %v2491
      %v2496 = vadd.f32 %v2482, %v2492
      %v2497 = vadd.f32 %v2483, %v2491
      %v2498 = vadd.f32 %v2484, %v2492
      %v2499 = vadd.f32 %v2485, %v2491
      %v2500 = vadd.f32 %v2486, %v2492
      %v2501 = vadd.f32 %v2487, %v2491
      %v2502 = vadd.f32 %v2488, %v2492
      %vm2503 = vcmp.ge.f32.partialorder %v2495, 0.0
      %vm2504 = vcmp.ge.f32.partialorder %v2496, 0.0
      %vm2505 = vcmp.ge.f32.partialorder %v2497, 0.0
      %vm2506 = vcmp.ge.f32.partialorder %v2498, 0.0
      %vm2507 = vcmp.ge.f32.partialorder %v2499, 0.0
      %vm2508 = vcmp.ge.f32.partialorder %v2500, 0.0
      %vm2509 = vcmp.ge.f32.partialorder %v2501, 0.0
      %vm2510 = vcmp.ge.f32.partialorder %v2502, 0.0
      %v2511 = vmul.f32 %v2495, 0.01
      %v2512 = vmul.f32 %v2496, 0.01
      %v2513 = vmul.f32 %v2497, 0.01
      %v2514 = vmul.f32 %v2498, 0.01
      %v2515 = vmul.f32 %v2499, 0.01
      %v2516 = vmul.f32 %v2500, 0.01
      %v2517 = vmul.f32 %v2501, 0.01
      %v2518 = vmul.f32 %v2502, 0.01
      %v2519 = vsel %vm2503, %v2495, %v2511
      %v2520 = vsel %vm2504, %v2496, %v2512
      %v2521 = vsel %vm2505, %v2497, %v2513
      %v2522 = vsel %vm2506, %v2498, %v2514
      %v2523 = vsel %vm2507, %v2499, %v2515
      %v2524 = vsel %vm2508, %v2500, %v2516
      %v2525 = vsel %vm2509, %v2501, %v2517
      %v2526 = vsel %vm2510, %v2502, %v2518
      %2527 = vst [vmem:[#allocation4] sm:$0xff] %v2519
      %2528 = vst [vmem:[#allocation4 + $0x8] sm:$0xff] %v2520
      %2529 = vst [vmem:[#allocation4 + $0x10] sm:$0xff] %v2521
      %2530 = vst [vmem:[#allocation4 + $0x18] sm:$0xff] %v2522
      %2531 = vst [vmem:[#allocation4 + $0x20] sm:$0xff] %v2523
      %2532 = vst [vmem:[#allocation4 + $0x28] sm:$0xff] %v2524
      %2533 = vst [vmem:[#allocation4 + $0x30] sm:$0xff] %v2525
      %2534 = vst [vmem:[#allocation4 + $0x38] sm:$0xff] %v2526
      %2535 = vst [vmem:[#allocation5 + $0x90] sm:$0xff] 0.0
      %2536 = vst [vmem:[#allocation5 + $0x98] sm:$0xff] 0.0
      %2537 = vst [vmem:[#allocation5 + $0xa0] sm:$0xff] 0.0
      %2538 = vst [vmem:[#allocation5 + $0xa8] sm:$0xff] 0.0
      %2539 = vst [vmem:[#allocation5 + $0xb0] sm:$0xff] 0.0
      %2540 = vst [vmem:[#allocation5 + $0xb8] sm:$0xff] 0.0
      %2541 = vst [vmem:[#allocation5 + $0xc0] sm:$0xff] 0.0
      %2542 = vst [vmem:[#allocation5 + $0xc8] sm:$0xff] 0.0
      %2543 = vst [vmem:[#allocation5 + $0xd0] sm:$0xff] 0.0
      %2544 = vst [vmem:[#allocation5 + $0xd8] sm:$0xff] 0.0
      %2545 = vst [vmem:[#allocation5 + $0xe0] sm:$0xff] 0.0
      %2546 = vst [vmem:[#allocation5 + $0xe8] sm:$0xff] 0.0
      %2547 = vst [vmem:[#allocation5 + $0xf0] sm:$0xff] 0.0
      %2548 = vst [vmem:[#allocation5 + $0xf8] sm:$0xff] 0.0
      %2549 = vst [vmem:[#allocation5 + $0x100] sm:$0xff] 0.0
      %2550 = vst [vmem:[#allocation5 + $0x108] sm:$0xff] 0.0
      %2551 = vst [vmem:[#allocation5 + $0x110] sm:$0xff] 0.0
      %2552 = vst [vmem:[#allocation5 + $0x118] sm:$0xff] 0.0
      %v2553 = vld [vmem:[#allocation4] sm:$0xff]
      %v2554 = vld [vmem:[#allocation4 + $0x8] sm:$0xff]
      %v2555 = vld [vmem:[#allocation4 + $0x10] sm:$0x3]
      %v2556 = vld [vmem:[#allocation4 + $0x18] sm:$0x3]
      %2557 = vst [vmem:[#allocation5] sm:$0xff] %v2553
      %2558 = vst [vmem:[#allocation5 + $0x8] sm:$0xff] %v2554
      %2559 = vst [vmem:[#allocation5 + $0x90] sm:$0x3] %v2555
      %2560 = vst [vmem:[#allocation5 + $0x98] sm:$0x3] %v2556
      %v2561 = vld [vmem:[#allocation4] sm:$0xfe]
      %v2562 = vld [vmem:[#allocation4 + $0x8] sm:$0xfe]
      %v2563 = vld [vmem:[#allocation4 + $0x10] sm:$0x7]
      %v2564 = vld [vmem:[#allocation4 + $0x18] sm:$0x7]
      %vm2569 = vcmask 1046528
      %v2570 = vrot.slane %v2561, 1
      %v2571 = vrot.slane %v2563, 1
      %v2572 = vsel %vm2569, %v2570, %v2571
      %v2573 = vrot.slane %v2562, 1
      %v2574 = vrot.slane %v2564, 1
      %v2575 = vsel %vm2569, %v2573, %v2574
      %2580 = vst [vmem:[#allocation5 + $0x10] sm:$0xff] %v2572
      %2581 = vst [vmem:[#allocation5 + $0x18] sm:$0xff] %v2575
      %2582 = vst [vmem:[#allocation5 + $0xa0] sm:$0x3] %v2571
      %2583 = vst [vmem:[#allocation5 + $0xa8] sm:$0x3] %v2574
      %v2584 = vld [vmem:[#allocation4] sm:$0xfc]
      %v2585 = vld [vmem:[#allocation4 + $0x8] sm:$0xfc]
      %v2586 = vld [vmem:[#allocation4 + $0x10] sm:$0xf]
      %v2587 = vld [vmem:[#allocation4 + $0x18] sm:$0xf]
      %vm2592 = vcmask 1045504
      %v2593 = vrot.slane %v2584, 2
      %v2594 = vrot.slane %v2586, 2
      %v2595 = vsel %vm2592, %v2593, %v2594
      %v2596 = vrot.slane %v2585, 2
      %v2597 = vrot.slane %v2587, 2
      %v2598 = vsel %vm2592, %v2596, %v2597
      %2603 = vst [vmem:[#allocation5 + $0x20] sm:$0xff] %v2595
      %2604 = vst [vmem:[#allocation5 + $0x28] sm:$0xff] %v2598
      %2605 = vst [vmem:[#allocation5 + $0xb0] sm:$0x3] %v2594
      %2606 = vst [vmem:[#allocation5 + $0xb8] sm:$0x3] %v2597
      %v2607 = vld [vmem:[#allocation4 + $0x10] sm:$0xff]
      %v2608 = vld [vmem:[#allocation4 + $0x18] sm:$0xff]
      %v2609 = vld [vmem:[#allocation4 + $0x20] sm:$0x3]
      %v2610 = vld [vmem:[#allocation4 + $0x28] sm:$0x3]
      %2611 = vst [vmem:[#allocation5 + $0x30] sm:$0xff] %v2607
      %2612 = vst [vmem:[#allocation5 + $0x38] sm:$0xff] %v2608
      %2613 = vst [vmem:[#allocation5 + $0xc0] sm:$0x3] %v2609
      %2614 = vst [vmem:[#allocation5 + $0xc8] sm:$0x3] %v2610
      %v2615 = vld [vmem:[#allocation4 + $0x10] sm:$0xfe]
      %v2616 = vld [vmem:[#allocation4 + $0x18] sm:$0xfe]
      %v2617 = vld [vmem:[#allocation4 + $0x20] sm:$0x7]
      %v2618 = vld [vmem:[#allocation4 + $0x28] sm:$0x7]
      %v2623 = vrot.slane %v2615, 1
      %v2624 = vrot.slane %v2617, 1
      %v2625 = vsel %vm2569, %v2623, %v2624
      %v2626 = vrot.slane %v2616, 1
      %v2627 = vrot.slane %v2618, 1
      %v2628 = vsel %vm2569, %v2626, %v2627
      %2633 = vst [vmem:[#allocation5 + $0x40] sm:$0xff] %v2625
      %2634 = vst [vmem:[#allocation5 + $0x48] sm:$0xff] %v2628
      %2635 = vst [vmem:[#allocation5 + $0xd0] sm:$0x3] %v2624
      %2636 = vst [vmem:[#allocation5 + $0xd8] sm:$0x3] %v2627
      %v2637 = vld [vmem:[#allocation4 + $0x10] sm:$0xfc]
      %v2638 = vld [vmem:[#allocation4 + $0x18] sm:$0xfc]
      %v2639 = vld [vmem:[#allocation4 + $0x20] sm:$0xf]
      %v2640 = vld [vmem:[#allocation4 + $0x28] sm:$0xf]
      %v2645 = vrot.slane %v2637, 2
      %v2646 = vrot.slane %v2639, 2
      %v2647 = vsel %vm2592, %v2645, %v2646
      %v2648 = vrot.slane %v2638, 2
      %v2649 = vrot.slane %v2640, 2
      %v2650 = vsel %vm2592, %v2648, %v2649
      %2655 = vst [vmem:[#allocation5 + $0x50] sm:$0xff] %v2647
      %2656 = vst [vmem:[#allocation5 + $0x58] sm:$0xff] %v2650
      %2657 = vst [vmem:[#allocation5 + $0xe0] sm:$0x3] %v2646
      %2658 = vst [vmem:[#allocation5 + $0xe8] sm:$0x3] %v2649
      %v2659 = vld [vmem:[#allocation4 + $0x20] sm:$0xff]
      %v2660 = vld [vmem:[#allocation4 + $0x28] sm:$0xff]
      %v2661 = vld [vmem:[#allocation4 + $0x30] sm:$0x3]
      %v2662 = vld [vmem:[#allocation4 + $0x38] sm:$0x3]
      %2663 = vst [vmem:[#allocation5 + $0x60] sm:$0xff] %v2659
      %2664 = vst [vmem:[#allocation5 + $0x68] sm:$0xff] %v2660
      %2665 = vst [vmem:[#allocation5 + $0xf0] sm:$0x3] %v2661
      %2666 = vst [vmem:[#allocation5 + $0xf8] sm:$0x3] %v2662
      %v2667 = vld [vmem:[#allocation4 + $0x20] sm:$0xfe]
      %v2668 = vld [vmem:[#allocation4 + $0x28] sm:$0xfe]
      %v2669 = vld [vmem:[#allocation4 + $0x30] sm:$0x7]
      %v2670 = vld [vmem:[#allocation4 + $0x38] sm:$0x7]
      %v2675 = vrot.slane %v2667, 1
      %v2676 = vrot.slane %v2669, 1
      %v2677 = vsel %vm2569, %v2675, %v2676
      %v2678 = vrot.slane %v2668, 1
      %v2679 = vrot.slane %v2670, 1
      %v2680 = vsel %vm2569, %v2678, %v2679
      %2685 = vst [vmem:[#allocation5 + $0x70] sm:$0xff] %v2677
      %2686 = vst [vmem:[#allocation5 + $0x78] sm:$0xff] %v2680
      %2687 = vst [vmem:[#allocation5 + $0x100] sm:$0x3] %v2676
      %2688 = vst [vmem:[#allocation5 + $0x108] sm:$0x3] %v2679
      %v2689 = vld [vmem:[#allocation4 + $0x20] sm:$0xfc]
      %v2690 = vld [vmem:[#allocation4 + $0x28] sm:$0xfc]
      %v2691 = vld [vmem:[#allocation4 + $0x30] sm:$0xf]
      %v2692 = vld [vmem:[#allocation4 + $0x38] sm:$0xf]
      %v2697 = vrot.slane %v2689, 2
      %v2698 = vrot.slane %v2691, 2
      %v2699 = vsel %vm2592, %v2697, %v2698
      %v2700 = vrot.slane %v2690, 2
      %v2701 = vrot.slane %v2692, 2
      %v2702 = vsel %vm2592, %v2700, %v2701
      %2707 = vst [vmem:[#allocation5 + $0x80] sm:$0xff] %v2699
      %2708 = vst [vmem:[#allocation5 + $0x88] sm:$0xff] %v2702
      %2709 = vst [vmem:[#allocation5 + $0x110] sm:$0x3] %v2698
      %2710 = vst [vmem:[#allocation5 + $0x118] sm:$0x3] %v2701
      %v2711 = vld [vmem:[#allocation5] sm:$0xff]
      %v2712 = vld [vmem:[#allocation5 + $0x8] sm:$0xff]
      %v2713 = vld [vmem:[#allocation5 + $0x10] sm:$0xff]
      %v2714 = vld [vmem:[#allocation5 + $0x18] sm:$0xff]
      %v2715 = vld [vmem:[#allocation5 + $0x20] sm:$0xff]
      %v2716 = vld [vmem:[#allocation5 + $0x28] sm:$0xff]
      %v2717 = vld [vmem:[#allocation5 + $0x30] sm:$0xff]
      %v2718 = vld [vmem:[#allocation5 + $0x38] sm:$0xff]
      %v2719 = vld [vmem:[#allocation5 + $0x40] sm:$0xff]
      %v2720 = vld [vmem:[#allocation5 + $0x48] sm:$0xff]
      %v2721 = vld [vmem:[#allocation5 + $0x50] sm:$0xff]
      %v2722 = vld [vmem:[#allocation5 + $0x58] sm:$0xff]
      %v2723 = vld [vmem:[#allocation5 + $0x60] sm:$0xff]
      %v2724 = vld [vmem:[#allocation5 + $0x68] sm:$0xff]
      %v2725 = vld [vmem:[#allocation5 + $0x70] sm:$0xff]
      %v2726 = vld [vmem:[#allocation5 + $0x78] sm:$0xff]
      %v2727 = vld [vmem:[#allocation5 + $0x80] sm:$0xff]
      %v2728 = vld [vmem:[#allocation5 + $0x88] sm:$0xff]
      %v2729 = vld [vmem:[#allocation5 + $0x90] sm:$0xff]
      %v2730 = vld [vmem:[#allocation5 + $0x98] sm:$0xff]
      %v2731 = vld [vmem:[#allocation5 + $0xa0] sm:$0xff]
      %v2732 = vld [vmem:[#allocation5 + $0xa8] sm:$0xff]
      %v2733 = vld [vmem:[#allocation5 + $0xb0] sm:$0xff]
      %v2734 = vld [vmem:[#allocation5 + $0xb8] sm:$0xff]
      %v2735 = vld [vmem:[#allocation5 + $0xc0] sm:$0xff]
      %v2736 = vld [vmem:[#allocation5 + $0xc8] sm:$0xff]
      %v2737 = vld [vmem:[#allocation5 + $0xd0] sm:$0xff]
      %v2738 = vld [vmem:[#allocation5 + $0xd8] sm:$0xff]
      %v2739 = vld [vmem:[#allocation5 + $0xe0] sm:$0xff]
      %v2740 = vld [vmem:[#allocation5 + $0xe8] sm:$0xff]
      %v2741 = vld [vmem:[#allocation5 + $0xf0] sm:$0xff]
      %v2742 = vld [vmem:[#allocation5 + $0xf8] sm:$0xff]
      %v2743 = vld [vmem:[#allocation5 + $0x100] sm:$0xff]
      %v2744 = vld [vmem:[#allocation5 + $0x108] sm:$0xff]
      %v2745 = vld [vmem:[#allocation5 + $0x110] sm:$0xff]
      %v2746 = vld [vmem:[#allocation5 + $0x118] sm:$0xff]
      %v2747 = vld [vmem:[%s8] sm:$0xff]
      %v2748 = vld [vmem:[%s8 + $0x8] sm:$0xff]
      %v2749 = vld [vmem:[%s8 + $0x10] sm:$0xff]
      %v2750 = vld [vmem:[%s8 + $0x18] sm:$0xff]
      %v2751 = vld [vmem:[%s8 + $0x20] sm:$0xff]
      %v2752 = vld [vmem:[%s8 + $0x28] sm:$0xff]
      %v2753 = vld [vmem:[%s8 + $0x30] sm:$0xff]
      %v2754 = vld [vmem:[%s8 + $0x38] sm:$0xff]
      %v2755 = vld [vmem:[%s8 + $0x40] sm:$0xff]
      %v2756 = vld [vmem:[%s8 + $0x48] sm:$0xff]
      %v2757 = vld [vmem:[%s8 + $0x50] sm:$0xff]
      %v2758 = vld [vmem:[%s8 + $0x58] sm:$0xff]
      %v2759 = vld [vmem:[%s8 + $0x60] sm:$0xff]
      %v2760 = vld [vmem:[%s8 + $0x68] sm:$0xff]
      %v2761 = vld [vmem:[%s8 + $0x70] sm:$0xff]
      %v2762 = vld [vmem:[%s8 + $0x78] sm:$0xff]
      %v2763 = vld [vmem:[%s8 + $0x80] sm:$0xff]
      %v2764 = vld [vmem:[%s8 + $0x88] sm:$0xff]
      %v2765 = vld [vmem:[%s8 + $0x90] sm:$0xff]
      %v2766 = vld [vmem:[%s8 + $0x98] sm:$0xff]
      %v2767 = vld [vmem:[%s8 + $0xa0] sm:$0xff]
      %v2768 = vld [vmem:[%s8 + $0xa8] sm:$0xff]
      %v2769 = vld [vmem:[%s8 + $0xb0] sm:$0xff]
      %v2770 = vld [vmem:[%s8 + $0xb8] sm:$0xff]
      %v2771 = vld [vmem:[%s8 + $0xc0] sm:$0xff]
      %v2772 = vld [vmem:[%s8 + $0xc8] sm:$0xff]
      %v2773 = vld [vmem:[%s8 + $0xd0] sm:$0xff]
      %v2774 = vld [vmem:[%s8 + $0xd8] sm:$0xff]
      %v2775 = vld [vmem:[%s8 + $0xe0] sm:$0xff]
      %v2776 = vld [vmem:[%s8 + $0xe8] sm:$0xff]
      %v2777 = vld [vmem:[%s8 + $0xf0] sm:$0xff]
      %v2778 = vld [vmem:[%s8 + $0xf8] sm:$0xff]
      %v2779 = vld [vmem:[%s8 + $0x100] sm:$0xff]
      %v2780 = vld [vmem:[%s8 + $0x108] sm:$0xff]
      %v2781 = vld [vmem:[%s8 + $0x110] sm:$0xff]
      %v2782 = vld [vmem:[%s8 + $0x118] sm:$0xff]
      %v2783 = vld [vmem:[%s8 + $0x120] sm:$0xff]
      %v2784 = vld [vmem:[%s8 + $0x128] sm:$0xff]
      %v2785 = vld [vmem:[%s8 + $0x130] sm:$0xff]
      %v2786 = vld [vmem:[%s8 + $0x138] sm:$0xff]
      %v2787 = vld [vmem:[%s8 + $0x140] sm:$0xff]
      %v2788 = vld [vmem:[%s8 + $0x148] sm:$0xff]
      %v2789 = vld [vmem:[%s8 + $0x150] sm:$0xff]
      %v2790 = vld [vmem:[%s8 + $0x158] sm:$0xff]
      %v2791 = vld [vmem:[%s8 + $0x160] sm:$0xff]
      %v2792 = vld [vmem:[%s8 + $0x168] sm:$0xff]
      %v2793 = vld [vmem:[%s8 + $0x170] sm:$0xff]
      %v2794 = vld [vmem:[%s8 + $0x178] sm:$0xff]
      %v2795 = vld [vmem:[%s8 + $0x180] sm:$0xff]
      %v2796 = vld [vmem:[%s8 + $0x188] sm:$0xff]
      %v2797 = vld [vmem:[%s8 + $0x190] sm:$0xff]
      %v2798 = vld [vmem:[%s8 + $0x198] sm:$0xff]
      %v2799 = vld [vmem:[%s8 + $0x1a0] sm:$0xff]
      %v2800 = vld [vmem:[%s8 + $0x1a8] sm:$0xff]
      %v2801 = vld [vmem:[%s8 + $0x1b0] sm:$0xff]
      %v2802 = vld [vmem:[%s8 + $0x1b8] sm:$0xff]
      %v2803 = vld [vmem:[%s8 + $0x1c0] sm:$0xff]
      %v2804 = vld [vmem:[%s8 + $0x1c8] sm:$0xff]
      %v2805 = vld [vmem:[%s8 + $0x1d0] sm:$0xff]
      %v2806 = vld [vmem:[%s8 + $0x1d8] sm:$0xff]
      %v2807 = vld [vmem:[%s8 + $0x1e0] sm:$0xff]
      %v2808 = vld [vmem:[%s8 + $0x1e8] sm:$0xff]
      %v2809 = vld [vmem:[%s8 + $0x1f0] sm:$0xff]
      %v2810 = vld [vmem:[%s8 + $0x1f8] sm:$0xff]
      %v2811 = vld [vmem:[%s8 + $0x200] sm:$0xff]
      %v2812 = vld [vmem:[%s8 + $0x208] sm:$0xff]
      %v2813 = vld [vmem:[%s8 + $0x210] sm:$0xff]
      %v2814 = vld [vmem:[%s8 + $0x218] sm:$0xff]
      %v2815 = vld [vmem:[%s8 + $0x220] sm:$0xff]
      %v2816 = vld [vmem:[%s8 + $0x228] sm:$0xff]
      %v2817 = vld [vmem:[%s8 + $0x230] sm:$0xff]
      %v2818 = vld [vmem:[%s8 + $0x238] sm:$0xff]
      %v2819 = vld [vmem:[%s8 + $0x240] sm:$0xff]
      %v2820 = vld [vmem:[%s8 + $0x248] sm:$0xff]
      %v2821 = vld [vmem:[%s8 + $0x250] sm:$0xff]
      %v2822 = vld [vmem:[%s8 + $0x258] sm:$0xff]
      %v2823 = vld [vmem:[%s8 + $0x260] sm:$0xff]
      %v2824 = vld [vmem:[%s8 + $0x268] sm:$0xff]
      %v2825 = vld [vmem:[%s8 + $0x270] sm:$0xff]
      %v2826 = vld [vmem:[%s8 + $0x278] sm:$0xff]
      %v2827 = vld [vmem:[%s8 + $0x280] sm:$0xff]
      %v2828 = vld [vmem:[%s8 + $0x288] sm:$0xff]
      %v2829 = vld [vmem:[%s8 + $0x290] sm:$0xff]
      %v2830 = vld [vmem:[%s8 + $0x298] sm:$0xff]
      %v2831 = vld [vmem:[%s8 + $0x2a0] sm:$0xff]
      %v2832 = vld [vmem:[%s8 + $0x2a8] sm:$0xff]
      %v2833 = vld [vmem:[%s8 + $0x2b0] sm:$0xff]
      %v2834 = vld [vmem:[%s8 + $0x2b8] sm:$0xff]
      %v2835 = vld [vmem:[%s8 + $0x2c0] sm:$0xff]
      %v2836 = vld [vmem:[%s8 + $0x2c8] sm:$0xff]
      %v2837 = vld [vmem:[%s8 + $0x2d0] sm:$0xff]
      %v2838 = vld [vmem:[%s8 + $0x2d8] sm:$0xff]
      %v2839 = vld [vmem:[%s8 + $0x2e0] sm:$0xff]
      %v2840 = vld [vmem:[%s8 + $0x2e8] sm:$0xff]
      %v2841 = vld [vmem:[%s8 + $0x2f0] sm:$0xff]
      %v2842 = vld [vmem:[%s8 + $0x2f8] sm:$0xff]
      %v2843 = vld [vmem:[%s8 + $0x300] sm:$0xff]
      %v2844 = vld [vmem:[%s8 + $0x308] sm:$0xff]
      %v2845 = vld [vmem:[%s8 + $0x310] sm:$0xff]
      %v2846 = vld [vmem:[%s8 + $0x318] sm:$0xff]
      %v2847 = vld [vmem:[%s8 + $0x320] sm:$0xff]
      %v2848 = vld [vmem:[%s8 + $0x328] sm:$0xff]
      %v2849 = vld [vmem:[%s8 + $0x330] sm:$0xff]
      %v2850 = vld [vmem:[%s8 + $0x338] sm:$0xff]
      %v2851 = vld [vmem:[%s8 + $0x340] sm:$0xff]
      %v2852 = vld [vmem:[%s8 + $0x348] sm:$0xff]
      %v2853 = vld [vmem:[%s8 + $0x350] sm:$0xff]
      %v2854 = vld [vmem:[%s8 + $0x358] sm:$0xff]
      %v2855 = vld [vmem:[%s8 + $0x360] sm:$0xff]
      %v2856 = vld [vmem:[%s8 + $0x368] sm:$0xff]
      %v2857 = vld [vmem:[%s8 + $0x370] sm:$0xff]
      %v2858 = vld [vmem:[%s8 + $0x378] sm:$0xff]
      %v2859 = vld [vmem:[%s8 + $0x380] sm:$0xff]
      %v2860 = vld [vmem:[%s8 + $0x388] sm:$0xff]
      %v2861 = vld [vmem:[%s8 + $0x390] sm:$0xff]
      %v2862 = vld [vmem:[%s8 + $0x398] sm:$0xff]
      %v2863 = vld [vmem:[%s8 + $0x3a0] sm:$0xff]
      %v2864 = vld [vmem:[%s8 + $0x3a8] sm:$0xff]
      %v2865 = vld [vmem:[%s8 + $0x3b0] sm:$0xff]
      %v2866 = vld [vmem:[%s8 + $0x3b8] sm:$0xff]
      %v2867 = vld [vmem:[%s8 + $0x3c0] sm:$0xff]
      %v2868 = vld [vmem:[%s8 + $0x3c8] sm:$0xff]
      %v2869 = vld [vmem:[%s8 + $0x3d0] sm:$0xff]
      %v2870 = vld [vmem:[%s8 + $0x3d8] sm:$0xff]
      %v2871 = vld [vmem:[%s8 + $0x3e0] sm:$0xff]
      %v2872 = vld [vmem:[%s8 + $0x3e8] sm:$0xff]
      %v2873 = vld [vmem:[%s8 + $0x3f0] sm:$0xff]
      %v2874 = vld [vmem:[%s8 + $0x3f8] sm:$0xff]
      %v2875 = vld [vmem:[%s8 + $0x400] sm:$0xff]
      %v2876 = vld [vmem:[%s8 + $0x408] sm:$0xff]
      %v2877 = vld [vmem:[%s8 + $0x410] sm:$0xff]
      %v2878 = vld [vmem:[%s8 + $0x418] sm:$0xff]
      %v2879 = vld [vmem:[%s8 + $0x420] sm:$0xff]
      %v2880 = vld [vmem:[%s8 + $0x428] sm:$0xff]
      %v2881 = vld [vmem:[%s8 + $0x430] sm:$0xff]
      %v2882 = vld [vmem:[%s8 + $0x438] sm:$0xff]
      %v2883 = vld [vmem:[%s8 + $0x440] sm:$0xff]
      %v2884 = vld [vmem:[%s8 + $0x448] sm:$0xff]
      %v2885 = vld [vmem:[%s8 + $0x450] sm:$0xff]
      %v2886 = vld [vmem:[%s8 + $0x458] sm:$0xff]
      %v2887 = vld [vmem:[%s8 + $0x460] sm:$0xff]
      %v2888 = vld [vmem:[%s8 + $0x468] sm:$0xff]
      %v2889 = vld [vmem:[%s8 + $0x470] sm:$0xff]
      %v2890 = vld [vmem:[%s8 + $0x478] sm:$0xff]
      %v2891 = vld [vmem:[%s8 + $0x480] sm:$0xff]
      %v2892 = vld [vmem:[%s8 + $0x488] sm:$0xff]
      %v2893 = vld [vmem:[%s8 + $0x490] sm:$0xff]
      %v2894 = vld [vmem:[%s8 + $0x498] sm:$0xff]
      %v2895 = vld [vmem:[%s8 + $0x4a0] sm:$0xff]
      %v2896 = vld [vmem:[%s8 + $0x4a8] sm:$0xff]
      %v2897 = vld [vmem:[%s8 + $0x4b0] sm:$0xff]
      %v2898 = vld [vmem:[%s8 + $0x4b8] sm:$0xff]
      %v2899 = vld [vmem:[%s8 + $0x4c0] sm:$0xff]
      %v2900 = vld [vmem:[%s8 + $0x4c8] sm:$0xff]
      %v2901 = vld [vmem:[%s8 + $0x4d0] sm:$0xff]
      %v2902 = vld [vmem:[%s8 + $0x4d8] sm:$0xff]
      %v2903 = vld [vmem:[%s8 + $0x4e0] sm:$0xff]
      %v2904 = vld [vmem:[%s8 + $0x4e8] sm:$0xff]
      %v2905 = vld [vmem:[%s8 + $0x4f0] sm:$0xff]
      %v2906 = vld [vmem:[%s8 + $0x4f8] sm:$0xff]
      %v2907 = vld [vmem:[%s8 + $0x500] sm:$0xff]
      %v2908 = vld [vmem:[%s8 + $0x508] sm:$0xff]
      %v2909 = vld [vmem:[%s8 + $0x510] sm:$0xff]
      %v2910 = vld [vmem:[%s8 + $0x518] sm:$0xff]
      %v2911 = vld [vmem:[%s8 + $0x520] sm:$0xff]
      %v2912 = vld [vmem:[%s8 + $0x528] sm:$0xff]
      %v2913 = vld [vmem:[%s8 + $0x530] sm:$0xff]
      %v2914 = vld [vmem:[%s8 + $0x538] sm:$0xff]
      %v2915 = vld [vmem:[%s8 + $0x540] sm:$0xff]
      %v2916 = vld [vmem:[%s8 + $0x548] sm:$0xff]
      %v2917 = vld [vmem:[%s8 + $0x550] sm:$0xff]
      %v2918 = vld [vmem:[%s8 + $0x558] sm:$0xff]
      %v2919 = vld [vmem:[%s8 + $0x560] sm:$0xff]
      %v2920 = vld [vmem:[%s8 + $0x568] sm:$0xff]
      %v2921 = vld [vmem:[%s8 + $0x570] sm:$0xff]
      %v2922 = vld [vmem:[%s8 + $0x578] sm:$0xff]
      %v2923 = vld [vmem:[%s8 + $0x580] sm:$0xff]
      %v2924 = vld [vmem:[%s8 + $0x588] sm:$0xff]
      %v2925 = vld [vmem:[%s8 + $0x590] sm:$0xff]
      %v2926 = vld [vmem:[%s8 + $0x598] sm:$0xff]
      %v2927 = vld [vmem:[%s8 + $0x5a0] sm:$0xff]
      %v2928 = vld [vmem:[%s8 + $0x5a8] sm:$0xff]
      %v2929 = vld [vmem:[%s8 + $0x5b0] sm:$0xff]
      %v2930 = vld [vmem:[%s8 + $0x5b8] sm:$0xff]
      %v2931 = vld [vmem:[%s8 + $0x5c0] sm:$0xff]
      %v2932 = vld [vmem:[%s8 + $0x5c8] sm:$0xff]
      %v2933 = vld [vmem:[%s8 + $0x5d0] sm:$0xff]
      %v2934 = vld [vmem:[%s8 + $0x5d8] sm:$0xff]
      %v2935 = vld [vmem:[%s8 + $0x5e0] sm:$0xff]
      %v2936 = vld [vmem:[%s8 + $0x5e8] sm:$0xff]
      %v2937 = vld [vmem:[%s8 + $0x5f0] sm:$0xff]
      %v2938 = vld [vmem:[%s8 + $0x5f8] sm:$0xff]
      %v2939 = vld [vmem:[%s8 + $0x600] sm:$0xff]
      %v2940 = vld [vmem:[%s8 + $0x608] sm:$0xff]
      %v2941 = vld [vmem:[%s8 + $0x610] sm:$0xff]
      %v2942 = vld [vmem:[%s8 + $0x618] sm:$0xff]
      %v2943 = vld [vmem:[%s8 + $0x620] sm:$0xff]
      %v2944 = vld [vmem:[%s8 + $0x628] sm:$0xff]
      %v2945 = vld [vmem:[%s8 + $0x630] sm:$0xff]
      %v2946 = vld [vmem:[%s8 + $0x638] sm:$0xff]
      %v2947 = vld [vmem:[%s8 + $0x640] sm:$0xff]
      %v2948 = vld [vmem:[%s8 + $0x648] sm:$0xff]
      %v2949 = vld [vmem:[%s8 + $0x650] sm:$0xff]
      %v2950 = vld [vmem:[%s8 + $0x658] sm:$0xff]
      %v2951 = vld [vmem:[%s8 + $0x660] sm:$0xff]
      %v2952 = vld [vmem:[%s8 + $0x668] sm:$0xff]
      %v2953 = vld [vmem:[%s8 + $0x670] sm:$0xff]
      %v2954 = vld [vmem:[%s8 + $0x678] sm:$0xff]
      %v2955 = vld [vmem:[%s8 + $0x680] sm:$0xff]
      %v2956 = vld [vmem:[%s8 + $0x688] sm:$0xff]
      %v2957 = vld [vmem:[%s8 + $0x690] sm:$0xff]
      %v2958 = vld [vmem:[%s8 + $0x698] sm:$0xff]
      %v2959 = vld [vmem:[%s8 + $0x6a0] sm:$0xff]
      %v2960 = vld [vmem:[%s8 + $0x6a8] sm:$0xff]
      %v2961 = vld [vmem:[%s8 + $0x6b0] sm:$0xff]
      %v2962 = vld [vmem:[%s8 + $0x6b8] sm:$0xff]
      %v2963 = vld [vmem:[%s8 + $0x6c0] sm:$0xff]
      %v2964 = vld [vmem:[%s8 + $0x6c8] sm:$0xff]
      %v2965 = vld [vmem:[%s8 + $0x6d0] sm:$0xff]
      %v2966 = vld [vmem:[%s8 + $0x6d8] sm:$0xff]
      %v2967 = vld [vmem:[%s8 + $0x6e0] sm:$0xff]
      %v2968 = vld [vmem:[%s8 + $0x6e8] sm:$0xff]
      %v2969 = vld [vmem:[%s8 + $0x6f0] sm:$0xff]
      %v2970 = vld [vmem:[%s8 + $0x6f8] sm:$0xff]
      %v2971 = vld [vmem:[%s8 + $0x700] sm:$0xff]
      %v2972 = vld [vmem:[%s8 + $0x708] sm:$0xff]
      %v2973 = vld [vmem:[%s8 + $0x710] sm:$0xff]
      %v2974 = vld [vmem:[%s8 + $0x718] sm:$0xff]
      %v2975 = vld [vmem:[%s8 + $0x720] sm:$0xff]
      %v2976 = vld [vmem:[%s8 + $0x728] sm:$0xff]
      %v2977 = vld [vmem:[%s8 + $0x730] sm:$0xff]
      %v2978 = vld [vmem:[%s8 + $0x738] sm:$0xff]
      %v2979 = vld [vmem:[%s8 + $0x740] sm:$0xff]
      %v2980 = vld [vmem:[%s8 + $0x748] sm:$0xff]
      %v2981 = vld [vmem:[%s8 + $0x750] sm:$0xff]
      %v2982 = vld [vmem:[%s8 + $0x758] sm:$0xff]
      %v2983 = vld [vmem:[%s8 + $0x760] sm:$0xff]
      %v2984 = vld [vmem:[%s8 + $0x768] sm:$0xff]
      %v2985 = vld [vmem:[%s8 + $0x770] sm:$0xff]
      %v2986 = vld [vmem:[%s8 + $0x778] sm:$0xff]
      %v2987 = vld [vmem:[%s8 + $0x780] sm:$0xff]
      %v2988 = vld [vmem:[%s8 + $0x788] sm:$0xff]
      %v2989 = vld [vmem:[%s8 + $0x790] sm:$0xff]
      %v2990 = vld [vmem:[%s8 + $0x798] sm:$0xff]
      %v2991 = vld [vmem:[%s8 + $0x7a0] sm:$0xff]
      %v2992 = vld [vmem:[%s8 + $0x7a8] sm:$0xff]
      %v2993 = vld [vmem:[%s8 + $0x7b0] sm:$0xff]
      %v2994 = vld [vmem:[%s8 + $0x7b8] sm:$0xff]
      %v2995 = vld [vmem:[%s8 + $0x7c0] sm:$0xff]
      %v2996 = vld [vmem:[%s8 + $0x7c8] sm:$0xff]
      %v2997 = vld [vmem:[%s8 + $0x7d0] sm:$0xff]
      %v2998 = vld [vmem:[%s8 + $0x7d8] sm:$0xff]
      %v2999 = vld [vmem:[%s8 + $0x7e0] sm:$0xff]
      %v3000 = vld [vmem:[%s8 + $0x7e8] sm:$0xff]
      %v3001 = vld [vmem:[%s8 + $0x7f0] sm:$0xff]
      %v3002 = vld [vmem:[%s8 + $0x7f8] sm:$0xff]
      %v3003 = vld [vmem:[%s8 + $0x800] sm:$0xff]
      %v3004 = vld [vmem:[%s8 + $0x808] sm:$0xff]
      %v3005 = vld [vmem:[%s8 + $0x810] sm:$0xff]
      %v3006 = vld [vmem:[%s8 + $0x818] sm:$0xff]
      %v3007 = vld [vmem:[%s8 + $0x820] sm:$0xff]
      %v3008 = vld [vmem:[%s8 + $0x828] sm:$0xff]
      %v3009 = vld [vmem:[%s8 + $0x830] sm:$0xff]
      %v3010 = vld [vmem:[%s8 + $0x838] sm:$0xff]
      %v3011 = vld [vmem:[%s8 + $0x840] sm:$0xff]
      %v3012 = vld [vmem:[%s8 + $0x848] sm:$0xff]
      %v3013 = vld [vmem:[%s8 + $0x850] sm:$0xff]
      %v3014 = vld [vmem:[%s8 + $0x858] sm:$0xff]
      %v3015 = vld [vmem:[%s8 + $0x860] sm:$0xff]
      %v3016 = vld [vmem:[%s8 + $0x868] sm:$0xff]
      %v3017 = vld [vmem:[%s8 + $0x870] sm:$0xff]
      %v3018 = vld [vmem:[%s8 + $0x878] sm:$0xff]
      %v3019 = vld [vmem:[%s8 + $0x880] sm:$0xff]
      %v3020 = vld [vmem:[%s8 + $0x888] sm:$0xff]
      %v3021 = vld [vmem:[%s8 + $0x890] sm:$0xff]
      %v3022 = vld [vmem:[%s8 + $0x898] sm:$0xff]
      %v3023 = vld [vmem:[%s8 + $0x8a0] sm:$0xff]
      %v3024 = vld [vmem:[%s8 + $0x8a8] sm:$0xff]
      %v3025 = vld [vmem:[%s8 + $0x8b0] sm:$0xff]
      %v3026 = vld [vmem:[%s8 + $0x8b8] sm:$0xff]
      %v3027 = vld [vmem:[%s8 + $0x8c0] sm:$0xff]
      %v3028 = vld [vmem:[%s8 + $0x8c8] sm:$0xff]
      %v3029 = vld [vmem:[%s8 + $0x8d0] sm:$0xff]
      %v3030 = vld [vmem:[%s8 + $0x8d8] sm:$0xff]
      %v3031 = vld [vmem:[%s8 + $0x8e0] sm:$0xff]
      %v3032 = vld [vmem:[%s8 + $0x8e8] sm:$0xff]
      %v3033 = vld [vmem:[%s8 + $0x8f0] sm:$0xff]
      %v3034 = vld [vmem:[%s8 + $0x8f8] sm:$0xff]
      %v3035 = vld [vmem:[%s8 + $0x900] sm:$0xff]
      %v3036 = vld [vmem:[%s8 + $0x908] sm:$0xff]
      %v3037 = vld [vmem:[%s8 + $0x910] sm:$0xff]
      %v3038 = vld [vmem:[%s8 + $0x918] sm:$0xff]
      %v3039 = vld [vmem:[%s8 + $0x920] sm:$0xff]
      %v3040 = vld [vmem:[%s8 + $0x928] sm:$0xff]
      %v3041 = vld [vmem:[%s8 + $0x930] sm:$0xff]
      %v3042 = vld [vmem:[%s8 + $0x938] sm:$0xff]
      %v3043 = vld [vmem:[%s8 + $0x940] sm:$0xff]
      %v3044 = vld [vmem:[%s8 + $0x948] sm:$0xff]
      %v3045 = vld [vmem:[%s8 + $0x950] sm:$0xff]
      %v3046 = vld [vmem:[%s8 + $0x958] sm:$0xff]
      %v3047 = vld [vmem:[%s8 + $0x960] sm:$0xff]
      %v3048 = vld [vmem:[%s8 + $0x968] sm:$0xff]
      %v3049 = vld [vmem:[%s8 + $0x970] sm:$0xff]
      %v3050 = vld [vmem:[%s8 + $0x978] sm:$0xff]
      %v3051 = vld [vmem:[%s8 + $0x980] sm:$0xff]
      %v3052 = vld [vmem:[%s8 + $0x988] sm:$0xff]
      %v3053 = vld [vmem:[%s8 + $0x990] sm:$0xff]
      %v3054 = vld [vmem:[%s8 + $0x998] sm:$0xff]
      %v3055 = vld [vmem:[%s8 + $0x9a0] sm:$0xff]
      %v3056 = vld [vmem:[%s8 + $0x9a8] sm:$0xff]
      %v3057 = vld [vmem:[%s8 + $0x9b0] sm:$0xff]
      %v3058 = vld [vmem:[%s8 + $0x9b8] sm:$0xff]
      %v3059 = vld [vmem:[%s8 + $0x9c0] sm:$0xff]
      %v3060 = vld [vmem:[%s8 + $0x9c8] sm:$0xff]
      %v3061 = vld [vmem:[%s8 + $0x9d0] sm:$0xff]
      %v3062 = vld [vmem:[%s8 + $0x9d8] sm:$0xff]
      %v3063 = vld [vmem:[%s8 + $0x9e0] sm:$0xff]
      %v3064 = vld [vmem:[%s8 + $0x9e8] sm:$0xff]
      %v3065 = vld [vmem:[%s8 + $0x9f0] sm:$0xff]
      %v3066 = vld [vmem:[%s8 + $0x9f8] sm:$0xff]
      %v3067 = vld [vmem:[%s8 + $0xa00] sm:$0xff]
      %v3068 = vld [vmem:[%s8 + $0xa08] sm:$0xff]
      %v3069 = vld [vmem:[%s8 + $0xa10] sm:$0xff]
      %v3070 = vld [vmem:[%s8 + $0xa18] sm:$0xff]
      %v3071 = vld [vmem:[%s8 + $0xa20] sm:$0xff]
      %v3072 = vld [vmem:[%s8 + $0xa28] sm:$0xff]
      %v3073 = vld [vmem:[%s8 + $0xa30] sm:$0xff]
      %v3074 = vld [vmem:[%s8 + $0xa38] sm:$0xff]
      %v3075 = vld [vmem:[%s8 + $0xa40] sm:$0xff]
      %v3076 = vld [vmem:[%s8 + $0xa48] sm:$0xff]
      %v3077 = vld [vmem:[%s8 + $0xa50] sm:$0xff]
      %v3078 = vld [vmem:[%s8 + $0xa58] sm:$0xff]
      %v3079 = vld [vmem:[%s8 + $0xa60] sm:$0xff]
      %v3080 = vld [vmem:[%s8 + $0xa68] sm:$0xff]
      %v3081 = vld [vmem:[%s8 + $0xa70] sm:$0xff]
      %v3082 = vld [vmem:[%s8 + $0xa78] sm:$0xff]
      %v3083 = vld [vmem:[%s8 + $0xa80] sm:$0xff]
      %v3084 = vld [vmem:[%s8 + $0xa88] sm:$0xff]
      %v3085 = vld [vmem:[%s8 + $0xa90] sm:$0xff]
      %v3086 = vld [vmem:[%s8 + $0xa98] sm:$0xff]
      %v3087 = vld [vmem:[%s8 + $0xaa0] sm:$0xff]
      %v3088 = vld [vmem:[%s8 + $0xaa8] sm:$0xff]
      %v3089 = vld [vmem:[%s8 + $0xab0] sm:$0xff]
      %v3090 = vld [vmem:[%s8 + $0xab8] sm:$0xff]
      %v3091 = vld [vmem:[%s8 + $0xac0] sm:$0xff]
      %v3092 = vld [vmem:[%s8 + $0xac8] sm:$0xff]
      %v3093 = vld [vmem:[%s8 + $0xad0] sm:$0xff]
      %v3094 = vld [vmem:[%s8 + $0xad8] sm:$0xff]
      %v3095 = vld [vmem:[%s8 + $0xae0] sm:$0xff]
      %v3096 = vld [vmem:[%s8 + $0xae8] sm:$0xff]
      %v3097 = vld [vmem:[%s8 + $0xaf0] sm:$0xff]
      %v3098 = vld [vmem:[%s8 + $0xaf8] sm:$0xff]
      %v3099 = vld [vmem:[%s8 + $0xb00] sm:$0xff]
      %v3100 = vld [vmem:[%s8 + $0xb08] sm:$0xff]
      %v3101 = vld [vmem:[%s8 + $0xb10] sm:$0xff]
      %v3102 = vld [vmem:[%s8 + $0xb18] sm:$0xff]
      %v3103 = vld [vmem:[%s8 + $0xb20] sm:$0xff]
      %v3104 = vld [vmem:[%s8 + $0xb28] sm:$0xff]
      %v3105 = vld [vmem:[%s8 + $0xb30] sm:$0xff]
      %v3106 = vld [vmem:[%s8 + $0xb38] sm:$0xff]
      %v3107 = vld [vmem:[%s8 + $0xb40] sm:$0xff]
      %v3108 = vld [vmem:[%s8 + $0xb48] sm:$0xff]
      %v3109 = vld [vmem:[%s8 + $0xb50] sm:$0xff]
      %v3110 = vld [vmem:[%s8 + $0xb58] sm:$0xff]
      %v3111 = vld [vmem:[%s8 + $0xb60] sm:$0xff]
      %v3112 = vld [vmem:[%s8 + $0xb68] sm:$0xff]
      %v3113 = vld [vmem:[%s8 + $0xb70] sm:$0xff]
      %v3114 = vld [vmem:[%s8 + $0xb78] sm:$0xff]
      %v3115 = vld [vmem:[%s8 + $0xb80] sm:$0xff]
      %v3116 = vld [vmem:[%s8 + $0xb88] sm:$0xff]
      %v3117 = vld [vmem:[%s8 + $0xb90] sm:$0xff]
      %v3118 = vld [vmem:[%s8 + $0xb98] sm:$0xff]
      %v3119 = vld [vmem:[%s8 + $0xba0] sm:$0xff]
      %v3120 = vld [vmem:[%s8 + $0xba8] sm:$0xff]
      %v3121 = vld [vmem:[%s8 + $0xbb0] sm:$0xff]
      %v3122 = vld [vmem:[%s8 + $0xbb8] sm:$0xff]
      %v3123 = vld [vmem:[%s8 + $0xbc0] sm:$0xff]
      %v3124 = vld [vmem:[%s8 + $0xbc8] sm:$0xff]
      %v3125 = vld [vmem:[%s8 + $0xbd0] sm:$0xff]
      %v3126 = vld [vmem:[%s8 + $0xbd8] sm:$0xff]
      %v3127 = vld [vmem:[%s8 + $0xbe0] sm:$0xff]
      %v3128 = vld [vmem:[%s8 + $0xbe8] sm:$0xff]
      %v3129 = vld [vmem:[%s8 + $0xbf0] sm:$0xff]
      %v3130 = vld [vmem:[%s8 + $0xbf8] sm:$0xff]
      %v3131 = vld [vmem:[%s8 + $0xc00] sm:$0xff]
      %v3132 = vld [vmem:[%s8 + $0xc08] sm:$0xff]
      %v3133 = vld [vmem:[%s8 + $0xc10] sm:$0xff]
      %v3134 = vld [vmem:[%s8 + $0xc18] sm:$0xff]
      %v3135 = vld [vmem:[%s8 + $0xc20] sm:$0xff]
      %v3136 = vld [vmem:[%s8 + $0xc28] sm:$0xff]
      %v3137 = vld [vmem:[%s8 + $0xc30] sm:$0xff]
      %v3138 = vld [vmem:[%s8 + $0xc38] sm:$0xff]
      %v3139 = vld [vmem:[%s8 + $0xc40] sm:$0xff]
      %v3140 = vld [vmem:[%s8 + $0xc48] sm:$0xff]
      %v3141 = vld [vmem:[%s8 + $0xc50] sm:$0xff]
      %v3142 = vld [vmem:[%s8 + $0xc58] sm:$0xff]
      %v3143 = vld [vmem:[%s8 + $0xc60] sm:$0xff]
      %v3144 = vld [vmem:[%s8 + $0xc68] sm:$0xff]
      %v3145 = vld [vmem:[%s8 + $0xc70] sm:$0xff]
      %v3146 = vld [vmem:[%s8 + $0xc78] sm:$0xff]
      %v3147 = vld [vmem:[%s8 + $0xc80] sm:$0xff]
      %v3148 = vld [vmem:[%s8 + $0xc88] sm:$0xff]
      %v3149 = vld [vmem:[%s8 + $0xc90] sm:$0xff]
      %v3150 = vld [vmem:[%s8 + $0xc98] sm:$0xff]
      %v3151 = vld [vmem:[%s8 + $0xca0] sm:$0xff]
      %v3152 = vld [vmem:[%s8 + $0xca8] sm:$0xff]
      %v3153 = vld [vmem:[%s8 + $0xcb0] sm:$0xff]
      %v3154 = vld [vmem:[%s8 + $0xcb8] sm:$0xff]
      %v3155 = vld [vmem:[%s8 + $0xcc0] sm:$0xff]
      %v3156 = vld [vmem:[%s8 + $0xcc8] sm:$0xff]
      %v3157 = vld [vmem:[%s8 + $0xcd0] sm:$0xff]
      %v3158 = vld [vmem:[%s8 + $0xcd8] sm:$0xff]
      %v3159 = vld [vmem:[%s8 + $0xce0] sm:$0xff]
      %v3160 = vld [vmem:[%s8 + $0xce8] sm:$0xff]
      %v3161 = vld [vmem:[%s8 + $0xcf0] sm:$0xff]
      %v3162 = vld [vmem:[%s8 + $0xcf8] sm:$0xff]
      %v3163 = vld [vmem:[%s8 + $0xd00] sm:$0xff]
      %v3164 = vld [vmem:[%s8 + $0xd08] sm:$0xff]
      %v3165 = vld [vmem:[%s8 + $0xd10] sm:$0xff]
      %v3166 = vld [vmem:[%s8 + $0xd18] sm:$0xff]
      %v3167 = vld [vmem:[%s8 + $0xd20] sm:$0xff]
      %v3168 = vld [vmem:[%s8 + $0xd28] sm:$0xff]
      %v3169 = vld [vmem:[%s8 + $0xd30] sm:$0xff]
      %v3170 = vld [vmem:[%s8 + $0xd38] sm:$0xff]
      %v3171 = vld [vmem:[%s8 + $0xd40] sm:$0xff]
      %v3172 = vld [vmem:[%s8 + $0xd48] sm:$0xff]
      %v3173 = vld [vmem:[%s8 + $0xd50] sm:$0xff]
      %v3174 = vld [vmem:[%s8 + $0xd58] sm:$0xff]
      %v3175 = vld [vmem:[%s8 + $0xd60] sm:$0xff]
      %v3176 = vld [vmem:[%s8 + $0xd68] sm:$0xff]
      %v3177 = vld [vmem:[%s8 + $0xd70] sm:$0xff]
      %v3178 = vld [vmem:[%s8 + $0xd78] sm:$0xff]
      %v3179 = vld [vmem:[%s8 + $0xd80] sm:$0xff]
      %v3180 = vld [vmem:[%s8 + $0xd88] sm:$0xff]
      %v3181 = vld [vmem:[%s8 + $0xd90] sm:$0xff]
      %v3182 = vld [vmem:[%s8 + $0xd98] sm:$0xff]
      %v3183 = vld [vmem:[%s8 + $0xda0] sm:$0xff]
      %v3184 = vld [vmem:[%s8 + $0xda8] sm:$0xff]
      %v3185 = vld [vmem:[%s8 + $0xdb0] sm:$0xff]
      %v3186 = vld [vmem:[%s8 + $0xdb8] sm:$0xff]
      %v3187 = vld [vmem:[%s8 + $0xdc0] sm:$0xff]
      %v3188 = vld [vmem:[%s8 + $0xdc8] sm:$0xff]
      %v3189 = vld [vmem:[%s8 + $0xdd0] sm:$0xff]
      %v3190 = vld [vmem:[%s8 + $0xdd8] sm:$0xff]
      %v3191 = vld [vmem:[%s8 + $0xde0] sm:$0xff]
      %v3192 = vld [vmem:[%s8 + $0xde8] sm:$0xff]
      %v3193 = vld [vmem:[%s8 + $0xdf0] sm:$0xff]
      %v3194 = vld [vmem:[%s8 + $0xdf8] sm:$0xff]
      %v3195 = vld [vmem:[%s8 + $0xe00] sm:$0xff]
      %v3196 = vld [vmem:[%s8 + $0xe08] sm:$0xff]
      %v3197 = vld [vmem:[%s8 + $0xe10] sm:$0xff]
      %v3198 = vld [vmem:[%s8 + $0xe18] sm:$0xff]
      %v3199 = vld [vmem:[%s8 + $0xe20] sm:$0xff]
      %v3200 = vld [vmem:[%s8 + $0xe28] sm:$0xff]
      %v3201 = vld [vmem:[%s8 + $0xe30] sm:$0xff]
      %v3202 = vld [vmem:[%s8 + $0xe38] sm:$0xff]
      %v3203 = vld [vmem:[%s8 + $0xe40] sm:$0xff]
      %v3204 = vld [vmem:[%s8 + $0xe48] sm:$0xff]
      %v3205 = vld [vmem:[%s8 + $0xe50] sm:$0xff]
      %v3206 = vld [vmem:[%s8 + $0xe58] sm:$0xff]
      %v3207 = vld [vmem:[%s8 + $0xe60] sm:$0xff]
      %v3208 = vld [vmem:[%s8 + $0xe68] sm:$0xff]
      %v3209 = vld [vmem:[%s8 + $0xe70] sm:$0xff]
      %v3210 = vld [vmem:[%s8 + $0xe78] sm:$0xff]
      %v3211 = vld [vmem:[%s8 + $0xe80] sm:$0xff]
      %v3212 = vld [vmem:[%s8 + $0xe88] sm:$0xff]
      %v3213 = vld [vmem:[%s8 + $0xe90] sm:$0xff]
      %v3214 = vld [vmem:[%s8 + $0xe98] sm:$0xff]
      %v3215 = vld [vmem:[%s8 + $0xea0] sm:$0xff]
      %v3216 = vld [vmem:[%s8 + $0xea8] sm:$0xff]
      %v3217 = vld [vmem:[%s8 + $0xeb0] sm:$0xff]
      %v3218 = vld [vmem:[%s8 + $0xeb8] sm:$0xff]
      %v3219 = vld [vmem:[%s8 + $0xec0] sm:$0xff]
      %v3220 = vld [vmem:[%s8 + $0xec8] sm:$0xff]
      %v3221 = vld [vmem:[%s8 + $0xed0] sm:$0xff]
      %v3222 = vld [vmem:[%s8 + $0xed8] sm:$0xff]
      %v3223 = vld [vmem:[%s8 + $0xee0] sm:$0xff]
      %v3224 = vld [vmem:[%s8 + $0xee8] sm:$0xff]
      %v3225 = vld [vmem:[%s8 + $0xef0] sm:$0xff]
      %v3226 = vld [vmem:[%s8 + $0xef8] sm:$0xff]
      %v3227 = vld [vmem:[%s8 + $0xf00] sm:$0xff]
      %v3228 = vld [vmem:[%s8 + $0xf08] sm:$0xff]
      %v3229 = vld [vmem:[%s8 + $0xf10] sm:$0xff]
      %v3230 = vld [vmem:[%s8 + $0xf18] sm:$0xff]
      %v3231 = vld [vmem:[%s8 + $0xf20] sm:$0xff]
      %v3232 = vld [vmem:[%s8 + $0xf28] sm:$0xff]
      %v3233 = vld [vmem:[%s8 + $0xf30] sm:$0xff]
      %v3234 = vld [vmem:[%s8 + $0xf38] sm:$0xff]
      %v3235 = vld [vmem:[%s8 + $0xf40] sm:$0xff]
      %v3236 = vld [vmem:[%s8 + $0xf48] sm:$0xff]
      %v3237 = vld [vmem:[%s8 + $0xf50] sm:$0xff]
      %v3238 = vld [vmem:[%s8 + $0xf58] sm:$0xff]
      %v3239 = vld [vmem:[%s8 + $0xf60] sm:$0xff]
      %v3240 = vld [vmem:[%s8 + $0xf68] sm:$0xff]
      %v3241 = vld [vmem:[%s8 + $0xf70] sm:$0xff]
      %v3242 = vld [vmem:[%s8 + $0xf78] sm:$0xff]
      %v3243 = vld [vmem:[%s8 + $0xf80] sm:$0xff]
      %v3244 = vld [vmem:[%s8 + $0xf88] sm:$0xff]
      %v3245 = vld [vmem:[%s8 + $0xf90] sm:$0xff]
      %v3246 = vld [vmem:[%s8 + $0xf98] sm:$0xff]
      %v3247 = vld [vmem:[%s8 + $0xfa0] sm:$0xff]
      %v3248 = vld [vmem:[%s8 + $0xfa8] sm:$0xff]
      %v3249 = vld [vmem:[%s8 + $0xfb0] sm:$0xff]
      %v3250 = vld [vmem:[%s8 + $0xfb8] sm:$0xff]
      %v3251 = vld [vmem:[%s8 + $0xfc0] sm:$0xff]
      %v3252 = vld [vmem:[%s8 + $0xfc8] sm:$0xff]
      %v3253 = vld [vmem:[%s8 + $0xfd0] sm:$0xff]
      %v3254 = vld [vmem:[%s8 + $0xfd8] sm:$0xff]
      %v3255 = vld [vmem:[%s8 + $0xfe0] sm:$0xff]
      %v3256 = vld [vmem:[%s8 + $0xfe8] sm:$0xff]
      %v3257 = vld [vmem:[%s8 + $0xff0] sm:$0xff]
      %v3258 = vld [vmem:[%s8 + $0xff8] sm:$0xff]
      %v3259 = vld [vmem:[%s8 + $0x1000] sm:$0xff]
      %v3260 = vld [vmem:[%s8 + $0x1008] sm:$0xff]
      %v3261 = vld [vmem:[%s8 + $0x1010] sm:$0xff]
      %v3262 = vld [vmem:[%s8 + $0x1018] sm:$0xff]
      %v3263 = vld [vmem:[%s8 + $0x1020] sm:$0xff]
      %v3264 = vld [vmem:[%s8 + $0x1028] sm:$0xff]
      %v3265 = vld [vmem:[%s8 + $0x1030] sm:$0xff]
      %v3266 = vld [vmem:[%s8 + $0x1038] sm:$0xff]
      %v3267 = vld [vmem:[%s8 + $0x1040] sm:$0xff]
      %v3268 = vld [vmem:[%s8 + $0x1048] sm:$0xff]
      %v3269 = vld [vmem:[%s8 + $0x1050] sm:$0xff]
      %v3270 = vld [vmem:[%s8 + $0x1058] sm:$0xff]
      %v3271 = vld [vmem:[%s8 + $0x1060] sm:$0xff]
      %v3272 = vld [vmem:[%s8 + $0x1068] sm:$0xff]
      %v3273 = vld [vmem:[%s8 + $0x1070] sm:$0xff]
      %v3274 = vld [vmem:[%s8 + $0x1078] sm:$0xff]
      %v3275 = vld [vmem:[%s8 + $0x1080] sm:$0xff]
      %v3276 = vld [vmem:[%s8 + $0x1088] sm:$0xff]
      %v3277 = vld [vmem:[%s8 + $0x1090] sm:$0xff]
      %v3278 = vld [vmem:[%s8 + $0x1098] sm:$0xff]
      %v3279 = vld [vmem:[%s8 + $0x10a0] sm:$0xff]
      %v3280 = vld [vmem:[%s8 + $0x10a8] sm:$0xff]
      %v3281 = vld [vmem:[%s8 + $0x10b0] sm:$0xff]
      %v3282 = vld [vmem:[%s8 + $0x10b8] sm:$0xff]
      %v3283 = vld [vmem:[%s8 + $0x10c0] sm:$0xff]
      %v3284 = vld [vmem:[%s8 + $0x10c8] sm:$0xff]
      %v3285 = vld [vmem:[%s8 + $0x10d0] sm:$0xff]
      %v3286 = vld [vmem:[%s8 + $0x10d8] sm:$0xff]
      %v3287 = vld [vmem:[%s8 + $0x10e0] sm:$0xff]
      %v3288 = vld [vmem:[%s8 + $0x10e8] sm:$0xff]
      %v3289 = vld [vmem:[%s8 + $0x10f0] sm:$0xff]
      %v3290 = vld [vmem:[%s8 + $0x10f8] sm:$0xff]
      %v3291 = vld [vmem:[%s8 + $0x1100] sm:$0xff]
      %v3292 = vld [vmem:[%s8 + $0x1108] sm:$0xff]
      %v3293 = vld [vmem:[%s8 + $0x1110] sm:$0xff]
      %v3294 = vld [vmem:[%s8 + $0x1118] sm:$0xff]
      %v3295 = vld [vmem:[%s8 + $0x1120] sm:$0xff]
      %v3296 = vld [vmem:[%s8 + $0x1128] sm:$0xff]
      %v3297 = vld [vmem:[%s8 + $0x1130] sm:$0xff]
      %v3298 = vld [vmem:[%s8 + $0x1138] sm:$0xff]
      %v3299 = vld [vmem:[%s8 + $0x1140] sm:$0xff]
      %v3300 = vld [vmem:[%s8 + $0x1148] sm:$0xff]
      %v3301 = vld [vmem:[%s8 + $0x1150] sm:$0xff]
      %v3302 = vld [vmem:[%s8 + $0x1158] sm:$0xff]
      %v3303 = vld [vmem:[%s8 + $0x1160] sm:$0xff]
      %v3304 = vld [vmem:[%s8 + $0x1168] sm:$0xff]
      %v3305 = vld [vmem:[%s8 + $0x1170] sm:$0xff]
      %v3306 = vld [vmem:[%s8 + $0x1178] sm:$0xff]
      %v3307 = vld [vmem:[%s8 + $0x1180] sm:$0xff]
      %v3308 = vld [vmem:[%s8 + $0x1188] sm:$0xff]
      %v3309 = vld [vmem:[%s8 + $0x1190] sm:$0xff]
      %v3310 = vld [vmem:[%s8 + $0x1198] sm:$0xff]
      %v3311 = vld [vmem:[%s8 + $0x11a0] sm:$0xff]
      %v3312 = vld [vmem:[%s8 + $0x11a8] sm:$0xff]
      %v3313 = vld [vmem:[%s8 + $0x11b0] sm:$0xff]
      %v3314 = vld [vmem:[%s8 + $0x11b8] sm:$0xff]
      %v3315 = vld [vmem:[%s8 + $0x11c0] sm:$0xff]
      %v3316 = vld [vmem:[%s8 + $0x11c8] sm:$0xff]
      %v3317 = vld [vmem:[%s8 + $0x11d0] sm:$0xff]
      %v3318 = vld [vmem:[%s8 + $0x11d8] sm:$0xff]
      %v3319 = vld [vmem:[%s8 + $0x11e0] sm:$0xff]
      %v3320 = vld [vmem:[%s8 + $0x11e8] sm:$0xff]
      %v3321 = vld [vmem:[%s8 + $0x11f0] sm:$0xff]
      %v3322 = vld [vmem:[%s8 + $0x11f8] sm:$0xff]
      %v3323 = vunpack.c.l.bf16 %v2747
      %v3324 = vunpack.c.h.bf16 %v2747
      %v3325 = vunpack.c.l.bf16 %v2748
      %v3326 = vunpack.c.h.bf16 %v2748
      %v3327 = vunpack.c.l.bf16 %v2749
      %v3328 = vunpack.c.h.bf16 %v2749
      %v3329 = vunpack.c.l.bf16 %v2750
      %v3330 = vunpack.c.h.bf16 %v2750
      %v3331 = vunpack.c.l.bf16 %v2751
      %v3332 = vunpack.c.h.bf16 %v2751
      %v3333 = vunpack.c.l.bf16 %v2752
      %v3334 = vunpack.c.h.bf16 %v2752
      %v3335 = vunpack.c.l.bf16 %v2753
      %v3336 = vunpack.c.h.bf16 %v2753
      %v3337 = vunpack.c.l.bf16 %v2754
      %v3338 = vunpack.c.h.bf16 %v2754
      %v3339 = vunpack.c.l.bf16 %v2755
      %v3340 = vunpack.c.h.bf16 %v2755
      %v3341 = vunpack.c.l.bf16 %v2756
      %v3342 = vunpack.c.h.bf16 %v2756
      %v3343 = vunpack.c.l.bf16 %v2757
      %v3344 = vunpack.c.h.bf16 %v2757
      %v3345 = vunpack.c.l.bf16 %v2758
      %v3346 = vunpack.c.h.bf16 %v2758
      %v3347 = vunpack.c.l.bf16 %v2759
      %v3348 = vunpack.c.h.bf16 %v2759
      %v3349 = vunpack.c.l.bf16 %v2760
      %v3350 = vunpack.c.h.bf16 %v2760
      %v3351 = vunpack.c.l.bf16 %v2761
      %v3352 = vunpack.c.h.bf16 %v2761
      %v3353 = vunpack.c.l.bf16 %v2762
      %v3354 = vunpack.c.h.bf16 %v2762
      %v3355 = vunpack.c.l.bf16 %v2763
      %v3356 = vunpack.c.h.bf16 %v2763
      %v3357 = vunpack.c.l.bf16 %v2764
      %v3358 = vunpack.c.h.bf16 %v2764
      %v3359 = vunpack.c.l.bf16 %v2765
      %v3360 = vunpack.c.h.bf16 %v2765
      %v3361 = vunpack.c.l.bf16 %v2766
      %v3362 = vunpack.c.h.bf16 %v2766
      %v3363 = vunpack.c.l.bf16 %v2767
      %v3364 = vunpack.c.h.bf16 %v2767
      %v3365 = vunpack.c.l.bf16 %v2768
      %v3366 = vunpack.c.h.bf16 %v2768
      %v3367 = vunpack.c.l.bf16 %v2769
      %v3368 = vunpack.c.h.bf16 %v2769
      %v3369 = vunpack.c.l.bf16 %v2770
      %v3370 = vunpack.c.h.bf16 %v2770
      %v3371 = vunpack.c.l.bf16 %v2771
      %v3372 = vunpack.c.h.bf16 %v2771
      %v3373 = vunpack.c.l.bf16 %v2772
      %v3374 = vunpack.c.h.bf16 %v2772
      %v3375 = vunpack.c.l.bf16 %v2773
      %v3376 = vunpack.c.h.bf16 %v2773
      %v3377 = vunpack.c.l.bf16 %v2774
      %v3378 = vunpack.c.h.bf16 %v2774
      %v3379 = vunpack.c.l.bf16 %v2775
      %v3380 = vunpack.c.h.bf16 %v2775
      %v3381 = vunpack.c.l.bf16 %v2776
      %v3382 = vunpack.c.h.bf16 %v2776
      %v3383 = vunpack.c.l.bf16 %v2777
      %v3384 = vunpack.c.h.bf16 %v2777
      %v3385 = vunpack.c.l.bf16 %v2778
      %v3386 = vunpack.c.h.bf16 %v2778
      %v3387 = vunpack.c.l.bf16 %v2779
      %v3388 = vunpack.c.h.bf16 %v2779
      %v3389 = vunpack.c.l.bf16 %v2780
      %v3390 = vunpack.c.h.bf16 %v2780
      %v3391 = vunpack.c.l.bf16 %v2781
      %v3392 = vunpack.c.h.bf16 %v2781
      %v3393 = vunpack.c.l.bf16 %v2782
      %v3394 = vunpack.c.h.bf16 %v2782
      %v3395 = vunpack.c.l.bf16 %v2783
      %v3396 = vunpack.c.h.bf16 %v2783
      %v3397 = vunpack.c.l.bf16 %v2784
      %v3398 = vunpack.c.h.bf16 %v2784
      %v3399 = vunpack.c.l.bf16 %v2785
      %v3400 = vunpack.c.h.bf16 %v2785
      %v3401 = vunpack.c.l.bf16 %v2786
      %v3402 = vunpack.c.h.bf16 %v2786
      %v3403 = vunpack.c.l.bf16 %v2787
      %v3404 = vunpack.c.h.bf16 %v2787
      %v3405 = vunpack.c.l.bf16 %v2788
      %v3406 = vunpack.c.h.bf16 %v2788
      %v3407 = vunpack.c.l.bf16 %v2789
      %v3408 = vunpack.c.h.bf16 %v2789
      %v3409 = vunpack.c.l.bf16 %v2790
      %v3410 = vunpack.c.h.bf16 %v2790
      %v3411 = vunpack.c.l.bf16 %v2791
      %v3412 = vunpack.c.h.bf16 %v2791
      %v3413 = vunpack.c.l.bf16 %v2792
      %v3414 = vunpack.c.h.bf16 %v2792
      %v3415 = vunpack.c.l.bf16 %v2793
      %v3416 = vunpack.c.h.bf16 %v2793
      %v3417 = vunpack.c.l.bf16 %v2794
      %v3418 = vunpack.c.h.bf16 %v2794
      %v3419 = vunpack.c.l.bf16 %v2795
      %v3420 = vunpack.c.h.bf16 %v2795
      %v3421 = vunpack.c.l.bf16 %v2796
      %v3422 = vunpack.c.h.bf16 %v2796
      %v3423 = vunpack.c.l.bf16 %v2797
      %v3424 = vunpack.c.h.bf16 %v2797
      %v3425 = vunpack.c.l.bf16 %v2798
      %v3426 = vunpack.c.h.bf16 %v2798
      %v3427 = vunpack.c.l.bf16 %v2799
      %v3428 = vunpack.c.h.bf16 %v2799
      %v3429 = vunpack.c.l.bf16 %v2800
      %v3430 = vunpack.c.h.bf16 %v2800
      %v3431 = vunpack.c.l.bf16 %v2801
      %v3432 = vunpack.c.h.bf16 %v2801
      %v3433 = vunpack.c.l.bf16 %v2802
      %v3434 = vunpack.c.h.bf16 %v2802
      %v3435 = vunpack.c.l.bf16 %v2803
      %v3436 = vunpack.c.h.bf16 %v2803
      %v3437 = vunpack.c.l.bf16 %v2804
      %v3438 = vunpack.c.h.bf16 %v2804
      %v3439 = vunpack.c.l.bf16 %v2805
      %v3440 = vunpack.c.h.bf16 %v2805
      %v3441 = vunpack.c.l.bf16 %v2806
      %v3442 = vunpack.c.h.bf16 %v2806
      %v3443 = vunpack.c.l.bf16 %v2807
      %v3444 = vunpack.c.h.bf16 %v2807
      %v3445 = vunpack.c.l.bf16 %v2808
      %v3446 = vunpack.c.h.bf16 %v2808
      %v3447 = vunpack.c.l.bf16 %v2809
      %v3448 = vunpack.c.h.bf16 %v2809
      %v3449 = vunpack.c.l.bf16 %v2810
      %v3450 = vunpack.c.h.bf16 %v2810
      %v3451 = vunpack.c.l.bf16 %v2811
      %v3452 = vunpack.c.h.bf16 %v2811
      %v3453 = vunpack.c.l.bf16 %v2812
      %v3454 = vunpack.c.h.bf16 %v2812
      %v3455 = vunpack.c.l.bf16 %v2813
      %v3456 = vunpack.c.h.bf16 %v2813
      %v3457 = vunpack.c.l.bf16 %v2814
      %v3458 = vunpack.c.h.bf16 %v2814
      %v3459 = vunpack.c.l.bf16 %v2815
      %v3460 = vunpack.c.h.bf16 %v2815
      %v3461 = vunpack.c.l.bf16 %v2816
      %v3462 = vunpack.c.h.bf16 %v2816
      %v3463 = vunpack.c.l.bf16 %v2817
      %v3464 = vunpack.c.h.bf16 %v2817
      %v3465 = vunpack.c.l.bf16 %v2818
      %v3466 = vunpack.c.h.bf16 %v2818
      %v3467 = vunpack.c.l.bf16 %v2819
      %v3468 = vunpack.c.h.bf16 %v2819
      %v3469 = vunpack.c.l.bf16 %v2820
      %v3470 = vunpack.c.h.bf16 %v2820
      %v3471 = vunpack.c.l.bf16 %v2821
      %v3472 = vunpack.c.h.bf16 %v2821
      %v3473 = vunpack.c.l.bf16 %v2822
      %v3474 = vunpack.c.h.bf16 %v2822
      %v3475 = vunpack.c.l.bf16 %v2823
      %v3476 = vunpack.c.h.bf16 %v2823
      %v3477 = vunpack.c.l.bf16 %v2824
      %v3478 = vunpack.c.h.bf16 %v2824
      %v3479 = vunpack.c.l.bf16 %v2825
      %v3480 = vunpack.c.h.bf16 %v2825
      %v3481 = vunpack.c.l.bf16 %v2826
      %v3482 = vunpack.c.h.bf16 %v2826
      %v3483 = vunpack.c.l.bf16 %v2827
      %v3484 = vunpack.c.h.bf16 %v2827
      %v3485 = vunpack.c.l.bf16 %v2828
      %v3486 = vunpack.c.h.bf16 %v2828
      %v3487 = vunpack.c.l.bf16 %v2829
      %v3488 = vunpack.c.h.bf16 %v2829
      %v3489 = vunpack.c.l.bf16 %v2830
      %v3490 = vunpack.c.h.bf16 %v2830
      %v3491 = vunpack.c.l.bf16 %v2831
      %v3492 = vunpack.c.h.bf16 %v2831
      %v3493 = vunpack.c.l.bf16 %v2832
      %v3494 = vunpack.c.h.bf16 %v2832
      %v3495 = vunpack.c.l.bf16 %v2833
      %v3496 = vunpack.c.h.bf16 %v2833
      %v3497 = vunpack.c.l.bf16 %v2834
      %v3498 = vunpack.c.h.bf16 %v2834
      %v3499 = vunpack.c.l.bf16 %v2835
      %v3500 = vunpack.c.h.bf16 %v2835
      %v3501 = vunpack.c.l.bf16 %v2836
      %v3502 = vunpack.c.h.bf16 %v2836
      %v3503 = vunpack.c.l.bf16 %v2837
      %v3504 = vunpack.c.h.bf16 %v2837
      %v3505 = vunpack.c.l.bf16 %v2838
      %v3506 = vunpack.c.h.bf16 %v2838
      %v3507 = vunpack.c.l.bf16 %v2839
      %v3508 = vunpack.c.h.bf16 %v2839
      %v3509 = vunpack.c.l.bf16 %v2840
      %v3510 = vunpack.c.h.bf16 %v2840
      %v3511 = vunpack.c.l.bf16 %v2841
      %v3512 = vunpack.c.h.bf16 %v2841
      %v3513 = vunpack.c.l.bf16 %v2842
      %v3514 = vunpack.c.h.bf16 %v2842
      %v3515 = vunpack.c.l.bf16 %v2843
      %v3516 = vunpack.c.h.bf16 %v2843
      %v3517 = vunpack.c.l.bf16 %v2844
      %v3518 = vunpack.c.h.bf16 %v2844
      %v3519 = vunpack.c.l.bf16 %v2845
      %v3520 = vunpack.c.h.bf16 %v2845
      %v3521 = vunpack.c.l.bf16 %v2846
      %v3522 = vunpack.c.h.bf16 %v2846
      %v3523 = vunpack.c.l.bf16 %v2847
      %v3524 = vunpack.c.h.bf16 %v2847
      %v3525 = vunpack.c.l.bf16 %v2848
      %v3526 = vunpack.c.h.bf16 %v2848
      %v3527 = vunpack.c.l.bf16 %v2849
      %v3528 = vunpack.c.h.bf16 %v2849
      %v3529 = vunpack.c.l.bf16 %v2850
      %v3530 = vunpack.c.h.bf16 %v2850
      %v3531 = vunpack.c.l.bf16 %v2851
      %v3532 = vunpack.c.h.bf16 %v2851
      %v3533 = vunpack.c.l.bf16 %v2852
      %v3534 = vunpack.c.h.bf16 %v2852
      %v3535 = vunpack.c.l.bf16 %v2853
      %v3536 = vunpack.c.h.bf16 %v2853
      %v3537 = vunpack.c.l.bf16 %v2854
      %v3538 = vunpack.c.h.bf16 %v2854
      %v3539 = vunpack.c.l.bf16 %v2855
      %v3540 = vunpack.c.h.bf16 %v2855
      %v3541 = vunpack.c.l.bf16 %v2856
      %v3542 = vunpack.c.h.bf16 %v2856
      %v3543 = vunpack.c.l.bf16 %v2857
      %v3544 = vunpack.c.h.bf16 %v2857
      %v3545 = vunpack.c.l.bf16 %v2858
      %v3546 = vunpack.c.h.bf16 %v2858
      %v3547 = vunpack.c.l.bf16 %v2859
      %v3548 = vunpack.c.h.bf16 %v2859
      %v3549 = vunpack.c.l.bf16 %v2860
      %v3550 = vunpack.c.h.bf16 %v2860
      %v3551 = vunpack.c.l.bf16 %v2861
      %v3552 = vunpack.c.h.bf16 %v2861
      %v3553 = vunpack.c.l.bf16 %v2862
      %v3554 = vunpack.c.h.bf16 %v2862
      %v3555 = vunpack.c.l.bf16 %v2863
      %v3556 = vunpack.c.h.bf16 %v2863
      %v3557 = vunpack.c.l.bf16 %v2864
      %v3558 = vunpack.c.h.bf16 %v2864
      %v3559 = vunpack.c.l.bf16 %v2865
      %v3560 = vunpack.c.h.bf16 %v2865
      %v3561 = vunpack.c.l.bf16 %v2866
      %v3562 = vunpack.c.h.bf16 %v2866
      %v3563 = vunpack.c.l.bf16 %v2867
      %v3564 = vunpack.c.h.bf16 %v2867
      %v3565 = vunpack.c.l.bf16 %v2868
      %v3566 = vunpack.c.h.bf16 %v2868
      %v3567 = vunpack.c.l.bf16 %v2869
      %v3568 = vunpack.c.h.bf16 %v2869
      %v3569 = vunpack.c.l.bf16 %v2870
      %v3570 = vunpack.c.h.bf16 %v2870
      %v3571 = vunpack.c.l.bf16 %v2871
      %v3572 = vunpack.c.h.bf16 %v2871
      %v3573 = vunpack.c.l.bf16 %v2872
      %v3574 = vunpack.c.h.bf16 %v2872
      %v3575 = vunpack.c.l.bf16 %v2873
      %v3576 = vunpack.c.h.bf16 %v2873
      %v3577 = vunpack.c.l.bf16 %v2874
      %v3578 = vunpack.c.h.bf16 %v2874
      %v3579 = vunpack.c.l.bf16 %v2875
      %v3580 = vunpack.c.h.bf16 %v2875
      %v3581 = vunpack.c.l.bf16 %v2876
      %v3582 = vunpack.c.h.bf16 %v2876
      %v3583 = vunpack.c.l.bf16 %v2877
      %v3584 = vunpack.c.h.bf16 %v2877
      %v3585 = vunpack.c.l.bf16 %v2878
      %v3586 = vunpack.c.h.bf16 %v2878
      %v3587 = vunpack.c.l.bf16 %v2879
      %v3588 = vunpack.c.h.bf16 %v2879
      %v3589 = vunpack.c.l.bf16 %v2880
      %v3590 = vunpack.c.h.bf16 %v2880
      %v3591 = vunpack.c.l.bf16 %v2881
      %v3592 = vunpack.c.h.bf16 %v2881
      %v3593 = vunpack.c.l.bf16 %v2882
      %v3594 = vunpack.c.h.bf16 %v2882
      %v3595 = vunpack.c.l.bf16 %v2883
      %v3596 = vunpack.c.h.bf16 %v2883
      %v3597 = vunpack.c.l.bf16 %v2884
      %v3598 = vunpack.c.h.bf16 %v2884
      %v3599 = vunpack.c.l.bf16 %v2885
      %v3600 = vunpack.c.h.bf16 %v2885
      %v3601 = vunpack.c.l.bf16 %v2886
      %v3602 = vunpack.c.h.bf16 %v2886
      %v3603 = vunpack.c.l.bf16 %v2887
      %v3604 = vunpack.c.h.bf16 %v2887
      %v3605 = vunpack.c.l.bf16 %v2888
      %v3606 = vunpack.c.h.bf16 %v2888
      %v3607 = vunpack.c.l.bf16 %v2889
      %v3608 = vunpack.c.h.bf16 %v2889
      %v3609 = vunpack.c.l.bf16 %v2890
      %v3610 = vunpack.c.h.bf16 %v2890
      %v3611 = vunpack.c.l.bf16 %v2891
      %v3612 = vunpack.c.h.bf16 %v2891
      %v3613 = vunpack.c.l.bf16 %v2892
      %v3614 = vunpack.c.h.bf16 %v2892
      %v3615 = vunpack.c.l.bf16 %v2893
      %v3616 = vunpack.c.h.bf16 %v2893
      %v3617 = vunpack.c.l.bf16 %v2894
      %v3618 = vunpack.c.h.bf16 %v2894
      %v3619 = vunpack.c.l.bf16 %v2895
      %v3620 = vunpack.c.h.bf16 %v2895
      %v3621 = vunpack.c.l.bf16 %v2896
      %v3622 = vunpack.c.h.bf16 %v2896
      %v3623 = vunpack.c.l.bf16 %v2897
      %v3624 = vunpack.c.h.bf16 %v2897
      %v3625 = vunpack.c.l.bf16 %v2898
      %v3626 = vunpack.c.h.bf16 %v2898
      %v3627 = vunpack.c.l.bf16 %v2899
      %v3628 = vunpack.c.h.bf16 %v2899
      %v3629 = vunpack.c.l.bf16 %v2900
      %v3630 = vunpack.c.h.bf16 %v2900
      %v3631 = vunpack.c.l.bf16 %v2901
      %v3632 = vunpack.c.h.bf16 %v2901
      %v3633 = vunpack.c.l.bf16 %v2902
      %v3634 = vunpack.c.h.bf16 %v2902
      %v3635 = vunpack.c.l.bf16 %v2903
      %v3636 = vunpack.c.h.bf16 %v2903
      %v3637 = vunpack.c.l.bf16 %v2904
      %v3638 = vunpack.c.h.bf16 %v2904
      %v3639 = vunpack.c.l.bf16 %v2905
      %v3640 = vunpack.c.h.bf16 %v2905
      %v3641 = vunpack.c.l.bf16 %v2906
      %v3642 = vunpack.c.h.bf16 %v2906
      %v3643 = vunpack.c.l.bf16 %v2907
      %v3644 = vunpack.c.h.bf16 %v2907
      %v3645 = vunpack.c.l.bf16 %v2908
      %v3646 = vunpack.c.h.bf16 %v2908
      %v3647 = vunpack.c.l.bf16 %v2909
      %v3648 = vunpack.c.h.bf16 %v2909
      %v3649 = vunpack.c.l.bf16 %v2910
      %v3650 = vunpack.c.h.bf16 %v2910
      %v3651 = vunpack.c.l.bf16 %v2911
      %v3652 = vunpack.c.h.bf16 %v2911
      %v3653 = vunpack.c.l.bf16 %v2912
      %v3654 = vunpack.c.h.bf16 %v2912
      %v3655 = vunpack.c.l.bf16 %v2913
      %v3656 = vunpack.c.h.bf16 %v2913
      %v3657 = vunpack.c.l.bf16 %v2914
      %v3658 = vunpack.c.h.bf16 %v2914
      %v3659 = vunpack.c.l.bf16 %v2915
      %v3660 = vunpack.c.h.bf16 %v2915
      %v3661 = vunpack.c.l.bf16 %v2916
      %v3662 = vunpack.c.h.bf16 %v2916
      %v3663 = vunpack.c.l.bf16 %v2917
      %v3664 = vunpack.c.h.bf16 %v2917
      %v3665 = vunpack.c.l.bf16 %v2918
      %v3666 = vunpack.c.h.bf16 %v2918
      %v3667 = vunpack.c.l.bf16 %v2919
      %v3668 = vunpack.c.h.bf16 %v2919
      %v3669 = vunpack.c.l.bf16 %v2920
      %v3670 = vunpack.c.h.bf16 %v2920
      %v3671 = vunpack.c.l.bf16 %v2921
      %v3672 = vunpack.c.h.bf16 %v2921
      %v3673 = vunpack.c.l.bf16 %v2922
      %v3674 = vunpack.c.h.bf16 %v2922
      %v3675 = vunpack.c.l.bf16 %v2923
      %v3676 = vunpack.c.h.bf16 %v2923
      %v3677 = vunpack.c.l.bf16 %v2924
      %v3678 = vunpack.c.h.bf16 %v2924
      %v3679 = vunpack.c.l.bf16 %v2925
      %v3680 = vunpack.c.h.bf16 %v2925
      %v3681 = vunpack.c.l.bf16 %v2926
      %v3682 = vunpack.c.h.bf16 %v2926
      %v3683 = vunpack.c.l.bf16 %v2927
      %v3684 = vunpack.c.h.bf16 %v2927
      %v3685 = vunpack.c.l.bf16 %v2928
      %v3686 = vunpack.c.h.bf16 %v2928
      %v3687 = vunpack.c.l.bf16 %v2929
      %v3688 = vunpack.c.h.bf16 %v2929
      %v3689 = vunpack.c.l.bf16 %v2930
      %v3690 = vunpack.c.h.bf16 %v2930
      %v3691 = vunpack.c.l.bf16 %v2931
      %v3692 = vunpack.c.h.bf16 %v2931
      %v3693 = vunpack.c.l.bf16 %v2932
      %v3694 = vunpack.c.h.bf16 %v2932
      %v3695 = vunpack.c.l.bf16 %v2933
      %v3696 = vunpack.c.h.bf16 %v2933
      %v3697 = vunpack.c.l.bf16 %v2934
      %v3698 = vunpack.c.h.bf16 %v2934
      %v3699 = vunpack.c.l.bf16 %v2935
      %v3700 = vunpack.c.h.bf16 %v2935
      %v3701 = vunpack.c.l.bf16 %v2936
      %v3702 = vunpack.c.h.bf16 %v2936
      %v3703 = vunpack.c.l.bf16 %v2937
      %v3704 = vunpack.c.h.bf16 %v2937
      %v3705 = vunpack.c.l.bf16 %v2938
      %v3706 = vunpack.c.h.bf16 %v2938
      %v3707 = vunpack.c.l.bf16 %v2939
      %v3708 = vunpack.c.h.bf16 %v2939
      %v3709 = vunpack.c.l.bf16 %v2940
      %v3710 = vunpack.c.h.bf16 %v2940
      %v3711 = vunpack.c.l.bf16 %v2941
      %v3712 = vunpack.c.h.bf16 %v2941
      %v3713 = vunpack.c.l.bf16 %v2942
      %v3714 = vunpack.c.h.bf16 %v2942
      %v3715 = vunpack.c.l.bf16 %v2943
      %v3716 = vunpack.c.h.bf16 %v2943
      %v3717 = vunpack.c.l.bf16 %v2944
      %v3718 = vunpack.c.h.bf16 %v2944
      %v3719 = vunpack.c.l.bf16 %v2945
      %v3720 = vunpack.c.h.bf16 %v2945
      %v3721 = vunpack.c.l.bf16 %v2946
      %v3722 = vunpack.c.h.bf16 %v2946
      %v3723 = vunpack.c.l.bf16 %v2947
      %v3724 = vunpack.c.h.bf16 %v2947
      %v3725 = vunpack.c.l.bf16 %v2948
      %v3726 = vunpack.c.h.bf16 %v2948
      %v3727 = vunpack.c.l.bf16 %v2949
      %v3728 = vunpack.c.h.bf16 %v2949
      %v3729 = vunpack.c.l.bf16 %v2950
      %v3730 = vunpack.c.h.bf16 %v2950
      %v3731 = vunpack.c.l.bf16 %v2951
      %v3732 = vunpack.c.h.bf16 %v2951
      %v3733 = vunpack.c.l.bf16 %v2952
      %v3734 = vunpack.c.h.bf16 %v2952
      %v3735 = vunpack.c.l.bf16 %v2953
      %v3736 = vunpack.c.h.bf16 %v2953
      %v3737 = vunpack.c.l.bf16 %v2954
      %v3738 = vunpack.c.h.bf16 %v2954
      %v3739 = vunpack.c.l.bf16 %v2955
      %v3740 = vunpack.c.h.bf16 %v2955
      %v3741 = vunpack.c.l.bf16 %v2956
      %v3742 = vunpack.c.h.bf16 %v2956
      %v3743 = vunpack.c.l.bf16 %v2957
      %v3744 = vunpack.c.h.bf16 %v2957
      %v3745 = vunpack.c.l.bf16 %v2958
      %v3746 = vunpack.c.h.bf16 %v2958
      %v3747 = vunpack.c.l.bf16 %v2959
      %v3748 = vunpack.c.h.bf16 %v2959
      %v3749 = vunpack.c.l.bf16 %v2960
      %v3750 = vunpack.c.h.bf16 %v2960
      %v3751 = vunpack.c.l.bf16 %v2961
      %v3752 = vunpack.c.h.bf16 %v2961
      %v3753 = vunpack.c.l.bf16 %v2962
      %v3754 = vunpack.c.h.bf16 %v2962
      %v3755 = vunpack.c.l.bf16 %v2963
      %v3756 = vunpack.c.h.bf16 %v2963
      %v3757 = vunpack.c.l.bf16 %v2964
      %v3758 = vunpack.c.h.bf16 %v2964
      %v3759 = vunpack.c.l.bf16 %v2965
      %v3760 = vunpack.c.h.bf16 %v2965
      %v3761 = vunpack.c.l.bf16 %v2966
      %v3762 = vunpack.c.h.bf16 %v2966
      %v3763 = vunpack.c.l.bf16 %v2967
      %v3764 = vunpack.c.h.bf16 %v2967
      %v3765 = vunpack.c.l.bf16 %v2968
      %v3766 = vunpack.c.h.bf16 %v2968
      %v3767 = vunpack.c.l.bf16 %v2969
      %v3768 = vunpack.c.h.bf16 %v2969
      %v3769 = vunpack.c.l.bf16 %v2970
      %v3770 = vunpack.c.h.bf16 %v2970
      %v3771 = vunpack.c.l.bf16 %v2971
      %v3772 = vunpack.c.h.bf16 %v2971
      %v3773 = vunpack.c.l.bf16 %v2972
      %v3774 = vunpack.c.h.bf16 %v2972
      %v3775 = vunpack.c.l.bf16 %v2973
      %v3776 = vunpack.c.h.bf16 %v2973
      %v3777 = vunpack.c.l.bf16 %v2974
      %v3778 = vunpack.c.h.bf16 %v2974
      %v3779 = vunpack.c.l.bf16 %v2975
      %v3780 = vunpack.c.h.bf16 %v2975
      %v3781 = vunpack.c.l.bf16 %v2976
      %v3782 = vunpack.c.h.bf16 %v2976
      %v3783 = vunpack.c.l.bf16 %v2977
      %v3784 = vunpack.c.h.bf16 %v2977
      %v3785 = vunpack.c.l.bf16 %v2978
      %v3786 = vunpack.c.h.bf16 %v2978
      %v3787 = vunpack.c.l.bf16 %v2979
      %v3788 = vunpack.c.h.bf16 %v2979
      %v3789 = vunpack.c.l.bf16 %v2980
      %v3790 = vunpack.c.h.bf16 %v2980
      %v3791 = vunpack.c.l.bf16 %v2981
      %v3792 = vunpack.c.h.bf16 %v2981
      %v3793 = vunpack.c.l.bf16 %v2982
      %v3794 = vunpack.c.h.bf16 %v2982
      %v3795 = vunpack.c.l.bf16 %v2983
      %v3796 = vunpack.c.h.bf16 %v2983
      %v3797 = vunpack.c.l.bf16 %v2984
      %v3798 = vunpack.c.h.bf16 %v2984
      %v3799 = vunpack.c.l.bf16 %v2985
      %v3800 = vunpack.c.h.bf16 %v2985
      %v3801 = vunpack.c.l.bf16 %v2986
      %v3802 = vunpack.c.h.bf16 %v2986
      %v3803 = vunpack.c.l.bf16 %v2987
      %v3804 = vunpack.c.h.bf16 %v2987
      %v3805 = vunpack.c.l.bf16 %v2988
      %v3806 = vunpack.c.h.bf16 %v2988
      %v3807 = vunpack.c.l.bf16 %v2989
      %v3808 = vunpack.c.h.bf16 %v2989
      %v3809 = vunpack.c.l.bf16 %v2990
      %v3810 = vunpack.c.h.bf16 %v2990
      %v3811 = vunpack.c.l.bf16 %v2991
      %v3812 = vunpack.c.h.bf16 %v2991
      %v3813 = vunpack.c.l.bf16 %v2992
      %v3814 = vunpack.c.h.bf16 %v2992
      %v3815 = vunpack.c.l.bf16 %v2993
      %v3816 = vunpack.c.h.bf16 %v2993
      %v3817 = vunpack.c.l.bf16 %v2994
      %v3818 = vunpack.c.h.bf16 %v2994
      %v3819 = vunpack.c.l.bf16 %v2995
      %v3820 = vunpack.c.h.bf16 %v2995
      %v3821 = vunpack.c.l.bf16 %v2996
      %v3822 = vunpack.c.h.bf16 %v2996
      %v3823 = vunpack.c.l.bf16 %v2997
      %v3824 = vunpack.c.h.bf16 %v2997
      %v3825 = vunpack.c.l.bf16 %v2998
      %v3826 = vunpack.c.h.bf16 %v2998
      %v3827 = vunpack.c.l.bf16 %v2999
      %v3828 = vunpack.c.h.bf16 %v2999
      %v3829 = vunpack.c.l.bf16 %v3000
      %v3830 = vunpack.c.h.bf16 %v3000
      %v3831 = vunpack.c.l.bf16 %v3001
      %v3832 = vunpack.c.h.bf16 %v3001
      %v3833 = vunpack.c.l.bf16 %v3002
      %v3834 = vunpack.c.h.bf16 %v3002
      %v3835 = vunpack.c.l.bf16 %v3003
      %v3836 = vunpack.c.h.bf16 %v3003
      %v3837 = vunpack.c.l.bf16 %v3004
      %v3838 = vunpack.c.h.bf16 %v3004
      %v3839 = vunpack.c.l.bf16 %v3005
      %v3840 = vunpack.c.h.bf16 %v3005
      %v3841 = vunpack.c.l.bf16 %v3006
      %v3842 = vunpack.c.h.bf16 %v3006
      %v3843 = vunpack.c.l.bf16 %v3007
      %v3844 = vunpack.c.h.bf16 %v3007
      %v3845 = vunpack.c.l.bf16 %v3008
      %v3846 = vunpack.c.h.bf16 %v3008
      %v3847 = vunpack.c.l.bf16 %v3009
      %v3848 = vunpack.c.h.bf16 %v3009
      %v3849 = vunpack.c.l.bf16 %v3010
      %v3850 = vunpack.c.h.bf16 %v3010
      %v3851 = vunpack.c.l.bf16 %v3011
      %v3852 = vunpack.c.h.bf16 %v3011
      %v3853 = vunpack.c.l.bf16 %v3012
      %v3854 = vunpack.c.h.bf16 %v3012
      %v3855 = vunpack.c.l.bf16 %v3013
      %v3856 = vunpack.c.h.bf16 %v3013
      %v3857 = vunpack.c.l.bf16 %v3014
      %v3858 = vunpack.c.h.bf16 %v3014
      %v3859 = vunpack.c.l.bf16 %v3015
      %v3860 = vunpack.c.h.bf16 %v3015
      %v3861 = vunpack.c.l.bf16 %v3016
      %v3862 = vunpack.c.h.bf16 %v3016
      %v3863 = vunpack.c.l.bf16 %v3017
      %v3864 = vunpack.c.h.bf16 %v3017
      %v3865 = vunpack.c.l.bf16 %v3018
      %v3866 = vunpack.c.h.bf16 %v3018
      %v3867 = vunpack.c.l.bf16 %v3019
      %v3868 = vunpack.c.h.bf16 %v3019
      %v3869 = vunpack.c.l.bf16 %v3020
      %v3870 = vunpack.c.h.bf16 %v3020
      %v3871 = vunpack.c.l.bf16 %v3021
      %v3872 = vunpack.c.h.bf16 %v3021
      %v3873 = vunpack.c.l.bf16 %v3022
      %v3874 = vunpack.c.h.bf16 %v3022
      %v3875 = vunpack.c.l.bf16 %v3023
      %v3876 = vunpack.c.h.bf16 %v3023
      %v3877 = vunpack.c.l.bf16 %v3024
      %v3878 = vunpack.c.h.bf16 %v3024
      %v3879 = vunpack.c.l.bf16 %v3025
      %v3880 = vunpack.c.h.bf16 %v3025
      %v3881 = vunpack.c.l.bf16 %v3026
      %v3882 = vunpack.c.h.bf16 %v3026
      %v3883 = vunpack.c.l.bf16 %v3027
      %v3884 = vunpack.c.h.bf16 %v3027
      %v3885 = vunpack.c.l.bf16 %v3028
      %v3886 = vunpack.c.h.bf16 %v3028
      %v3887 = vunpack.c.l.bf16 %v3029
      %v3888 = vunpack.c.h.bf16 %v3029
      %v3889 = vunpack.c.l.bf16 %v3030
      %v3890 = vunpack.c.h.bf16 %v3030
      %v3891 = vunpack.c.l.bf16 %v3031
      %v3892 = vunpack.c.h.bf16 %v3031
      %v3893 = vunpack.c.l.bf16 %v3032
      %v3894 = vunpack.c.h.bf16 %v3032
      %v3895 = vunpack.c.l.bf16 %v3033
      %v3896 = vunpack.c.h.bf16 %v3033
      %v3897 = vunpack.c.l.bf16 %v3034
      %v3898 = vunpack.c.h.bf16 %v3034
      %v3899 = vunpack.c.l.bf16 %v3035
      %v3900 = vunpack.c.h.bf16 %v3035
      %v3901 = vunpack.c.l.bf16 %v3036
      %v3902 = vunpack.c.h.bf16 %v3036
      %v3903 = vunpack.c.l.bf16 %v3037
      %v3904 = vunpack.c.h.bf16 %v3037
      %v3905 = vunpack.c.l.bf16 %v3038
      %v3906 = vunpack.c.h.bf16 %v3038
      %v3907 = vunpack.c.l.bf16 %v3039
      %v3908 = vunpack.c.h.bf16 %v3039
      %v3909 = vunpack.c.l.bf16 %v3040
      %v3910 = vunpack.c.h.bf16 %v3040
      %v3911 = vunpack.c.l.bf16 %v3041
      %v3912 = vunpack.c.h.bf16 %v3041
      %v3913 = vunpack.c.l.bf16 %v3042
      %v3914 = vunpack.c.h.bf16 %v3042
      %v3915 = vunpack.c.l.bf16 %v3043
      %v3916 = vunpack.c.h.bf16 %v3043
      %v3917 = vunpack.c.l.bf16 %v3044
      %v3918 = vunpack.c.h.bf16 %v3044
      %v3919 = vunpack.c.l.bf16 %v3045
      %v3920 = vunpack.c.h.bf16 %v3045
      %v3921 = vunpack.c.l.bf16 %v3046
      %v3922 = vunpack.c.h.bf16 %v3046
      %v3923 = vunpack.c.l.bf16 %v3047
      %v3924 = vunpack.c.h.bf16 %v3047
      %v3925 = vunpack.c.l.bf16 %v3048
      %v3926 = vunpack.c.h.bf16 %v3048
      %v3927 = vunpack.c.l.bf16 %v3049
      %v3928 = vunpack.c.h.bf16 %v3049
      %v3929 = vunpack.c.l.bf16 %v3050
      %v3930 = vunpack.c.h.bf16 %v3050
      %v3931 = vunpack.c.l.bf16 %v3051
      %v3932 = vunpack.c.h.bf16 %v3051
      %v3933 = vunpack.c.l.bf16 %v3052
      %v3934 = vunpack.c.h.bf16 %v3052
      %v3935 = vunpack.c.l.bf16 %v3053
      %v3936 = vunpack.c.h.bf16 %v3053
      %v3937 = vunpack.c.l.bf16 %v3054
      %v3938 = vunpack.c.h.bf16 %v3054
      %v3939 = vunpack.c.l.bf16 %v3055
      %v3940 = vunpack.c.h.bf16 %v3055
      %v3941 = vunpack.c.l.bf16 %v3056
      %v3942 = vunpack.c.h.bf16 %v3056
      %v3943 = vunpack.c.l.bf16 %v3057
      %v3944 = vunpack.c.h.bf16 %v3057
      %v3945 = vunpack.c.l.bf16 %v3058
      %v3946 = vunpack.c.h.bf16 %v3058
      %v3947 = vunpack.c.l.bf16 %v3059
      %v3948 = vunpack.c.h.bf16 %v3059
      %v3949 = vunpack.c.l.bf16 %v3060
      %v3950 = vunpack.c.h.bf16 %v3060
      %v3951 = vunpack.c.l.bf16 %v3061
      %v3952 = vunpack.c.h.bf16 %v3061
      %v3953 = vunpack.c.l.bf16 %v3062
      %v3954 = vunpack.c.h.bf16 %v3062
      %v3955 = vunpack.c.l.bf16 %v3063
      %v3956 = vunpack.c.h.bf16 %v3063
      %v3957 = vunpack.c.l.bf16 %v3064
      %v3958 = vunpack.c.h.bf16 %v3064
      %v3959 = vunpack.c.l.bf16 %v3065
      %v3960 = vunpack.c.h.bf16 %v3065
      %v3961 = vunpack.c.l.bf16 %v3066
      %v3962 = vunpack.c.h.bf16 %v3066
      %v3963 = vunpack.c.l.bf16 %v3067
      %v3964 = vunpack.c.h.bf16 %v3067
      %v3965 = vunpack.c.l.bf16 %v3068
      %v3966 = vunpack.c.h.bf16 %v3068
      %v3967 = vunpack.c.l.bf16 %v3069
      %v3968 = vunpack.c.h.bf16 %v3069
      %v3969 = vunpack.c.l.bf16 %v3070
      %v3970 = vunpack.c.h.bf16 %v3070
      %v3971 = vunpack.c.l.bf16 %v3071
      %v3972 = vunpack.c.h.bf16 %v3071
      %v3973 = vunpack.c.l.bf16 %v3072
      %v3974 = vunpack.c.h.bf16 %v3072
      %v3975 = vunpack.c.l.bf16 %v3073
      %v3976 = vunpack.c.h.bf16 %v3073
      %v3977 = vunpack.c.l.bf16 %v3074
      %v3978 = vunpack.c.h.bf16 %v3074
      %v3979 = vunpack.c.l.bf16 %v3075
      %v3980 = vunpack.c.h.bf16 %v3075
      %v3981 = vunpack.c.l.bf16 %v3076
      %v3982 = vunpack.c.h.bf16 %v3076
      %v3983 = vunpack.c.l.bf16 %v3077
      %v3984 = vunpack.c.h.bf16 %v3077
      %v3985 = vunpack.c.l.bf16 %v3078
      %v3986 = vunpack.c.h.bf16 %v3078
      %v3987 = vunpack.c.l.bf16 %v3079
      %v3988 = vunpack.c.h.bf16 %v3079
      %v3989 = vunpack.c.l.bf16 %v3080
      %v3990 = vunpack.c.h.bf16 %v3080
      %v3991 = vunpack.c.l.bf16 %v3081
      %v3992 = vunpack.c.h.bf16 %v3081
      %v3993 = vunpack.c.l.bf16 %v3082
      %v3994 = vunpack.c.h.bf16 %v3082
      %v3995 = vunpack.c.l.bf16 %v3083
      %v3996 = vunpack.c.h.bf16 %v3083
      %v3997 = vunpack.c.l.bf16 %v3084
      %v3998 = vunpack.c.h.bf16 %v3084
      %v3999 = vunpack.c.l.bf16 %v3085
      %v4000 = vunpack.c.h.bf16 %v3085
      %v4001 = vunpack.c.l.bf16 %v3086
      %v4002 = vunpack.c.h.bf16 %v3086
      %v4003 = vunpack.c.l.bf16 %v3087
      %v4004 = vunpack.c.h.bf16 %v3087
      %v4005 = vunpack.c.l.bf16 %v3088
      %v4006 = vunpack.c.h.bf16 %v3088
      %v4007 = vunpack.c.l.bf16 %v3089
      %v4008 = vunpack.c.h.bf16 %v3089
      %v4009 = vunpack.c.l.bf16 %v3090
      %v4010 = vunpack.c.h.bf16 %v3090
      %v4011 = vunpack.c.l.bf16 %v3091
      %v4012 = vunpack.c.h.bf16 %v3091
      %v4013 = vunpack.c.l.bf16 %v3092
      %v4014 = vunpack.c.h.bf16 %v3092
      %v4015 = vunpack.c.l.bf16 %v3093
      %v4016 = vunpack.c.h.bf16 %v3093
      %v4017 = vunpack.c.l.bf16 %v3094
      %v4018 = vunpack.c.h.bf16 %v3094
      %v4019 = vunpack.c.l.bf16 %v3095
      %v4020 = vunpack.c.h.bf16 %v3095
      %v4021 = vunpack.c.l.bf16 %v3096
      %v4022 = vunpack.c.h.bf16 %v3096
      %v4023 = vunpack.c.l.bf16 %v3097
      %v4024 = vunpack.c.h.bf16 %v3097
      %v4025 = vunpack.c.l.bf16 %v3098
      %v4026 = vunpack.c.h.bf16 %v3098
      %v4027 = vunpack.c.l.bf16 %v3099
      %v4028 = vunpack.c.h.bf16 %v3099
      %v4029 = vunpack.c.l.bf16 %v3100
      %v4030 = vunpack.c.h.bf16 %v3100
      %v4031 = vunpack.c.l.bf16 %v3101
      %v4032 = vunpack.c.h.bf16 %v3101
      %v4033 = vunpack.c.l.bf16 %v3102
      %v4034 = vunpack.c.h.bf16 %v3102
      %v4035 = vunpack.c.l.bf16 %v3103
      %v4036 = vunpack.c.h.bf16 %v3103
      %v4037 = vunpack.c.l.bf16 %v3104
      %v4038 = vunpack.c.h.bf16 %v3104
      %v4039 = vunpack.c.l.bf16 %v3105
      %v4040 = vunpack.c.h.bf16 %v3105
      %v4041 = vunpack.c.l.bf16 %v3106
      %v4042 = vunpack.c.h.bf16 %v3106
      %v4043 = vunpack.c.l.bf16 %v3107
      %v4044 = vunpack.c.h.bf16 %v3107
      %v4045 = vunpack.c.l.bf16 %v3108
      %v4046 = vunpack.c.h.bf16 %v3108
      %v4047 = vunpack.c.l.bf16 %v3109
      %v4048 = vunpack.c.h.bf16 %v3109
      %v4049 = vunpack.c.l.bf16 %v3110
      %v4050 = vunpack.c.h.bf16 %v3110
      %v4051 = vunpack.c.l.bf16 %v3111
      %v4052 = vunpack.c.h.bf16 %v3111
      %v4053 = vunpack.c.l.bf16 %v3112
      %v4054 = vunpack.c.h.bf16 %v3112
      %v4055 = vunpack.c.l.bf16 %v3113
      %v4056 = vunpack.c.h.bf16 %v3113
      %v4057 = vunpack.c.l.bf16 %v3114
      %v4058 = vunpack.c.h.bf16 %v3114
      %v4059 = vunpack.c.l.bf16 %v3115
      %v4060 = vunpack.c.h.bf16 %v3115
      %v4061 = vunpack.c.l.bf16 %v3116
      %v4062 = vunpack.c.h.bf16 %v3116
      %v4063 = vunpack.c.l.bf16 %v3117
      %v4064 = vunpack.c.h.bf16 %v3117
      %v4065 = vunpack.c.l.bf16 %v3118
      %v4066 = vunpack.c.h.bf16 %v3118
      %v4067 = vunpack.c.l.bf16 %v3119
      %v4068 = vunpack.c.h.bf16 %v3119
      %v4069 = vunpack.c.l.bf16 %v3120
      %v4070 = vunpack.c.h.bf16 %v3120
      %v4071 = vunpack.c.l.bf16 %v3121
      %v4072 = vunpack.c.h.bf16 %v3121
      %v4073 = vunpack.c.l.bf16 %v3122
      %v4074 = vunpack.c.h.bf16 %v3122
      %v4075 = vunpack.c.l.bf16 %v3123
      %v4076 = vunpack.c.h.bf16 %v3123
      %v4077 = vunpack.c.l.bf16 %v3124
      %v4078 = vunpack.c.h.bf16 %v3124
      %v4079 = vunpack.c.l.bf16 %v3125
      %v4080 = vunpack.c.h.bf16 %v3125
      %v4081 = vunpack.c.l.bf16 %v3126
      %v4082 = vunpack.c.h.bf16 %v3126
      %v4083 = vunpack.c.l.bf16 %v3127
      %v4084 = vunpack.c.h.bf16 %v3127
      %v4085 = vunpack.c.l.bf16 %v3128
      %v4086 = vunpack.c.h.bf16 %v3128
      %v4087 = vunpack.c.l.bf16 %v3129
      %v4088 = vunpack.c.h.bf16 %v3129
      %v4089 = vunpack.c.l.bf16 %v3130
      %v4090 = vunpack.c.h.bf16 %v3130
      %v4091 = vunpack.c.l.bf16 %v3131
      %v4092 = vunpack.c.h.bf16 %v3131
      %v4093 = vunpack.c.l.bf16 %v3132
      %v4094 = vunpack.c.h.bf16 %v3132
      %v4095 = vunpack.c.l.bf16 %v3133
      %v4096 = vunpack.c.h.bf16 %v3133
      %v4097 = vunpack.c.l.bf16 %v3134
      %v4098 = vunpack.c.h.bf16 %v3134
      %v4099 = vunpack.c.l.bf16 %v3135
      %v4100 = vunpack.c.h.bf16 %v3135
      %v4101 = vunpack.c.l.bf16 %v3136
      %v4102 = vunpack.c.h.bf16 %v3136
      %v4103 = vunpack.c.l.bf16 %v3137
      %v4104 = vunpack.c.h.bf16 %v3137
      %v4105 = vunpack.c.l.bf16 %v3138
      %v4106 = vunpack.c.h.bf16 %v3138
      %v4107 = vunpack.c.l.bf16 %v3139
      %v4108 = vunpack.c.h.bf16 %v3139
      %v4109 = vunpack.c.l.bf16 %v3140
      %v4110 = vunpack.c.h.bf16 %v3140
      %v4111 = vunpack.c.l.bf16 %v3141
      %v4112 = vunpack.c.h.bf16 %v3141
      %v4113 = vunpack.c.l.bf16 %v3142
      %v4114 = vunpack.c.h.bf16 %v3142
      %v4115 = vunpack.c.l.bf16 %v3143
      %v4116 = vunpack.c.h.bf16 %v3143
      %v4117 = vunpack.c.l.bf16 %v3144
      %v4118 = vunpack.c.h.bf16 %v3144
      %v4119 = vunpack.c.l.bf16 %v3145
      %v4120 = vunpack.c.h.bf16 %v3145
      %v4121 = vunpack.c.l.bf16 %v3146
      %v4122 = vunpack.c.h.bf16 %v3146
      %v4123 = vunpack.c.l.bf16 %v3147
      %v4124 = vunpack.c.h.bf16 %v3147
      %v4125 = vunpack.c.l.bf16 %v3148
      %v4126 = vunpack.c.h.bf16 %v3148
      %v4127 = vunpack.c.l.bf16 %v3149
      %v4128 = vunpack.c.h.bf16 %v3149
      %v4129 = vunpack.c.l.bf16 %v3150
      %v4130 = vunpack.c.h.bf16 %v3150
      %v4131 = vunpack.c.l.bf16 %v3151
      %v4132 = vunpack.c.h.bf16 %v3151
      %v4133 = vunpack.c.l.bf16 %v3152
      %v4134 = vunpack.c.h.bf16 %v3152
      %v4135 = vunpack.c.l.bf16 %v3153
      %v4136 = vunpack.c.h.bf16 %v3153
      %v4137 = vunpack.c.l.bf16 %v3154
      %v4138 = vunpack.c.h.bf16 %v3154
      %v4139 = vunpack.c.l.bf16 %v3155
      %v4140 = vunpack.c.h.bf16 %v3155
      %v4141 = vunpack.c.l.bf16 %v3156
      %v4142 = vunpack.c.h.bf16 %v3156
      %v4143 = vunpack.c.l.bf16 %v3157
      %v4144 = vunpack.c.h.bf16 %v3157
      %v4145 = vunpack.c.l.bf16 %v3158
      %v4146 = vunpack.c.h.bf16 %v3158
      %v4147 = vunpack.c.l.bf16 %v3159
      %v4148 = vunpack.c.h.bf16 %v3159
      %v4149 = vunpack.c.l.bf16 %v3160
      %v4150 = vunpack.c.h.bf16 %v3160
      %v4151 = vunpack.c.l.bf16 %v3161
      %v4152 = vunpack.c.h.bf16 %v3161
      %v4153 = vunpack.c.l.bf16 %v3162
      %v4154 = vunpack.c.h.bf16 %v3162
      %v4155 = vunpack.c.l.bf16 %v3163
      %v4156 = vunpack.c.h.bf16 %v3163
      %v4157 = vunpack.c.l.bf16 %v3164
      %v4158 = vunpack.c.h.bf16 %v3164
      %v4159 = vunpack.c.l.bf16 %v3165
      %v4160 = vunpack.c.h.bf16 %v3165
      %v4161 = vunpack.c.l.bf16 %v3166
      %v4162 = vunpack.c.h.bf16 %v3166
      %v4163 = vunpack.c.l.bf16 %v3167
      %v4164 = vunpack.c.h.bf16 %v3167
      %v4165 = vunpack.c.l.bf16 %v3168
      %v4166 = vunpack.c.h.bf16 %v3168
      %v4167 = vunpack.c.l.bf16 %v3169
      %v4168 = vunpack.c.h.bf16 %v3169
      %v4169 = vunpack.c.l.bf16 %v3170
      %v4170 = vunpack.c.h.bf16 %v3170
      %v4171 = vunpack.c.l.bf16 %v3171
      %v4172 = vunpack.c.h.bf16 %v3171
      %v4173 = vunpack.c.l.bf16 %v3172
      %v4174 = vunpack.c.h.bf16 %v3172
      %v4175 = vunpack.c.l.bf16 %v3173
      %v4176 = vunpack.c.h.bf16 %v3173
      %v4177 = vunpack.c.l.bf16 %v3174
      %v4178 = vunpack.c.h.bf16 %v3174
      %v4179 = vunpack.c.l.bf16 %v3175
      %v4180 = vunpack.c.h.bf16 %v3175
      %v4181 = vunpack.c.l.bf16 %v3176
      %v4182 = vunpack.c.h.bf16 %v3176
      %v4183 = vunpack.c.l.bf16 %v3177
      %v4184 = vunpack.c.h.bf16 %v3177
      %v4185 = vunpack.c.l.bf16 %v3178
      %v4186 = vunpack.c.h.bf16 %v3178
      %v4187 = vunpack.c.l.bf16 %v3179
      %v4188 = vunpack.c.h.bf16 %v3179
      %v4189 = vunpack.c.l.bf16 %v3180
      %v4190 = vunpack.c.h.bf16 %v3180
      %v4191 = vunpack.c.l.bf16 %v3181
      %v4192 = vunpack.c.h.bf16 %v3181
      %v4193 = vunpack.c.l.bf16 %v3182
      %v4194 = vunpack.c.h.bf16 %v3182
      %v4195 = vunpack.c.l.bf16 %v3183
      %v4196 = vunpack.c.h.bf16 %v3183
      %v4197 = vunpack.c.l.bf16 %v3184
      %v4198 = vunpack.c.h.bf16 %v3184
      %v4199 = vunpack.c.l.bf16 %v3185
      %v4200 = vunpack.c.h.bf16 %v3185
      %v4201 = vunpack.c.l.bf16 %v3186
      %v4202 = vunpack.c.h.bf16 %v3186
      %v4203 = vunpack.c.l.bf16 %v3187
      %v4204 = vunpack.c.h.bf16 %v3187
      %v4205 = vunpack.c.l.bf16 %v3188
      %v4206 = vunpack.c.h.bf16 %v3188
      %v4207 = vunpack.c.l.bf16 %v3189
      %v4208 = vunpack.c.h.bf16 %v3189
      %v4209 = vunpack.c.l.bf16 %v3190
      %v4210 = vunpack.c.h.bf16 %v3190
      %v4211 = vunpack.c.l.bf16 %v3191
      %v4212 = vunpack.c.h.bf16 %v3191
      %v4213 = vunpack.c.l.bf16 %v3192
      %v4214 = vunpack.c.h.bf16 %v3192
      %v4215 = vunpack.c.l.bf16 %v3193
      %v4216 = vunpack.c.h.bf16 %v3193
      %v4217 = vunpack.c.l.bf16 %v3194
      %v4218 = vunpack.c.h.bf16 %v3194
      %v4219 = vunpack.c.l.bf16 %v3195
      %v4220 = vunpack.c.h.bf16 %v3195
      %v4221 = vunpack.c.l.bf16 %v3196
      %v4222 = vunpack.c.h.bf16 %v3196
      %v4223 = vunpack.c.l.bf16 %v3197
      %v4224 = vunpack.c.h.bf16 %v3197
      %v4225 = vunpack.c.l.bf16 %v3198
      %v4226 = vunpack.c.h.bf16 %v3198
      %v4227 = vunpack.c.l.bf16 %v3199
      %v4228 = vunpack.c.h.bf16 %v3199
      %v4229 = vunpack.c.l.bf16 %v3200
      %v4230 = vunpack.c.h.bf16 %v3200
      %v4231 = vunpack.c.l.bf16 %v3201
      %v4232 = vunpack.c.h.bf16 %v3201
      %v4233 = vunpack.c.l.bf16 %v3202
      %v4234 = vunpack.c.h.bf16 %v3202
      %v4235 = vunpack.c.l.bf16 %v3203
      %v4236 = vunpack.c.h.bf16 %v3203
      %v4237 = vunpack.c.l.bf16 %v3204
      %v4238 = vunpack.c.h.bf16 %v3204
      %v4239 = vunpack.c.l.bf16 %v3205
      %v4240 = vunpack.c.h.bf16 %v3205
      %v4241 = vunpack.c.l.bf16 %v3206
      %v4242 = vunpack.c.h.bf16 %v3206
      %v4243 = vunpack.c.l.bf16 %v3207
      %v4244 = vunpack.c.h.bf16 %v3207
      %v4245 = vunpack.c.l.bf16 %v3208
      %v4246 = vunpack.c.h.bf16 %v3208
      %v4247 = vunpack.c.l.bf16 %v3209
      %v4248 = vunpack.c.h.bf16 %v3209
      %v4249 = vunpack.c.l.bf16 %v3210
      %v4250 = vunpack.c.h.bf16 %v3210
      %v4251 = vunpack.c.l.bf16 %v3211
      %v4252 = vunpack.c.h.bf16 %v3211
      %v4253 = vunpack.c.l.bf16 %v3212
      %v4254 = vunpack.c.h.bf16 %v3212
      %v4255 = vunpack.c.l.bf16 %v3213
      %v4256 = vunpack.c.h.bf16 %v3213
      %v4257 = vunpack.c.l.bf16 %v3214
      %v4258 = vunpack.c.h.bf16 %v3214
      %v4259 = vunpack.c.l.bf16 %v3215
      %v4260 = vunpack.c.h.bf16 %v3215
      %v4261 = vunpack.c.l.bf16 %v3216
      %v4262 = vunpack.c.h.bf16 %v3216
      %v4263 = vunpack.c.l.bf16 %v3217
      %v4264 = vunpack.c.h.bf16 %v3217
      %v4265 = vunpack.c.l.bf16 %v3218
      %v4266 = vunpack.c.h.bf16 %v3218
      %v4267 = vunpack.c.l.bf16 %v3219
      %v4268 = vunpack.c.h.bf16 %v3219
      %v4269 = vunpack.c.l.bf16 %v3220
      %v4270 = vunpack.c.h.bf16 %v3220
      %v4271 = vunpack.c.l.bf16 %v3221
      %v4272 = vunpack.c.h.bf16 %v3221
      %v4273 = vunpack.c.l.bf16 %v3222
      %v4274 = vunpack.c.h.bf16 %v3222
      %v4275 = vunpack.c.l.bf16 %v3223
      %v4276 = vunpack.c.h.bf16 %v3223
      %v4277 = vunpack.c.l.bf16 %v3224
      %v4278 = vunpack.c.h.bf16 %v3224
      %v4279 = vunpack.c.l.bf16 %v3225
      %v4280 = vunpack.c.h.bf16 %v3225
      %v4281 = vunpack.c.l.bf16 %v3226
      %v4282 = vunpack.c.h.bf16 %v3226
      %v4283 = vunpack.c.l.bf16 %v3227
      %v4284 = vunpack.c.h.bf16 %v3227
      %v4285 = vunpack.c.l.bf16 %v3228
      %v4286 = vunpack.c.h.bf16 %v3228
      %v4287 = vunpack.c.l.bf16 %v3229
      %v4288 = vunpack.c.h.bf16 %v3229
      %v4289 = vunpack.c.l.bf16 %v3230
      %v4290 = vunpack.c.h.bf16 %v3230
      %v4291 = vunpack.c.l.bf16 %v3231
      %v4292 = vunpack.c.h.bf16 %v3231
      %v4293 = vunpack.c.l.bf16 %v3232
      %v4294 = vunpack.c.h.bf16 %v3232
      %v4295 = vunpack.c.l.bf16 %v3233
      %v4296 = vunpack.c.h.bf16 %v3233
      %v4297 = vunpack.c.l.bf16 %v3234
      %v4298 = vunpack.c.h.bf16 %v3234
      %v4299 = vunpack.c.l.bf16 %v3235
      %v4300 = vunpack.c.h.bf16 %v3235
      %v4301 = vunpack.c.l.bf16 %v3236
      %v4302 = vunpack.c.h.bf16 %v3236
      %v4303 = vunpack.c.l.bf16 %v3237
      %v4304 = vunpack.c.h.bf16 %v3237
      %v4305 = vunpack.c.l.bf16 %v3238
      %v4306 = vunpack.c.h.bf16 %v3238
      %v4307 = vunpack.c.l.bf16 %v3239
      %v4308 = vunpack.c.h.bf16 %v3239
      %v4309 = vunpack.c.l.bf16 %v3240
      %v4310 = vunpack.c.h.bf16 %v3240
      %v4311 = vunpack.c.l.bf16 %v3241
      %v4312 = vunpack.c.h.bf16 %v3241
      %v4313 = vunpack.c.l.bf16 %v3242
      %v4314 = vunpack.c.h.bf16 %v3242
      %v4315 = vunpack.c.l.bf16 %v3243
      %v4316 = vunpack.c.h.bf16 %v3243
      %v4317 = vunpack.c.l.bf16 %v3244
      %v4318 = vunpack.c.h.bf16 %v3244
      %v4319 = vunpack.c.l.bf16 %v3245
      %v4320 = vunpack.c.h.bf16 %v3245
      %v4321 = vunpack.c.l.bf16 %v3246
      %v4322 = vunpack.c.h.bf16 %v3246
      %v4323 = vunpack.c.l.bf16 %v3247
      %v4324 = vunpack.c.h.bf16 %v3247
      %v4325 = vunpack.c.l.bf16 %v3248
      %v4326 = vunpack.c.h.bf16 %v3248
      %v4327 = vunpack.c.l.bf16 %v3249
      %v4328 = vunpack.c.h.bf16 %v3249
      %v4329 = vunpack.c.l.bf16 %v3250
      %v4330 = vunpack.c.h.bf16 %v3250
      %v4331 = vunpack.c.l.bf16 %v3251
      %v4332 = vunpack.c.h.bf16 %v3251
      %v4333 = vunpack.c.l.bf16 %v3252
      %v4334 = vunpack.c.h.bf16 %v3252
      %v4335 = vunpack.c.l.bf16 %v3253
      %v4336 = vunpack.c.h.bf16 %v3253
      %v4337 = vunpack.c.l.bf16 %v3254
      %v4338 = vunpack.c.h.bf16 %v3254
      %v4339 = vunpack.c.l.bf16 %v3255
      %v4340 = vunpack.c.h.bf16 %v3255
      %v4341 = vunpack.c.l.bf16 %v3256
      %v4342 = vunpack.c.h.bf16 %v3256
      %v4343 = vunpack.c.l.bf16 %v3257
      %v4344 = vunpack.c.h.bf16 %v3257
      %v4345 = vunpack.c.l.bf16 %v3258
      %v4346 = vunpack.c.h.bf16 %v3258
      %v4347 = vunpack.c.l.bf16 %v3259
      %v4348 = vunpack.c.h.bf16 %v3259
      %v4349 = vunpack.c.l.bf16 %v3260
      %v4350 = vunpack.c.h.bf16 %v3260
      %v4351 = vunpack.c.l.bf16 %v3261
      %v4352 = vunpack.c.h.bf16 %v3261
      %v4353 = vunpack.c.l.bf16 %v3262
      %v4354 = vunpack.c.h.bf16 %v3262
      %v4355 = vunpack.c.l.bf16 %v3263
      %v4356 = vunpack.c.h.bf16 %v3263
      %v4357 = vunpack.c.l.bf16 %v3264
      %v4358 = vunpack.c.h.bf16 %v3264
      %v4359 = vunpack.c.l.bf16 %v3265
      %v4360 = vunpack.c.h.bf16 %v3265
      %v4361 = vunpack.c.l.bf16 %v3266
      %v4362 = vunpack.c.h.bf16 %v3266
      %v4363 = vunpack.c.l.bf16 %v3267
      %v4364 = vunpack.c.h.bf16 %v3267
      %v4365 = vunpack.c.l.bf16 %v3268
      %v4366 = vunpack.c.h.bf16 %v3268
      %v4367 = vunpack.c.l.bf16 %v3269
      %v4368 = vunpack.c.h.bf16 %v3269
      %v4369 = vunpack.c.l.bf16 %v3270
      %v4370 = vunpack.c.h.bf16 %v3270
      %v4371 = vunpack.c.l.bf16 %v3271
      %v4372 = vunpack.c.h.bf16 %v3271
      %v4373 = vunpack.c.l.bf16 %v3272
      %v4374 = vunpack.c.h.bf16 %v3272
      %v4375 = vunpack.c.l.bf16 %v3273
      %v4376 = vunpack.c.h.bf16 %v3273
      %v4377 = vunpack.c.l.bf16 %v3274
      %v4378 = vunpack.c.h.bf16 %v3274
      %v4379 = vunpack.c.l.bf16 %v3275
      %v4380 = vunpack.c.h.bf16 %v3275
      %v4381 = vunpack.c.l.bf16 %v3276
      %v4382 = vunpack.c.h.bf16 %v3276
      %v4383 = vunpack.c.l.bf16 %v3277
      %v4384 = vunpack.c.h.bf16 %v3277
      %v4385 = vunpack.c.l.bf16 %v3278
      %v4386 = vunpack.c.h.bf16 %v3278
      %v4387 = vunpack.c.l.bf16 %v3279
      %v4388 = vunpack.c.h.bf16 %v3279
      %v4389 = vunpack.c.l.bf16 %v3280
      %v4390 = vunpack.c.h.bf16 %v3280
      %v4391 = vunpack.c.l.bf16 %v3281
      %v4392 = vunpack.c.h.bf16 %v3281
      %v4393 = vunpack.c.l.bf16 %v3282
      %v4394 = vunpack.c.h.bf16 %v3282
      %v4395 = vunpack.c.l.bf16 %v3283
      %v4396 = vunpack.c.h.bf16 %v3283
      %v4397 = vunpack.c.l.bf16 %v3284
      %v4398 = vunpack.c.h.bf16 %v3284
      %v4399 = vunpack.c.l.bf16 %v3285
      %v4400 = vunpack.c.h.bf16 %v3285
      %v4401 = vunpack.c.l.bf16 %v3286
      %v4402 = vunpack.c.h.bf16 %v3286
      %v4403 = vunpack.c.l.bf16 %v3287
      %v4404 = vunpack.c.h.bf16 %v3287
      %v4405 = vunpack.c.l.bf16 %v3288
      %v4406 = vunpack.c.h.bf16 %v3288
      %v4407 = vunpack.c.l.bf16 %v3289
      %v4408 = vunpack.c.h.bf16 %v3289
      %v4409 = vunpack.c.l.bf16 %v3290
      %v4410 = vunpack.c.h.bf16 %v3290
      %v4411 = vunpack.c.l.bf16 %v3291
      %v4412 = vunpack.c.h.bf16 %v3291
      %v4413 = vunpack.c.l.bf16 %v3292
      %v4414 = vunpack.c.h.bf16 %v3292
      %v4415 = vunpack.c.l.bf16 %v3293
      %v4416 = vunpack.c.h.bf16 %v3293
      %v4417 = vunpack.c.l.bf16 %v3294
      %v4418 = vunpack.c.h.bf16 %v3294
      %v4419 = vunpack.c.l.bf16 %v3295
      %v4420 = vunpack.c.h.bf16 %v3295
      %v4421 = vunpack.c.l.bf16 %v3296
      %v4422 = vunpack.c.h.bf16 %v3296
      %v4423 = vunpack.c.l.bf16 %v3297
      %v4424 = vunpack.c.h.bf16 %v3297
      %v4425 = vunpack.c.l.bf16 %v3298
      %v4426 = vunpack.c.h.bf16 %v3298
      %v4427 = vunpack.c.l.bf16 %v3299
      %v4428 = vunpack.c.h.bf16 %v3299
      %v4429 = vunpack.c.l.bf16 %v3300
      %v4430 = vunpack.c.h.bf16 %v3300
      %v4431 = vunpack.c.l.bf16 %v3301
      %v4432 = vunpack.c.h.bf16 %v3301
      %v4433 = vunpack.c.l.bf16 %v3302
      %v4434 = vunpack.c.h.bf16 %v3302
      %v4435 = vunpack.c.l.bf16 %v3303
      %v4436 = vunpack.c.h.bf16 %v3303
      %v4437 = vunpack.c.l.bf16 %v3304
      %v4438 = vunpack.c.h.bf16 %v3304
      %v4439 = vunpack.c.l.bf16 %v3305
      %v4440 = vunpack.c.h.bf16 %v3305
      %v4441 = vunpack.c.l.bf16 %v3306
      %v4442 = vunpack.c.h.bf16 %v3306
      %v4443 = vunpack.c.l.bf16 %v3307
      %v4444 = vunpack.c.h.bf16 %v3307
      %v4445 = vunpack.c.l.bf16 %v3308
      %v4446 = vunpack.c.h.bf16 %v3308
      %v4447 = vunpack.c.l.bf16 %v3309
      %v4448 = vunpack.c.h.bf16 %v3309
      %v4449 = vunpack.c.l.bf16 %v3310
      %v4450 = vunpack.c.h.bf16 %v3310
      %v4451 = vunpack.c.l.bf16 %v3311
      %v4452 = vunpack.c.h.bf16 %v3311
      %v4453 = vunpack.c.l.bf16 %v3312
      %v4454 = vunpack.c.h.bf16 %v3312
      %v4455 = vunpack.c.l.bf16 %v3313
      %v4456 = vunpack.c.h.bf16 %v3313
      %v4457 = vunpack.c.l.bf16 %v3314
      %v4458 = vunpack.c.h.bf16 %v3314
      %v4459 = vunpack.c.l.bf16 %v3315
      %v4460 = vunpack.c.h.bf16 %v3315
      %v4461 = vunpack.c.l.bf16 %v3316
      %v4462 = vunpack.c.h.bf16 %v3316
      %v4463 = vunpack.c.l.bf16 %v3317
      %v4464 = vunpack.c.h.bf16 %v3317
      %v4465 = vunpack.c.l.bf16 %v3318
      %v4466 = vunpack.c.h.bf16 %v3318
      %v4467 = vunpack.c.l.bf16 %v3319
      %v4468 = vunpack.c.h.bf16 %v3319
      %v4469 = vunpack.c.l.bf16 %v3320
      %v4470 = vunpack.c.h.bf16 %v3320
      %v4471 = vunpack.c.l.bf16 %v3321
      %v4472 = vunpack.c.h.bf16 %v3321
      %v4473 = vunpack.c.l.bf16 %v3322
      %v4474 = vunpack.c.h.bf16 %v3322
      %v4475 = vld [vmem:[%s9] sm:$0xf]
      %v4477 = vperm.slane %v4475, 0
      %v4478 = vperm.slane %v4475, 1
      %v4479 = vperm.slane %v4475, 2
      %v4480 = vperm.slane %v4475, 3
      %4485 = vmatpush.msra.mxu0 %v3383
      %4486 = vmatpush.msra.mxu0 %v3379
      %4487 = vmatpush.msra.mxu0 %v3375
      %4488 = vmatpush.msra.mxu0 %v3371
      %4489 = vmatpush.msra.mxu0 %v3367
      %4490 = vmatpush.msra.mxu0 %v3363
      %4491 = vmatpush.msra.mxu0 %v3359
      %4492 = vmatpush.msra.mxu0 %v3355
      %4493 = vmatpush.msra.mxu0 %v3351
      %4494 = vmatpush.msra.mxu0 %v3347
      %4495 = vmatpush.msra.mxu0 %v3343
      %4496 = vmatpush.msra.mxu0 %v3339
      %4497 = vmatpush.msra.mxu0 %v3335
      %4498 = vmatpush.msra.mxu0 %v3331
      %4499 = vmatpush.msra.mxu0 %v3327
      %4500 = vmatpush.msra.mxu0 %v3323
      %4501 = vmatmul.f32.gmra.mxu0 %v2711
      %v4502 = vpop.f32.mrf.mxu0
      %v4503 = vadd.f32 %v4477, %v4502
      %4504 = vmatmul.f32.gmra.mxu0 %v2729
      %v4505 = vpop.f32.mrf.mxu0
      %v4506 = vadd.f32 %v4477, %v4505
      %4507 = vdwg.mxu0
      %4508 = vmatpush.msra.mxu0 %v3447
      %4509 = vmatpush.msra.mxu0 %v3443
      %4510 = vmatpush.msra.mxu0 %v3439
      %4511 = vmatpush.msra.mxu0 %v3435
      %4512 = vmatpush.msra.mxu0 %v3431
      %4513 = vmatpush.msra.mxu0 %v3427
      %4514 = vmatpush.msra.mxu0 %v3423
      %4515 = vmatpush.msra.mxu0 %v3419
      %4516 = vmatpush.msra.mxu0 %v3415
      %4517 = vmatpush.msra.mxu0 %v3411
      %4518 = vmatpush.msra.mxu0 %v3407
      %4519 = vmatpush.msra.mxu0 %v3403
      %4520 = vmatpush.msra.mxu0 %v3399
      %4521 = vmatpush.msra.mxu0 %v3395
      %4522 = vmatpush.msra.mxu0 %v3391
      %4523 = vmatpush.msra.mxu0 %v3387
      %4524 = vmatmul.f32.gmra.mxu0 %v2712
      %v4525 = vpop.f32.mrf.mxu0
      %v4526 = vadd.f32 %v4503, %v4525
      %4527 = vmatmul.f32.gmra.mxu0 %v2730
      %v4528 = vpop.f32.mrf.mxu0
      %v4529 = vadd.f32 %v4506, %v4528
      %4530 = vdwg.mxu0
      %4531 = vmatpush.msra.mxu0 %v3511
      %4532 = vmatpush.msra.mxu0 %v3507
      %4533 = vmatpush.msra.mxu0 %v3503
      %4534 = vmatpush.msra.mxu0 %v3499
      %4535 = vmatpush.msra.mxu0 %v3495
      %4536 = vmatpush.msra.mxu0 %v3491
      %4537 = vmatpush.msra.mxu0 %v3487
      %4538 = vmatpush.msra.mxu0 %v3483
      %4539 = vmatpush.msra.mxu0 %v3479
      %4540 = vmatpush.msra.mxu0 %v3475
      %4541 = vmatpush.msra.mxu0 %v3471
      %4542 = vmatpush.msra.mxu0 %v3467
      %4543 = vmatpush.msra.mxu0 %v3463
      %4544 = vmatpush.msra.mxu0 %v3459
      %4545 = vmatpush.msra.mxu0 %v3455
      %4546 = vmatpush.msra.mxu0 %v3451
      %4547 = vmatmul.f32.gmra.mxu0 %v2713
      %v4548 = vpop.f32.mrf.mxu0
      %v4549 = vadd.f32 %v4526, %v4548
      %4550 = vmatmul.f32.gmra.mxu0 %v2731
      %v4551 = vpop.f32.mrf.mxu0
      %v4552 = vadd.f32 %v4529, %v4551
      %4553 = vdwg.mxu0
      %4554 = vmatpush.msra.mxu0 %v3575
      %4555 = vmatpush.msra.mxu0 %v3571
      %4556 = vmatpush.msra.mxu0 %v3567
      %4557 = vmatpush.msra.mxu0 %v3563
      %4558 = vmatpush.msra.mxu0 %v3559
      %4559 = vmatpush.msra.mxu0 %v3555
      %4560 = vmatpush.msra.mxu0 %v3551
      %4561 = vmatpush.msra.mxu0 %v3547
      %4562 = vmatpush.msra.mxu0 %v3543
      %4563 = vmatpush.msra.mxu0 %v3539
      %4564 = vmatpush.msra.mxu0 %v3535
      %4565 = vmatpush.msra.mxu0 %v3531
      %4566 = vmatpush.msra.mxu0 %v3527
      %4567 = vmatpush.msra.mxu0 %v3523
      %4568 = vmatpush.msra.mxu0 %v3519
      %4569 = vmatpush.msra.mxu0 %v3515
      %4570 = vmatmul.f32.gmra.mxu0 %v2714
      %v4571 = vpop.f32.mrf.mxu0
      %v4572 = vadd.f32 %v4549, %v4571
      %4573 = vmatmul.f32.gmra.mxu0 %v2732
      %v4574 = vpop.f32.mrf.mxu0
      %v4575 = vadd.f32 %v4552, %v4574
      %4576 = vdwg.mxu0
      %4577 = vmatpush.msra.mxu0 %v3639
      %4578 = vmatpush.msra.mxu0 %v3635
      %4579 = vmatpush.msra.mxu0 %v3631
      %4580 = vmatpush.msra.mxu0 %v3627
      %4581 = vmatpush.msra.mxu0 %v3623
      %4582 = vmatpush.msra.mxu0 %v3619
      %4583 = vmatpush.msra.mxu0 %v3615
      %4584 = vmatpush.msra.mxu0 %v3611
      %4585 = vmatpush.msra.mxu0 %v3607
      %4586 = vmatpush.msra.mxu0 %v3603
      %4587 = vmatpush.msra.mxu0 %v3599
      %4588 = vmatpush.msra.mxu0 %v3595
      %4589 = vmatpush.msra.mxu0 %v3591
      %4590 = vmatpush.msra.mxu0 %v3587
      %4591 = vmatpush.msra.mxu0 %v3583
      %4592 = vmatpush.msra.mxu0 %v3579
      %4593 = vmatmul.f32.gmra.mxu0 %v2715
      %v4594 = vpop.f32.mrf.mxu0
      %v4595 = vadd.f32 %v4572, %v4594
      %4596 = vmatmul.f32.gmra.mxu0 %v2733
      %v4597 = vpop.f32.mrf.mxu0
      %v4598 = vadd.f32 %v4575, %v4597
      %4599 = vdwg.mxu0
      %4600 = vmatpush.msra.mxu0 %v3703
      %4601 = vmatpush.msra.mxu0 %v3699
      %4602 = vmatpush.msra.mxu0 %v3695
      %4603 = vmatpush.msra.mxu0 %v3691
      %4604 = vmatpush.msra.mxu0 %v3687
      %4605 = vmatpush.msra.mxu0 %v3683
      %4606 = vmatpush.msra.mxu0 %v3679
      %4607 = vmatpush.msra.mxu0 %v3675
      %4608 = vmatpush.msra.mxu0 %v3671
      %4609 = vmatpush.msra.mxu0 %v3667
      %4610 = vmatpush.msra.mxu0 %v3663
      %4611 = vmatpush.msra.mxu0 %v3659
      %4612 = vmatpush.msra.mxu0 %v3655
      %4613 = vmatpush.msra.mxu0 %v3651
      %4614 = vmatpush.msra.mxu0 %v3647
      %4615 = vmatpush.msra.mxu0 %v3643
      %4616 = vmatmul.f32.gmra.mxu0 %v2716
      %v4617 = vpop.f32.mrf.mxu0
      %v4618 = vadd.f32 %v4595, %v4617
      %4619 = vmatmul.f32.gmra.mxu0 %v2734
      %v4620 = vpop.f32.mrf.mxu0
      %v4621 = vadd.f32 %v4598, %v4620
      %4622 = vdwg.mxu0
      %4623 = vmatpush.msra.mxu0 %v3767
      %4624 = vmatpush.msra.mxu0 %v3763
      %4625 = vmatpush.msra.mxu0 %v3759
      %4626 = vmatpush.msra.mxu0 %v3755
      %4627 = vmatpush.msra.mxu0 %v3751
      %4628 = vmatpush.msra.mxu0 %v3747
      %4629 = vmatpush.msra.mxu0 %v3743
      %4630 = vmatpush.msra.mxu0 %v3739
      %4631 = vmatpush.msra.mxu0 %v3735
      %4632 = vmatpush.msra.mxu0 %v3731
      %4633 = vmatpush.msra.mxu0 %v3727
      %4634 = vmatpush.msra.mxu0 %v3723
      %4635 = vmatpush.msra.mxu0 %v3719
      %4636 = vmatpush.msra.mxu0 %v3715
      %4637 = vmatpush.msra.mxu0 %v3711
      %4638 = vmatpush.msra.mxu0 %v3707
      %4639 = vmatmul.f32.gmra.mxu0 %v2717
      %v4640 = vpop.f32.mrf.mxu0
      %v4641 = vadd.f32 %v4618, %v4640
      %4642 = vmatmul.f32.gmra.mxu0 %v2735
      %v4643 = vpop.f32.mrf.mxu0
      %v4644 = vadd.f32 %v4621, %v4643
      %4645 = vdwg.mxu0
      %4646 = vmatpush.msra.mxu0 %v3831
      %4647 = vmatpush.msra.mxu0 %v3827
      %4648 = vmatpush.msra.mxu0 %v3823
      %4649 = vmatpush.msra.mxu0 %v3819
      %4650 = vmatpush.msra.mxu0 %v3815
      %4651 = vmatpush.msra.mxu0 %v3811
      %4652 = vmatpush.msra.mxu0 %v3807
      %4653 = vmatpush.msra.mxu0 %v3803
      %4654 = vmatpush.msra.mxu0 %v3799
      %4655 = vmatpush.msra.mxu0 %v3795
      %4656 = vmatpush.msra.mxu0 %v3791
      %4657 = vmatpush.msra.mxu0 %v3787
      %4658 = vmatpush.msra.mxu0 %v3783
      %4659 = vmatpush.msra.mxu0 %v3779
      %4660 = vmatpush.msra.mxu0 %v3775
      %4661 = vmatpush.msra.mxu0 %v3771
      %4662 = vmatmul.f32.gmra.mxu0 %v2718
      %v4663 = vpop.f32.mrf.mxu0
      %v4664 = vadd.f32 %v4641, %v4663
      %4665 = vmatmul.f32.gmra.mxu0 %v2736
      %v4666 = vpop.f32.mrf.mxu0
      %v4667 = vadd.f32 %v4644, %v4666
      %4668 = vdwg.mxu0
      %4669 = vmatpush.msra.mxu0 %v3895
      %4670 = vmatpush.msra.mxu0 %v3891
      %4671 = vmatpush.msra.mxu0 %v3887
      %4672 = vmatpush.msra.mxu0 %v3883
      %4673 = vmatpush.msra.mxu0 %v3879
      %4674 = vmatpush.msra.mxu0 %v3875
      %4675 = vmatpush.msra.mxu0 %v3871
      %4676 = vmatpush.msra.mxu0 %v3867
      %4677 = vmatpush.msra.mxu0 %v3863
      %4678 = vmatpush.msra.mxu0 %v3859
      %4679 = vmatpush.msra.mxu0 %v3855
      %4680 = vmatpush.msra.mxu0 %v3851
      %4681 = vmatpush.msra.mxu0 %v3847
      %4682 = vmatpush.msra.mxu0 %v3843
      %4683 = vmatpush.msra.mxu0 %v3839
      %4684 = vmatpush.msra.mxu0 %v3835
      %4685 = vmatmul.f32.gmra.mxu0 %v2719
      %v4686 = vpop.f32.mrf.mxu0
      %v4687 = vadd.f32 %v4664, %v4686
      %4688 = vmatmul.f32.gmra.mxu0 %v2737
      %v4689 = vpop.f32.mrf.mxu0
      %v4690 = vadd.f32 %v4667, %v4689
      %4691 = vdwg.mxu0
      %4692 = vmatpush.msra.mxu0 %v3959
      %4693 = vmatpush.msra.mxu0 %v3955
      %4694 = vmatpush.msra.mxu0 %v3951
      %4695 = vmatpush.msra.mxu0 %v3947
      %4696 = vmatpush.msra.mxu0 %v3943
      %4697 = vmatpush.msra.mxu0 %v3939
      %4698 = vmatpush.msra.mxu0 %v3935
      %4699 = vmatpush.msra.mxu0 %v3931
      %4700 = vmatpush.msra.mxu0 %v3927
      %4701 = vmatpush.msra.mxu0 %v3923
      %4702 = vmatpush.msra.mxu0 %v3919
      %4703 = vmatpush.msra.mxu0 %v3915
      %4704 = vmatpush.msra.mxu0 %v3911
      %4705 = vmatpush.msra.mxu0 %v3907
      %4706 = vmatpush.msra.mxu0 %v3903
      %4707 = vmatpush.msra.mxu0 %v3899
      %4708 = vmatmul.f32.gmra.mxu0 %v2720
      %v4709 = vpop.f32.mrf.mxu0
      %v4710 = vadd.f32 %v4687, %v4709
      %4711 = vmatmul.f32.gmra.mxu0 %v2738
      %v4712 = vpop.f32.mrf.mxu0
      %v4713 = vadd.f32 %v4690, %v4712
      %4714 = vdwg.mxu0
      %4715 = vmatpush.msra.mxu0 %v4023
      %4716 = vmatpush.msra.mxu0 %v4019
      %4717 = vmatpush.msra.mxu0 %v4015
      %4718 = vmatpush.msra.mxu0 %v4011
      %4719 = vmatpush.msra.mxu0 %v4007
      %4720 = vmatpush.msra.mxu0 %v4003
      %4721 = vmatpush.msra.mxu0 %v3999
      %4722 = vmatpush.msra.mxu0 %v3995
      %4723 = vmatpush.msra.mxu0 %v3991
      %4724 = vmatpush.msra.mxu0 %v3987
      %4725 = vmatpush.msra.mxu0 %v3983
      %4726 = vmatpush.msra.mxu0 %v3979
      %4727 = vmatpush.msra.mxu0 %v3975
      %4728 = vmatpush.msra.mxu0 %v3971
      %4729 = vmatpush.msra.mxu0 %v3967
      %4730 = vmatpush.msra.mxu0 %v3963
      %4731 = vmatmul.f32.gmra.mxu0 %v2721
      %v4732 = vpop.f32.mrf.mxu0
      %v4733 = vadd.f32 %v4710, %v4732
      %4734 = vmatmul.f32.gmra.mxu0 %v2739
      %v4735 = vpop.f32.mrf.mxu0
      %v4736 = vadd.f32 %v4713, %v4735
      %4737 = vdwg.mxu0
      %4738 = vmatpush.msra.mxu0 %v4087
      %4739 = vmatpush.msra.mxu0 %v4083
      %4740 = vmatpush.msra.mxu0 %v4079
      %4741 = vmatpush.msra.mxu0 %v4075
      %4742 = vmatpush.msra.mxu0 %v4071
      %4743 = vmatpush.msra.mxu0 %v4067
      %4744 = vmatpush.msra.mxu0 %v4063
      %4745 = vmatpush.msra.mxu0 %v4059
      %4746 = vmatpush.msra.mxu0 %v4055
      %4747 = vmatpush.msra.mxu0 %v4051
      %4748 = vmatpush.msra.mxu0 %v4047
      %4749 = vmatpush.msra.mxu0 %v4043
      %4750 = vmatpush.msra.mxu0 %v4039
      %4751 = vmatpush.msra.mxu0 %v4035
      %4752 = vmatpush.msra.mxu0 %v4031
      %4753 = vmatpush.msra.mxu0 %v4027
      %4754 = vmatmul.f32.gmra.mxu0 %v2722
      %v4755 = vpop.f32.mrf.mxu0
      %v4756 = vadd.f32 %v4733, %v4755
      %4757 = vmatmul.f32.gmra.mxu0 %v2740
      %v4758 = vpop.f32.mrf.mxu0
      %v4759 = vadd.f32 %v4736, %v4758
      %4760 = vdwg.mxu0
      %4761 = vmatpush.msra.mxu0 %v4151
      %4762 = vmatpush.msra.mxu0 %v4147
      %4763 = vmatpush.msra.mxu0 %v4143
      %4764 = vmatpush.msra.mxu0 %v4139
      %4765 = vmatpush.msra.mxu0 %v4135
      %4766 = vmatpush.msra.mxu0 %v4131
      %4767 = vmatpush.msra.mxu0 %v4127
      %4768 = vmatpush.msra.mxu0 %v4123
      %4769 = vmatpush.msra.mxu0 %v4119
      %4770 = vmatpush.msra.mxu0 %v4115
      %4771 = vmatpush.msra.mxu0 %v4111
      %4772 = vmatpush.msra.mxu0 %v4107
      %4773 = vmatpush.msra.mxu0 %v4103
      %4774 = vmatpush.msra.mxu0 %v4099
      %4775 = vmatpush.msra.mxu0 %v4095
      %4776 = vmatpush.msra.mxu0 %v4091
      %4777 = vmatmul.f32.gmra.mxu0 %v2723
      %v4778 = vpop.f32.mrf.mxu0
      %v4779 = vadd.f32 %v4756, %v4778
      %4780 = vmatmul.f32.gmra.mxu0 %v2741
      %v4781 = vpop.f32.mrf.mxu0
      %v4782 = vadd.f32 %v4759, %v4781
      %4783 = vdwg.mxu0
      %4784 = vmatpush.msra.mxu0 %v4215
      %4785 = vmatpush.msra.mxu0 %v4211
      %4786 = vmatpush.msra.mxu0 %v4207
      %4787 = vmatpush.msra.mxu0 %v4203
      %4788 = vmatpush.msra.mxu0 %v4199
      %4789 = vmatpush.msra.mxu0 %v4195
      %4790 = vmatpush.msra.mxu0 %v4191
      %4791 = vmatpush.msra.mxu0 %v4187
      %4792 = vmatpush.msra.mxu0 %v4183
      %4793 = vmatpush.msra.mxu0 %v4179
      %4794 = vmatpush.msra.mxu0 %v4175
      %4795 = vmatpush.msra.mxu0 %v4171
      %4796 = vmatpush.msra.mxu0 %v4167
      %4797 = vmatpush.msra.mxu0 %v4163
      %4798 = vmatpush.msra.mxu0 %v4159
      %4799 = vmatpush.msra.mxu0 %v4155
      %4800 = vmatmul.f32.gmra.mxu0 %v2724
      %v4801 = vpop.f32.mrf.mxu0
      %v4802 = vadd.f32 %v4779, %v4801
      %4803 = vmatmul.f32.gmra.mxu0 %v2742
      %v4804 = vpop.f32.mrf.mxu0
      %v4805 = vadd.f32 %v4782, %v4804
      %4806 = vdwg.mxu0
      %4807 = vmatpush.msra.mxu0 %v4279
      %4808 = vmatpush.msra.mxu0 %v4275
      %4809 = vmatpush.msra.mxu0 %v4271
      %4810 = vmatpush.msra.mxu0 %v4267
      %4811 = vmatpush.msra.mxu0 %v4263
      %4812 = vmatpush.msra.mxu0 %v4259
      %4813 = vmatpush.msra.mxu0 %v4255
      %4814 = vmatpush.msra.mxu0 %v4251
      %4815 = vmatpush.msra.mxu0 %v4247
      %4816 = vmatpush.msra.mxu0 %v4243
      %4817 = vmatpush.msra.mxu0 %v4239
      %4818 = vmatpush.msra.mxu0 %v4235
      %4819 = vmatpush.msra.mxu0 %v4231
      %4820 = vmatpush.msra.mxu0 %v4227
      %4821 = vmatpush.msra.mxu0 %v4223
      %4822 = vmatpush.msra.mxu0 %v4219
      %4823 = vmatmul.f32.gmra.mxu0 %v2725
      %v4824 = vpop.f32.mrf.mxu0
      %v4825 = vadd.f32 %v4802, %v4824
      %4826 = vmatmul.f32.gmra.mxu0 %v2743
      %v4827 = vpop.f32.mrf.mxu0
      %v4828 = vadd.f32 %v4805, %v4827
      %4829 = vdwg.mxu0
      %4830 = vmatpush.msra.mxu0 %v4343
      %4831 = vmatpush.msra.mxu0 %v4339
      %4832 = vmatpush.msra.mxu0 %v4335
      %4833 = vmatpush.msra.mxu0 %v4331
      %4834 = vmatpush.msra.mxu0 %v4327
      %4835 = vmatpush.msra.mxu0 %v4323
      %4836 = vmatpush.msra.mxu0 %v4319
      %4837 = vmatpush.msra.mxu0 %v4315
      %4838 = vmatpush.msra.mxu0 %v4311
      %4839 = vmatpush.msra.mxu0 %v4307
      %4840 = vmatpush.msra.mxu0 %v4303
      %4841 = vmatpush.msra.mxu0 %v4299
      %4842 = vmatpush.msra.mxu0 %v4295
      %4843 = vmatpush.msra.mxu0 %v4291
      %4844 = vmatpush.msra.mxu0 %v4287
      %4845 = vmatpush.msra.mxu0 %v4283
      %4846 = vmatmul.f32.gmra.mxu0 %v2726
      %v4847 = vpop.f32.mrf.mxu0
      %v4848 = vadd.f32 %v4825, %v4847
      %4849 = vmatmul.f32.gmra.mxu0 %v2744
      %v4850 = vpop.f32.mrf.mxu0
      %v4851 = vadd.f32 %v4828, %v4850
      %4852 = vdwg.mxu0
      %4853 = vmatpush.msra.mxu0 %v4407
      %4854 = vmatpush.msra.mxu0 %v4403
      %4855 = vmatpush.msra.mxu0 %v4399
      %4856 = vmatpush.msra.mxu0 %v4395
      %4857 = vmatpush.msra.mxu0 %v4391
      %4858 = vmatpush.msra.mxu0 %v4387
      %4859 = vmatpush.msra.mxu0 %v4383
      %4860 = vmatpush.msra.mxu0 %v4379
      %4861 = vmatpush.msra.mxu0 %v4375
      %4862 = vmatpush.msra.mxu0 %v4371
      %4863 = vmatpush.msra.mxu0 %v4367
      %4864 = vmatpush.msra.mxu0 %v4363
      %4865 = vmatpush.msra.mxu0 %v4359
      %4866 = vmatpush.msra.mxu0 %v4355
      %4867 = vmatpush.msra.mxu0 %v4351
      %4868 = vmatpush.msra.mxu0 %v4347
      %4869 = vmatmul.f32.gmra.mxu0 %v2727
      %v4870 = vpop.f32.mrf.mxu0
      %v4871 = vadd.f32 %v4848, %v4870
      %4872 = vmatmul.f32.gmra.mxu0 %v2745
      %v4873 = vpop.f32.mrf.mxu0
      %v4874 = vadd.f32 %v4851, %v4873
      %4875 = vdwg.mxu0
      %4876 = vmatpush.msra.mxu0 %v4471
      %4877 = vmatpush.msra.mxu0 %v4467
      %4878 = vmatpush.msra.mxu0 %v4463
      %4879 = vmatpush.msra.mxu0 %v4459
      %4880 = vmatpush.msra.mxu0 %v4455
      %4881 = vmatpush.msra.mxu0 %v4451
      %4882 = vmatpush.msra.mxu0 %v4447
      %4883 = vmatpush.msra.mxu0 %v4443
      %4884 = vmatpush.msra.mxu0 %v4439
      %4885 = vmatpush.msra.mxu0 %v4435
      %4886 = vmatpush.msra.mxu0 %v4431
      %4887 = vmatpush.msra.mxu0 %v4427
      %4888 = vmatpush.msra.mxu0 %v4423
      %4889 = vmatpush.msra.mxu0 %v4419
      %4890 = vmatpush.msra.mxu0 %v4415
      %4891 = vmatpush.msra.mxu0 %v4411
      %4892 = vmatmul.f32.gmra.mxu0 %v2728
      %v4893 = vpop.f32.mrf.mxu0
      %v4894 = vadd.f32 %v4871, %v4893
      %4895 = vmatmul.f32.gmra.mxu0 %v2746
      %v4896 = vpop.f32.mrf.mxu0
      %v4897 = vadd.f32 %v4874, %v4896
      %4898 = vdwg.mxu0
      %4899 = vmatpush.msra.mxu0 %v3384
      %4900 = vmatpush.msra.mxu0 %v3380
      %4901 = vmatpush.msra.mxu0 %v3376
      %4902 = vmatpush.msra.mxu0 %v3372
      %4903 = vmatpush.msra.mxu0 %v3368
      %4904 = vmatpush.msra.mxu0 %v3364
      %4905 = vmatpush.msra.mxu0 %v3360
      %4906 = vmatpush.msra.mxu0 %v3356
      %4907 = vmatpush.msra.mxu0 %v3352
      %4908 = vmatpush.msra.mxu0 %v3348
      %4909 = vmatpush.msra.mxu0 %v3344
      %4910 = vmatpush.msra.mxu0 %v3340
      %4911 = vmatpush.msra.mxu0 %v3336
      %4912 = vmatpush.msra.mxu0 %v3332
      %4913 = vmatpush.msra.mxu0 %v3328
      %4914 = vmatpush.msra.mxu0 %v3324
      %4915 = vmatmul.f32.gmra.mxu0 %v2711
      %v4916 = vpop.f32.mrf.mxu0
      %v4917 = vadd.f32 %v4478, %v4916
      %4918 = vmatmul.f32.gmra.mxu0 %v2729
      %v4919 = vpop.f32.mrf.mxu0
      %v4920 = vadd.f32 %v4478, %v4919
      %4921 = vdwg.mxu0
      %4922 = vmatpush.msra.mxu0 %v3448
      %4923 = vmatpush.msra.mxu0 %v3444
      %4924 = vmatpush.msra.mxu0 %v3440
      %4925 = vmatpush.msra.mxu0 %v3436
      %4926 = vmatpush.msra.mxu0 %v3432
      %4927 = vmatpush.msra.mxu0 %v3428
      %4928 = vmatpush.msra.mxu0 %v3424
      %4929 = vmatpush.msra.mxu0 %v3420
      %4930 = vmatpush.msra.mxu0 %v3416
      %4931 = vmatpush.msra.mxu0 %v3412
      %4932 = vmatpush.msra.mxu0 %v3408
      %4933 = vmatpush.msra.mxu0 %v3404
      %4934 = vmatpush.msra.mxu0 %v3400
      %4935 = vmatpush.msra.mxu0 %v3396
      %4936 = vmatpush.msra.mxu0 %v3392
      %4937 = vmatpush.msra.mxu0 %v3388
      %4938 = vmatmul.f32.gmra.mxu0 %v2712
      %v4939 = vpop.f32.mrf.mxu0
      %v4940 = vadd.f32 %v4917, %v4939
      %4941 = vmatmul.f32.gmra.mxu0 %v2730
      %v4942 = vpop.f32.mrf.mxu0
      %v4943 = vadd.f32 %v4920, %v4942
      %4944 = vdwg.mxu0
      %4945 = vmatpush.msra.mxu0 %v3512
      %4946 = vmatpush.msra.mxu0 %v3508
      %4947 = vmatpush.msra.mxu0 %v3504
      %4948 = vmatpush.msra.mxu0 %v3500
      %4949 = vmatpush.msra.mxu0 %v3496
      %4950 = vmatpush.msra.mxu0 %v3492
      %4951 = vmatpush.msra.mxu0 %v3488
      %4952 = vmatpush.msra.mxu0 %v3484
      %4953 = vmatpush.msra.mxu0 %v3480
      %4954 = vmatpush.msra.mxu0 %v3476
      %4955 = vmatpush.msra.mxu0 %v3472
      %4956 = vmatpush.msra.mxu0 %v3468
      %4957 = vmatpush.msra.mxu0 %v3464
      %4958 = vmatpush.msra.mxu0 %v3460
      %4959 = vmatpush.msra.mxu0 %v3456
      %4960 = vmatpush.msra.mxu0 %v3452
      %4961 = vmatmul.f32.gmra.mxu0 %v2713
      %v4962 = vpop.f32.mrf.mxu0
      %v4963 = vadd.f32 %v4940, %v4962
      %4964 = vmatmul.f32.gmra.mxu0 %v2731
      %v4965 = vpop.f32.mrf.mxu0
      %v4966 = vadd.f32 %v4943, %v4965
      %4967 = vdwg.mxu0
      %4968 = vmatpush.msra.mxu0 %v3576
      %4969 = vmatpush.msra.mxu0 %v3572
      %4970 = vmatpush.msra.mxu0 %v3568
      %4971 = vmatpush.msra.mxu0 %v3564
      %4972 = vmatpush.msra.mxu0 %v3560
      %4973 = vmatpush.msra.mxu0 %v3556
      %4974 = vmatpush.msra.mxu0 %v3552
      %4975 = vmatpush.msra.mxu0 %v3548
      %4976 = vmatpush.msra.mxu0 %v3544
      %4977 = vmatpush.msra.mxu0 %v3540
      %4978 = vmatpush.msra.mxu0 %v3536
      %4979 = vmatpush.msra.mxu0 %v3532
      %4980 = vmatpush.msra.mxu0 %v3528
      %4981 = vmatpush.msra.mxu0 %v3524
      %4982 = vmatpush.msra.mxu0 %v3520
      %4983 = vmatpush.msra.mxu0 %v3516
      %4984 = vmatmul.f32.gmra.mxu0 %v2714
      %v4985 = vpop.f32.mrf.mxu0
      %v4986 = vadd.f32 %v4963, %v4985
      %4987 = vmatmul.f32.gmra.mxu0 %v2732
      %v4988 = vpop.f32.mrf.mxu0
      %v4989 = vadd.f32 %v4966, %v4988
      %4990 = vdwg.mxu0
      %4991 = vmatpush.msra.mxu0 %v3640
      %4992 = vmatpush.msra.mxu0 %v3636
      %4993 = vmatpush.msra.mxu0 %v3632
      %4994 = vmatpush.msra.mxu0 %v3628
      %4995 = vmatpush.msra.mxu0 %v3624
      %4996 = vmatpush.msra.mxu0 %v3620
      %4997 = vmatpush.msra.mxu0 %v3616
      %4998 = vmatpush.msra.mxu0 %v3612
      %4999 = vmatpush.msra.mxu0 %v3608
      %5000 = vmatpush.msra.mxu0 %v3604
      %5001 = vmatpush.msra.mxu0 %v3600
      %5002 = vmatpush.msra.mxu0 %v3596
      %5003 = vmatpush.msra.mxu0 %v3592
      %5004 = vmatpush.msra.mxu0 %v3588
      %5005 = vmatpush.msra.mxu0 %v3584
      %5006 = vmatpush.msra.mxu0 %v3580
      %5007 = vmatmul.f32.gmra.mxu0 %v2715
      %v5008 = vpop.f32.mrf.mxu0
      %v5009 = vadd.f32 %v4986, %v5008
      %5010 = vmatmul.f32.gmra.mxu0 %v2733
      %v5011 = vpop.f32.mrf.mxu0
      %v5012 = vadd.f32 %v4989, %v5011
      %5013 = vdwg.mxu0
      %5014 = vmatpush.msra.mxu0 %v3704
      %5015 = vmatpush.msra.mxu0 %v3700
      %5016 = vmatpush.msra.mxu0 %v3696
      %5017 = vmatpush.msra.mxu0 %v3692
      %5018 = vmatpush.msra.mxu0 %v3688
      %5019 = vmatpush.msra.mxu0 %v3684
      %5020 = vmatpush.msra.mxu0 %v3680
      %5021 = vmatpush.msra.mxu0 %v3676
      %5022 = vmatpush.msra.mxu0 %v3672
      %5023 = vmatpush.msra.mxu0 %v3668
      %5024 = vmatpush.msra.mxu0 %v3664
      %5025 = vmatpush.msra.mxu0 %v3660
      %5026 = vmatpush.msra.mxu0 %v3656
      %5027 = vmatpush.msra.mxu0 %v3652
      %5028 = vmatpush.msra.mxu0 %v3648
      %5029 = vmatpush.msra.mxu0 %v3644
      %5030 = vmatmul.f32.gmra.mxu0 %v2716
      %v5031 = vpop.f32.mrf.mxu0
      %v5032 = vadd.f32 %v5009, %v5031
      %5033 = vmatmul.f32.gmra.mxu0 %v2734
      %v5034 = vpop.f32.mrf.mxu0
      %v5035 = vadd.f32 %v5012, %v5034
      %5036 = vdwg.mxu0
      %5037 = vmatpush.msra.mxu0 %v3768
      %5038 = vmatpush.msra.mxu0 %v3764
      %5039 = vmatpush.msra.mxu0 %v3760
      %5040 = vmatpush.msra.mxu0 %v3756
      %5041 = vmatpush.msra.mxu0 %v3752
      %5042 = vmatpush.msra.mxu0 %v3748
      %5043 = vmatpush.msra.mxu0 %v3744
      %5044 = vmatpush.msra.mxu0 %v3740
      %5045 = vmatpush.msra.mxu0 %v3736
      %5046 = vmatpush.msra.mxu0 %v3732
      %5047 = vmatpush.msra.mxu0 %v3728
      %5048 = vmatpush.msra.mxu0 %v3724
      %5049 = vmatpush.msra.mxu0 %v3720
      %5050 = vmatpush.msra.mxu0 %v3716
      %5051 = vmatpush.msra.mxu0 %v3712
      %5052 = vmatpush.msra.mxu0 %v3708
      %5053 = vmatmul.f32.gmra.mxu0 %v2717
      %v5054 = vpop.f32.mrf.mxu0
      %v5055 = vadd.f32 %v5032, %v5054
      %5056 = vmatmul.f32.gmra.mxu0 %v2735
      %v5057 = vpop.f32.mrf.mxu0
      %v5058 = vadd.f32 %v5035, %v5057
      %5059 = vdwg.mxu0
      %5060 = vmatpush.msra.mxu0 %v3832
      %5061 = vmatpush.msra.mxu0 %v3828
      %5062 = vmatpush.msra.mxu0 %v3824
      %5063 = vmatpush.msra.mxu0 %v3820
      %5064 = vmatpush.msra.mxu0 %v3816
      %5065 = vmatpush.msra.mxu0 %v3812
      %5066 = vmatpush.msra.mxu0 %v3808
      %5067 = vmatpush.msra.mxu0 %v3804
      %5068 = vmatpush.msra.mxu0 %v3800
      %5069 = vmatpush.msra.mxu0 %v3796
      %5070 = vmatpush.msra.mxu0 %v3792
      %5071 = vmatpush.msra.mxu0 %v3788
      %5072 = vmatpush.msra.mxu0 %v3784
      %5073 = vmatpush.msra.mxu0 %v3780
      %5074 = vmatpush.msra.mxu0 %v3776
      %5075 = vmatpush.msra.mxu0 %v3772
      %5076 = vmatmul.f32.gmra.mxu0 %v2718
      %v5077 = vpop.f32.mrf.mxu0
      %v5078 = vadd.f32 %v5055, %v5077
      %5079 = vmatmul.f32.gmra.mxu0 %v2736
      %v5080 = vpop.f32.mrf.mxu0
      %v5081 = vadd.f32 %v5058, %v5080
      %5082 = vdwg.mxu0
      %5083 = vmatpush.msra.mxu0 %v3896
      %5084 = vmatpush.msra.mxu0 %v3892
      %5085 = vmatpush.msra.mxu0 %v3888
      %5086 = vmatpush.msra.mxu0 %v3884
      %5087 = vmatpush.msra.mxu0 %v3880
      %5088 = vmatpush.msra.mxu0 %v3876
      %5089 = vmatpush.msra.mxu0 %v3872
      %5090 = vmatpush.msra.mxu0 %v3868
      %5091 = vmatpush.msra.mxu0 %v3864
      %5092 = vmatpush.msra.mxu0 %v3860
      %5093 = vmatpush.msra.mxu0 %v3856
      %5094 = vmatpush.msra.mxu0 %v3852
      %5095 = vmatpush.msra.mxu0 %v3848
      %5096 = vmatpush.msra.mxu0 %v3844
      %5097 = vmatpush.msra.mxu0 %v3840
      %5098 = vmatpush.msra.mxu0 %v3836
      %5099 = vmatmul.f32.gmra.mxu0 %v2719
      %v5100 = vpop.f32.mrf.mxu0
      %v5101 = vadd.f32 %v5078, %v5100
      %5102 = vmatmul.f32.gmra.mxu0 %v2737
      %v5103 = vpop.f32.mrf.mxu0
      %v5104 = vadd.f32 %v5081, %v5103
      %5105 = vdwg.mxu0
      %5106 = vmatpush.msra.mxu0 %v3960
      %5107 = vmatpush.msra.mxu0 %v3956
      %5108 = vmatpush.msra.mxu0 %v3952
      %5109 = vmatpush.msra.mxu0 %v3948
      %5110 = vmatpush.msra.mxu0 %v3944
      %5111 = vmatpush.msra.mxu0 %v3940
      %5112 = vmatpush.msra.mxu0 %v3936
      %5113 = vmatpush.msra.mxu0 %v3932
      %5114 = vmatpush.msra.mxu0 %v3928
      %5115 = vmatpush.msra.mxu0 %v3924
      %5116 = vmatpush.msra.mxu0 %v3920
      %5117 = vmatpush.msra.mxu0 %v3916
      %5118 = vmatpush.msra.mxu0 %v3912
      %5119 = vmatpush.msra.mxu0 %v3908
      %5120 = vmatpush.msra.mxu0 %v3904
      %5121 = vmatpush.msra.mxu0 %v3900
      %5122 = vmatmul.f32.gmra.mxu0 %v2720
      %v5123 = vpop.f32.mrf.mxu0
      %v5124 = vadd.f32 %v5101, %v5123
      %5125 = vmatmul.f32.gmra.mxu0 %v2738
      %v5126 = vpop.f32.mrf.mxu0
      %v5127 = vadd.f32 %v5104, %v5126
      %5128 = vdwg.mxu0
      %5129 = vmatpush.msra.mxu0 %v4024
      %5130 = vmatpush.msra.mxu0 %v4020
      %5131 = vmatpush.msra.mxu0 %v4016
      %5132 = vmatpush.msra.mxu0 %v4012
      %5133 = vmatpush.msra.mxu0 %v4008
      %5134 = vmatpush.msra.mxu0 %v4004
      %5135 = vmatpush.msra.mxu0 %v4000
      %5136 = vmatpush.msra.mxu0 %v3996
      %5137 = vmatpush.msra.mxu0 %v3992
      %5138 = vmatpush.msra.mxu0 %v3988
      %5139 = vmatpush.msra.mxu0 %v3984
      %5140 = vmatpush.msra.mxu0 %v3980
      %5141 = vmatpush.msra.mxu0 %v3976
      %5142 = vmatpush.msra.mxu0 %v3972
      %5143 = vmatpush.msra.mxu0 %v3968
      %5144 = vmatpush.msra.mxu0 %v3964
      %5145 = vmatmul.f32.gmra.mxu0 %v2721
      %v5146 = vpop.f32.mrf.mxu0
      %v5147 = vadd.f32 %v5124, %v5146
      %5148 = vmatmul.f32.gmra.mxu0 %v2739
      %v5149 = vpop.f32.mrf.mxu0
      %v5150 = vadd.f32 %v5127, %v5149
      %5151 = vdwg.mxu0
      %5152 = vmatpush.msra.mxu0 %v4088
      %5153 = vmatpush.msra.mxu0 %v4084
      %5154 = vmatpush.msra.mxu0 %v4080
      %5155 = vmatpush.msra.mxu0 %v4076
      %5156 = vmatpush.msra.mxu0 %v4072
      %5157 = vmatpush.msra.mxu0 %v4068
      %5158 = vmatpush.msra.mxu0 %v4064
      %5159 = vmatpush.msra.mxu0 %v4060
      %5160 = vmatpush.msra.mxu0 %v4056
      %5161 = vmatpush.msra.mxu0 %v4052
      %5162 = vmatpush.msra.mxu0 %v4048
      %5163 = vmatpush.msra.mxu0 %v4044
      %5164 = vmatpush.msra.mxu0 %v4040
      %5165 = vmatpush.msra.mxu0 %v4036
      %5166 = vmatpush.msra.mxu0 %v4032
      %5167 = vmatpush.msra.mxu0 %v4028
      %5168 = vmatmul.f32.gmra.mxu0 %v2722
      %v5169 = vpop.f32.mrf.mxu0
      %v5170 = vadd.f32 %v5147, %v5169
      %5171 = vmatmul.f32.gmra.mxu0 %v2740
      %v5172 = vpop.f32.mrf.mxu0
      %v5173 = vadd.f32 %v5150, %v5172
      %5174 = vdwg.mxu0
      %5175 = vmatpush.msra.mxu0 %v4152
      %5176 = vmatpush.msra.mxu0 %v4148
      %5177 = vmatpush.msra.mxu0 %v4144
      %5178 = vmatpush.msra.mxu0 %v4140
      %5179 = vmatpush.msra.mxu0 %v4136
      %5180 = vmatpush.msra.mxu0 %v4132
      %5181 = vmatpush.msra.mxu0 %v4128
      %5182 = vmatpush.msra.mxu0 %v4124
      %5183 = vmatpush.msra.mxu0 %v4120
      %5184 = vmatpush.msra.mxu0 %v4116
      %5185 = vmatpush.msra.mxu0 %v4112
      %5186 = vmatpush.msra.mxu0 %v4108
      %5187 = vmatpush.msra.mxu0 %v4104
      %5188 = vmatpush.msra.mxu0 %v4100
      %5189 = vmatpush.msra.mxu0 %v4096
      %5190 = vmatpush.msra.mxu0 %v4092
      %5191 = vmatmul.f32.gmra.mxu0 %v2723
      %v5192 = vpop.f32.mrf.mxu0
      %v5193 = vadd.f32 %v5170, %v5192
      %5194 = vmatmul.f32.gmra.mxu0 %v2741
      %v5195 = vpop.f32.mrf.mxu0
      %v5196 = vadd.f32 %v5173, %v5195
      %5197 = vdwg.mxu0
      %5198 = vmatpush.msra.mxu0 %v4216
      %5199 = vmatpush.msra.mxu0 %v4212
      %5200 = vmatpush.msra.mxu0 %v4208
      %5201 = vmatpush.msra.mxu0 %v4204
      %5202 = vmatpush.msra.mxu0 %v4200
      %5203 = vmatpush.msra.mxu0 %v4196
      %5204 = vmatpush.msra.mxu0 %v4192
      %5205 = vmatpush.msra.mxu0 %v4188
      %5206 = vmatpush.msra.mxu0 %v4184
      %5207 = vmatpush.msra.mxu0 %v4180
      %5208 = vmatpush.msra.mxu0 %v4176
      %5209 = vmatpush.msra.mxu0 %v4172
      %5210 = vmatpush.msra.mxu0 %v4168
      %5211 = vmatpush.msra.mxu0 %v4164
      %5212 = vmatpush.msra.mxu0 %v4160
      %5213 = vmatpush.msra.mxu0 %v4156
      %5214 = vmatmul.f32.gmra.mxu0 %v2724
      %v5215 = vpop.f32.mrf.mxu0
      %v5216 = vadd.f32 %v5193, %v5215
      %5217 = vmatmul.f32.gmra.mxu0 %v2742
      %v5218 = vpop.f32.mrf.mxu0
      %v5219 = vadd.f32 %v5196, %v5218
      %5220 = vdwg.mxu0
      %5221 = vmatpush.msra.mxu0 %v4280
      %5222 = vmatpush.msra.mxu0 %v4276
      %5223 = vmatpush.msra.mxu0 %v4272
      %5224 = vmatpush.msra.mxu0 %v4268
      %5225 = vmatpush.msra.mxu0 %v4264
      %5226 = vmatpush.msra.mxu0 %v4260
      %5227 = vmatpush.msra.mxu0 %v4256
      %5228 = vmatpush.msra.mxu0 %v4252
      %5229 = vmatpush.msra.mxu0 %v4248
      %5230 = vmatpush.msra.mxu0 %v4244
      %5231 = vmatpush.msra.mxu0 %v4240
      %5232 = vmatpush.msra.mxu0 %v4236
      %5233 = vmatpush.msra.mxu0 %v4232
      %5234 = vmatpush.msra.mxu0 %v4228
      %5235 = vmatpush.msra.mxu0 %v4224
      %5236 = vmatpush.msra.mxu0 %v4220
      %5237 = vmatmul.f32.gmra.mxu0 %v2725
      %v5238 = vpop.f32.mrf.mxu0
      %v5239 = vadd.f32 %v5216, %v5238
      %5240 = vmatmul.f32.gmra.mxu0 %v2743
      %v5241 = vpop.f32.mrf.mxu0
      %v5242 = vadd.f32 %v5219, %v5241
      %5243 = vdwg.mxu0
      %5244 = vmatpush.msra.mxu0 %v4344
      %5245 = vmatpush.msra.mxu0 %v4340
      %5246 = vmatpush.msra.mxu0 %v4336
      %5247 = vmatpush.msra.mxu0 %v4332
      %5248 = vmatpush.msra.mxu0 %v4328
      %5249 = vmatpush.msra.mxu0 %v4324
      %5250 = vmatpush.msra.mxu0 %v4320
      %5251 = vmatpush.msra.mxu0 %v4316
      %5252 = vmatpush.msra.mxu0 %v4312
      %5253 = vmatpush.msra.mxu0 %v4308
      %5254 = vmatpush.msra.mxu0 %v4304
      %5255 = vmatpush.msra.mxu0 %v4300
      %5256 = vmatpush.msra.mxu0 %v4296
      %5257 = vmatpush.msra.mxu0 %v4292
      %5258 = vmatpush.msra.mxu0 %v4288
      %5259 = vmatpush.msra.mxu0 %v4284
      %5260 = vmatmul.f32.gmra.mxu0 %v2726
      %v5261 = vpop.f32.mrf.mxu0
      %v5262 = vadd.f32 %v5239, %v5261
      %5263 = vmatmul.f32.gmra.mxu0 %v2744
      %v5264 = vpop.f32.mrf.mxu0
      %v5265 = vadd.f32 %v5242, %v5264
      %5266 = vdwg.mxu0
      %5267 = vmatpush.msra.mxu0 %v4408
      %5268 = vmatpush.msra.mxu0 %v4404
      %5269 = vmatpush.msra.mxu0 %v4400
      %5270 = vmatpush.msra.mxu0 %v4396
      %5271 = vmatpush.msra.mxu0 %v4392
      %5272 = vmatpush.msra.mxu0 %v4388
      %5273 = vmatpush.msra.mxu0 %v4384
      %5274 = vmatpush.msra.mxu0 %v4380
      %5275 = vmatpush.msra.mxu0 %v4376
      %5276 = vmatpush.msra.mxu0 %v4372
      %5277 = vmatpush.msra.mxu0 %v4368
      %5278 = vmatpush.msra.mxu0 %v4364
      %5279 = vmatpush.msra.mxu0 %v4360
      %5280 = vmatpush.msra.mxu0 %v4356
      %5281 = vmatpush.msra.mxu0 %v4352
      %5282 = vmatpush.msra.mxu0 %v4348
      %5283 = vmatmul.f32.gmra.mxu0 %v2727
      %v5284 = vpop.f32.mrf.mxu0
      %v5285 = vadd.f32 %v5262, %v5284
      %5286 = vmatmul.f32.gmra.mxu0 %v2745
      %v5287 = vpop.f32.mrf.mxu0
      %v5288 = vadd.f32 %v5265, %v5287
      %5289 = vdwg.mxu0
      %5290 = vmatpush.msra.mxu0 %v4472
      %5291 = vmatpush.msra.mxu0 %v4468
      %5292 = vmatpush.msra.mxu0 %v4464
      %5293 = vmatpush.msra.mxu0 %v4460
      %5294 = vmatpush.msra.mxu0 %v4456
      %5295 = vmatpush.msra.mxu0 %v4452
      %5296 = vmatpush.msra.mxu0 %v4448
      %5297 = vmatpush.msra.mxu0 %v4444
      %5298 = vmatpush.msra.mxu0 %v4440
      %5299 = vmatpush.msra.mxu0 %v4436
      %5300 = vmatpush.msra.mxu0 %v4432
      %5301 = vmatpush.msra.mxu0 %v4428
      %5302 = vmatpush.msra.mxu0 %v4424
      %5303 = vmatpush.msra.mxu0 %v4420
      %5304 = vmatpush.msra.mxu0 %v4416
      %5305 = vmatpush.msra.mxu0 %v4412
      %5306 = vmatmul.f32.gmra.mxu0 %v2728
      %v5307 = vpop.f32.mrf.mxu0
      %v5308 = vadd.f32 %v5285, %v5307
      %5309 = vmatmul.f32.gmra.mxu0 %v2746
      %v5310 = vpop.f32.mrf.mxu0
      %v5311 = vadd.f32 %v5288, %v5310
      %5312 = vdwg.mxu0
      %5313 = vmatpush.msra.mxu0 %v3385
      %5314 = vmatpush.msra.mxu0 %v3381
      %5315 = vmatpush.msra.mxu0 %v3377
      %5316 = vmatpush.msra.mxu0 %v3373
      %5317 = vmatpush.msra.mxu0 %v3369
      %5318 = vmatpush.msra.mxu0 %v3365
      %5319 = vmatpush.msra.mxu0 %v3361
      %5320 = vmatpush.msra.mxu0 %v3357
      %5321 = vmatpush.msra.mxu0 %v3353
      %5322 = vmatpush.msra.mxu0 %v3349
      %5323 = vmatpush.msra.mxu0 %v3345
      %5324 = vmatpush.msra.mxu0 %v3341
      %5325 = vmatpush.msra.mxu0 %v3337
      %5326 = vmatpush.msra.mxu0 %v3333
      %5327 = vmatpush.msra.mxu0 %v3329
      %5328 = vmatpush.msra.mxu0 %v3325
      %5329 = vmatmul.f32.gmra.mxu0 %v2711
      %v5330 = vpop.f32.mrf.mxu0
      %v5331 = vadd.f32 %v4479, %v5330
      %5332 = vmatmul.f32.gmra.mxu0 %v2729
      %v5333 = vpop.f32.mrf.mxu0
      %v5334 = vadd.f32 %v4479, %v5333
      %5335 = vdwg.mxu0
      %5336 = vmatpush.msra.mxu0 %v3449
      %5337 = vmatpush.msra.mxu0 %v3445
      %5338 = vmatpush.msra.mxu0 %v3441
      %5339 = vmatpush.msra.mxu0 %v3437
      %5340 = vmatpush.msra.mxu0 %v3433
      %5341 = vmatpush.msra.mxu0 %v3429
      %5342 = vmatpush.msra.mxu0 %v3425
      %5343 = vmatpush.msra.mxu0 %v3421
      %5344 = vmatpush.msra.mxu0 %v3417
      %5345 = vmatpush.msra.mxu0 %v3413
      %5346 = vmatpush.msra.mxu0 %v3409
      %5347 = vmatpush.msra.mxu0 %v3405
      %5348 = vmatpush.msra.mxu0 %v3401
      %5349 = vmatpush.msra.mxu0 %v3397
      %5350 = vmatpush.msra.mxu0 %v3393
      %5351 = vmatpush.msra.mxu0 %v3389
      %5352 = vmatmul.f32.gmra.mxu0 %v2712
      %v5353 = vpop.f32.mrf.mxu0
      %v5354 = vadd.f32 %v5331, %v5353
      %5355 = vmatmul.f32.gmra.mxu0 %v2730
      %v5356 = vpop.f32.mrf.mxu0
      %v5357 = vadd.f32 %v5334, %v5356
      %5358 = vdwg.mxu0
      %5359 = vmatpush.msra.mxu0 %v3513
      %5360 = vmatpush.msra.mxu0 %v3509
      %5361 = vmatpush.msra.mxu0 %v3505
      %5362 = vmatpush.msra.mxu0 %v3501
      %5363 = vmatpush.msra.mxu0 %v3497
      %5364 = vmatpush.msra.mxu0 %v3493
      %5365 = vmatpush.msra.mxu0 %v3489
      %5366 = vmatpush.msra.mxu0 %v3485
      %5367 = vmatpush.msra.mxu0 %v3481
      %5368 = vmatpush.msra.mxu0 %v3477
      %5369 = vmatpush.msra.mxu0 %v3473
      %5370 = vmatpush.msra.mxu0 %v3469
      %5371 = vmatpush.msra.mxu0 %v3465
      %5372 = vmatpush.msra.mxu0 %v3461
      %5373 = vmatpush.msra.mxu0 %v3457
      %5374 = vmatpush.msra.mxu0 %v3453
      %5375 = vmatmul.f32.gmra.mxu0 %v2713
      %v5376 = vpop.f32.mrf.mxu0
      %v5377 = vadd.f32 %v5354, %v5376
      %5378 = vmatmul.f32.gmra.mxu0 %v2731
      %v5379 = vpop.f32.mrf.mxu0
      %v5380 = vadd.f32 %v5357, %v5379
      %5381 = vdwg.mxu0
      %5382 = vmatpush.msra.mxu0 %v3577
      %5383 = vmatpush.msra.mxu0 %v3573
      %5384 = vmatpush.msra.mxu0 %v3569
      %5385 = vmatpush.msra.mxu0 %v3565
      %5386 = vmatpush.msra.mxu0 %v3561
      %5387 = vmatpush.msra.mxu0 %v3557
      %5388 = vmatpush.msra.mxu0 %v3553
      %5389 = vmatpush.msra.mxu0 %v3549
      %5390 = vmatpush.msra.mxu0 %v3545
      %5391 = vmatpush.msra.mxu0 %v3541
      %5392 = vmatpush.msra.mxu0 %v3537
      %5393 = vmatpush.msra.mxu0 %v3533
      %5394 = vmatpush.msra.mxu0 %v3529
      %5395 = vmatpush.msra.mxu0 %v3525
      %5396 = vmatpush.msra.mxu0 %v3521
      %5397 = vmatpush.msra.mxu0 %v3517
      %5398 = vmatmul.f32.gmra.mxu0 %v2714
      %v5399 = vpop.f32.mrf.mxu0
      %v5400 = vadd.f32 %v5377, %v5399
      %5401 = vmatmul.f32.gmra.mxu0 %v2732
      %v5402 = vpop.f32.mrf.mxu0
      %v5403 = vadd.f32 %v5380, %v5402
      %5404 = vdwg.mxu0
      %5405 = vmatpush.msra.mxu0 %v3641
      %5406 = vmatpush.msra.mxu0 %v3637
      %5407 = vmatpush.msra.mxu0 %v3633
      %5408 = vmatpush.msra.mxu0 %v3629
      %5409 = vmatpush.msra.mxu0 %v3625
      %5410 = vmatpush.msra.mxu0 %v3621
      %5411 = vmatpush.msra.mxu0 %v3617
      %5412 = vmatpush.msra.mxu0 %v3613
      %5413 = vmatpush.msra.mxu0 %v3609
      %5414 = vmatpush.msra.mxu0 %v3605
      %5415 = vmatpush.msra.mxu0 %v3601
      %5416 = vmatpush.msra.mxu0 %v3597
      %5417 = vmatpush.msra.mxu0 %v3593
      %5418 = vmatpush.msra.mxu0 %v3589
      %5419 = vmatpush.msra.mxu0 %v3585
      %5420 = vmatpush.msra.mxu0 %v3581
      %5421 = vmatmul.f32.gmra.mxu0 %v2715
      %v5422 = vpop.f32.mrf.mxu0
      %v5423 = vadd.f32 %v5400, %v5422
      %5424 = vmatmul.f32.gmra.mxu0 %v2733
      %v5425 = vpop.f32.mrf.mxu0
      %v5426 = vadd.f32 %v5403, %v5425
      %5427 = vdwg.mxu0
      %5428 = vmatpush.msra.mxu0 %v3705
      %5429 = vmatpush.msra.mxu0 %v3701
      %5430 = vmatpush.msra.mxu0 %v3697
      %5431 = vmatpush.msra.mxu0 %v3693
      %5432 = vmatpush.msra.mxu0 %v3689
      %5433 = vmatpush.msra.mxu0 %v3685
      %5434 = vmatpush.msra.mxu0 %v3681
      %5435 = vmatpush.msra.mxu0 %v3677
      %5436 = vmatpush.msra.mxu0 %v3673
      %5437 = vmatpush.msra.mxu0 %v3669
      %5438 = vmatpush.msra.mxu0 %v3665
      %5439 = vmatpush.msra.mxu0 %v3661
      %5440 = vmatpush.msra.mxu0 %v3657
      %5441 = vmatpush.msra.mxu0 %v3653
      %5442 = vmatpush.msra.mxu0 %v3649
      %5443 = vmatpush.msra.mxu0 %v3645
      %5444 = vmatmul.f32.gmra.mxu0 %v2716
      %v5445 = vpop.f32.mrf.mxu0
      %v5446 = vadd.f32 %v5423, %v5445
      %5447 = vmatmul.f32.gmra.mxu0 %v2734
      %v5448 = vpop.f32.mrf.mxu0
      %v5449 = vadd.f32 %v5426, %v5448
      %5450 = vdwg.mxu0
      %5451 = vmatpush.msra.mxu0 %v3769
      %5452 = vmatpush.msra.mxu0 %v3765
      %5453 = vmatpush.msra.mxu0 %v3761
      %5454 = vmatpush.msra.mxu0 %v3757
      %5455 = vmatpush.msra.mxu0 %v3753
      %5456 = vmatpush.msra.mxu0 %v3749
      %5457 = vmatpush.msra.mxu0 %v3745
      %5458 = vmatpush.msra.mxu0 %v3741
      %5459 = vmatpush.msra.mxu0 %v3737
      %5460 = vmatpush.msra.mxu0 %v3733
      %5461 = vmatpush.msra.mxu0 %v3729
      %5462 = vmatpush.msra.mxu0 %v3725
      %5463 = vmatpush.msra.mxu0 %v3721
      %5464 = vmatpush.msra.mxu0 %v3717
      %5465 = vmatpush.msra.mxu0 %v3713
      %5466 = vmatpush.msra.mxu0 %v3709
      %5467 = vmatmul.f32.gmra.mxu0 %v2717
      %v5468 = vpop.f32.mrf.mxu0
      %v5469 = vadd.f32 %v5446, %v5468
      %5470 = vmatmul.f32.gmra.mxu0 %v2735
      %v5471 = vpop.f32.mrf.mxu0
      %v5472 = vadd.f32 %v5449, %v5471
      %5473 = vdwg.mxu0
      %5474 = vmatpush.msra.mxu0 %v3833
      %5475 = vmatpush.msra.mxu0 %v3829
      %5476 = vmatpush.msra.mxu0 %v3825
      %5477 = vmatpush.msra.mxu0 %v3821
      %5478 = vmatpush.msra.mxu0 %v3817
      %5479 = vmatpush.msra.mxu0 %v3813
      %5480 = vmatpush.msra.mxu0 %v3809
      %5481 = vmatpush.msra.mxu0 %v3805
      %5482 = vmatpush.msra.mxu0 %v3801
      %5483 = vmatpush.msra.mxu0 %v3797
      %5484 = vmatpush.msra.mxu0 %v3793
      %5485 = vmatpush.msra.mxu0 %v3789
      %5486 = vmatpush.msra.mxu0 %v3785
      %5487 = vmatpush.msra.mxu0 %v3781
      %5488 = vmatpush.msra.mxu0 %v3777
      %5489 = vmatpush.msra.mxu0 %v3773
      %5490 = vmatmul.f32.gmra.mxu0 %v2718
      %v5491 = vpop.f32.mrf.mxu0
      %v5492 = vadd.f32 %v5469, %v5491
      %5493 = vmatmul.f32.gmra.mxu0 %v2736
      %v5494 = vpop.f32.mrf.mxu0
      %v5495 = vadd.f32 %v5472, %v5494
      %5496 = vdwg.mxu0
      %5497 = vmatpush.msra.mxu0 %v3897
      %5498 = vmatpush.msra.mxu0 %v3893
      %5499 = vmatpush.msra.mxu0 %v3889
      %5500 = vmatpush.msra.mxu0 %v3885
      %5501 = vmatpush.msra.mxu0 %v3881
      %5502 = vmatpush.msra.mxu0 %v3877
      %5503 = vmatpush.msra.mxu0 %v3873
      %5504 = vmatpush.msra.mxu0 %v3869
      %5505 = vmatpush.msra.mxu0 %v3865
      %5506 = vmatpush.msra.mxu0 %v3861
      %5507 = vmatpush.msra.mxu0 %v3857
      %5508 = vmatpush.msra.mxu0 %v3853
      %5509 = vmatpush.msra.mxu0 %v3849
      %5510 = vmatpush.msra.mxu0 %v3845
      %5511 = vmatpush.msra.mxu0 %v3841
      %5512 = vmatpush.msra.mxu0 %v3837
      %5513 = vmatmul.f32.gmra.mxu0 %v2719
      %v5514 = vpop.f32.mrf.mxu0
      %v5515 = vadd.f32 %v5492, %v5514
      %5516 = vmatmul.f32.gmra.mxu0 %v2737
      %v5517 = vpop.f32.mrf.mxu0
      %v5518 = vadd.f32 %v5495, %v5517
      %5519 = vdwg.mxu0
      %5520 = vmatpush.msra.mxu0 %v3961
      %5521 = vmatpush.msra.mxu0 %v3957
      %5522 = vmatpush.msra.mxu0 %v3953
      %5523 = vmatpush.msra.mxu0 %v3949
      %5524 = vmatpush.msra.mxu0 %v3945
      %5525 = vmatpush.msra.mxu0 %v3941
      %5526 = vmatpush.msra.mxu0 %v3937
      %5527 = vmatpush.msra.mxu0 %v3933
      %5528 = vmatpush.msra.mxu0 %v3929
      %5529 = vmatpush.msra.mxu0 %v3925
      %5530 = vmatpush.msra.mxu0 %v3921
      %5531 = vmatpush.msra.mxu0 %v3917
      %5532 = vmatpush.msra.mxu0 %v3913
      %5533 = vmatpush.msra.mxu0 %v3909
      %5534 = vmatpush.msra.mxu0 %v3905
      %5535 = vmatpush.msra.mxu0 %v3901
      %5536 = vmatmul.f32.gmra.mxu0 %v2720
      %v5537 = vpop.f32.mrf.mxu0
      %v5538 = vadd.f32 %v5515, %v5537
      %5539 = vmatmul.f32.gmra.mxu0 %v2738
      %v5540 = vpop.f32.mrf.mxu0
      %v5541 = vadd.f32 %v5518, %v5540
      %5542 = vdwg.mxu0
      %5543 = vmatpush.msra.mxu0 %v4025
      %5544 = vmatpush.msra.mxu0 %v4021
      %5545 = vmatpush.msra.mxu0 %v4017
      %5546 = vmatpush.msra.mxu0 %v4013
      %5547 = vmatpush.msra.mxu0 %v4009
      %5548 = vmatpush.msra.mxu0 %v4005
      %5549 = vmatpush.msra.mxu0 %v4001
      %5550 = vmatpush.msra.mxu0 %v3997
      %5551 = vmatpush.msra.mxu0 %v3993
      %5552 = vmatpush.msra.mxu0 %v3989
      %5553 = vmatpush.msra.mxu0 %v3985
      %5554 = vmatpush.msra.mxu0 %v3981
      %5555 = vmatpush.msra.mxu0 %v3977
      %5556 = vmatpush.msra.mxu0 %v3973
      %5557 = vmatpush.msra.mxu0 %v3969
      %5558 = vmatpush.msra.mxu0 %v3965
      %5559 = vmatmul.f32.gmra.mxu0 %v2721
      %v5560 = vpop.f32.mrf.mxu0
      %v5561 = vadd.f32 %v5538, %v5560
      %5562 = vmatmul.f32.gmra.mxu0 %v2739
      %v5563 = vpop.f32.mrf.mxu0
      %v5564 = vadd.f32 %v5541, %v5563
      %5565 = vdwg.mxu0
      %5566 = vmatpush.msra.mxu0 %v4089
      %5567 = vmatpush.msra.mxu0 %v4085
      %5568 = vmatpush.msra.mxu0 %v4081
      %5569 = vmatpush.msra.mxu0 %v4077
      %5570 = vmatpush.msra.mxu0 %v4073
      %5571 = vmatpush.msra.mxu0 %v4069
      %5572 = vmatpush.msra.mxu0 %v4065
      %5573 = vmatpush.msra.mxu0 %v4061
      %5574 = vmatpush.msra.mxu0 %v4057
      %5575 = vmatpush.msra.mxu0 %v4053
      %5576 = vmatpush.msra.mxu0 %v4049
      %5577 = vmatpush.msra.mxu0 %v4045
      %5578 = vmatpush.msra.mxu0 %v4041
      %5579 = vmatpush.msra.mxu0 %v4037
      %5580 = vmatpush.msra.mxu0 %v4033
      %5581 = vmatpush.msra.mxu0 %v4029
      %5582 = vmatmul.f32.gmra.mxu0 %v2722
      %v5583 = vpop.f32.mrf.mxu0
      %v5584 = vadd.f32 %v5561, %v5583
      %5585 = vmatmul.f32.gmra.mxu0 %v2740
      %v5586 = vpop.f32.mrf.mxu0
      %v5587 = vadd.f32 %v5564, %v5586
      %5588 = vdwg.mxu0
      %5589 = vmatpush.msra.mxu0 %v4153
      %5590 = vmatpush.msra.mxu0 %v4149
      %5591 = vmatpush.msra.mxu0 %v4145
      %5592 = vmatpush.msra.mxu0 %v4141
      %5593 = vmatpush.msra.mxu0 %v4137
      %5594 = vmatpush.msra.mxu0 %v4133
      %5595 = vmatpush.msra.mxu0 %v4129
      %5596 = vmatpush.msra.mxu0 %v4125
      %5597 = vmatpush.msra.mxu0 %v4121
      %5598 = vmatpush.msra.mxu0 %v4117
      %5599 = vmatpush.msra.mxu0 %v4113
      %5600 = vmatpush.msra.mxu0 %v4109
      %5601 = vmatpush.msra.mxu0 %v4105
      %5602 = vmatpush.msra.mxu0 %v4101
      %5603 = vmatpush.msra.mxu0 %v4097
      %5604 = vmatpush.msra.mxu0 %v4093
      %5605 = vmatmul.f32.gmra.mxu0 %v2723
      %v5606 = vpop.f32.mrf.mxu0
      %v5607 = vadd.f32 %v5584, %v5606
      %5608 = vmatmul.f32.gmra.mxu0 %v2741
      %v5609 = vpop.f32.mrf.mxu0
      %v5610 = vadd.f32 %v5587, %v5609
      %5611 = vdwg.mxu0
      %5612 = vmatpush.msra.mxu0 %v4217
      %5613 = vmatpush.msra.mxu0 %v4213
      %5614 = vmatpush.msra.mxu0 %v4209
      %5615 = vmatpush.msra.mxu0 %v4205
      %5616 = vmatpush.msra.mxu0 %v4201
      %5617 = vmatpush.msra.mxu0 %v4197
      %5618 = vmatpush.msra.mxu0 %v4193
      %5619 = vmatpush.msra.mxu0 %v4189
      %5620 = vmatpush.msra.mxu0 %v4185
      %5621 = vmatpush.msra.mxu0 %v4181
      %5622 = vmatpush.msra.mxu0 %v4177
      %5623 = vmatpush.msra.mxu0 %v4173
      %5624 = vmatpush.msra.mxu0 %v4169
      %5625 = vmatpush.msra.mxu0 %v4165
      %5626 = vmatpush.msra.mxu0 %v4161
      %5627 = vmatpush.msra.mxu0 %v4157
      %5628 = vmatmul.f32.gmra.mxu0 %v2724
      %v5629 = vpop.f32.mrf.mxu0
      %v5630 = vadd.f32 %v5607, %v5629
      %5631 = vmatmul.f32.gmra.mxu0 %v2742
      %v5632 = vpop.f32.mrf.mxu0
      %v5633 = vadd.f32 %v5610, %v5632
      %5634 = vdwg.mxu0
      %5635 = vmatpush.msra.mxu0 %v4281
      %5636 = vmatpush.msra.mxu0 %v4277
      %5637 = vmatpush.msra.mxu0 %v4273
      %5638 = vmatpush.msra.mxu0 %v4269
      %5639 = vmatpush.msra.mxu0 %v4265
      %5640 = vmatpush.msra.mxu0 %v4261
      %5641 = vmatpush.msra.mxu0 %v4257
      %5642 = vmatpush.msra.mxu0 %v4253
      %5643 = vmatpush.msra.mxu0 %v4249
      %5644 = vmatpush.msra.mxu0 %v4245
      %5645 = vmatpush.msra.mxu0 %v4241
      %5646 = vmatpush.msra.mxu0 %v4237
      %5647 = vmatpush.msra.mxu0 %v4233
      %5648 = vmatpush.msra.mxu0 %v4229
      %5649 = vmatpush.msra.mxu0 %v4225
      %5650 = vmatpush.msra.mxu0 %v4221
      %5651 = vmatmul.f32.gmra.mxu0 %v2725
      %v5652 = vpop.f32.mrf.mxu0
      %v5653 = vadd.f32 %v5630, %v5652
      %5654 = vmatmul.f32.gmra.mxu0 %v2743
      %v5655 = vpop.f32.mrf.mxu0
      %v5656 = vadd.f32 %v5633, %v5655
      %5657 = vdwg.mxu0
      %5658 = vmatpush.msra.mxu0 %v4345
      %5659 = vmatpush.msra.mxu0 %v4341
      %5660 = vmatpush.msra.mxu0 %v4337
      %5661 = vmatpush.msra.mxu0 %v4333
      %5662 = vmatpush.msra.mxu0 %v4329
      %5663 = vmatpush.msra.mxu0 %v4325
      %5664 = vmatpush.msra.mxu0 %v4321
      %5665 = vmatpush.msra.mxu0 %v4317
      %5666 = vmatpush.msra.mxu0 %v4313
      %5667 = vmatpush.msra.mxu0 %v4309
      %5668 = vmatpush.msra.mxu0 %v4305
      %5669 = vmatpush.msra.mxu0 %v4301
      %5670 = vmatpush.msra.mxu0 %v4297
      %5671 = vmatpush.msra.mxu0 %v4293
      %5672 = vmatpush.msra.mxu0 %v4289
      %5673 = vmatpush.msra.mxu0 %v4285
      %5674 = vmatmul.f32.gmra.mxu0 %v2726
      %v5675 = vpop.f32.mrf.mxu0
      %v5676 = vadd.f32 %v5653, %v5675
      %5677 = vmatmul.f32.gmra.mxu0 %v2744
      %v5678 = vpop.f32.mrf.mxu0
      %v5679 = vadd.f32 %v5656, %v5678
      %5680 = vdwg.mxu0
      %5681 = vmatpush.msra.mxu0 %v4409
      %5682 = vmatpush.msra.mxu0 %v4405
      %5683 = vmatpush.msra.mxu0 %v4401
      %5684 = vmatpush.msra.mxu0 %v4397
      %5685 = vmatpush.msra.mxu0 %v4393
      %5686 = vmatpush.msra.mxu0 %v4389
      %5687 = vmatpush.msra.mxu0 %v4385
      %5688 = vmatpush.msra.mxu0 %v4381
      %5689 = vmatpush.msra.mxu0 %v4377
      %5690 = vmatpush.msra.mxu0 %v4373
      %5691 = vmatpush.msra.mxu0 %v4369
      %5692 = vmatpush.msra.mxu0 %v4365
      %5693 = vmatpush.msra.mxu0 %v4361
      %5694 = vmatpush.msra.mxu0 %v4357
      %5695 = vmatpush.msra.mxu0 %v4353
      %5696 = vmatpush.msra.mxu0 %v4349
      %5697 = vmatmul.f32.gmra.mxu0 %v2727
      %v5698 = vpop.f32.mrf.mxu0
      %v5699 = vadd.f32 %v5676, %v5698
      %5700 = vmatmul.f32.gmra.mxu0 %v2745
      %v5701 = vpop.f32.mrf.mxu0
      %v5702 = vadd.f32 %v5679, %v5701
      %5703 = vdwg.mxu0
      %5704 = vmatpush.msra.mxu0 %v4473
      %5705 = vmatpush.msra.mxu0 %v4469
      %5706 = vmatpush.msra.mxu0 %v4465
      %5707 = vmatpush.msra.mxu0 %v4461
      %5708 = vmatpush.msra.mxu0 %v4457
      %5709 = vmatpush.msra.mxu0 %v4453
      %5710 = vmatpush.msra.mxu0 %v4449
      %5711 = vmatpush.msra.mxu0 %v4445
      %5712 = vmatpush.msra.mxu0 %v4441
      %5713 = vmatpush.msra.mxu0 %v4437
      %5714 = vmatpush.msra.mxu0 %v4433
      %5715 = vmatpush.msra.mxu0 %v4429
      %5716 = vmatpush.msra.mxu0 %v4425
      %5717 = vmatpush.msra.mxu0 %v4421
      %5718 = vmatpush.msra.mxu0 %v4417
      %5719 = vmatpush.msra.mxu0 %v4413
      %5720 = vmatmul.f32.gmra.mxu0 %v2728
      %v5721 = vpop.f32.mrf.mxu0
      %v5722 = vadd.f32 %v5699, %v5721
      %5723 = vmatmul.f32.gmra.mxu0 %v2746
      %v5724 = vpop.f32.mrf.mxu0
      %v5725 = vadd.f32 %v5702, %v5724
      %5726 = vdwg.mxu0
      %5727 = vmatpush.msra.mxu0 %v3386
      %5728 = vmatpush.msra.mxu0 %v3382
      %5729 = vmatpush.msra.mxu0 %v3378
      %5730 = vmatpush.msra.mxu0 %v3374
      %5731 = vmatpush.msra.mxu0 %v3370
      %5732 = vmatpush.msra.mxu0 %v3366
      %5733 = vmatpush.msra.mxu0 %v3362
      %5734 = vmatpush.msra.mxu0 %v3358
      %5735 = vmatpush.msra.mxu0 %v3354
      %5736 = vmatpush.msra.mxu0 %v3350
      %5737 = vmatpush.msra.mxu0 %v3346
      %5738 = vmatpush.msra.mxu0 %v3342
      %5739 = vmatpush.msra.mxu0 %v3338
      %5740 = vmatpush.msra.mxu0 %v3334
      %5741 = vmatpush.msra.mxu0 %v3330
      %5742 = vmatpush.msra.mxu0 %v3326
      %5743 = vmatmul.f32.gmra.mxu0 %v2711
      %v5744 = vpop.f32.mrf.mxu0
      %v5745 = vadd.f32 %v4480, %v5744
      %5746 = vmatmul.f32.gmra.mxu0 %v2729
      %v5747 = vpop.f32.mrf.mxu0
      %v5748 = vadd.f32 %v4480, %v5747
      %5749 = vdwg.mxu0
      %5750 = vmatpush.msra.mxu0 %v3450
      %5751 = vmatpush.msra.mxu0 %v3446
      %5752 = vmatpush.msra.mxu0 %v3442
      %5753 = vmatpush.msra.mxu0 %v3438
      %5754 = vmatpush.msra.mxu0 %v3434
      %5755 = vmatpush.msra.mxu0 %v3430
      %5756 = vmatpush.msra.mxu0 %v3426
      %5757 = vmatpush.msra.mxu0 %v3422
      %5758 = vmatpush.msra.mxu0 %v3418
      %5759 = vmatpush.msra.mxu0 %v3414
      %5760 = vmatpush.msra.mxu0 %v3410
      %5761 = vmatpush.msra.mxu0 %v3406
      %5762 = vmatpush.msra.mxu0 %v3402
      %5763 = vmatpush.msra.mxu0 %v3398
      %5764 = vmatpush.msra.mxu0 %v3394
      %5765 = vmatpush.msra.mxu0 %v3390
      %5766 = vmatmul.f32.gmra.mxu0 %v2712
      %v5767 = vpop.f32.mrf.mxu0
      %v5768 = vadd.f32 %v5745, %v5767
      %5769 = vmatmul.f32.gmra.mxu0 %v2730
      %v5770 = vpop.f32.mrf.mxu0
      %v5771 = vadd.f32 %v5748, %v5770
      %5772 = vdwg.mxu0
      %5773 = vmatpush.msra.mxu0 %v3514
      %5774 = vmatpush.msra.mxu0 %v3510
      %5775 = vmatpush.msra.mxu0 %v3506
      %5776 = vmatpush.msra.mxu0 %v3502
      %5777 = vmatpush.msra.mxu0 %v3498
      %5778 = vmatpush.msra.mxu0 %v3494
      %5779 = vmatpush.msra.mxu0 %v3490
      %5780 = vmatpush.msra.mxu0 %v3486
      %5781 = vmatpush.msra.mxu0 %v3482
      %5782 = vmatpush.msra.mxu0 %v3478
      %5783 = vmatpush.msra.mxu0 %v3474
      %5784 = vmatpush.msra.mxu0 %v3470
      %5785 = vmatpush.msra.mxu0 %v3466
      %5786 = vmatpush.msra.mxu0 %v3462
      %5787 = vmatpush.msra.mxu0 %v3458
      %5788 = vmatpush.msra.mxu0 %v3454
      %5789 = vmatmul.f32.gmra.mxu0 %v2713
      %v5790 = vpop.f32.mrf.mxu0
      %v5791 = vadd.f32 %v5768, %v5790
      %5792 = vmatmul.f32.gmra.mxu0 %v2731
      %v5793 = vpop.f32.mrf.mxu0
      %v5794 = vadd.f32 %v5771, %v5793
      %5795 = vdwg.mxu0
      %5796 = vmatpush.msra.mxu0 %v3578
      %5797 = vmatpush.msra.mxu0 %v3574
      %5798 = vmatpush.msra.mxu0 %v3570
      %5799 = vmatpush.msra.mxu0 %v3566
      %5800 = vmatpush.msra.mxu0 %v3562
      %5801 = vmatpush.msra.mxu0 %v3558
      %5802 = vmatpush.msra.mxu0 %v3554
      %5803 = vmatpush.msra.mxu0 %v3550
      %5804 = vmatpush.msra.mxu0 %v3546
      %5805 = vmatpush.msra.mxu0 %v3542
      %5806 = vmatpush.msra.mxu0 %v3538
      %5807 = vmatpush.msra.mxu0 %v3534
      %5808 = vmatpush.msra.mxu0 %v3530
      %5809 = vmatpush.msra.mxu0 %v3526
      %5810 = vmatpush.msra.mxu0 %v3522
      %5811 = vmatpush.msra.mxu0 %v3518
      %5812 = vmatmul.f32.gmra.mxu0 %v2714
      %v5813 = vpop.f32.mrf.mxu0
      %v5814 = vadd.f32 %v5791, %v5813
      %5815 = vmatmul.f32.gmra.mxu0 %v2732
      %v5816 = vpop.f32.mrf.mxu0
      %v5817 = vadd.f32 %v5794, %v5816
      %5818 = vdwg.mxu0
      %5819 = vmatpush.msra.mxu0 %v3642
      %5820 = vmatpush.msra.mxu0 %v3638
      %5821 = vmatpush.msra.mxu0 %v3634
      %5822 = vmatpush.msra.mxu0 %v3630
      %5823 = vmatpush.msra.mxu0 %v3626
      %5824 = vmatpush.msra.mxu0 %v3622
      %5825 = vmatpush.msra.mxu0 %v3618
      %5826 = vmatpush.msra.mxu0 %v3614
      %5827 = vmatpush.msra.mxu0 %v3610
      %5828 = vmatpush.msra.mxu0 %v3606
      %5829 = vmatpush.msra.mxu0 %v3602
      %5830 = vmatpush.msra.mxu0 %v3598
      %5831 = vmatpush.msra.mxu0 %v3594
      %5832 = vmatpush.msra.mxu0 %v3590
      %5833 = vmatpush.msra.mxu0 %v3586
      %5834 = vmatpush.msra.mxu0 %v3582
      %5835 = vmatmul.f32.gmra.mxu0 %v2715
      %v5836 = vpop.f32.mrf.mxu0
      %v5837 = vadd.f32 %v5814, %v5836
      %5838 = vmatmul.f32.gmra.mxu0 %v2733
      %v5839 = vpop.f32.mrf.mxu0
      %v5840 = vadd.f32 %v5817, %v5839
      %5841 = vdwg.mxu0
      %5842 = vmatpush.msra.mxu0 %v3706
      %5843 = vmatpush.msra.mxu0 %v3702
      %5844 = vmatpush.msra.mxu0 %v3698
      %5845 = vmatpush.msra.mxu0 %v3694
      %5846 = vmatpush.msra.mxu0 %v3690
      %5847 = vmatpush.msra.mxu0 %v3686
      %5848 = vmatpush.msra.mxu0 %v3682
      %5849 = vmatpush.msra.mxu0 %v3678
      %5850 = vmatpush.msra.mxu0 %v3674
      %5851 = vmatpush.msra.mxu0 %v3670
      %5852 = vmatpush.msra.mxu0 %v3666
      %5853 = vmatpush.msra.mxu0 %v3662
      %5854 = vmatpush.msra.mxu0 %v3658
      %5855 = vmatpush.msra.mxu0 %v3654
      %5856 = vmatpush.msra.mxu0 %v3650
      %5857 = vmatpush.msra.mxu0 %v3646
      %5858 = vmatmul.f32.gmra.mxu0 %v2716
      %v5859 = vpop.f32.mrf.mxu0
      %v5860 = vadd.f32 %v5837, %v5859
      %5861 = vmatmul.f32.gmra.mxu0 %v2734
      %v5862 = vpop.f32.mrf.mxu0
      %v5863 = vadd.f32 %v5840, %v5862
      %5864 = vdwg.mxu0
      %5865 = vmatpush.msra.mxu0 %v3770
      %5866 = vmatpush.msra.mxu0 %v3766
      %5867 = vmatpush.msra.mxu0 %v3762
      %5868 = vmatpush.msra.mxu0 %v3758
      %5869 = vmatpush.msra.mxu0 %v3754
      %5870 = vmatpush.msra.mxu0 %v3750
      %5871 = vmatpush.msra.mxu0 %v3746
      %5872 = vmatpush.msra.mxu0 %v3742
      %5873 = vmatpush.msra.mxu0 %v3738
      %5874 = vmatpush.msra.mxu0 %v3734
      %5875 = vmatpush.msra.mxu0 %v3730
      %5876 = vmatpush.msra.mxu0 %v3726
      %5877 = vmatpush.msra.mxu0 %v3722
      %5878 = vmatpush.msra.mxu0 %v3718
      %5879 = vmatpush.msra.mxu0 %v3714
      %5880 = vmatpush.msra.mxu0 %v3710
      %5881 = vmatmul.f32.gmra.mxu0 %v2717
      %v5882 = vpop.f32.mrf.mxu0
      %v5883 = vadd.f32 %v5860, %v5882
      %5884 = vmatmul.f32.gmra.mxu0 %v2735
      %v5885 = vpop.f32.mrf.mxu0
      %v5886 = vadd.f32 %v5863, %v5885
      %5887 = vdwg.mxu0
      %5888 = vmatpush.msra.mxu0 %v3834
      %5889 = vmatpush.msra.mxu0 %v3830
      %5890 = vmatpush.msra.mxu0 %v3826
      %5891 = vmatpush.msra.mxu0 %v3822
      %5892 = vmatpush.msra.mxu0 %v3818
      %5893 = vmatpush.msra.mxu0 %v3814
      %5894 = vmatpush.msra.mxu0 %v3810
      %5895 = vmatpush.msra.mxu0 %v3806
      %5896 = vmatpush.msra.mxu0 %v3802
      %5897 = vmatpush.msra.mxu0 %v3798
      %5898 = vmatpush.msra.mxu0 %v3794
      %5899 = vmatpush.msra.mxu0 %v3790
      %5900 = vmatpush.msra.mxu0 %v3786
      %5901 = vmatpush.msra.mxu0 %v3782
      %5902 = vmatpush.msra.mxu0 %v3778
      %5903 = vmatpush.msra.mxu0 %v3774
      %5904 = vmatmul.f32.gmra.mxu0 %v2718
      %v5905 = vpop.f32.mrf.mxu0
      %v5906 = vadd.f32 %v5883, %v5905
      %5907 = vmatmul.f32.gmra.mxu0 %v2736
      %v5908 = vpop.f32.mrf.mxu0
      %v5909 = vadd.f32 %v5886, %v5908
      %5910 = vdwg.mxu0
      %5911 = vmatpush.msra.mxu0 %v3898
      %5912 = vmatpush.msra.mxu0 %v3894
      %5913 = vmatpush.msra.mxu0 %v3890
      %5914 = vmatpush.msra.mxu0 %v3886
      %5915 = vmatpush.msra.mxu0 %v3882
      %5916 = vmatpush.msra.mxu0 %v3878
      %5917 = vmatpush.msra.mxu0 %v3874
      %5918 = vmatpush.msra.mxu0 %v3870
      %5919 = vmatpush.msra.mxu0 %v3866
      %5920 = vmatpush.msra.mxu0 %v3862
      %5921 = vmatpush.msra.mxu0 %v3858
      %5922 = vmatpush.msra.mxu0 %v3854
      %5923 = vmatpush.msra.mxu0 %v3850
      %5924 = vmatpush.msra.mxu0 %v3846
      %5925 = vmatpush.msra.mxu0 %v3842
      %5926 = vmatpush.msra.mxu0 %v3838
      %5927 = vmatmul.f32.gmra.mxu0 %v2719
      %v5928 = vpop.f32.mrf.mxu0
      %v5929 = vadd.f32 %v5906, %v5928
      %5930 = vmatmul.f32.gmra.mxu0 %v2737
      %v5931 = vpop.f32.mrf.mxu0
      %v5932 = vadd.f32 %v5909, %v5931
      %5933 = vdwg.mxu0
      %5934 = vmatpush.msra.mxu0 %v3962
      %5935 = vmatpush.msra.mxu0 %v3958
      %5936 = vmatpush.msra.mxu0 %v3954
      %5937 = vmatpush.msra.mxu0 %v3950
      %5938 = vmatpush.msra.mxu0 %v3946
      %5939 = vmatpush.msra.mxu0 %v3942
      %5940 = vmatpush.msra.mxu0 %v3938
      %5941 = vmatpush.msra.mxu0 %v3934
      %5942 = vmatpush.msra.mxu0 %v3930
      %5943 = vmatpush.msra.mxu0 %v3926
      %5944 = vmatpush.msra.mxu0 %v3922
      %5945 = vmatpush.msra.mxu0 %v3918
      %5946 = vmatpush.msra.mxu0 %v3914
      %5947 = vmatpush.msra.mxu0 %v3910
      %5948 = vmatpush.msra.mxu0 %v3906
      %5949 = vmatpush.msra.mxu0 %v3902
      %5950 = vmatmul.f32.gmra.mxu0 %v2720
      %v5951 = vpop.f32.mrf.mxu0
      %v5952 = vadd.f32 %v5929, %v5951
      %5953 = vmatmul.f32.gmra.mxu0 %v2738
      %v5954 = vpop.f32.mrf.mxu0
      %v5955 = vadd.f32 %v5932, %v5954
      %5956 = vdwg.mxu0
      %5957 = vmatpush.msra.mxu0 %v4026
      %5958 = vmatpush.msra.mxu0 %v4022
      %5959 = vmatpush.msra.mxu0 %v4018
      %5960 = vmatpush.msra.mxu0 %v4014
      %5961 = vmatpush.msra.mxu0 %v4010
      %5962 = vmatpush.msra.mxu0 %v4006
      %5963 = vmatpush.msra.mxu0 %v4002
      %5964 = vmatpush.msra.mxu0 %v3998
      %5965 = vmatpush.msra.mxu0 %v3994
      %5966 = vmatpush.msra.mxu0 %v3990
      %5967 = vmatpush.msra.mxu0 %v3986
      %5968 = vmatpush.msra.mxu0 %v3982
      %5969 = vmatpush.msra.mxu0 %v3978
      %5970 = vmatpush.msra.mxu0 %v3974
      %5971 = vmatpush.msra.mxu0 %v3970
      %5972 = vmatpush.msra.mxu0 %v3966
      %5973 = vmatmul.f32.gmra.mxu0 %v2721
      %v5974 = vpop.f32.mrf.mxu0
      %v5975 = vadd.f32 %v5952, %v5974
      %5976 = vmatmul.f32.gmra.mxu0 %v2739
      %v5977 = vpop.f32.mrf.mxu0
      %v5978 = vadd.f32 %v5955, %v5977
      %5979 = vdwg.mxu0
      %5980 = vmatpush.msra.mxu0 %v4090
      %5981 = vmatpush.msra.mxu0 %v4086
      %5982 = vmatpush.msra.mxu0 %v4082
      %5983 = vmatpush.msra.mxu0 %v4078
      %5984 = vmatpush.msra.mxu0 %v4074
      %5985 = vmatpush.msra.mxu0 %v4070
      %5986 = vmatpush.msra.mxu0 %v4066
      %5987 = vmatpush.msra.mxu0 %v4062
      %5988 = vmatpush.msra.mxu0 %v4058
      %5989 = vmatpush.msra.mxu0 %v4054
      %5990 = vmatpush.msra.mxu0 %v4050
      %5991 = vmatpush.msra.mxu0 %v4046
      %5992 = vmatpush.msra.mxu0 %v4042
      %5993 = vmatpush.msra.mxu0 %v4038
      %5994 = vmatpush.msra.mxu0 %v4034
      %5995 = vmatpush.msra.mxu0 %v4030
      %5996 = vmatmul.f32.gmra.mxu0 %v2722
      %v5997 = vpop.f32.mrf.mxu0
      %v5998 = vadd.f32 %v5975, %v5997
      %5999 = vmatmul.f32.gmra.mxu0 %v2740
      %v6000 = vpop.f32.mrf.mxu0
      %v6001 = vadd.f32 %v5978, %v6000
      %6002 = vdwg.mxu0
      %6003 = vmatpush.msra.mxu0 %v4154
      %6004 = vmatpush.msra.mxu0 %v4150
      %6005 = vmatpush.msra.mxu0 %v4146
      %6006 = vmatpush.msra.mxu0 %v4142
      %6007 = vmatpush.msra.mxu0 %v4138
      %6008 = vmatpush.msra.mxu0 %v4134
      %6009 = vmatpush.msra.mxu0 %v4130
      %6010 = vmatpush.msra.mxu0 %v4126
      %6011 = vmatpush.msra.mxu0 %v4122
      %6012 = vmatpush.msra.mxu0 %v4118
      %6013 = vmatpush.msra.mxu0 %v4114
      %6014 = vmatpush.msra.mxu0 %v4110
      %6015 = vmatpush.msra.mxu0 %v4106
      %6016 = vmatpush.msra.mxu0 %v4102
      %6017 = vmatpush.msra.mxu0 %v4098
      %6018 = vmatpush.msra.mxu0 %v4094
      %6019 = vmatmul.f32.gmra.mxu0 %v2723
      %v6020 = vpop.f32.mrf.mxu0
      %v6021 = vadd.f32 %v5998, %v6020
      %6022 = vmatmul.f32.gmra.mxu0 %v2741
      %v6023 = vpop.f32.mrf.mxu0
      %v6024 = vadd.f32 %v6001, %v6023
      %6025 = vdwg.mxu0
      %6026 = vmatpush.msra.mxu0 %v4218
      %6027 = vmatpush.msra.mxu0 %v4214
      %6028 = vmatpush.msra.mxu0 %v4210
      %6029 = vmatpush.msra.mxu0 %v4206
      %6030 = vmatpush.msra.mxu0 %v4202
      %6031 = vmatpush.msra.mxu0 %v4198
      %6032 = vmatpush.msra.mxu0 %v4194
      %6033 = vmatpush.msra.mxu0 %v4190
      %6034 = vmatpush.msra.mxu0 %v4186
      %6035 = vmatpush.msra.mxu0 %v4182
      %6036 = vmatpush.msra.mxu0 %v4178
      %6037 = vmatpush.msra.mxu0 %v4174
      %6038 = vmatpush.msra.mxu0 %v4170
      %6039 = vmatpush.msra.mxu0 %v4166
      %6040 = vmatpush.msra.mxu0 %v4162
      %6041 = vmatpush.msra.mxu0 %v4158
      %6042 = vmatmul.f32.gmra.mxu0 %v2724
      %v6043 = vpop.f32.mrf.mxu0
      %v6044 = vadd.f32 %v6021, %v6043
      %6045 = vmatmul.f32.gmra.mxu0 %v2742
      %v6046 = vpop.f32.mrf.mxu0
      %v6047 = vadd.f32 %v6024, %v6046
      %6048 = vdwg.mxu0
      %6049 = vmatpush.msra.mxu0 %v4282
      %6050 = vmatpush.msra.mxu0 %v4278
      %6051 = vmatpush.msra.mxu0 %v4274
      %6052 = vmatpush.msra.mxu0 %v4270
      %6053 = vmatpush.msra.mxu0 %v4266
      %6054 = vmatpush.msra.mxu0 %v4262
      %6055 = vmatpush.msra.mxu0 %v4258
      %6056 = vmatpush.msra.mxu0 %v4254
      %6057 = vmatpush.msra.mxu0 %v4250
      %6058 = vmatpush.msra.mxu0 %v4246
      %6059 = vmatpush.msra.mxu0 %v4242
      %6060 = vmatpush.msra.mxu0 %v4238
      %6061 = vmatpush.msra.mxu0 %v4234
      %6062 = vmatpush.msra.mxu0 %v4230
      %6063 = vmatpush.msra.mxu0 %v4226
      %6064 = vmatpush.msra.mxu0 %v4222
      %6065 = vmatmul.f32.gmra.mxu0 %v2725
      %v6066 = vpop.f32.mrf.mxu0
      %v6067 = vadd.f32 %v6044, %v6066
      %6068 = vmatmul.f32.gmra.mxu0 %v2743
      %v6069 = vpop.f32.mrf.mxu0
      %v6070 = vadd.f32 %v6047, %v6069
      %6071 = vdwg.mxu0
      %6072 = vmatpush.msra.mxu0 %v4346
      %6073 = vmatpush.msra.mxu0 %v4342
      %6074 = vmatpush.msra.mxu0 %v4338
      %6075 = vmatpush.msra.mxu0 %v4334
      %6076 = vmatpush.msra.mxu0 %v4330
      %6077 = vmatpush.msra.mxu0 %v4326
      %6078 = vmatpush.msra.mxu0 %v4322
      %6079 = vmatpush.msra.mxu0 %v4318
      %6080 = vmatpush.msra.mxu0 %v4314
      %6081 = vmatpush.msra.mxu0 %v4310
      %6082 = vmatpush.msra.mxu0 %v4306
      %6083 = vmatpush.msra.mxu0 %v4302
      %6084 = vmatpush.msra.mxu0 %v4298
      %6085 = vmatpush.msra.mxu0 %v4294
      %6086 = vmatpush.msra.mxu0 %v4290
      %6087 = vmatpush.msra.mxu0 %v4286
      %6088 = vmatmul.f32.gmra.mxu0 %v2726
      %v6089 = vpop.f32.mrf.mxu0
      %v6090 = vadd.f32 %v6067, %v6089
      %6091 = vmatmul.f32.gmra.mxu0 %v2744
      %v6092 = vpop.f32.mrf.mxu0
      %v6093 = vadd.f32 %v6070, %v6092
      %6094 = vdwg.mxu0
      %6095 = vmatpush.msra.mxu0 %v4410
      %6096 = vmatpush.msra.mxu0 %v4406
      %6097 = vmatpush.msra.mxu0 %v4402
      %6098 = vmatpush.msra.mxu0 %v4398
      %6099 = vmatpush.msra.mxu0 %v4394
      %6100 = vmatpush.msra.mxu0 %v4390
      %6101 = vmatpush.msra.mxu0 %v4386
      %6102 = vmatpush.msra.mxu0 %v4382
      %6103 = vmatpush.msra.mxu0 %v4378
      %6104 = vmatpush.msra.mxu0 %v4374
      %6105 = vmatpush.msra.mxu0 %v4370
      %6106 = vmatpush.msra.mxu0 %v4366
      %6107 = vmatpush.msra.mxu0 %v4362
      %6108 = vmatpush.msra.mxu0 %v4358
      %6109 = vmatpush.msra.mxu0 %v4354
      %6110 = vmatpush.msra.mxu0 %v4350
      %6111 = vmatmul.f32.gmra.mxu0 %v2727
      %v6112 = vpop.f32.mrf.mxu0
      %v6113 = vadd.f32 %v6090, %v6112
      %6114 = vmatmul.f32.gmra.mxu0 %v2745
      %v6115 = vpop.f32.mrf.mxu0
      %v6116 = vadd.f32 %v6093, %v6115
      %6117 = vdwg.mxu0
      %6118 = vmatpush.msra.mxu0 %v4474
      %6119 = vmatpush.msra.mxu0 %v4470
      %6120 = vmatpush.msra.mxu0 %v4466
      %6121 = vmatpush.msra.mxu0 %v4462
      %6122 = vmatpush.msra.mxu0 %v4458
      %6123 = vmatpush.msra.mxu0 %v4454
      %6124 = vmatpush.msra.mxu0 %v4450
      %6125 = vmatpush.msra.mxu0 %v4446
      %6126 = vmatpush.msra.mxu0 %v4442
      %6127 = vmatpush.msra.mxu0 %v4438
      %6128 = vmatpush.msra.mxu0 %v4434
      %6129 = vmatpush.msra.mxu0 %v4430
      %6130 = vmatpush.msra.mxu0 %v4426
      %6131 = vmatpush.msra.mxu0 %v4422
      %6132 = vmatpush.msra.mxu0 %v4418
      %6133 = vmatpush.msra.mxu0 %v4414
      %6134 = vmatmul.f32.gmra.mxu0 %v2728
      %v6135 = vpop.f32.mrf.mxu0
      %v6136 = vadd.f32 %v6113, %v6135
      %6137 = vmatmul.f32.gmra.mxu0 %v2746
      %v6138 = vpop.f32.mrf.mxu0
      %v6139 = vadd.f32 %v6116, %v6138
      %6140 = vdwg.mxu0
      %6141 = vst [vmem:[%s366] sm:$0xff] %v4894
      %6142 = vst [vmem:[%s366 + $0x8] sm:$0xff] %v5308
      %6143 = vst [vmem:[%s366 + $0x10] sm:$0xff] %v5722
      %6144 = vst [vmem:[%s366 + $0x18] sm:$0xff] %v6136
      %6145 = vst [vmem:[%s366 + $0x20] sm:$0xff] %v4897
      %6146 = vst [vmem:[%s366 + $0x28] sm:$0xff] %v5311
      %6147 = vst [vmem:[%s366 + $0x30] sm:$0xff] %v5725
      %6148 = vst [vmem:[%s366 + $0x38] sm:$0xff] %v6139
      %s6149 = smul.u32 2, %s21
      %p6150 = scmp.lt.s32.totalorder %s6149, 3
      %s6151 = scalar_select %p6150, %s6149, 3
      %s6152 = smul.addr %s6151, 4
      %s6153 = smul.addr %s6152, 8
      %s6154 = scalar_lea.vmem %s10, %s6153
      // Predicated region
      $region61: #{global_encoder.1} parent=59 // pred_check
        %p6155 = pneg %p254
      $region62: #{global_encoder.1} parent=59 // pred_check_branch
        %6157 = sbr.rel (%p6155) target = $region64
      $region63: #{global_encoder.1} parent=59 // pred_region
        %s6158 = smul.u32 2, %s21
      $region64: #{global_encoder.1} parent=59 // pred_fallthru
        _
    $region60: #{global_encoder.1} parent=5 // pred_fallthru
      _
    %p6159 = scmp.le.s32.totalorder 2, %s16
    // Predicated region
    $region65: #{global_encoder.1} parent=5 // pred_check
      %p6160 = pneg %p6159
    $region66: #{global_encoder.1} parent=5 // pred_check_branch
      %6162 = sbr.rel (%p6160) target = $region68
    $region67: #{global_encoder.1} parent=5 // pred_region
      %s6163 = ssub.s32 %s16, 2
      // Predicated region
      $region69: #{global_encoder.1} parent=67 // pred_check
        %p6164 = pneg %p260
      $region70: #{global_encoder.1} parent=67 // pred_check_branch
        %6166 = sbr.rel (%p6164) target = $region72
      $region71: #{global_encoder.1} parent=67 // pred_region
        %s6167 = smul.u32 2, %s22
        %p6168 = scmp.lt.s32.totalorder %s6167, 3
        %s6169 = scalar_select %p6168, %s6167, 3
        %s6170 = smul.addr %s6169, 4
        %s6171 = smul.addr %s6170, 8
        %s6172 = scalar_lea.vmem %s10, %s6171
      $region72: #{global_encoder.1} parent=67 // pred_fallthru
        _
    $region68: #{global_encoder.1} parent=5 // pred_fallthru
      _
  $region6: #{global_encoder.1} parent=0 // loop_footer
    %s20 = sadd.s32 1, %s16
  $region7: #{global_encoder.1} parent=0 // loop_footer_branch
    %15 = sbr.rel target = $region3
  $region8: #{global_encoder.1} parent=0 // loop_exit
    _

</llo_original>
